<compile_context>
chip_gen: v6e
topology: v6e:2x2x1
jax: 0.10.0
libtpu: 0.0.40
codegen_flags: <defaults>
</compile_context>

<pallas_src>
import functools
import math

import jax
import jax.numpy as jnp
from jax.experimental import pallas as pl
from jax.experimental.pallas import tpu as pltpu

PARAM_DTYPE = jnp.bfloat16   # weights / embeddings (bf16 MXU path)
ACT_DTYPE = jnp.bfloat16     # activations between kernels
_LN_EPS = 1e-5


def _tpu_config():
    """Generation-dependent tile sizes and VMEM budget."""
    cap = None
    try:
        cap = int(pltpu.get_tpu_info().vmem_capacity_bytes)
    except Exception:
        cap = None
    kind = ""
    try:
        kind = jax.devices()[0].device_kind.lower()
    except Exception:
        pass
    if cap is None:  # heuristic fallback
        cap = 64 * 1024 * 1024 if "7" in kind else 128 * 1024 * 1024

    mib = 1024 * 1024
    if cap >= 96 * mib:            # v5e / v6e class: 128 MiB physical VMEM
        cfg = dict(vmem_limit=100 * mib, tile_m=1024, tile_n=1024,
                   tile_k=1024, tile_q=(128 if "v5" in kind else 256))
    elif cap >= 48 * mib:          # v7x class: 64 MiB physical VMEM per TC
        cfg = dict(vmem_limit=52 * mib, tile_m=512, tile_n=1024,
                   tile_k=512, tile_q=256)
    else:                          # small-VMEM fallback
        cfg = dict(vmem_limit=max(cap - 4 * mib, 8 * mib), tile_m=256,
                   tile_n=512, tile_k=512, tile_q=128)
    cfg["vmem_limit"] = max(min(cfg["vmem_limit"], cap - 4 * mib), 8 * mib)
    return cfg


_CFG = _tpu_config()


def _cparams(semantics):
    return pltpu.CompilerParams(dimension_semantics=semantics,
                                vmem_limit_bytes=_CFG["vmem_limit"])


def _cap(dim, pref):
    """min(dim, pref) -- used with cdiv grids (edge blocks masked)."""
    return dim if dim <= pref else pref


def _tile(dim, pref):
    """Largest tile <= pref that exactly divides dim (falls back to dim)."""
    if dim <= pref:
        return dim
    t = pref
    while t > 8 and dim % t:
        t //= 2
    return t if dim % t == 0 else dim


def _head_group(n_head, head_dim):
    """# heads processed together so the attention lane width is >= 128."""
    g = max(1, min(n_head, 128 // max(head_dim, 1)))
    while n_head % g:
        g -= 1
    return g


# ----------------------------- kernel helpers -------------------------------

def _gelu_tanh(x):
    # PyTorch nn.GELU(approximate='tanh'), computed in f32 (tanh -> EUP).
    c = math.sqrt(2.0 / math.pi)
    return 0.5 * x * (1.0 + jnp.tanh(c * (x + 0.044715 * x * x * x)))


def _layernorm_f32(x, g, b):
    mu = jnp.mean(x, axis=-1, keepdims=True)
    var = jnp.mean(jnp.square(x - mu), axis=-1, keepdims=True)
    return (x - mu) * jax.lax.rsqrt(var + _LN_EPS) * g + b


# ------------------------------ Pallas kernels ------------------------------

def _ln_qkv_kernel(x_ref, g_ref, b_ref, w_ref, bias_ref,
                   q_ref, k_ref, v_ref, xn_sc, *, gd, q_scale):
    """Fused LayerNorm -> QKV matmul -> bias; Q pre-scaled by 1/sqrt(hd).
    LN result is cached in VMEM scratch and only recomputed at head-group 0."""
    @pl.when(pl.program_id(1) == 0)
    def _():
        x = x_ref[...].astype(jnp.float32)
        xn_sc[...] = _layernorm_f32(
            x, g_ref[...].astype(jnp.float32),
            b_ref[...].astype(jnp.float32)).astype(xn_sc.dtype)

    acc = jnp.dot(xn_sc[...], w_ref[...], preferred_element_type=jnp.float32)
    acc = acc + bias_ref[...].astype(jnp.float32)
    q_ref[...] = (acc[:, 0:gd] * q_scale).astype(q_ref.dtype)
    k_ref[...] = acc[:, gd:2 * gd].astype(k_ref.dtype)
    v_ref[...] = acc[:, 2 * gd:3 * gd].astype(v_ref.dtype)


def _ln_linear_kernel(x_ref, g_ref, b_ref, w_ref, bias_ref, o_ref, xn_sc,
                      *, gelu):
    """Fused LayerNorm -> matmul -> bias (-> GELU); LN cached in scratch."""
    @pl.when(pl.program_id(1) == 0)
    def _():
        x = x_ref[...].astype(jnp.float32)
        xn_sc[...] = _layernorm_f32(
            x, g_ref[...].astype(jnp.float32),
            b_ref[...].astype(jnp.float32)).astype(xn_sc.dtype)

    acc = jnp.dot(xn_sc[...], w_ref[...], preferred_element_type=jnp.float32)
    acc = acc + bias_ref[...].astype(jnp.float32)
    if gelu:
        acc = _gelu_tanh(acc)
    o_ref[...] = acc.astype(o_ref.dtype)


def _ln_lmhead_kernel(x_ref, g_ref, b_ref, w_ref, o_ref, xn_sc):
    """Fused final LayerNorm + tied lm_head against pre-transposed (C, V)
    weight blocks (plain NN matmul, no in-kernel transpose, no zero bias)."""
    @pl.when(pl.program_id(1) == 0)
    def _():
        x = x_ref[...].astype(jnp.float32)
        xn_sc[...] = _layernorm_f32(
            x, g_ref[...].astype(jnp.float32),
            b_ref[...].astype(jnp.float32)).astype(xn_sc.dtype)

    o_ref[...] = jnp.dot(xn_sc[...], w_ref[...],
                         preferred_element_type=jnp.float32).astype(o_ref.dtype)


def _matmul_residual_kernel(x_ref, w_ref, bias_ref, res_ref, o_ref, acc_ref):
    """K-tiled matmul with f32 VMEM accumulator; bias + residual fused into
    the epilogue (store only on the last K step)."""
    k = pl.program_id(2)

    @pl.when(k == 0)
    def _():
        acc_ref[...] = jnp.zeros_like(acc_ref)

    acc_ref[...] += jnp.dot(x_ref[...], w_ref[...],
                            preferred_element_type=jnp.float32)

    @pl.when(k == pl.num_programs(2) - 1)
    def _():
        out = (acc_ref[...] + bias_ref[...].astype(jnp.float32)
               + res_ref[...].astype(jnp.float32))
        o_ref[...] = out.astype(o_ref.dtype)


def _flash_attn_kernel(q_ref, k_ref, v_ref, o_ref, m_sc, l_sc, acc_sc,
                       *, hd, grp, tq, tkv):
    """Flash-style causal attention, `grp` heads per grid point (lane width
    grp*hd).  Q already carries the 1/sqrt(hd) scale.  The causal mask is only
    built on the diagonal block; future KV blocks are skipped (and their DMAs
    are elided by the clamped index_map in the wrapper)."""
    qi = pl.program_id(2)
    ki = pl.program_id(3)

    @pl.when(ki == 0)
    def _():
        m_sc[...] = jnp.full_like(m_sc, -jnp.inf)
        l_sc[...] = jnp.zeros_like(l_sc)
        acc_sc[...] = jnp.zeros_like(acc_sc)

    def process(masked):
        q_all = q_ref[...]
        k_all = k_ref[...]
        v_all = v_ref[...]
        if masked:
            row = jax.lax.broadcasted_iota(jnp.int32, (tq, tkv), 0)
            col = jax.lax.broadcasted_iota(jnp.int32, (tq, tkv), 1)
            keep = col <= row            # tq == tkv and same block offset
        for g in range(grp):
            sl = slice(g * hd, (g + 1) * hd)
            q = q_all[:, sl]
            k = k_all[:, sl]
            v = v_all[:, sl]
            s = jax.lax.dot_general(q, k, (((1,), (1,)), ((), ())),
                                    preferred_element_type=jnp.float32)
            if masked:
                s = jnp.where(keep, s, -1e30)
            m_prev = m_sc[g]
            m_new = jnp.maximum(m_prev, jnp.max(s, axis=-1, keepdims=True))
            alpha = jnp.exp(m_prev - m_new)
            p = jnp.exp(s - m_new)
            l_sc[g] = alpha * l_sc[g] + jnp.sum(p, axis=-1, keepdims=True)
            acc_sc[g] = alpha * acc_sc[g] + jnp.dot(
                p.astype(v.dtype), v, preferred_element_type=jnp.float32)
            m_sc[g] = m_new

    @pl.when(ki < qi)        # interior (fully unmasked) blocks
    def _():
        process(False)

    @pl.when(ki == qi)       # diagonal block: apply causal mask
    def _():
        process(True)

    @pl.when(ki == pl.num_programs(3) - 1)
    def _():
        outs = []
        for g in range(grp):
            inv_l = pl.reciprocal(l_sc[g], approx=True)
            outs.append(acc_sc[g] * inv_l)
        out = outs[0] if grp == 1 else jnp.concatenate(outs, axis=-1)
        o_ref[...] = out.astype(o_ref.dtype)


# ------------------------------ kernel wrappers -----------------------------

def ln_qkv(x2d, g, b, w, bias, *, hd):
    """Fused LN + QKV projection, head-group-major outputs.
    x2d:(M,C)  w:(HG,C,3*gd)  bias:(HG,1,3*gd)  ->  q,k,v each (HG, M, gd)."""
    M, C = x2d.shape
    HG, _, w3 = w.shape
    gd = w3 // 3
    tm = _cap(M, _CFG["tile_m"])
    grid = (pl.cdiv(M, tm), HG)
    kernel = functools.partial(_ln_qkv_kernel, gd=gd,
                               q_scale=1.0 / math.sqrt(hd))
    out_sds = jax.ShapeDtypeStruct((HG, M, gd), x2d.dtype)
    return pl.pallas_call(
        kernel,
        out_shape=(out_sds, out_sds, out_sds),
        grid=grid,
        in_specs=[
            pl.BlockSpec((tm, C), lambda i, j: (i, 0)),
            pl.BlockSpec((1, C), lambda i, j: (0, 0)),
            pl.BlockSpec((1, C), lambda i, j: (0, 0)),
            pl.BlockSpec((None, C, w3), lambda i, j: (j, 0, 0)),
            pl.BlockSpec((None, 1, w3), lambda i, j: (j, 0, 0)),
        ],
        out_specs=(
            pl.BlockSpec((None, tm, gd), lambda i, j: (j, i, 0)),
            pl.BlockSpec((None, tm, gd), lambda i, j: (j, i, 0)),
            pl.BlockSpec((None, tm, gd), lambda i, j: (j, i, 0)),
        ),
        scratch_shapes=[pltpu.VMEM((tm, C), x2d.dtype)],
        compiler_params=_cparams(("parallel", "arbitrary")),
    )(x2d, g, b, w, bias)


def ln_linear(x2d, g, b, w, bias, gelu=False):
    """Fused LN + linear (+ GELU).  x2d:(M,C)  w:(C,N)  bias:(1,N)."""
    M, C = x2d.shape
    _, N = w.shape
    tm = _cap(M, _CFG["tile_m"])
    tn = _cap(N, _CFG["tile_n"])
    grid = (pl.cdiv(M, tm), pl.cdiv(N, tn))
    return pl.pallas_call(
        functools.partial(_ln_linear_kernel, gelu=gelu),
        out_shape=jax.ShapeDtypeStruct((M, N), x2d.dtype),
        grid=grid,
        in_specs=[
            pl.BlockSpec((tm, C), lambda i, j: (i, 0)),
            pl.BlockSpec((1, C), lambda i, j: (0, 0)),
            pl.BlockSpec((1, C), lambda i, j: (0, 0)),
            pl.BlockSpec((C, tn), lambda i, j: (0, j)),
            pl.BlockSpec((1, tn), lambda i, j: (0, j)),
        ],
        out_specs=pl.BlockSpec((tm, tn), lambda i, j: (i, j)),
        scratch_shapes=[pltpu.VMEM((tm, C), x2d.dtype)],
        compiler_params=_cparams(("parallel", "arbitrary")),
    )(x2d, g, b, w, bias)


def causal_flash_attention(q, k, v, *, hd):
    """q/k/v: (HG, B, T, gd) head-group-major  ->  (HG, B, T, gd)."""
    HG, B, T, gd = q.shape
    grp = gd // hd
    tq = _tile(T, _CFG["tile_q"])
    tkv = tq
    nq = T // tq
    grid = (B, HG, nq, nq)
    kernel = functools.partial(_flash_attn_kernel, hd=hd, grp=grp,
                               tq=tq, tkv=tkv)
    q_spec = pl.BlockSpec((None, None, tq, gd),
                          lambda b, h, qi, ki: (h, b, qi, 0))
    # Clamp KV block index so causally-masked (future) blocks map to the
    # already-resident block and the DMA is elided.
    kv_idx = lambda b, h, qi, ki: (h, b, jnp.minimum(ki, qi), 0)
    k_spec = pl.BlockSpec((None, None, tkv, gd), kv_idx)
    v_spec = pl.BlockSpec((None, None, tkv, gd), kv_idx)
    o_spec = pl.BlockSpec((None, None, tq, gd),
                          lambda b, h, qi, ki: (h, b, qi, 0))
    return pl.pallas_call(
        kernel,
        out_shape=jax.ShapeDtypeStruct((HG, B, T, gd), q.dtype),
        grid=grid,
        in_specs=[q_spec, k_spec, v_spec],
        out_specs=o_spec,
        scratch_shapes=[
            pltpu.VMEM((grp, tq, 1), jnp.float32),    # running max
            pltpu.VMEM((grp, tq, 1), jnp.float32),    # running sum
            pltpu.VMEM((grp, tq, hd), jnp.float32),   # output accumulator
        ],
        compiler_params=_cparams(("parallel", "parallel", "parallel",
                                  "arbitrary")),
    )(q, k, v)


def attn_proj_residual(y_hm, w, bias, res):
    """Attention output projection; contracts over head groups via the K grid
    axis (depth gd >= 128) and fuses bias + residual into the epilogue.
    y_hm:(HG,M,gd)  w:(HG,gd,C)  bias:(1,C)  res:(M,C)  ->  (M,C)."""
    HG, M, gd = y_hm.shape
    C = w.shape[2]
    tm = _cap(M, _CFG["tile_m"])
    tn = _cap(C, _CFG["tile_n"])
    grid = (pl.cdiv(M, tm), pl.cdiv(C, tn), HG)
    return pl.pallas_call(
        _matmul_residual_kernel,
        out_shape=jax.ShapeDtypeStruct((M, C), res.dtype),
        grid=grid,
        in_specs=[
            pl.BlockSpec((None, tm, gd), lambda i, j, k: (k, i, 0)),
            pl.BlockSpec((None, gd, tn), lambda i, j, k: (k, 0, j)),
            pl.BlockSpec((1, tn), lambda i, j, k: (0, j)),
            pl.BlockSpec((tm, tn), lambda i, j, k: (i, j)),
        ],
        out_specs=pl.BlockSpec((tm, tn), lambda i, j, k: (i, j)),
        scratch_shapes=[pltpu.VMEM((tm, tn), jnp.float32)],
        compiler_params=_cparams(("parallel", "parallel", "arbitrary")),
    )(y_hm, w, bias, res)


def linear_residual(x2d, w, bias, res):
    """K-tiled matmul + bias + residual (MLP down-projection)."""
    M, K = x2d.shape
    _, N = w.shape
    tm = _cap(M, _CFG["tile_m"])
    tn = _cap(N, _CFG["tile_n"])
    tk = _CFG["tile_k"] if (K > _CFG["tile_k"] and K % _CFG["tile_k"] == 0) else K
    grid = (pl.cdiv(M, tm), pl.cdiv(N, tn), K // tk)
    return pl.pallas_call(
        _matmul_residual_kernel,
        out_shape=jax.ShapeDtypeStruct((M, N), res.dtype),
        grid=grid,
        in_specs=[
            pl.BlockSpec((tm, tk), lambda i, j, k: (i, k)),
            pl.BlockSpec((tk, tn), lambda i, j, k: (k, j)),
            pl.BlockSpec((1, tn), lambda i, j, k: (0, j)),
            pl.BlockSpec((tm, tn), lambda i, j, k: (i, j)),
        ],
        out_specs=pl.BlockSpec((tm, tn), lambda i, j, k: (i, j)),
        scratch_shapes=[pltpu.VMEM((tm, tn), jnp.float32)],
        compiler_params=_cparams(("parallel", "parallel", "arbitrary")),
    )(x2d, w, bias, res)


def ln_lm_head(x2d, g, b, wte_t):
    """Fused final LN + tied lm_head.  wte_t:(C,V) pre-transposed once."""
    M, C = x2d.shape
    V = wte_t.shape[1]
    tm = _cap(M, _CFG["tile_m"])
    tv = _cap(V, _CFG["tile_n"])
    grid = (pl.cdiv(M, tm), pl.cdiv(V, tv))
    return pl.pallas_call(
        _ln_lmhead_kernel,
        out_shape=jax.ShapeDtypeStruct((M, V), ACT_DTYPE),
        grid=grid,
        in_specs=[
            pl.BlockSpec((tm, C), lambda i, j: (i, 0)),
            pl.BlockSpec((1, C), lambda i, j: (0, 0)),
            pl.BlockSpec((1, C), lambda i, j: (0, 0)),
            pl.BlockSpec((C, tv), lambda i, j: (0, j)),
        ],
        out_specs=pl.BlockSpec((tm, tv), lambda i, j: (i, j)),
        scratch_shapes=[pltpu.VMEM((tm, C), ACT_DTYPE)],
        compiler_params=_cparams(("parallel", "arbitrary")),
    )(x2d, g, b, wte_t)


# ------------------------------ parameters ---------------------------------

def init_params(key, cfg):
    C, V, L, H = cfg["n_embd"], cfg["vocab_size"], cfg["n_layer"], cfg["n_head"]
    hd = C // H
    G = _head_group(H, hd)
    HG, gd = H // G, G * hd
    std = 0.02
    std_proj = 0.02 * (2 * L) ** -0.5   # NANOGPT_SCALE_INIT layers
    keys = iter(jax.random.split(key, 4 + 8 * L))

    def nrm(shape, s):
        return (s * jax.random.normal(next(keys), shape,
                                      dtype=jnp.float32)).astype(PARAM_DTYPE)

    wte = nrm((V, C), std)
    params = {
        "wte": wte,                        # embedding rows (gather)
        "wte_t": jnp.asarray(wte.T),       # tied lm_head weight, (C, V)
        "wpe": nrm((cfg["block_size"], C), std),
        "lnf_g": jnp.ones((1, C), jnp.float32),
        "lnf_b": jnp.zeros((1, C), jnp.float32),
        "blocks": [],
    }
    for _ in range(L):
        params["blocks"].append({
            "ln1_g": jnp.ones((1, C), jnp.float32),
            "ln1_b": jnp.zeros((1, C), jnp.float32),
            # c_attn stored head-group-major: (HG, C, 3*gd).
            "attn_w": nrm((HG, C, 3 * gd), std),
            "attn_b": jnp.zeros((HG, 1, 3 * gd), jnp.float32),
            # c_proj stored as (HG, gd, C) == (C, C) with K split over groups.
            "attn_proj_w": nrm((HG, gd, C), std_proj),
            "attn_proj_b": jnp.zeros((1, C), jnp.float32),
            "ln2_g": jnp.ones((1, C), jnp.float32),
            "ln2_b": jnp.zeros((1, C), jnp.float32),
            "fc_w": nrm((C, 4 * C), std),
            "fc_b": jnp.zeros((1, 4 * C), jnp.float32),
            "mlp_proj_w": nrm((4 * C, C), std_proj),
            "mlp_proj_b": jnp.zeros((1, C), jnp.float32),
        })
    return params


# ------------------------------ model forward -------------------------------

def gpt_forward(idx, params, cfg):
    B, T = idx.shape
    C, H = cfg["n_embd"], cfg["n_head"]
    hd = C // H
    G = _head_group(H, hd)
    HG, gd = H // G, G * hd
    M = B * T
    assert T <= cfg["block_size"]

    # Embedding lookups are glue (small gather, plain JAX).
    tok_emb = jnp.take(params["wte"], idx, axis=0)          # (B, T, C)
    pos_emb = params["wpe"][:T]                              # (T, C)
    x = (tok_emb + pos_emb[None, :, :]).reshape(M, C).astype(ACT_DTYPE)

    for layer in params["blocks"]:
        # --- attention sub-block (LN fused into QKV, residual into proj) ---
        q, k, v = ln_qkv(x, layer["ln1_g"], layer["ln1_b"],
                         layer["attn_w"], layer["attn_b"], hd=hd)
        y = causal_flash_attention(q.reshape(HG, B, T, gd),
                                   k.reshape(HG, B, T, gd),
                                   v.reshape(HG, B, T, gd), hd=hd)
        x = attn_proj_residual(y.reshape(HG, M, gd),
                               layer["attn_proj_w"], layer["attn_proj_b"], x)

        # --- MLP sub-block (LN+GELU fused into c_fc, residual into c_proj) --
        h = ln_linear(x, layer["ln2_g"], layer["ln2_b"],
                      layer["fc_w"], layer["fc_b"], gelu=True)    # (M, 4C)
        x = linear_residual(h, layer["mlp_proj_w"], layer["mlp_proj_b"], x)

    # Final LN fused into the tied lm_head (bf16 logits).
    logits = ln_lm_head(x, params["lnf_g"], params["lnf_b"], params["wte_t"])
    return logits.reshape(B, T, cfg["vocab_size"])
    # TODO(synk): targets / cross-entropy loss path of GPT.forward is not
    # implemented (forward returns logits only, matching targets=None).


# --------------------------- pure-JAX reference -----------------------------

def gpt_forward_reference(idx, params, cfg):
    """f32 reference with identical (head-group-major) weight layout."""
    B, T = idx.shape
    C, H = cfg["n_embd"], cfg["n_head"]
    hd = C // H
    G = _head_group(H, hd)
    HG, gd = H // G, G * hd
    f32 = jnp.float32

    def ln(x, g, b):
        mu = jnp.mean(x, axis=-1, keepdims=True)
        var = jnp.mean(jnp.square(x - mu), axis=-1, keepdims=True)
        return (x - mu) * jax.lax.rsqrt(var + _LN_EPS) * g + b

    x = params["wte"].astype(f32)[idx] + params["wpe"][:T].astype(f32)[None]
    causal = jnp.tril(jnp.ones((T, T), dtype=bool))
    for layer in params["blocks"]:
        xn = ln(x, layer["ln1_g"].astype(f32), layer["ln1_b"].astype(f32))
        y = jnp.zeros_like(x)
        for hg in range(HG):
            qkv = xn @ layer["attn_w"][hg].astype(f32) + \
                layer["attn_b"][hg, 0].astype(f32)
            heads = []
            for g_ in range(G):
                qh = qkv[..., g_ * hd:(g_ + 1) * hd]
                kh = qkv[..., gd + g_ * hd:gd + (g_ + 1) * hd]
                vh = qkv[..., 2 * gd + g_ * hd:2 * gd + (g_ + 1) * hd]
                s = jnp.einsum("btd,bsd->bts", qh, kh) / math.sqrt(hd)
                s = jnp.where(causal[None], s, -jnp.inf)
                p = jax.nn.softmax(s, axis=-1)
                heads.append(jnp.einsum("bts,bsd->btd", p, vh))
            ygrp = jnp.concatenate(heads, axis=-1)
            y = y + ygrp @ layer["attn_proj_w"][hg].astype(f32)
        x = x + y + layer["attn_proj_b"].astype(f32)
        xn = ln(x, layer["ln2_g"].astype(f32), layer["ln2_b"].astype(f32))
        h = _gelu_tanh(xn @ layer["fc_w"].astype(f32)
                       + layer["fc_b"].astype(f32))
        x = x + h @ layer["mlp_proj_w"].astype(f32) + \
            layer["mlp_proj_b"].astype(f32)
    xn = ln(x, params["lnf_g"].astype(f32), params["lnf_b"].astype(f32))
    return xn @ params["wte_t"].astype(f32)


# ---------------------------------- main ------------------------------------

if __name__ == "__main__":
    # Small config that still exercises 128-lane head groups (hd=32, G=4).
    cfg = dict(block_size=128, vocab_size=512, n_layer=2, n_head=4, n_embd=128)
    B, T = 2, 64

    key = jax.random.PRNGKey(0)
    k_params, k_idx = jax.random.split(key)
    params = init_params(k_params, cfg)
    idx = jax.random.randint(k_idx, (B, T), 0, cfg["vocab_size"],
                             dtype=jnp.int32)

    logits = jax.jit(lambda i: gpt_forward(i, params, cfg))(idx)
    logits = jax.block_until_ready(logits)

    assert logits.shape == (B, T, cfg["vocab_size"])
    assert bool(jnp.all(jnp.isfinite(logits)))

    # Validate against a pure-JAX f32 reference (loose tolerance: bf16
    # activations + approx reciprocal in the softmax denominator).
    ref = jax.jit(lambda i: gpt_forward_reference(i, params, cfg))(idx)
    ref = jax.block_until_ready(ref)
    err = float(jnp.max(jnp.abs(logits.astype(jnp.float32) - ref)))
    scale = float(jnp.max(jnp.abs(ref)))
    assert err <= 0.05 + 0.05 * scale, f"mismatch: err={err} scale={scale}"

    print("KERNEL_OK")
</pallas_src>

<mosaic_0001>
module attributes {stable_mosaic.version = 11 : i64} {
  func.func @_ln_qkv_kernel(%arg0: i32, %arg1: i32, %arg2: memref<128x128xbf16, #tpu.memory_space<vmem>>, %arg3: memref<1x128xf32, #tpu.memory_space<vmem>>, %arg4: memref<1x128xf32, #tpu.memory_space<vmem>>, %arg5: memref<1x128x384xbf16, #tpu.memory_space<vmem>>, %arg6: memref<1x1x384xf32, #tpu.memory_space<vmem>>, %arg7: memref<1x128x128xbf16, #tpu.memory_space<vmem>>, %arg8: memref<1x128x128xbf16, #tpu.memory_space<vmem>>, %arg9: memref<1x128x128xbf16, #tpu.memory_space<vmem>>, %arg10: memref<128x128xbf16, #tpu.memory_space<vmem>>) attributes {dimension_semantics = [#tpu.dimension_semantics<parallel>, #tpu.dimension_semantics<arbitrary>], iteration_bounds = array<i64: 1, 1>, scalar_prefetch = 0 : i64, scratch_operands = 1 : i64, tpu.core_type = #tpu.core_type<tc>, window_params = [{transform_indices = @transform_0, window_bounds = array<i64: 128, 128>}, {pipeline_mode = #tpu.pipeline_mode<synchronous>, transform_indices = @transform_1, window_bounds = array<i64: 1, 128>}, {pipeline_mode = #tpu.pipeline_mode<synchronous>, transform_indices = @transform_2, window_bounds = array<i64: 1, 128>}, {transform_indices = @transform_3, window_bounds = array<i64: 1, 128, 384>}, {transform_indices = @transform_4, window_bounds = array<i64: 1, 1, 384>}, {transform_indices = @transform_5, window_bounds = array<i64: 1, 128, 128>}, {transform_indices = @transform_6, window_bounds = array<i64: 1, 128, 128>}, {transform_indices = @transform_7, window_bounds = array<i64: 1, 128, 128>}]} {
    %c0_i32 = arith.constant 0 : i32
    %0 = arith.cmpi eq, %arg1, %c0_i32 : i32
    %1 = arith.extui %0 : i1 to i32
    %c0_i32_0 = arith.constant 0 : i32
    %2 = arith.cmpi ne, %1, %c0_i32_0 : i32
    scf.if %2 {
      %c0_18 = arith.constant 0 : index
      %c0_19 = arith.constant 0 : index
      %28 = vector.load %arg2[%c0_18, %c0_19] : memref<128x128xbf16, #tpu.memory_space<vmem>>, vector<128x128xbf16>
      %29 = arith.extf %28 : vector<128x128xbf16> to vector<128x128xf32>
      %c0_20 = arith.constant 0 : index
      %c0_21 = arith.constant 0 : index
      %30 = vector.load %arg3[%c0_20, %c0_21] : memref<1x128xf32, #tpu.memory_space<vmem>>, vector<1x128xf32>
      %c0_22 = arith.constant 0 : index
      %c0_23 = arith.constant 0 : index
      %31 = vector.load %arg4[%c0_22, %c0_23] : memref<1x128xf32, #tpu.memory_space<vmem>>, vector<1x128xf32>
      %cst_24 = arith.constant dense<0.000000e+00> : vector<128xf32>
      %32 = vector.multi_reduction <add>, %29, %cst_24 [1] : vector<128x128xf32> to vector<128xf32>
      %33 = vector.shape_cast %32 : vector<128xf32> to vector<128x1xf32>
      %cst_25 = arith.constant 1.280000e+02 : f32
      %34 = vector.broadcast %cst_25 : f32 to vector<128x1xf32>
      %35 = arith.divf %33, %34 : vector<128x1xf32>
      %36 = vector.broadcast %35 : vector<128x1xf32> to vector<128x128xf32>
      %37 = arith.subf %29, %36 : vector<128x128xf32>
      %38 = arith.mulf %37, %37 : vector<128x128xf32>
      %cst_26 = arith.constant dense<0.000000e+00> : vector<128xf32>
      %39 = vector.multi_reduction <add>, %38, %cst_26 [1] : vector<128x128xf32> to vector<128xf32>
      %40 = vector.shape_cast %39 : vector<128xf32> to vector<128x1xf32>
      %cst_27 = arith.constant 1.280000e+02 : f32
      %41 = vector.broadcast %cst_27 : f32 to vector<128x1xf32>
      %42 = arith.divf %40, %41 : vector<128x1xf32>
      %43 = vector.broadcast %35 : vector<128x1xf32> to vector<128x128xf32>
      %44 = arith.subf %29, %43 : vector<128x128xf32>
      %cst_28 = arith.constant 9.99999974E-6 : f32
      %45 = vector.broadcast %cst_28 : f32 to vector<128x1xf32>
      %46 = arith.addf %42, %45 : vector<128x1xf32>
      %47 = math.rsqrt %46 : vector<128x1xf32>
      %48 = vector.broadcast %47 : vector<128x1xf32> to vector<128x128xf32>
      %49 = arith.mulf %44, %48 : vector<128x128xf32>
      %50 = vector.broadcast %30 : vector<1x128xf32> to vector<128x128xf32>
      %51 = arith.mulf %49, %50 : vector<128x128xf32>
      %52 = vector.broadcast %31 : vector<1x128xf32> to vector<128x128xf32>
      %53 = arith.addf %51, %52 : vector<128x128xf32>
      %54 = arith.truncf %53 : vector<128x128xf32> to vector<128x128xbf16>
      %c0_29 = arith.constant 0 : index
      %c0_30 = arith.constant 0 : index
      %55 = vector.load %arg10[%c0_29, %c0_30] : memref<128x128xbf16, #tpu.memory_space<vmem>>, vector<128x128xbf16>
      tpu.vector_store %arg10[%c0_29, %c0_30], %54 {strides = array<i32>} : memref<128x128xbf16, #tpu.memory_space<vmem>>, vector<128x128xbf16>,
    } else {
    }
    %c0 = arith.constant 0 : index
    %c0_1 = arith.constant 0 : index
    %3 = vector.load %arg10[%c0, %c0_1] : memref<128x128xbf16, #tpu.memory_space<vmem>>, vector<128x128xbf16>
    %c0_2 = arith.constant 0 : index
    %c0_3 = arith.constant 0 : index
    %c0_4 = arith.constant 0 : index
    %4 = vector.load %arg5[%c0_2, %c0_3, %c0_4] : memref<1x128x384xbf16, #tpu.memory_space<vmem>>, vector<1x128x384xbf16>
    %5 = vector.shape_cast %4 : vector<1x128x384xbf16> to vector<128x384xbf16>
    %cst = arith.constant dense<0.000000e+00> : vector<128x384xf32>
    %6 = tpu.matmul %3, %5, %cst {dimension_numbers = #tpu.dot_dimension_numbers<[1], [0], [0], [1], [0, 0, 1, 1], [], []>} : vector<128x128xbf16>, vector<128x384xbf16>, vector<128x384xf32> -> vector<128x384xf32>
    %c0_5 = arith.constant 0 : index
    %c0_6 = arith.constant 0 : index
    %c0_7 = arith.constant 0 : index
    %7 = vector.load %arg6[%c0_5, %c0_6, %c0_7] : memref<1x1x384xf32, #tpu.memory_space<vmem>>, vector<1x1x384xf32>
    %8 = vector.shape_cast %7 : vector<1x1x384xf32> to vector<1x384xf32>
    %9 = vector.broadcast %8 : vector<1x384xf32> to vector<128x384xf32>
    %10 = arith.addf %6, %9 : vector<128x384xf32>
    %11 = vector.extract_strided_slice %10 {offsets = [0, 0], sizes = [128, 128], strides = [1, 1]} : vector<128x384xf32> to vector<128x128xf32>
    %cst_8 = arith.constant 0.176776692 : f32
    %12 = vector.broadcast %cst_8 : f32 to vector<128x128xf32>
    %13 = arith.mulf %11, %12 : vector<128x128xf32>
    %14 = arith.truncf %13 : vector<128x128xf32> to vector<128x128xbf16>
    %c0_9 = arith.constant 0 : index
    %c0_10 = arith.constant 0 : index
    %c0_11 = arith.constant 0 : index
    %15 = vector.load %arg7[%c0_9, %c0_10, %c0_11] : memref<1x128x128xbf16, #tpu.memory_space<vmem>>, vector<1x128x128xbf16>
    %16 = vector.shape_cast %15 : vector<1x128x128xbf16> to vector<128x128xbf16>
    %17 = vector.shape_cast %14 : vector<128x128xbf16> to vector<1x128x128xbf16>
    tpu.vector_store %arg7[%c0_9, %c0_10, %c0_11], %17 {strides = array<i32>} : memref<1x128x128xbf16, #tpu.memory_space<vmem>>, vector<1x128x128xbf16>,
    %18 = vector.extract_strided_slice %10 {offsets = [0, 128], sizes = [128, 128], strides = [1, 1]} : vector<128x384xf32> to vector<128x128xf32>
    %19 = arith.truncf %18 : vector<128x128xf32> to vector<128x128xbf16>
    %c0_12 = arith.constant 0 : index
    %c0_13 = arith.constant 0 : index
    %c0_14 = arith.constant 0 : index
    %20 = vector.load %arg8[%c0_12, %c0_13, %c0_14] : memref<1x128x128xbf16, #tpu.memory_space<vmem>>, vector<1x128x128xbf16>
    %21 = vector.shape_cast %20 : vector<1x128x128xbf16> to vector<128x128xbf16>
    %22 = vector.shape_cast %19 : vector<128x128xbf16> to vector<1x128x128xbf16>
    tpu.vector_store %arg8[%c0_12, %c0_13, %c0_14], %22 {strides = array<i32>} : memref<1x128x128xbf16, #tpu.memory_space<vmem>>, vector<1x128x128xbf16>,
    %23 = vector.extract_strided_slice %10 {offsets = [0, 256], sizes = [128, 128], strides = [1, 1]} : vector<128x384xf32> to vector<128x128xf32>
    %24 = arith.truncf %23 : vector<128x128xf32> to vector<128x128xbf16>
    %c0_15 = arith.constant 0 : index
    %c0_16 = arith.constant 0 : index
    %c0_17 = arith.constant 0 : index
    %25 = vector.load %arg9[%c0_15, %c0_16, %c0_17] : memref<1x128x128xbf16, #tpu.memory_space<vmem>>, vector<1x128x128xbf16>
    %26 = vector.shape_cast %25 : vector<1x128x128xbf16> to vector<128x128xbf16>
    %27 = vector.shape_cast %24 : vector<128x128xbf16> to vector<1x128x128xbf16>
    tpu.vector_store %arg9[%c0_15, %c0_16, %c0_17], %27 {strides = array<i32>} : memref<1x128x128xbf16, #tpu.memory_space<vmem>>, vector<1x128x128xbf16>,
    return
  }
  func.func @transform_0(%arg0: i32, %arg1: i32) -> (i32, i32) {
    %c0_i32 = arith.constant 0 : i32
    %c0_i32_0 = arith.constant 0 : i32
    return %arg0, %c0_i32 : i32, i32
  }
  func.func @transform_1(%arg0: i32, %arg1: i32) -> (i32, i32) {
    %c0_i32 = arith.constant 0 : i32
    %c0_i32_0 = arith.constant 0 : i32
    %c0_i32_1 = arith.constant 0 : i32
    return %c0_i32, %c0_i32_0 : i32, i32
  }
  func.func @transform_2(%arg0: i32, %arg1: i32) -> (i32, i32) {
    %c0_i32 = arith.constant 0 : i32
    %c0_i32_0 = arith.constant 0 : i32
    %c0_i32_1 = arith.constant 0 : i32
    return %c0_i32, %c0_i32_0 : i32, i32
  }
  func.func @transform_3(%arg0: i32, %arg1: i32) -> (i32, i32, i32) {
    %c0_i32 = arith.constant 0 : i32
    %c0_i32_0 = arith.constant 0 : i32
    %c0_i32_1 = arith.constant 0 : i32
    return %arg1, %c0_i32, %c0_i32_0 : i32, i32, i32
  }
  func.func @transform_4(%arg0: i32, %arg1: i32) -> (i32, i32, i32) {
    %c0_i32 = arith.constant 0 : i32
    %c0_i32_0 = arith.constant 0 : i32
    %c0_i32_1 = arith.constant 0 : i32
    return %arg1, %c0_i32, %c0_i32_0 : i32, i32, i32
  }
  func.func @transform_5(%arg0: i32, %arg1: i32) -> (i32, i32, i32) {
    %c0_i32 = arith.constant 0 : i32
    %c0_i32_0 = arith.constant 0 : i32
    return %arg1, %arg0, %c0_i32 : i32, i32, i32
  }
  func.func @transform_6(%arg0: i32, %arg1: i32) -> (i32, i32, i32) {
    %c0_i32 = arith.constant 0 : i32
    %c0_i32_0 = arith.constant 0 : i32
    return %arg1, %arg0, %c0_i32 : i32, i32, i32
  }
  func.func @transform_7(%arg0: i32, %arg1: i32) -> (i32, i32, i32) {
    %c0_i32 = arith.constant 0 : i32
    %c0_i32_0 = arith.constant 0 : i32
    return %arg1, %arg0, %c0_i32 : i32, i32, i32
  }
}

module attributes {stable_mosaic.version = 11 : i64} {
  func.func @_matmul_residual_kernel(%arg0: i32, %arg1: i32, %arg2: i32, %arg3: memref<1x128x128xbf16, #tpu.memory_space<vmem>>, %arg4: memref<1x128x128xbf16, #tpu.memory_space<vmem>>, %arg5: memref<1x128xf32, #tpu.memory_space<vmem>>, %arg6: memref<128x128xbf16, #tpu.memory_space<vmem>>, %arg7: memref<128x128xbf16, #tpu.memory_space<vmem>>, %arg8: memref<128x128xf32, #tpu.memory_space<vmem>>) attributes {dimension_semantics = [#tpu.dimension_semantics<parallel>, #tpu.dimension_semantics<parallel>, #tpu.dimension_semantics<arbitrary>], iteration_bounds = array<i64: 1, 1, 1>, scalar_prefetch = 0 : i64, scratch_operands = 1 : i64, tpu.core_type = #tpu.core_type<tc>, window_params = [{transform_indices = @transform_0, window_bounds = array<i64: 1, 128, 128>}, {transform_indices = @transform_1, window_bounds = array<i64: 1, 128, 128>}, {transform_indices = @transform_2, window_bounds = array<i64: 1, 128>}, {transform_indices = @transform_3, window_bounds = array<i64: 128, 128>}, {transform_indices = @transform_4, window_bounds = array<i64: 128, 128>}]} {
    %c0_i32 = arith.constant 0 : i32
    %0 = arith.cmpi eq, %arg2, %c0_i32 : i32
    %1 = arith.extui %0 : i1 to i32
    %c0_i32_0 = arith.constant 0 : i32
    %2 = arith.cmpi ne, %1, %c0_i32_0 : i32
    scf.if %2 {
      %cst_12 = arith.constant 0.000000e+00 : f32
      %14 = vector.broadcast %cst_12 : f32 to vector<128x128xf32>
      %c0_13 = arith.constant 0 : index
      %c0_14 = arith.constant 0 : index
      %15 = vector.load %arg8[%c0_13, %c0_14] : memref<128x128xf32, #tpu.memory_space<vmem>>, vector<128x128xf32>
      tpu.vector_store %arg8[%c0_13, %c0_14], %14 {strides = array<i32>} : memref<128x128xf32, #tpu.memory_space<vmem>>, vector<128x128xf32>,
    } else {
    }
    %c0 = arith.constant 0 : index
    %c0_1 = arith.constant 0 : index
    %3 = vector.load %arg8[%c0, %c0_1] : memref<128x128xf32, #tpu.memory_space<vmem>>, vector<128x128xf32>
    %c0_2 = arith.constant 0 : index
    %c0_3 = arith.constant 0 : index
    %c0_4 = arith.constant 0 : index
    %4 = vector.load %arg3[%c0_2, %c0_3, %c0_4] : memref<1x128x128xbf16, #tpu.memory_space<vmem>>, vector<1x128x128xbf16>
    %5 = vector.shape_cast %4 : vector<1x128x128xbf16> to vector<128x128xbf16>
    %c0_5 = arith.constant 0 : index
    %c0_6 = arith.constant 0 : index
    %c0_7 = arith.constant 0 : index
    %6 = vector.load %arg4[%c0_5, %c0_6, %c0_7] : memref<1x128x128xbf16, #tpu.memory_space<vmem>>, vector<1x128x128xbf16>
    %7 = vector.shape_cast %6 : vector<1x128x128xbf16> to vector<128x128xbf16>
    %cst = arith.constant dense<0.000000e+00> : vector<128x128xf32>
    %8 = tpu.matmul %5, %7, %cst {dimension_numbers = #tpu.dot_dimension_numbers<[1], [0], [0], [1], [0, 0, 1, 1], [], []>} : vector<128x128xbf16>, vector<128x128xbf16>, vector<128x128xf32> -> vector<128x128xf32>
    %9 = arith.addf %3, %8 : vector<128x128xf32>
    %c0_8 = arith.constant 0 : index
    %c0_9 = arith.constant 0 : index
    %10 = vector.load %arg8[%c0_8, %c0_9] : memref<128x128xf32, #tpu.memory_space<vmem>>, vector<128x128xf32>
    tpu.vector_store %arg8[%c0_8, %c0_9], %9 {strides = array<i32>} : memref<128x128xf32, #tpu.memory_space<vmem>>, vector<128x128xf32>,
    %c0_i32_10 = arith.constant 0 : i32
    %11 = arith.cmpi eq, %arg2, %c0_i32_10 : i32
    %12 = arith.extui %11 : i1 to i32
    %c0_i32_11 = arith.constant 0 : i32
    %13 = arith.cmpi ne, %12, %c0_i32_11 : i32
    scf.if %13 {
      %c0_12 = arith.constant 0 : index
      %c0_13 = arith.constant 0 : index
      %14 = vector.load %arg8[%c0_12, %c0_13] : memref<128x128xf32, #tpu.memory_space<vmem>>, vector<128x128xf32>
      %c0_14 = arith.constant 0 : index
      %c0_15 = arith.constant 0 : index
      %15 = vector.load %arg5[%c0_14, %c0_15] : memref<1x128xf32, #tpu.memory_space<vmem>>, vector<1x128xf32>
      %16 = vector.broadcast %15 : vector<1x128xf32> to vector<128x128xf32>
      %17 = arith.addf %14, %16 : vector<128x128xf32>
      %c0_16 = arith.constant 0 : index
      %c0_17 = arith.constant 0 : index
      %18 = vector.load %arg6[%c0_16, %c0_17] : memref<128x128xbf16, #tpu.memory_space<vmem>>, vector<128x128xbf16>
      %19 = arith.extf %18 : vector<128x128xbf16> to vector<128x128xf32>
      %20 = arith.addf %17, %19 : vector<128x128xf32>
      %21 = arith.truncf %20 : vector<128x128xf32> to vector<128x128xbf16>
      %c0_18 = arith.constant 0 : index
      %c0_19 = arith.constant 0 : index
      %22 = vector.load %arg7[%c0_18, %c0_19] : memref<128x128xbf16, #tpu.memory_space<vmem>>, vector<128x128xbf16>
      tpu.vector_store %arg7[%c0_18, %c0_19], %21 {strides = array<i32>} : memref<128x128xbf16, #tpu.memory_space<vmem>>, vector<128x128xbf16>,
    } else {
    }
    return
  }
  func.func @transform_0(%arg0: i32, %arg1: i32, %arg2: i32) -> (i32, i32, i32) {
    %c0_i32 = arith.constant 0 : i32
    %c0_i32_0 = arith.constant 0 : i32
    return %arg2, %arg0, %c0_i32 : i32, i32, i32
  }
  func.func @transform_1(%arg0: i32, %arg1: i32, %arg2: i32) -> (i32, i32, i32) {
    %c0_i32 = arith.constant 0 : i32
    %c0_i32_0 = arith.constant 0 : i32
    return %arg2, %c0_i32, %arg1 : i32, i32, i32
  }
  func.func @transform_2(%arg0: i32, %arg1: i32, %arg2: i32) -> (i32, i32) {
    %c0_i32 = arith.constant 0 : i32
    %c0_i32_0 = arith.constant 0 : i32
    return %c0_i32, %arg1 : i32, i32
  }
  func.func @transform_3(%arg0: i32, %arg1: i32, %arg2: i32) -> (i32, i32) {
    %c0_i32 = arith.constant 0 : i32
    return %arg0, %arg1 : i32, i32
  }
  func.func @transform_4(%arg0: i32, %arg1: i32, %arg2: i32) -> (i32, i32) {
    %c0_i32 = arith.constant 0 : i32
    return %arg0, %arg1 : i32, i32
  }
}

module attributes {stable_mosaic.version = 11 : i64} {
  func.func @_flash_attn_kernel(%arg0: i32, %arg1: i32, %arg2: i32, %arg3: i32, %arg4: memref<1x1x64x128xbf16, #tpu.memory_space<vmem>>, %arg5: memref<1x1x64x128xbf16, #tpu.memory_space<vmem>>, %arg6: memref<1x1x64x128xbf16, #tpu.memory_space<vmem>>, %arg7: memref<1x1x64x128xbf16, #tpu.memory_space<vmem>>, %arg8: memref<4x64x1xf32, #tpu.memory_space<vmem>>, %arg9: memref<4x64x1xf32, #tpu.memory_space<vmem>>, %arg10: memref<4x64x32xf32, #tpu.memory_space<vmem>>) attributes {dimension_semantics = [#tpu.dimension_semantics<parallel>, #tpu.dimension_semantics<parallel>, #tpu.dimension_semantics<parallel>, #tpu.dimension_semantics<arbitrary>], iteration_bounds = array<i64: 2, 1, 1, 1>, scalar_prefetch = 0 : i64, scratch_operands = 3 : i64, tpu.core_type = #tpu.core_type<tc>, window_params = [{transform_indices = @transform_0, window_bounds = array<i64: 1, 1, 64, 128>}, {transform_indices = @transform_1, window_bounds = array<i64: 1, 1, 64, 128>}, {transform_indices = @transform_2, window_bounds = array<i64: 1, 1, 64, 128>}, {transform_indices = @transform_3, window_bounds = array<i64: 1, 1, 64, 128>}]} {
    %c0_i32 = arith.constant 0 : i32
    %0 = arith.cmpi eq, %arg3, %c0_i32 : i32
    %1 = arith.extui %0 : i1 to i32
    %c0_i32_0 = arith.constant 0 : i32
    %2 = arith.cmpi ne, %1, %c0_i32_0 : i32
    scf.if %2 {
      %cst = arith.constant 0xFF800000 : f32
      %12 = vector.broadcast %cst : f32 to vector<4x64x1xf32>
      %c0 = arith.constant 0 : index
      %c0_5 = arith.constant 0 : index
      %c0_6 = arith.constant 0 : index
      %13 = vector.load %arg8[%c0, %c0_5, %c0_6] : memref<4x64x1xf32, #tpu.memory_space<vmem>>, vector<4x64x1xf32>
      tpu.vector_store %arg8[%c0, %c0_5, %c0_6], %12 {strides = array<i32>} : memref<4x64x1xf32, #tpu.memory_space<vmem>>, vector<4x64x1xf32>,
      %cst_7 = arith.constant 0.000000e+00 : f32
      %14 = vector.broadcast %cst_7 : f32 to vector<4x64x1xf32>
      %c0_8 = arith.constant 0 : index
      %c0_9 = arith.constant 0 : index
      %c0_10 = arith.constant 0 : index
      %15 = vector.load %arg9[%c0_8, %c0_9, %c0_10] : memref<4x64x1xf32, #tpu.memory_space<vmem>>, vector<4x64x1xf32>
      tpu.vector_store %arg9[%c0_8, %c0_9, %c0_10], %14 {strides = array<i32>} : memref<4x64x1xf32, #tpu.memory_space<vmem>>, vector<4x64x1xf32>,
      %cst_11 = arith.constant 0.000000e+00 : f32
      %16 = vector.broadcast %cst_11 : f32 to vector<4x64x32xf32>
      %c0_12 = arith.constant 0 : index
      %c0_13 = arith.constant 0 : index
      %c0_14 = arith.constant 0 : index
      %17 = vector.load %arg10[%c0_12, %c0_13, %c0_14] : memref<4x64x32xf32, #tpu.memory_space<vmem>>, vector<4x64x32xf32>
      tpu.vector_store %arg10[%c0_12, %c0_13, %c0_14], %16 {strides = array<i32>} : memref<4x64x32xf32, #tpu.memory_space<vmem>>, vector<4x64x32xf32>,
    } else {
    }
    %3 = arith.cmpi slt, %arg3, %arg2 : i32
    %4 = arith.extui %3 : i1 to i32
    %c0_i32_1 = arith.constant 0 : i32
    %5 = arith.cmpi ne, %4, %c0_i32_1 : i32
    scf.if %5 {
      %c0 = arith.constant 0 : index
      %c0_5 = arith.constant 0 : index
      %c0_6 = arith.constant 0 : index
      %c0_7 = arith.constant 0 : index
      %12 = vector.load %arg4[%c0, %c0_5, %c0_6, %c0_7] : memref<1x1x64x128xbf16, #tpu.memory_space<vmem>>, vector<1x1x64x128xbf16>
      %13 = vector.shape_cast %12 : vector<1x1x64x128xbf16> to vector<64x128xbf16>
      %c0_8 = arith.constant 0 : index
      %c0_9 = arith.constant 0 : index
      %c0_10 = arith.constant 0 : index
      %c0_11 = arith.constant 0 : index
      %14 = vector.load %arg5[%c0_8, %c0_9, %c0_10, %c0_11] : memref<1x1x64x128xbf16, #tpu.memory_space<vmem>>, vector<1x1x64x128xbf16>
      %15 = vector.shape_cast %14 : vector<1x1x64x128xbf16> to vector<64x128xbf16>
      %c0_12 = arith.constant 0 : index
      %c0_13 = arith.constant 0 : index
      %c0_14 = arith.constant 0 : index
      %c0_15 = arith.constant 0 : index
      %16 = vector.load %arg6[%c0_12, %c0_13, %c0_14, %c0_15] : memref<1x1x64x128xbf16, #tpu.memory_space<vmem>>, vector<1x1x64x128xbf16>
      %17 = vector.shape_cast %16 : vector<1x1x64x128xbf16> to vector<64x128xbf16>
      %18 = vector.extract_strided_slice %13 {offsets = [0, 0], sizes = [64, 32], strides = [1, 1]} : vector<64x128xbf16> to vector<64x32xbf16>
      %19 = vector.extract_strided_slice %15 {offsets = [0, 0], sizes = [64, 32], strides = [1, 1]} : vector<64x128xbf16> to vector<64x32xbf16>
      %20 = vector.extract_strided_slice %17 {offsets = [0, 0], sizes = [64, 32], strides = [1, 1]} : vector<64x128xbf16> to vector<64x32xbf16>
      %cst = arith.constant dense<0.000000e+00> : vector<64x64xf32>
      %21 = tpu.matmul %18, %19, %cst {dimension_numbers = #tpu.dot_dimension_numbers<[1], [1], [0], [0], [0, 0, 1, 0], [], []>} : vector<64x32xbf16>, vector<64x32xbf16>, vector<64x64xf32> -> vector<64x64xf32>
      %c0_16 = arith.constant 0 : index
      %c0_17 = arith.constant 0 : index
      %c0_18 = arith.constant 0 : index
      %22 = vector.load %arg8[%c0_16, %c0_17, %c0_18] : memref<4x64x1xf32, #tpu.memory_space<vmem>>, vector<1x64x1xf32>
      %23 = vector.shape_cast %22 : vector<1x64x1xf32> to vector<64x1xf32>
      %cst_19 = arith.constant dense<0xFF800000> : vector<64xf32>
      %24 = vector.multi_reduction <maximumf>, %21, %cst_19 [1] : vector<64x64xf32> to vector<64xf32>
      %25 = vector.shape_cast %24 : vector<64xf32> to vector<64x1xf32>
      %26 = arith.maximumf %23, %25 : vector<64x1xf32>
      %27 = arith.subf %23, %26 : vector<64x1xf32>
      %28 = math.exp %27 : vector<64x1xf32>
      %29 = vector.broadcast %26 : vector<64x1xf32> to vector<64x64xf32>
      %30 = arith.subf %21, %29 : vector<64x64xf32>
      %31 = math.exp %30 : vector<64x64xf32>
      %c0_20 = arith.constant 0 : index
      %c0_21 = arith.constant 0 : index
      %c0_22 = arith.constant 0 : index
      %32 = vector.load %arg9[%c0_20, %c0_21, %c0_22] : memref<4x64x1xf32, #tpu.memory_space<vmem>>, vector<1x64x1xf32>
      %33 = vector.shape_cast %32 : vector<1x64x1xf32> to vector<64x1xf32>
      %34 = arith.mulf %28, %33 : vector<64x1xf32>
      %cst_23 = arith.constant dense<0.000000e+00> : vector<64xf32>
      %35 = vector.multi_reduction <add>, %31, %cst_23 [1] : vector<64x64xf32> to vector<64xf32>
      %36 = vector.shape_cast %35 : vector<64xf32> to vector<64x1xf32>
      %37 = arith.addf %34, %36 : vector<64x1xf32>
      %c0_24 = arith.constant 0 : index
      %c0_25 = arith.constant 0 : index
      %c0_26 = arith.constant 0 : index
      %38 = vector.load %arg9[%c0_24, %c0_25, %c0_26] : memref<4x64x1xf32, #tpu.memory_space<vmem>>, vector<1x64x1xf32>
      %39 = vector.shape_cast %38 : vector<1x64x1xf32> to vector<64x1xf32>
      %40 = vector.shape_cast %37 : vector<64x1xf32> to vector<1x64x1xf32>
      tpu.vector_store %arg9[%c0_24, %c0_25, %c0_26], %40 {strides = array<i32>} : memref<4x64x1xf32, #tpu.memory_space<vmem>>, vector<1x64x1xf32>,
      %c0_27 = arith.constant 0 : index
      %c0_28 = arith.constant 0 : index
      %c0_29 = arith.constant 0 : index
      %41 = vector.load %arg10[%c0_27, %c0_28, %c0_29] : memref<4x64x32xf32, #tpu.memory_space<vmem>>, vector<1x64x32xf32>
      %42 = vector.shape_cast %41 : vector<1x64x32xf32> to vector<64x32xf32>
      %43 = vector.broadcast %28 : vector<64x1xf32> to vector<64x32xf32>
      %44 = arith.mulf %43, %42 : vector<64x32xf32>
      %45 = arith.truncf %31 : vector<64x64xf32> to vector<64x64xbf16>
      %cst_30 = arith.constant dense<0.000000e+00> : vector<64x32xf32>
      %46 = tpu.matmul %45, %20, %cst_30 {dimension_numbers = #tpu.dot_dimension_numbers<[1], [0], [0], [1], [0, 0, 1, 1], [], []>} : vector<64x64xbf16>, vector<64x32xbf16>, vector<64x32xf32> -> vector<64x32xf32>
      %47 = arith.addf %44, %46 : vector<64x32xf32>
      %c0_31 = arith.constant 0 : index
      %c0_32 = arith.constant 0 : index
      %c0_33 = arith.constant 0 : index
      %48 = vector.load %arg10[%c0_31, %c0_32, %c0_33] : memref<4x64x32xf32, #tpu.memory_space<vmem>>, vector<1x64x32xf32>
      %49 = vector.shape_cast %48 : vector<1x64x32xf32> to vector<64x32xf32>
      %50 = vector.shape_cast %47 : vector<64x32xf32> to vector<1x64x32xf32>
      tpu.vector_store %arg10[%c0_31, %c0_32, %c0_33], %50 {strides = array<i32>} : memref<4x64x32xf32, #tpu.memory_space<vmem>>, vector<1x64x32xf32>,
      %c0_34 = arith.constant 0 : index
      %c0_35 = arith.constant 0 : index
      %c0_36 = arith.constant 0 : index
      %51 = vector.load %arg8[%c0_34, %c0_35, %c0_36] : memref<4x64x1xf32, #tpu.memory_space<vmem>>, vector<1x64x1xf32>
      %52 = vector.shape_cast %51 : vector<1x64x1xf32> to vector<64x1xf32>
      %53 = vector.shape_cast %26 : vector<64x1xf32> to vector<1x64x1xf32>
      tpu.vector_store %arg8[%c0_34, %c0_35, %c0_36], %53 {strides = array<i32>} : memref<4x64x1xf32, #tpu.memory_space<vmem>>, vector<1x64x1xf32>,
      %54 = vector.extract_strided_slice %13 {offsets = [0, 32], sizes = [64, 32], strides = [1, 1]} : vector<64x128xbf16> to vector<64x32xbf16>
      %55 = vector.extract_strided_slice %15 {offsets = [0, 32], sizes = [64, 32], strides = [1, 1]} : vector<64x128xbf16> to vector<64x32xbf16>
      %56 = vector.extract_strided_slice %17 {offsets = [0, 32], sizes = [64, 32], strides = [1, 1]} : vector<64x128xbf16> to vector<64x32xbf16>
      %cst_37 = arith.constant dense<0.000000e+00> : vector<64x64xf32>
      %57 = tpu.matmul %54, %55, %cst_37 {dimension_numbers = #tpu.dot_dimension_numbers<[1], [1], [0], [0], [0, 0, 1, 0], [], []>} : vector<64x32xbf16>, vector<64x32xbf16>, vector<64x64xf32> -> vector<64x64xf32>
      %c1 = arith.constant 1 : index
      %c0_38 = arith.constant 0 : index
      %c0_39 = arith.constant 0 : index
      %58 = vector.load %arg8[%c1, %c0_38, %c0_39] : memref<4x64x1xf32, #tpu.memory_space<vmem>>, vector<1x64x1xf32>
      %59 = vector.shape_cast %58 : vector<1x64x1xf32> to vector<64x1xf32>
      %cst_40 = arith.constant dense<0xFF800000> : vector<64xf32>
      %60 = vector.multi_reduction <maximumf>, %57, %cst_40 [1] : vector<64x64xf32> to vector<64xf32>
      %61 = vector.shape_cast %60 : vector<64xf32> to vector<64x1xf32>
      %62 = arith.maximumf %59, %61 : vector<64x1xf32>
      %63 = arith.subf %59, %62 : vector<64x1xf32>
      %64 = math.exp %63 : vector<64x1xf32>
      %65 = vector.broadcast %62 : vector<64x1xf32> to vector<64x64xf32>
      %66 = arith.subf %57, %65 : vector<64x64xf32>
      %67 = math.exp %66 : vector<64x64xf32>
      %c1_41 = arith.constant 1 : index
      %c0_42 = arith.constant 0 : index
      %c0_43 = arith.constant 0 : index
      %68 = vector.load %arg9[%c1_41, %c0_42, %c0_43] : memref<4x64x1xf32, #tpu.memory_space<vmem>>, vector<1x64x1xf32>
      %69 = vector.shape_cast %68 : vector<1x64x1xf32> to vector<64x1xf32>
      %70 = arith.mulf %64, %69 : vector<64x1xf32>
      %cst_44 = arith.constant dense<0.000000e+00> : vector<64xf32>
      %71 = vector.multi_reduction <add>, %67, %cst_44 [1] : vector<64x64xf32> to vector<64xf32>
      %72 = vector.shape_cast %71 : vector<64xf32> to vector<64x1xf32>
      %73 = arith.addf %70, %72 : vector<64x1xf32>
      %c1_45 = arith.constant 1 : index
      %c0_46 = arith.constant 0 : index
      %c0_47 = arith.constant 0 : index
      %74 = vector.load %arg9[%c1_45, %c0_46, %c0_47] : memref<4x64x1xf32, #tpu.memory_space<vmem>>, vector<1x64x1xf32>
      %75 = vector.shape_cast %74 : vector<1x64x1xf32> to vector<64x1xf32>
      %76 = vector.shape_cast %73 : vector<64x1xf32> to vector<1x64x1xf32>
      tpu.vector_store %arg9[%c1_45, %c0_46, %c0_47], %76 {strides = array<i32>} : memref<4x64x1xf32, #tpu.memory_space<vmem>>, vector<1x64x1xf32>,
      %c1_48 = arith.constant 1 : index
      %c0_49 = arith.constant 0 : index
      %c0_50 = arith.constant 0 : index
      %77 = vector.load %arg10[%c1_48, %c0_49, %c0_50] : memref<4x64x32xf32, #tpu.memory_space<vmem>>, vector<1x64x32xf32>
      %78 = vector.shape_cast %77 : vector<1x64x32xf32> to vector<64x32xf32>
      %79 = vector.broadcast %64 : vector<64x1xf32> to vector<64x32xf32>
      %80 = arith.mulf %79, %78 : vector<64x32xf32>
      %81 = arith.truncf %67 : vector<64x64xf32> to vector<64x64xbf16>
      %cst_51 = arith.constant dense<0.000000e+00> : vector<64x32xf32>
      %82 = tpu.matmul %81, %56, %cst_51 {dimension_numbers = #tpu.dot_dimension_numbers<[1], [0], [0], [1], [0, 0, 1, 1], [], []>} : vector<64x64xbf16>, vector<64x32xbf16>, vector<64x32xf32> -> vector<64x32xf32>
      %83 = arith.addf %80, %82 : vector<64x32xf32>
      %c1_52 = arith.constant 1 : index
      %c0_53 = arith.constant 0 : index
      %c0_54 = arith.constant 0 : index
      %84 = vector.load %arg10[%c1_52, %c0_53, %c0_54] : memref<4x64x32xf32, #tpu.memory_space<vmem>>, vector<1x64x32xf32>
      %85 = vector.shape_cast %84 : vector<1x64x32xf32> to vector<64x32xf32>
      %86 = vector.shape_cast %83 : vector<64x32xf32> to vector<1x64x32xf32>
      tpu.vector_store %arg10[%c1_52, %c0_53, %c0_54], %86 {strides = array<i32>} : memref<4x64x32xf32, #tpu.memory_space<vmem>>, vector<1x64x32xf32>,
      %c1_55 = arith.constant 1 : index
      %c0_56 = arith.constant 0 : index
      %c0_57 = arith.constant 0 : index
      %87 = vector.load %arg8[%c1_55, %c0_56, %c0_57] : memref<4x64x1xf32, #tpu.memory_space<vmem>>, vector<1x64x1xf32>
      %88 = vector.shape_cast %87 : vector<1x64x1xf32> to vector<64x1xf32>
      %89 = vector.shape_cast %62 : vector<64x1xf32> to vector<1x64x1xf32>
      tpu.vector_store %arg8[%c1_55, %c0_56, %c0_57], %89 {strides = array<i32>} : memref<4x64x1xf32, #tpu.memory_space<vmem>>, vector<1x64x1xf32>,
      %90 = vector.extract_strided_slice %13 {offsets = [0, 64], sizes = [64, 32], strides = [1, 1]} : vector<64x128xbf16> to vector<64x32xbf16>
      %91 = vector.extract_strided_slice %15 {offsets = [0, 64], sizes = [64, 32], strides = [1, 1]} : vector<64x128xbf16> to vector<64x32xbf16>
      %92 = vector.extract_strided_slice %17 {offsets = [0, 64], sizes = [64, 32], strides = [1, 1]} : vector<64x128xbf16> to vector<64x32xbf16>
      %cst_58 = arith.constant dense<0.000000e+00> : vector<64x64xf32>
      %93 = tpu.matmul %90, %91, %cst_58 {dimension_numbers = #tpu.dot_dimension_numbers<[1], [1], [0], [0], [0, 0, 1, 0], [], []>} : vector<64x32xbf16>, vector<64x32xbf16>, vector<64x64xf32> -> vector<64x64xf32>
      %c2 = arith.constant 2 : index
      %c0_59 = arith.constant 0 : index
      %c0_60 = arith.constant 0 : index
      %94 = vector.load %arg8[%c2, %c0_59, %c0_60] : memref<4x64x1xf32, #tpu.memory_space<vmem>>, vector<1x64x1xf32>
      %95 = vector.shape_cast %94 : vector<1x64x1xf32> to vector<64x1xf32>
      %cst_61 = arith.constant dense<0xFF800000> : vector<64xf32>
      %96 = vector.multi_reduction <maximumf>, %93, %cst_61 [1] : vector<64x64xf32> to vector<64xf32>
      %97 = vector.shape_cast %96 : vector<64xf32> to vector<64x1xf32>
      %98 = arith.maximumf %95, %97 : vector<64x1xf32>
      %99 = arith.subf %95, %98 : vector<64x1xf32>
      %100 = math.exp %99 : vector<64x1xf32>
      %101 = vector.broadcast %98 : vector<64x1xf32> to vector<64x64xf32>
      %102 = arith.subf %93, %101 : vector<64x64xf32>
      %103 = math.exp %102 : vector<64x64xf32>
      %c2_62 = arith.constant 2 : index
      %c0_63 = arith.constant 0 : index
      %c0_64 = arith.constant 0 : index
      %104 = vector.load %arg9[%c2_62, %c0_63, %c0_64] : memref<4x64x1xf32, #tpu.memory_space<vmem>>, vector<1x64x1xf32>
      %105 = vector.shape_cast %104 : vector<1x64x1xf32> to vector<64x1xf32>
      %106 = arith.mulf %100, %105 : vector<64x1xf32>
      %cst_65 = arith.constant dense<0.000000e+00> : vector<64xf32>
      %107 = vector.multi_reduction <add>, %103, %cst_65 [1] : vector<64x64xf32> to vector<64xf32>
      %108 = vector.shape_cast %107 : vector<64xf32> to vector<64x1xf32>
      %109 = arith.addf %106, %108 : vector<64x1xf32>
      %c2_66 = arith.constant 2 : index
      %c0_67 = arith.constant 0 : index
      %c0_68 = arith.constant 0 : index
      %110 = vector.load %arg9[%c2_66, %c0_67, %c0_68] : memref<4x64x1xf32, #tpu.memory_space<vmem>>, vector<1x64x1xf32>
      %111 = vector.shape_cast %110 : vector<1x64x1xf32> to vector<64x1xf32>
      %112 = vector.shape_cast %109 : vector<64x1xf32> to vector<1x64x1xf32>
      tpu.vector_store %arg9[%c2_66, %c0_67, %c0_68], %112 {strides = array<i32>} : memref<4x64x1xf32, #tpu.memory_space<vmem>>, vector<1x64x1xf32>,
      %c2_69 = arith.constant 2 : index
      %c0_70 = arith.constant 0 : index
      %c0_71 = arith.constant 0 : index
      %113 = vector.load %arg10[%c2_69, %c0_70, %c0_71] : memref<4x64x32xf32, #tpu.memory_space<vmem>>, vector<1x64x32xf32>
      %114 = vector.shape_cast %113 : vector<1x64x32xf32> to vector<64x32xf32>
      %115 = vector.broadcast %100 : vector<64x1xf32> to vector<64x32xf32>
      %116 = arith.mulf %115, %114 : vector<64x32xf32>
      %117 = arith.truncf %103 : vector<64x64xf32> to vector<64x64xbf16>
      %cst_72 = arith.constant dense<0.000000e+00> : vector<64x32xf32>
      %118 = tpu.matmul %117, %92, %cst_72 {dimension_numbers = #tpu.dot_dimension_numbers<[1], [0], [0], [1], [0, 0, 1, 1], [], []>} : vector<64x64xbf16>, vector<64x32xbf16>, vector<64x32xf32> -> vector<64x32xf32>
      %119 = arith.addf %116, %118 : vector<64x32xf32>
      %c2_73 = arith.constant 2 : index
      %c0_74 = arith.constant 0 : index
      %c0_75 = arith.constant 0 : index
      %120 = vector.load %arg10[%c2_73, %c0_74, %c0_75] : memref<4x64x32xf32, #tpu.memory_space<vmem>>, vector<1x64x32xf32>
      %121 = vector.shape_cast %120 : vector<1x64x32xf32> to vector<64x32xf32>
      %122 = vector.shape_cast %119 : vector<64x32xf32> to vector<1x64x32xf32>
      tpu.vector_store %arg10[%c2_73, %c0_74, %c0_75], %122 {strides = array<i32>} : memref<4x64x32xf32, #tpu.memory_space<vmem>>, vector<1x64x32xf32>,
      %c2_76 = arith.constant 2 : index
      %c0_77 = arith.constant 0 : index
      %c0_78 = arith.constant 0 : index
      %123 = vector.load %arg8[%c2_76, %c0_77, %c0_78] : memref<4x64x1xf32, #tpu.memory_space<vmem>>, vector<1x64x1xf32>
      %124 = vector.shape_cast %123 : vector<1x64x1xf32> to vector<64x1xf32>
      %125 = vector.shape_cast %98 : vector<64x1xf32> to vector<1x64x1xf32>
      tpu.vector_store %arg8[%c2_76, %c0_77, %c0_78], %125 {strides = array<i32>} : memref<4x64x1xf32, #tpu.memory_space<vmem>>, vector<1x64x1xf32>,
      %126 = vector.extract_strided_slice %13 {offsets = [0, 96], sizes = [64, 32], strides = [1, 1]} : vector<64x128xbf16> to vector<64x32xbf16>
      %127 = vector.extract_strided_slice %15 {offsets = [0, 96], sizes = [64, 32], strides = [1, 1]} : vector<64x128xbf16> to vector<64x32xbf16>
      %128 = vector.extract_strided_slice %17 {offsets = [0, 96], sizes = [64, 32], strides = [1, 1]} : vector<64x128xbf16> to vector<64x32xbf16>
      %cst_79 = arith.constant dense<0.000000e+00> : vector<64x64xf32>
      %129 = tpu.matmul %126, %127, %cst_79 {dimension_numbers = #tpu.dot_dimension_numbers<[1], [1], [0], [0], [0, 0, 1, 0], [], []>} : vector<64x32xbf16>, vector<64x32xbf16>, vector<64x64xf32> -> vector<64x64xf32>
      %c3 = arith.constant 3 : index
      %c0_80 = arith.constant 0 : index
      %c0_81 = arith.constant 0 : index
      %130 = vector.load %arg8[%c3, %c0_80, %c0_81] : memref<4x64x1xf32, #tpu.memory_space<vmem>>, vector<1x64x1xf32>
      %131 = vector.shape_cast %130 : vector<1x64x1xf32> to vector<64x1xf32>
      %cst_82 = arith.constant dense<0xFF800000> : vector<64xf32>
      %132 = vector.multi_reduction <maximumf>, %129, %cst_82 [1] : vector<64x64xf32> to vector<64xf32>
      %133 = vector.shape_cast %132 : vector<64xf32> to vector<64x1xf32>
      %134 = arith.maximumf %131, %133 : vector<64x1xf32>
      %135 = arith.subf %131, %134 : vector<64x1xf32>
      %136 = math.exp %135 : vector<64x1xf32>
      %137 = vector.broadcast %134 : vector<64x1xf32> to vector<64x64xf32>
      %138 = arith.subf %129, %137 : vector<64x64xf32>
      %139 = math.exp %138 : vector<64x64xf32>
      %c3_83 = arith.constant 3 : index
      %c0_84 = arith.constant 0 : index
      %c0_85 = arith.constant 0 : index
      %140 = vector.load %arg9[%c3_83, %c0_84, %c0_85] : memref<4x64x1xf32, #tpu.memory_space<vmem>>, vector<1x64x1xf32>
      %141 = vector.shape_cast %140 : vector<1x64x1xf32> to vector<64x1xf32>
      %142 = arith.mulf %136, %141 : vector<64x1xf32>
      %cst_86 = arith.constant dense<0.000000e+00> : vector<64xf32>
      %143 = vector.multi_reduction <add>, %139, %cst_86 [1] : vector<64x64xf32> to vector<64xf32>
      %144 = vector.shape_cast %143 : vector<64xf32> to vector<64x1xf32>
      %145 = arith.addf %142, %144 : vector<64x1xf32>
      %c3_87 = arith.constant 3 : index
      %c0_88 = arith.constant 0 : index
      %c0_89 = arith.constant 0 : index
      %146 = vector.load %arg9[%c3_87, %c0_88, %c0_89] : memref<4x64x1xf32, #tpu.memory_space<vmem>>, vector<1x64x1xf32>
      %147 = vector.shape_cast %146 : vector<1x64x1xf32> to vector<64x1xf32>
      %148 = vector.shape_cast %145 : vector<64x1xf32> to vector<1x64x1xf32>
      tpu.vector_store %arg9[%c3_87, %c0_88, %c0_89], %148 {strides = array<i32>} : memref<4x64x1xf32, #tpu.memory_space<vmem>>, vector<1x64x1xf32>,
      %c3_90 = arith.constant 3 : index
      %c0_91 = arith.constant 0 : index
      %c0_92 = arith.constant 0 : index
      %149 = vector.load %arg10[%c3_90, %c0_91, %c0_92] : memref<4x64x32xf32, #tpu.memory_space<vmem>>, vector<1x64x32xf32>
      %150 = vector.shape_cast %149 : vector<1x64x32xf32> to vector<64x32xf32>
      %151 = vector.broadcast %136 : vector<64x1xf32> to vector<64x32xf32>
      %152 = arith.mulf %151, %150 : vector<64x32xf32>
      %153 = arith.truncf %139 : vector<64x64xf32> to vector<64x64xbf16>
      %cst_93 = arith.constant dense<0.000000e+00> : vector<64x32xf32>
      %154 = tpu.matmul %153, %128, %cst_93 {dimension_numbers = #tpu.dot_dimension_numbers<[1], [0], [0], [1], [0, 0, 1, 1], [], []>} : vector<64x64xbf16>, vector<64x32xbf16>, vector<64x32xf32> -> vector<64x32xf32>
      %155 = arith.addf %152, %154 : vector<64x32xf32>
      %c3_94 = arith.constant 3 : index
      %c0_95 = arith.constant 0 : index
      %c0_96 = arith.constant 0 : index
      %156 = vector.load %arg10[%c3_94, %c0_95, %c0_96] : memref<4x64x32xf32, #tpu.memory_space<vmem>>, vector<1x64x32xf32>
      %157 = vector.shape_cast %156 : vector<1x64x32xf32> to vector<64x32xf32>
      %158 = vector.shape_cast %155 : vector<64x32xf32> to vector<1x64x32xf32>
      tpu.vector_store %arg10[%c3_94, %c0_95, %c0_96], %158 {strides = array<i32>} : memref<4x64x32xf32, #tpu.memory_space<vmem>>, vector<1x64x32xf32>,
      %c3_97 = arith.constant 3 : index
      %c0_98 = arith.constant 0 : index
      %c0_99 = arith.constant 0 : index
      %159 = vector.load %arg8[%c3_97, %c0_98, %c0_99] : memref<4x64x1xf32, #tpu.memory_space<vmem>>, vector<1x64x1xf32>
      %160 = vector.shape_cast %159 : vector<1x64x1xf32> to vector<64x1xf32>
      %161 = vector.shape_cast %134 : vector<64x1xf32> to vector<1x64x1xf32>
      tpu.vector_store %arg8[%c3_97, %c0_98, %c0_99], %161 {strides = array<i32>} : memref<4x64x1xf32, #tpu.memory_space<vmem>>, vector<1x64x1xf32>,
    } else {
    }
    %6 = arith.cmpi eq, %arg3, %arg2 : i32
    %7 = arith.extui %6 : i1 to i32
    %c0_i32_2 = arith.constant 0 : i32
    %8 = arith.cmpi ne, %7, %c0_i32_2 : i32
    scf.if %8 {
      %c0 = arith.constant 0 : index
      %c0_5 = arith.constant 0 : index
      %c0_6 = arith.constant 0 : index
      %c0_7 = arith.constant 0 : index
      %12 = vector.load %arg4[%c0, %c0_5, %c0_6, %c0_7] : memref<1x1x64x128xbf16, #tpu.memory_space<vmem>>, vector<1x1x64x128xbf16>
      %13 = vector.shape_cast %12 : vector<1x1x64x128xbf16> to vector<64x128xbf16>
      %c0_8 = arith.constant 0 : index
      %c0_9 = arith.constant 0 : index
      %c0_10 = arith.constant 0 : index
      %c0_11 = arith.constant 0 : index
      %14 = vector.load %arg5[%c0_8, %c0_9, %c0_10, %c0_11] : memref<1x1x64x128xbf16, #tpu.memory_space<vmem>>, vector<1x1x64x128xbf16>
      %15 = vector.shape_cast %14 : vector<1x1x64x128xbf16> to vector<64x128xbf16>
      %c0_12 = arith.constant 0 : index
      %c0_13 = arith.constant 0 : index
      %c0_14 = arith.constant 0 : index
      %c0_15 = arith.constant 0 : index
      %16 = vector.load %arg6[%c0_12, %c0_13, %c0_14, %c0_15] : memref<1x1x64x128xbf16, #tpu.memory_space<vmem>>, vector<1x1x64x128xbf16>
      %17 = vector.shape_cast %16 : vector<1x1x64x128xbf16> to vector<64x128xbf16>
      %18 = tpu.iota {dimensions = array<i32: 0>} : vector<64x64xi32>
      %19 = tpu.iota {dimensions = array<i32: 1>} : vector<64x64xi32>
      %20 = arith.cmpi sle, %19, %18 : vector<64x64xi32>
      %21 = vector.extract_strided_slice %13 {offsets = [0, 0], sizes = [64, 32], strides = [1, 1]} : vector<64x128xbf16> to vector<64x32xbf16>
      %22 = vector.extract_strided_slice %15 {offsets = [0, 0], sizes = [64, 32], strides = [1, 1]} : vector<64x128xbf16> to vector<64x32xbf16>
      %23 = vector.extract_strided_slice %17 {offsets = [0, 0], sizes = [64, 32], strides = [1, 1]} : vector<64x128xbf16> to vector<64x32xbf16>
      %cst = arith.constant dense<0.000000e+00> : vector<64x64xf32>
      %24 = tpu.matmul %21, %22, %cst {dimension_numbers = #tpu.dot_dimension_numbers<[1], [1], [0], [0], [0, 0, 1, 0], [], []>} : vector<64x32xbf16>, vector<64x32xbf16>, vector<64x64xf32> -> vector<64x64xf32>
      %cst_16 = arith.constant -1.000000e+30 : f32
      %25 = vector.broadcast %cst_16 : f32 to vector<64x64xf32>
      %26 = arith.select %20, %24, %25 : vector<64x64xi1>, vector<64x64xf32>
      %c0_17 = arith.constant 0 : index
      %c0_18 = arith.constant 0 : index
      %c0_19 = arith.constant 0 : index
      %27 = vector.load %arg8[%c0_17, %c0_18, %c0_19] : memref<4x64x1xf32, #tpu.memory_space<vmem>>, vector<1x64x1xf32>
      %28 = vector.shape_cast %27 : vector<1x64x1xf32> to vector<64x1xf32>
      %cst_20 = arith.constant dense<0xFF800000> : vector<64xf32>
      %29 = vector.multi_reduction <maximumf>, %26, %cst_20 [1] : vector<64x64xf32> to vector<64xf32>
      %30 = vector.shape_cast %29 : vector<64xf32> to vector<64x1xf32>
      %31 = arith.maximumf %28, %30 : vector<64x1xf32>
      %32 = arith.subf %28, %31 : vector<64x1xf32>
      %33 = math.exp %32 : vector<64x1xf32>
      %34 = vector.broadcast %31 : vector<64x1xf32> to vector<64x64xf32>
      %35 = arith.subf %26, %34 : vector<64x64xf32>
      %36 = math.exp %35 : vector<64x64xf32>
      %c0_21 = arith.constant 0 : index
      %c0_22 = arith.constant 0 : index
      %c0_23 = arith.constant 0 : index
      %37 = vector.load %arg9[%c0_21, %c0_22, %c0_23] : memref<4x64x1xf32, #tpu.memory_space<vmem>>, vector<1x64x1xf32>
      %38 = vector.shape_cast %37 : vector<1x64x1xf32> to vector<64x1xf32>
      %39 = arith.mulf %33, %38 : vector<64x1xf32>
      %cst_24 = arith.constant dense<0.000000e+00> : vector<64xf32>
      %40 = vector.multi_reduction <add>, %36, %cst_24 [1] : vector<64x64xf32> to vector<64xf32>
      %41 = vector.shape_cast %40 : vector<64xf32> to vector<64x1xf32>
      %42 = arith.addf %39, %41 : vector<64x1xf32>
      %c0_25 = arith.constant 0 : index
      %c0_26 = arith.constant 0 : index
      %c0_27 = arith.constant 0 : index
      %43 = vector.load %arg9[%c0_25, %c0_26, %c0_27] : memref<4x64x1xf32, #tpu.memory_space<vmem>>, vector<1x64x1xf32>
      %44 = vector.shape_cast %43 : vector<1x64x1xf32> to vector<64x1xf32>
      %45 = vector.shape_cast %42 : vector<64x1xf32> to vector<1x64x1xf32>
      tpu.vector_store %arg9[%c0_25, %c0_26, %c0_27], %45 {strides = array<i32>} : memref<4x64x1xf32, #tpu.memory_space<vmem>>, vector<1x64x1xf32>,
      %c0_28 = arith.constant 0 : index
      %c0_29 = arith.constant 0 : index
      %c0_30 = arith.constant 0 : index
      %46 = vector.load %arg10[%c0_28, %c0_29, %c0_30] : memref<4x64x32xf32, #tpu.memory_space<vmem>>, vector<1x64x32xf32>
      %47 = vector.shape_cast %46 : vector<1x64x32xf32> to vector<64x32xf32>
      %48 = vector.broadcast %33 : vector<64x1xf32> to vector<64x32xf32>
      %49 = arith.mulf %48, %47 : vector<64x32xf32>
      %50 = arith.truncf %36 : vector<64x64xf32> to vector<64x64xbf16>
      %cst_31 = arith.constant dense<0.000000e+00> : vector<64x32xf32>
      %51 = tpu.matmul %50, %23, %cst_31 {dimension_numbers = #tpu.dot_dimension_numbers<[1], [0], [0], [1], [0, 0, 1, 1], [], []>} : vector<64x64xbf16>, vector<64x32xbf16>, vector<64x32xf32> -> vector<64x32xf32>
      %52 = arith.addf %49, %51 : vector<64x32xf32>
      %c0_32 = arith.constant 0 : index
      %c0_33 = arith.constant 0 : index
      %c0_34 = arith.constant 0 : index
      %53 = vector.load %arg10[%c0_32, %c0_33, %c0_34] : memref<4x64x32xf32, #tpu.memory_space<vmem>>, vector<1x64x32xf32>
      %54 = vector.shape_cast %53 : vector<1x64x32xf32> to vector<64x32xf32>
      %55 = vector.shape_cast %52 : vector<64x32xf32> to vector<1x64x32xf32>
      tpu.vector_store %arg10[%c0_32, %c0_33, %c0_34], %55 {strides = array<i32>} : memref<4x64x32xf32, #tpu.memory_space<vmem>>, vector<1x64x32xf32>,
      %c0_35 = arith.constant 0 : index
      %c0_36 = arith.constant 0 : index
      %c0_37 = arith.constant 0 : index
      %56 = vector.load %arg8[%c0_35, %c0_36, %c0_37] : memref<4x64x1xf32, #tpu.memory_space<vmem>>, vector<1x64x1xf32>
      %57 = vector.shape_cast %56 : vector<1x64x1xf32> to vector<64x1xf32>
      %58 = vector.shape_cast %31 : vector<64x1xf32> to vector<1x64x1xf32>
      tpu.vector_store %arg8[%c0_35, %c0_36, %c0_37], %58 {strides = array<i32>} : memref<4x64x1xf32, #tpu.memory_space<vmem>>, vector<1x64x1xf32>,
      %59 = vector.extract_strided_slice %13 {offsets = [0, 32], sizes = [64, 32], strides = [1, 1]} : vector<64x128xbf16> to vector<64x32xbf16>
      %60 = vector.extract_strided_slice %15 {offsets = [0, 32], sizes = [64, 32], strides = [1, 1]} : vector<64x128xbf16> to vector<64x32xbf16>
      %61 = vector.extract_strided_slice %17 {offsets = [0, 32], sizes = [64, 32], strides = [1, 1]} : vector<64x128xbf16> to vector<64x32xbf16>
      %cst_38 = arith.constant dense<0.000000e+00> : vector<64x64xf32>
      %62 = tpu.matmul %59, %60, %cst_38 {dimension_numbers = #tpu.dot_dimension_numbers<[1], [1], [0], [0], [0, 0, 1, 0], [], []>} : vector<64x32xbf16>, vector<64x32xbf16>, vector<64x64xf32> -> vector<64x64xf32>
      %cst_39 = arith.constant -1.000000e+30 : f32
      %63 = vector.broadcast %cst_39 : f32 to vector<64x64xf32>
      %64 = arith.select %20, %62, %63 : vector<64x64xi1>, vector<64x64xf32>
      %c1 = arith.constant 1 : index
      %c0_40 = arith.constant 0 : index
      %c0_41 = arith.constant 0 : index
      %65 = vector.load %arg8[%c1, %c0_40, %c0_41] : memref<4x64x1xf32, #tpu.memory_space<vmem>>, vector<1x64x1xf32>
      %66 = vector.shape_cast %65 : vector<1x64x1xf32> to vector<64x1xf32>
      %cst_42 = arith.constant dense<0xFF800000> : vector<64xf32>
      %67 = vector.multi_reduction <maximumf>, %64, %cst_42 [1] : vector<64x64xf32> to vector<64xf32>
      %68 = vector.shape_cast %67 : vector<64xf32> to vector<64x1xf32>
      %69 = arith.maximumf %66, %68 : vector<64x1xf32>
      %70 = arith.subf %66, %69 : vector<64x1xf32>
      %71 = math.exp %70 : vector<64x1xf32>
      %72 = vector.broadcast %69 : vector<64x1xf32> to vector<64x64xf32>
      %73 = arith.subf %64, %72 : vector<64x64xf32>
      %74 = math.exp %73 : vector<64x64xf32>
      %c1_43 = arith.constant 1 : index
      %c0_44 = arith.constant 0 : index
      %c0_45 = arith.constant 0 : index
      %75 = vector.load %arg9[%c1_43, %c0_44, %c0_45] : memref<4x64x1xf32, #tpu.memory_space<vmem>>, vector<1x64x1xf32>
      %76 = vector.shape_cast %75 : vector<1x64x1xf32> to vector<64x1xf32>
      %77 = arith.mulf %71, %76 : vector<64x1xf32>
      %cst_46 = arith.constant dense<0.000000e+00> : vector<64xf32>
      %78 = vector.multi_reduction <add>, %74, %cst_46 [1] : vector<64x64xf32> to vector<64xf32>
      %79 = vector.shape_cast %78 : vector<64xf32> to vector<64x1xf32>
      %80 = arith.addf %77, %79 : vector<64x1xf32>
      %c1_47 = arith.constant 1 : index
      %c0_48 = arith.constant 0 : index
      %c0_49 = arith.constant 0 : index
      %81 = vector.load %arg9[%c1_47, %c0_48, %c0_49] : memref<4x64x1xf32, #tpu.memory_space<vmem>>, vector<1x64x1xf32>
      %82 = vector.shape_cast %81 : vector<1x64x1xf32> to vector<64x1xf32>
      %83 = vector.shape_cast %80 : vector<64x1xf32> to vector<1x64x1xf32>
      tpu.vector_store %arg9[%c1_47, %c0_48, %c0_49], %83 {strides = array<i32>} : memref<4x64x1xf32, #tpu.memory_space<vmem>>, vector<1x64x1xf32>,
      %c1_50 = arith.constant 1 : index
      %c0_51 = arith.constant 0 : index
      %c0_52 = arith.constant 0 : index
      %84 = vector.load %arg10[%c1_50, %c0_51, %c0_52] : memref<4x64x32xf32, #tpu.memory_space<vmem>>, vector<1x64x32xf32>
      %85 = vector.shape_cast %84 : vector<1x64x32xf32> to vector<64x32xf32>
      %86 = vector.broadcast %71 : vector<64x1xf32> to vector<64x32xf32>
      %87 = arith.mulf %86, %85 : vector<64x32xf32>
      %88 = arith.truncf %74 : vector<64x64xf32> to vector<64x64xbf16>
      %cst_53 = arith.constant dense<0.000000e+00> : vector<64x32xf32>
      %89 = tpu.matmul %88, %61, %cst_53 {dimension_numbers = #tpu.dot_dimension_numbers<[1], [0], [0], [1], [0, 0, 1, 1], [], []>} : vector<64x64xbf16>, vector<64x32xbf16>, vector<64x32xf32> -> vector<64x32xf32>
      %90 = arith.addf %87, %89 : vector<64x32xf32>
      %c1_54 = arith.constant 1 : index
      %c0_55 = arith.constant 0 : index
      %c0_56 = arith.constant 0 : index
      %91 = vector.load %arg10[%c1_54, %c0_55, %c0_56] : memref<4x64x32xf32, #tpu.memory_space<vmem>>, vector<1x64x32xf32>
      %92 = vector.shape_cast %91 : vector<1x64x32xf32> to vector<64x32xf32>
      %93 = vector.shape_cast %90 : vector<64x32xf32> to vector<1x64x32xf32>
      tpu.vector_store %arg10[%c1_54, %c0_55, %c0_56], %93 {strides = array<i32>} : memref<4x64x32xf32, #tpu.memory_space<vmem>>, vector<1x64x32xf32>,
      %c1_57 = arith.constant 1 : index
      %c0_58 = arith.constant 0 : index
      %c0_59 = arith.constant 0 : index
      %94 = vector.load %arg8[%c1_57, %c0_58, %c0_59] : memref<4x64x1xf32, #tpu.memory_space<vmem>>, vector<1x64x1xf32>
      %95 = vector.shape_cast %94 : vector<1x64x1xf32> to vector<64x1xf32>
      %96 = vector.shape_cast %69 : vector<64x1xf32> to vector<1x64x1xf32>
      tpu.vector_store %arg8[%c1_57, %c0_58, %c0_59], %96 {strides = array<i32>} : memref<4x64x1xf32, #tpu.memory_space<vmem>>, vector<1x64x1xf32>,
      %97 = vector.extract_strided_slice %13 {offsets = [0, 64], sizes = [64, 32], strides = [1, 1]} : vector<64x128xbf16> to vector<64x32xbf16>
      %98 = vector.extract_strided_slice %15 {offsets = [0, 64], sizes = [64, 32], strides = [1, 1]} : vector<64x128xbf16> to vector<64x32xbf16>
      %99 = vector.extract_strided_slice %17 {offsets = [0, 64], sizes = [64, 32], strides = [1, 1]} : vector<64x128xbf16> to vector<64x32xbf16>
      %cst_60 = arith.constant dense<0.000000e+00> : vector<64x64xf32>
      %100 = tpu.matmul %97, %98, %cst_60 {dimension_numbers = #tpu.dot_dimension_numbers<[1], [1], [0], [0], [0, 0, 1, 0], [], []>} : vector<64x32xbf16>, vector<64x32xbf16>, vector<64x64xf32> -> vector<64x64xf32>
      %cst_61 = arith.constant -1.000000e+30 : f32
      %101 = vector.broadcast %cst_61 : f32 to vector<64x64xf32>
      %102 = arith.select %20, %100, %101 : vector<64x64xi1>, vector<64x64xf32>
      %c2 = arith.constant 2 : index
      %c0_62 = arith.constant 0 : index
      %c0_63 = arith.constant 0 : index
      %103 = vector.load %arg8[%c2, %c0_62, %c0_63] : memref<4x64x1xf32, #tpu.memory_space<vmem>>, vector<1x64x1xf32>
      %104 = vector.shape_cast %103 : vector<1x64x1xf32> to vector<64x1xf32>
      %cst_64 = arith.constant dense<0xFF800000> : vector<64xf32>
      %105 = vector.multi_reduction <maximumf>, %102, %cst_64 [1] : vector<64x64xf32> to vector<64xf32>
      %106 = vector.shape_cast %105 : vector<64xf32> to vector<64x1xf32>
      %107 = arith.maximumf %104, %106 : vector<64x1xf32>
      %108 = arith.subf %104, %107 : vector<64x1xf32>
      %109 = math.exp %108 : vector<64x1xf32>
      %110 = vector.broadcast %107 : vector<64x1xf32> to vector<64x64xf32>
      %111 = arith.subf %102, %110 : vector<64x64xf32>
      %112 = math.exp %111 : vector<64x64xf32>
      %c2_65 = arith.constant 2 : index
      %c0_66 = arith.constant 0 : index
      %c0_67 = arith.constant 0 : index
      %113 = vector.load %arg9[%c2_65, %c0_66, %c0_67] : memref<4x64x1xf32, #tpu.memory_space<vmem>>, vector<1x64x1xf32>
      %114 = vector.shape_cast %113 : vector<1x64x1xf32> to vector<64x1xf32>
      %115 = arith.mulf %109, %114 : vector<64x1xf32>
      %cst_68 = arith.constant dense<0.000000e+00> : vector<64xf32>
      %116 = vector.multi_reduction <add>, %112, %cst_68 [1] : vector<64x64xf32> to vector<64xf32>
      %117 = vector.shape_cast %116 : vector<64xf32> to vector<64x1xf32>
      %118 = arith.addf %115, %117 : vector<64x1xf32>
      %c2_69 = arith.constant 2 : index
      %c0_70 = arith.constant 0 : index
      %c0_71 = arith.constant 0 : index
      %119 = vector.load %arg9[%c2_69, %c0_70, %c0_71] : memref<4x64x1xf32, #tpu.memory_space<vmem>>, vector<1x64x1xf32>
      %120 = vector.shape_cast %119 : vector<1x64x1xf32> to vector<64x1xf32>
      %121 = vector.shape_cast %118 : vector<64x1xf32> to vector<1x64x1xf32>
      tpu.vector_store %arg9[%c2_69, %c0_70, %c0_71], %121 {strides = array<i32>} : memref<4x64x1xf32, #tpu.memory_space<vmem>>, vector<1x64x1xf32>,
      %c2_72 = arith.constant 2 : index
      %c0_73 = arith.constant 0 : index
      %c0_74 = arith.constant 0 : index
      %122 = vector.load %arg10[%c2_72, %c0_73, %c0_74] : memref<4x64x32xf32, #tpu.memory_space<vmem>>, vector<1x64x32xf32>
      %123 = vector.shape_cast %122 : vector<1x64x32xf32> to vector<64x32xf32>
      %124 = vector.broadcast %109 : vector<64x1xf32> to vector<64x32xf32>
      %125 = arith.mulf %124, %123 : vector<64x32xf32>
      %126 = arith.truncf %112 : vector<64x64xf32> to vector<64x64xbf16>
      %cst_75 = arith.constant dense<0.000000e+00> : vector<64x32xf32>
      %127 = tpu.matmul %126, %99, %cst_75 {dimension_numbers = #tpu.dot_dimension_numbers<[1], [0], [0], [1], [0, 0, 1, 1], [], []>} : vector<64x64xbf16>, vector<64x32xbf16>, vector<64x32xf32> -> vector<64x32xf32>
      %128 = arith.addf %125, %127 : vector<64x32xf32>
      %c2_76 = arith.constant 2 : index
      %c0_77 = arith.constant 0 : index
      %c0_78 = arith.constant 0 : index
      %129 = vector.load %arg10[%c2_76, %c0_77, %c0_78] : memref<4x64x32xf32, #tpu.memory_space<vmem>>, vector<1x64x32xf32>
      %130 = vector.shape_cast %129 : vector<1x64x32xf32> to vector<64x32xf32>
      %131 = vector.shape_cast %128 : vector<64x32xf32> to vector<1x64x32xf32>
      tpu.vector_store %arg10[%c2_76, %c0_77, %c0_78], %131 {strides = array<i32>} : memref<4x64x32xf32, #tpu.memory_space<vmem>>, vector<1x64x32xf32>,
      %c2_79 = arith.constant 2 : index
      %c0_80 = arith.constant 0 : index
      %c0_81 = arith.constant 0 : index
      %132 = vector.load %arg8[%c2_79, %c0_80, %c0_81] : memref<4x64x1xf32, #tpu.memory_space<vmem>>, vector<1x64x1xf32>
      %133 = vector.shape_cast %132 : vector<1x64x1xf32> to vector<64x1xf32>
      %134 = vector.shape_cast %107 : vector<64x1xf32> to vector<1x64x1xf32>
      tpu.vector_store %arg8[%c2_79, %c0_80, %c0_81], %134 {strides = array<i32>} : memref<4x64x1xf32, #tpu.memory_space<vmem>>, vector<1x64x1xf32>,
      %135 = vector.extract_strided_slice %13 {offsets = [0, 96], sizes = [64, 32], strides = [1, 1]} : vector<64x128xbf16> to vector<64x32xbf16>
      %136 = vector.extract_strided_slice %15 {offsets = [0, 96], sizes = [64, 32], strides = [1, 1]} : vector<64x128xbf16> to vector<64x32xbf16>
      %137 = vector.extract_strided_slice %17 {offsets = [0, 96], sizes = [64, 32], strides = [1, 1]} : vector<64x128xbf16> to vector<64x32xbf16>
      %cst_82 = arith.constant dense<0.000000e+00> : vector<64x64xf32>
      %138 = tpu.matmul %135, %136, %cst_82 {dimension_numbers = #tpu.dot_dimension_numbers<[1], [1], [0], [0], [0, 0, 1, 0], [], []>} : vector<64x32xbf16>, vector<64x32xbf16>, vector<64x64xf32> -> vector<64x64xf32>
      %cst_83 = arith.constant -1.000000e+30 : f32
      %139 = vector.broadcast %cst_83 : f32 to vector<64x64xf32>
      %140 = arith.select %20, %138, %139 : vector<64x64xi1>, vector<64x64xf32>
      %c3 = arith.constant 3 : index
      %c0_84 = arith.constant 0 : index
      %c0_85 = arith.constant 0 : index
      %141 = vector.load %arg8[%c3, %c0_84, %c0_85] : memref<4x64x1xf32, #tpu.memory_space<vmem>>, vector<1x64x1xf32>
      %142 = vector.shape_cast %141 : vector<1x64x1xf32> to vector<64x1xf32>
      %cst_86 = arith.constant dense<0xFF800000> : vector<64xf32>
      %143 = vector.multi_reduction <maximumf>, %140, %cst_86 [1] : vector<64x64xf32> to vector<64xf32>
      %144 = vector.shape_cast %143 : vector<64xf32> to vector<64x1xf32>
      %145 = arith.maximumf %142, %144 : vector<64x1xf32>
      %146 = arith.subf %142, %145 : vector<64x1xf32>
      %147 = math.exp %146 : vector<64x1xf32>
      %148 = vector.broadcast %145 : vector<64x1xf32> to vector<64x64xf32>
      %149 = arith.subf %140, %148 : vector<64x64xf32>
      %150 = math.exp %149 : vector<64x64xf32>
      %c3_87 = arith.constant 3 : index
      %c0_88 = arith.constant 0 : index
      %c0_89 = arith.constant 0 : index
      %151 = vector.load %arg9[%c3_87, %c0_88, %c0_89] : memref<4x64x1xf32, #tpu.memory_space<vmem>>, vector<1x64x1xf32>
      %152 = vector.shape_cast %151 : vector<1x64x1xf32> to vector<64x1xf32>
      %153 = arith.mulf %147, %152 : vector<64x1xf32>
      %cst_90 = arith.constant dense<0.000000e+00> : vector<64xf32>
      %154 = vector.multi_reduction <add>, %150, %cst_90 [1] : vector<64x64xf32> to vector<64xf32>
      %155 = vector.shape_cast %154 : vector<64xf32> to vector<64x1xf32>
      %156 = arith.addf %153, %155 : vector<64x1xf32>
      %c3_91 = arith.constant 3 : index
      %c0_92 = arith.constant 0 : index
      %c0_93 = arith.constant 0 : index
      %157 = vector.load %arg9[%c3_91, %c0_92, %c0_93] : memref<4x64x1xf32, #tpu.memory_space<vmem>>, vector<1x64x1xf32>
      %158 = vector.shape_cast %157 : vector<1x64x1xf32> to vector<64x1xf32>
      %159 = vector.shape_cast %156 : vector<64x1xf32> to vector<1x64x1xf32>
      tpu.vector_store %arg9[%c3_91, %c0_92, %c0_93], %159 {strides = array<i32>} : memref<4x64x1xf32, #tpu.memory_space<vmem>>, vector<1x64x1xf32>,
      %c3_94 = arith.constant 3 : index
      %c0_95 = arith.constant 0 : index
      %c0_96 = arith.constant 0 : index
      %160 = vector.load %arg10[%c3_94, %c0_95, %c0_96] : memref<4x64x32xf32, #tpu.memory_space<vmem>>, vector<1x64x32xf32>
      %161 = vector.shape_cast %160 : vector<1x64x32xf32> to vector<64x32xf32>
      %162 = vector.broadcast %147 : vector<64x1xf32> to vector<64x32xf32>
      %163 = arith.mulf %162, %161 : vector<64x32xf32>
      %164 = arith.truncf %150 : vector<64x64xf32> to vector<64x64xbf16>
      %cst_97 = arith.constant dense<0.000000e+00> : vector<64x32xf32>
      %165 = tpu.matmul %164, %137, %cst_97 {dimension_numbers = #tpu.dot_dimension_numbers<[1], [0], [0], [1], [0, 0, 1, 1], [], []>} : vector<64x64xbf16>, vector<64x32xbf16>, vector<64x32xf32> -> vector<64x32xf32>
      %166 = arith.addf %163, %165 : vector<64x32xf32>
      %c3_98 = arith.constant 3 : index
      %c0_99 = arith.constant 0 : index
      %c0_100 = arith.constant 0 : index
      %167 = vector.load %arg10[%c3_98, %c0_99, %c0_100] : memref<4x64x32xf32, #tpu.memory_space<vmem>>, vector<1x64x32xf32>
      %168 = vector.shape_cast %167 : vector<1x64x32xf32> to vector<64x32xf32>
      %169 = vector.shape_cast %166 : vector<64x32xf32> to vector<1x64x32xf32>
      tpu.vector_store %arg10[%c3_98, %c0_99, %c0_100], %169 {strides = array<i32>} : memref<4x64x32xf32, #tpu.memory_space<vmem>>, vector<1x64x32xf32>,
      %c3_101 = arith.constant 3 : index
      %c0_102 = arith.constant 0 : index
      %c0_103 = arith.constant 0 : index
      %170 = vector.load %arg8[%c3_101, %c0_102, %c0_103] : memref<4x64x1xf32, #tpu.memory_space<vmem>>, vector<1x64x1xf32>
      %171 = vector.shape_cast %170 : vector<1x64x1xf32> to vector<64x1xf32>
      %172 = vector.shape_cast %145 : vector<64x1xf32> to vector<1x64x1xf32>
      tpu.vector_store %arg8[%c3_101, %c0_102, %c0_103], %172 {strides = array<i32>} : memref<4x64x1xf32, #tpu.memory_space<vmem>>, vector<1x64x1xf32>,
    } else {
    }
    %c0_i32_3 = arith.constant 0 : i32
    %9 = arith.cmpi eq, %arg3, %c0_i32_3 : i32
    %10 = arith.extui %9 : i1 to i32
    %c0_i32_4 = arith.constant 0 : i32
    %11 = arith.cmpi ne, %10, %c0_i32_4 : i32
    scf.if %11 {
      %c0 = arith.constant 0 : index
      %c0_5 = arith.constant 0 : index
      %c0_6 = arith.constant 0 : index
      %12 = vector.load %arg9[%c0, %c0_5, %c0_6] : memref<4x64x1xf32, #tpu.memory_space<vmem>>, vector<1x64x1xf32>
      %13 = vector.shape_cast %12 : vector<1x64x1xf32> to vector<64x1xf32>
      %14 = tpu.reciprocal %13 {approx = true} : vector<64x1xf32> -> vector<64x1xf32>
      %c0_7 = arith.constant 0 : index
      %c0_8 = arith.constant 0 : index
      %c0_9 = arith.constant 0 : index
      %15 = vector.load %arg10[%c0_7, %c0_8, %c0_9] : memref<4x64x32xf32, #tpu.memory_space<vmem>>, vector<1x64x32xf32>
      %16 = vector.shape_cast %15 : vector<1x64x32xf32> to vector<64x32xf32>
      %17 = vector.broadcast %14 : vector<64x1xf32> to vector<64x32xf32>
      %18 = arith.mulf %16, %17 : vector<64x32xf32>
      %c1 = arith.constant 1 : index
      %c0_10 = arith.constant 0 : index
      %c0_11 = arith.constant 0 : index
      %19 = vector.load %arg9[%c1, %c0_10, %c0_11] : memref<4x64x1xf32, #tpu.memory_space<vmem>>, vector<1x64x1xf32>
      %20 = vector.shape_cast %19 : vector<1x64x1xf32> to vector<64x1xf32>
      %21 = tpu.reciprocal %20 {approx = true} : vector<64x1xf32> -> vector<64x1xf32>
      %c1_12 = arith.constant 1 : index
      %c0_13 = arith.constant 0 : index
      %c0_14 = arith.constant 0 : index
      %22 = vector.load %arg10[%c1_12, %c0_13, %c0_14] : memref<4x64x32xf32, #tpu.memory_space<vmem>>, vector<1x64x32xf32>
      %23 = vector.shape_cast %22 : vector<1x64x32xf32> to vector<64x32xf32>
      %24 = vector.broadcast %21 : vector<64x1xf32> to vector<64x32xf32>
      %25 = arith.mulf %23, %24 : vector<64x32xf32>
      %c2 = arith.constant 2 : index
      %c0_15 = arith.constant 0 : index
      %c0_16 = arith.constant 0 : index
      %26 = vector.load %arg9[%c2, %c0_15, %c0_16] : memref<4x64x1xf32, #tpu.memory_space<vmem>>, vector<1x64x1xf32>
      %27 = vector.shape_cast %26 : vector<1x64x1xf32> to vector<64x1xf32>
      %28 = tpu.reciprocal %27 {approx = true} : vector<64x1xf32> -> vector<64x1xf32>
      %c2_17 = arith.constant 2 : index
      %c0_18 = arith.constant 0 : index
      %c0_19 = arith.constant 0 : index
      %29 = vector.load %arg10[%c2_17, %c0_18, %c0_19] : memref<4x64x32xf32, #tpu.memory_space<vmem>>, vector<1x64x32xf32>
      %30 = vector.shape_cast %29 : vector<1x64x32xf32> to vector<64x32xf32>
      %31 = vector.broadcast %28 : vector<64x1xf32> to vector<64x32xf32>
      %32 = arith.mulf %30, %31 : vector<64x32xf32>
      %c3 = arith.constant 3 : index
      %c0_20 = arith.constant 0 : index
      %c0_21 = arith.constant 0 : index
      %33 = vector.load %arg9[%c3, %c0_20, %c0_21] : memref<4x64x1xf32, #tpu.memory_space<vmem>>, vector<1x64x1xf32>
      %34 = vector.shape_cast %33 : vector<1x64x1xf32> to vector<64x1xf32>
      %35 = tpu.reciprocal %34 {approx = true} : vector<64x1xf32> -> vector<64x1xf32>
      %c3_22 = arith.constant 3 : index
      %c0_23 = arith.constant 0 : index
      %c0_24 = arith.constant 0 : index
      %36 = vector.load %arg10[%c3_22, %c0_23, %c0_24] : memref<4x64x32xf32, #tpu.memory_space<vmem>>, vector<1x64x32xf32>
      %37 = vector.shape_cast %36 : vector<1x64x32xf32> to vector<64x32xf32>
      %38 = vector.broadcast %35 : vector<64x1xf32> to vector<64x32xf32>
      %39 = arith.mulf %37, %38 : vector<64x32xf32>
      %40 = tpu.concatenate %18, %25, %32, %39 in 1 : vector<64x32xf32>, vector<64x32xf32>, vector<64x32xf32>, vector<64x32xf32> -> vector<64x128xf32>
      %41 = arith.truncf %40 : vector<64x128xf32> to vector<64x128xbf16>
      %c0_25 = arith.constant 0 : index
      %c0_26 = arith.constant 0 : index
      %c0_27 = arith.constant 0 : index
      %c0_28 = arith.constant 0 : index
      %42 = vector.load %arg7[%c0_25, %c0_26, %c0_27, %c0_28] : memref<1x1x64x128xbf16, #tpu.memory_space<vmem>>, vector<1x1x64x128xbf16>
      %43 = vector.shape_cast %42 : vector<1x1x64x128xbf16> to vector<64x128xbf16>
      %44 = vector.shape_cast %41 : vector<64x128xbf16> to vector<1x1x64x128xbf16>
      tpu.vector_store %arg7[%c0_25, %c0_26, %c0_27, %c0_28], %44 {strides = array<i32>} : memref<1x1x64x128xbf16, #tpu.memory_space<vmem>>, vector<1x1x64x128xbf16>,
    } else {
    }
    return
  }
  func.func @transform_0(%arg0: i32, %arg1: i32, %arg2: i32, %arg3: i32) -> (i32, i32, i32, i32) {
    %c0_i32 = arith.constant 0 : i32
    %c0_i32_0 = arith.constant 0 : i32
    return %arg1, %arg0, %arg2, %c0_i32 : i32, i32, i32, i32
  }
  func.func @transform_1(%arg0: i32, %arg1: i32, %arg2: i32, %arg3: i32) -> (i32, i32, i32, i32) {
    %0 = arith.minsi %arg3, %arg2 : i32
    %c0_i32 = arith.constant 0 : i32
    %c0_i32_0 = arith.constant 0 : i32
    return %arg1, %arg0, %0, %c0_i32 : i32, i32, i32, i32
  }
  func.func @transform_2(%arg0: i32, %arg1: i32, %arg2: i32, %arg3: i32) -> (i32, i32, i32, i32) {
    %0 = arith.minsi %arg3, %arg2 : i32
    %c0_i32 = arith.constant 0 : i32
    %c0_i32_0 = arith.constant 0 : i32
    return %arg1, %arg0, %0, %c0_i32 : i32, i32, i32, i32
  }
  func.func @transform_3(%arg0: i32, %arg1: i32, %arg2: i32, %arg3: i32) -> (i32, i32, i32, i32) {
    %c0_i32 = arith.constant 0 : i32
    %c0_i32_0 = arith.constant 0 : i32
    return %arg1, %arg0, %arg2, %c0_i32 : i32, i32, i32, i32
  }
}

module attributes {stable_mosaic.version = 11 : i64} {
  func.func @_ln_linear_kernel(%arg0: i32, %arg1: i32, %arg2: memref<128x128xbf16, #tpu.memory_space<vmem>>, %arg3: memref<1x128xf32, #tpu.memory_space<vmem>>, %arg4: memref<1x128xf32, #tpu.memory_space<vmem>>, %arg5: memref<128x512xbf16, #tpu.memory_space<vmem>>, %arg6: memref<1x512xf32, #tpu.memory_space<vmem>>, %arg7: memref<128x512xbf16, #tpu.memory_space<vmem>>, %arg8: memref<128x128xbf16, #tpu.memory_space<vmem>>) attributes {dimension_semantics = [#tpu.dimension_semantics<parallel>, #tpu.dimension_semantics<arbitrary>], iteration_bounds = array<i64: 1, 1>, scalar_prefetch = 0 : i64, scratch_operands = 1 : i64, tpu.core_type = #tpu.core_type<tc>, window_params = [{transform_indices = @transform_0, window_bounds = array<i64: 128, 128>}, {pipeline_mode = #tpu.pipeline_mode<synchronous>, transform_indices = @transform_1, window_bounds = array<i64: 1, 128>}, {pipeline_mode = #tpu.pipeline_mode<synchronous>, transform_indices = @transform_2, window_bounds = array<i64: 1, 128>}, {transform_indices = @transform_3, window_bounds = array<i64: 128, 512>}, {transform_indices = @transform_4, window_bounds = array<i64: 1, 512>}, {transform_indices = @transform_5, window_bounds = array<i64: 128, 512>}]} {
    %c0_i32 = arith.constant 0 : i32
    %0 = arith.cmpi eq, %arg1, %c0_i32 : i32
    %1 = arith.extui %0 : i1 to i32
    %c0_i32_0 = arith.constant 0 : i32
    %2 = arith.cmpi ne, %1, %c0_i32_0 : i32
    scf.if %2 {
      %c0_12 = arith.constant 0 : index
      %c0_13 = arith.constant 0 : index
      %24 = vector.load %arg2[%c0_12, %c0_13] : memref<128x128xbf16, #tpu.memory_space<vmem>>, vector<128x128xbf16>
      %25 = arith.extf %24 : vector<128x128xbf16> to vector<128x128xf32>
      %c0_14 = arith.constant 0 : index
      %c0_15 = arith.constant 0 : index
      %26 = vector.load %arg3[%c0_14, %c0_15] : memref<1x128xf32, #tpu.memory_space<vmem>>, vector<1x128xf32>
      %c0_16 = arith.constant 0 : index
      %c0_17 = arith.constant 0 : index
      %27 = vector.load %arg4[%c0_16, %c0_17] : memref<1x128xf32, #tpu.memory_space<vmem>>, vector<1x128xf32>
      %cst_18 = arith.constant dense<0.000000e+00> : vector<128xf32>
      %28 = vector.multi_reduction <add>, %25, %cst_18 [1] : vector<128x128xf32> to vector<128xf32>
      %29 = vector.shape_cast %28 : vector<128xf32> to vector<128x1xf32>
      %cst_19 = arith.constant 1.280000e+02 : f32
      %30 = vector.broadcast %cst_19 : f32 to vector<128x1xf32>
      %31 = arith.divf %29, %30 : vector<128x1xf32>
      %32 = vector.broadcast %31 : vector<128x1xf32> to vector<128x128xf32>
      %33 = arith.subf %25, %32 : vector<128x128xf32>
      %34 = arith.mulf %33, %33 : vector<128x128xf32>
      %cst_20 = arith.constant dense<0.000000e+00> : vector<128xf32>
      %35 = vector.multi_reduction <add>, %34, %cst_20 [1] : vector<128x128xf32> to vector<128xf32>
      %36 = vector.shape_cast %35 : vector<128xf32> to vector<128x1xf32>
      %cst_21 = arith.constant 1.280000e+02 : f32
      %37 = vector.broadcast %cst_21 : f32 to vector<128x1xf32>
      %38 = arith.divf %36, %37 : vector<128x1xf32>
      %39 = vector.broadcast %31 : vector<128x1xf32> to vector<128x128xf32>
      %40 = arith.subf %25, %39 : vector<128x128xf32>
      %cst_22 = arith.constant 9.99999974E-6 : f32
      %41 = vector.broadcast %cst_22 : f32 to vector<128x1xf32>
      %42 = arith.addf %38, %41 : vector<128x1xf32>
      %43 = math.rsqrt %42 : vector<128x1xf32>
      %44 = vector.broadcast %43 : vector<128x1xf32> to vector<128x128xf32>
      %45 = arith.mulf %40, %44 : vector<128x128xf32>
      %46 = vector.broadcast %26 : vector<1x128xf32> to vector<128x128xf32>
      %47 = arith.mulf %45, %46 : vector<128x128xf32>
      %48 = vector.broadcast %27 : vector<1x128xf32> to vector<128x128xf32>
      %49 = arith.addf %47, %48 : vector<128x128xf32>
      %50 = arith.truncf %49 : vector<128x128xf32> to vector<128x128xbf16>
      %c0_23 = arith.constant 0 : index
      %c0_24 = arith.constant 0 : index
      %51 = vector.load %arg8[%c0_23, %c0_24] : memref<128x128xbf16, #tpu.memory_space<vmem>>, vector<128x128xbf16>
      tpu.vector_store %arg8[%c0_23, %c0_24], %50 {strides = array<i32>} : memref<128x128xbf16, #tpu.memory_space<vmem>>, vector<128x128xbf16>,
    } else {
    }
    %c0 = arith.constant 0 : index
    %c0_1 = arith.constant 0 : index
    %3 = vector.load %arg8[%c0, %c0_1] : memref<128x128xbf16, #tpu.memory_space<vmem>>, vector<128x128xbf16>
    %c0_2 = arith.constant 0 : index
    %c0_3 = arith.constant 0 : index
    %4 = vector.load %arg5[%c0_2, %c0_3] : memref<128x512xbf16, #tpu.memory_space<vmem>>, vector<128x512xbf16>
    %cst = arith.constant dense<0.000000e+00> : vector<128x512xf32>
    %5 = tpu.matmul %3, %4, %cst {dimension_numbers = #tpu.dot_dimension_numbers<[1], [0], [0], [1], [0, 0, 1, 1], [], []>} : vector<128x128xbf16>, vector<128x512xbf16>, vector<128x512xf32> -> vector<128x512xf32>
    %c0_4 = arith.constant 0 : index
    %c0_5 = arith.constant 0 : index
    %6 = vector.load %arg6[%c0_4, %c0_5] : memref<1x512xf32, #tpu.memory_space<vmem>>, vector<1x512xf32>
    %7 = vector.broadcast %6 : vector<1x512xf32> to vector<128x512xf32>
    %8 = arith.addf %5, %7 : vector<128x512xf32>
    %cst_6 = arith.constant 5.000000e-01 : f32
    %9 = vector.broadcast %cst_6 : f32 to vector<128x512xf32>
    %10 = arith.mulf %9, %8 : vector<128x512xf32>
    %cst_7 = arith.constant 4.471500e-02 : f32
    %11 = vector.broadcast %cst_7 : f32 to vector<128x512xf32>
    %12 = arith.mulf %11, %8 : vector<128x512xf32>
    %13 = arith.mulf %12, %8 : vector<128x512xf32>
    %14 = arith.mulf %13, %8 : vector<128x512xf32>
    %15 = arith.addf %8, %14 : vector<128x512xf32>
    %cst_8 = arith.constant 0.797884583 : f32
    %16 = vector.broadcast %cst_8 : f32 to vector<128x512xf32>
    %17 = arith.mulf %16, %15 : vector<128x512xf32>
    %18 = math.tanh %17 : vector<128x512xf32>
    %cst_9 = arith.constant 1.000000e+00 : f32
    %19 = vector.broadcast %cst_9 : f32 to vector<128x512xf32>
    %20 = arith.addf %19, %18 : vector<128x512xf32>
    %21 = arith.mulf %10, %20 : vector<128x512xf32>
    %22 = arith.truncf %21 : vector<128x512xf32> to vector<128x512xbf16>
    %c0_10 = arith.constant 0 : index
    %c0_11 = arith.constant 0 : index
    %23 = vector.load %arg7[%c0_10, %c0_11] : memref<128x512xbf16, #tpu.memory_space<vmem>>, vector<128x512xbf16>
    tpu.vector_store %arg7[%c0_10, %c0_11], %22 {strides = array<i32>} : memref<128x512xbf16, #tpu.memory_space<vmem>>, vector<128x512xbf16>,
    return
  }
  func.func @transform_0(%arg0: i32, %arg1: i32) -> (i32, i32) {
    %c0_i32 = arith.constant 0 : i32
    %c0_i32_0 = arith.constant 0 : i32
    return %arg0, %c0_i32 : i32, i32
  }
  func.func @transform_1(%arg0: i32, %arg1: i32) -> (i32, i32) {
    %c0_i32 = arith.constant 0 : i32
    %c0_i32_0 = arith.constant 0 : i32
    %c0_i32_1 = arith.constant 0 : i32
    return %c0_i32, %c0_i32_0 : i32, i32
  }
  func.func @transform_2(%arg0: i32, %arg1: i32) -> (i32, i32) {
    %c0_i32 = arith.constant 0 : i32
    %c0_i32_0 = arith.constant 0 : i32
    %c0_i32_1 = arith.constant 0 : i32
    return %c0_i32, %c0_i32_0 : i32, i32
  }
  func.func @transform_3(%arg0: i32, %arg1: i32) -> (i32, i32) {
    %c0_i32 = arith.constant 0 : i32
    %c0_i32_0 = arith.constant 0 : i32
    return %c0_i32, %arg1 : i32, i32
  }
  func.func @transform_4(%arg0: i32, %arg1: i32) -> (i32, i32) {
    %c0_i32 = arith.constant 0 : i32
    %c0_i32_0 = arith.constant 0 : i32
    return %c0_i32, %arg1 : i32, i32
  }
  func.func @transform_5(%arg0: i32, %arg1: i32) -> (i32, i32) {
    %c0_i32 = arith.constant 0 : i32
    return %arg0, %arg1 : i32, i32
  }
}

module attributes {stable_mosaic.version = 11 : i64} {
  func.func @_matmul_residual_kernel(%arg0: i32, %arg1: i32, %arg2: i32, %arg3: memref<128x512xbf16, #tpu.memory_space<vmem>>, %arg4: memref<512x128xbf16, #tpu.memory_space<vmem>>, %arg5: memref<1x128xf32, #tpu.memory_space<vmem>>, %arg6: memref<128x128xbf16, #tpu.memory_space<vmem>>, %arg7: memref<128x128xbf16, #tpu.memory_space<vmem>>, %arg8: memref<128x128xf32, #tpu.memory_space<vmem>>) attributes {dimension_semantics = [#tpu.dimension_semantics<parallel>, #tpu.dimension_semantics<parallel>, #tpu.dimension_semantics<arbitrary>], iteration_bounds = array<i64: 1, 1, 1>, scalar_prefetch = 0 : i64, scratch_operands = 1 : i64, tpu.core_type = #tpu.core_type<tc>, window_params = [{transform_indices = @transform_0, window_bounds = array<i64: 128, 512>}, {transform_indices = @transform_1, window_bounds = array<i64: 512, 128>}, {transform_indices = @transform_2, window_bounds = array<i64: 1, 128>}, {transform_indices = @transform_3, window_bounds = array<i64: 128, 128>}, {transform_indices = @transform_4, window_bounds = array<i64: 128, 128>}]} {
    %c0_i32 = arith.constant 0 : i32
    %0 = arith.cmpi eq, %arg2, %c0_i32 : i32
    %1 = arith.extui %0 : i1 to i32
    %c0_i32_0 = arith.constant 0 : i32
    %2 = arith.cmpi ne, %1, %c0_i32_0 : i32
    scf.if %2 {
      %cst_10 = arith.constant 0.000000e+00 : f32
      %12 = vector.broadcast %cst_10 : f32 to vector<128x128xf32>
      %c0_11 = arith.constant 0 : index
      %c0_12 = arith.constant 0 : index
      %13 = vector.load %arg8[%c0_11, %c0_12] : memref<128x128xf32, #tpu.memory_space<vmem>>, vector<128x128xf32>
      tpu.vector_store %arg8[%c0_11, %c0_12], %12 {strides = array<i32>} : memref<128x128xf32, #tpu.memory_space<vmem>>, vector<128x128xf32>,
    } else {
    }
    %c0 = arith.constant 0 : index
    %c0_1 = arith.constant 0 : index
    %3 = vector.load %arg8[%c0, %c0_1] : memref<128x128xf32, #tpu.memory_space<vmem>>, vector<128x128xf32>
    %c0_2 = arith.constant 0 : index
    %c0_3 = arith.constant 0 : index
    %4 = vector.load %arg3[%c0_2, %c0_3] : memref<128x512xbf16, #tpu.memory_space<vmem>>, vector<128x512xbf16>
    %c0_4 = arith.constant 0 : index
    %c0_5 = arith.constant 0 : index
    %5 = vector.load %arg4[%c0_4, %c0_5] : memref<512x128xbf16, #tpu.memory_space<vmem>>, vector<512x128xbf16>
    %cst = arith.constant dense<0.000000e+00> : vector<128x128xf32>
    %6 = tpu.matmul %4, %5, %cst {dimension_numbers = #tpu.dot_dimension_numbers<[1], [0], [0], [1], [0, 0, 1, 1], [], []>} : vector<128x512xbf16>, vector<512x128xbf16>, vector<128x128xf32> -> vector<128x128xf32>
    %7 = arith.addf %3, %6 : vector<128x128xf32>
    %c0_6 = arith.constant 0 : index
    %c0_7 = arith.constant 0 : index
    %8 = vector.load %arg8[%c0_6, %c0_7] : memref<128x128xf32, #tpu.memory_space<vmem>>, vector<128x128xf32>
    tpu.vector_store %arg8[%c0_6, %c0_7], %7 {strides = array<i32>} : memref<128x128xf32, #tpu.memory_space<vmem>>, vector<128x128xf32>,
    %c0_i32_8 = arith.constant 0 : i32
    %9 = arith.cmpi eq, %arg2, %c0_i32_8 : i32
    %10 = arith.extui %9 : i1 to i32
    %c0_i32_9 = arith.constant 0 : i32
    %11 = arith.cmpi ne, %10, %c0_i32_9 : i32
    scf.if %11 {
      %c0_10 = arith.constant 0 : index
      %c0_11 = arith.constant 0 : index
      %12 = vector.load %arg8[%c0_10, %c0_11] : memref<128x128xf32, #tpu.memory_space<vmem>>, vector<128x128xf32>
      %c0_12 = arith.constant 0 : index
      %c0_13 = arith.constant 0 : index
      %13 = vector.load %arg5[%c0_12, %c0_13] : memref<1x128xf32, #tpu.memory_space<vmem>>, vector<1x128xf32>
      %14 = vector.broadcast %13 : vector<1x128xf32> to vector<128x128xf32>
      %15 = arith.addf %12, %14 : vector<128x128xf32>
      %c0_14 = arith.constant 0 : index
      %c0_15 = arith.constant 0 : index
      %16 = vector.load %arg6[%c0_14, %c0_15] : memref<128x128xbf16, #tpu.memory_space<vmem>>, vector<128x128xbf16>
      %17 = arith.extf %16 : vector<128x128xbf16> to vector<128x128xf32>
      %18 = arith.addf %15, %17 : vector<128x128xf32>
      %19 = arith.truncf %18 : vector<128x128xf32> to vector<128x128xbf16>
      %c0_16 = arith.constant 0 : index
      %c0_17 = arith.constant 0 : index
      %20 = vector.load %arg7[%c0_16, %c0_17] : memref<128x128xbf16, #tpu.memory_space<vmem>>, vector<128x128xbf16>
      tpu.vector_store %arg7[%c0_16, %c0_17], %19 {strides = array<i32>} : memref<128x128xbf16, #tpu.memory_space<vmem>>, vector<128x128xbf16>,
    } else {
    }
    return
  }
  func.func @transform_0(%arg0: i32, %arg1: i32, %arg2: i32) -> (i32, i32) {
    %c0_i32 = arith.constant 0 : i32
    return %arg0, %arg2 : i32, i32
  }
  func.func @transform_1(%arg0: i32, %arg1: i32, %arg2: i32) -> (i32, i32) {
    %c0_i32 = arith.constant 0 : i32
    return %arg2, %arg1 : i32, i32
  }
  func.func @transform_2(%arg0: i32, %arg1: i32, %arg2: i32) -> (i32, i32) {
    %c0_i32 = arith.constant 0 : i32
    %c0_i32_0 = arith.constant 0 : i32
    return %c0_i32, %arg1 : i32, i32
  }
  func.func @transform_3(%arg0: i32, %arg1: i32, %arg2: i32) -> (i32, i32) {
    %c0_i32 = arith.constant 0 : i32
    return %arg0, %arg1 : i32, i32
  }
  func.func @transform_4(%arg0: i32, %arg1: i32, %arg2: i32) -> (i32, i32) {
    %c0_i32 = arith.constant 0 : i32
    return %arg0, %arg1 : i32, i32
  }
}

module attributes {stable_mosaic.version = 11 : i64} {
  func.func @_ln_lmhead_kernel(%arg0: i32, %arg1: i32, %arg2: memref<128x128xbf16, #tpu.memory_space<vmem>>, %arg3: memref<1x128xf32, #tpu.memory_space<vmem>>, %arg4: memref<1x128xf32, #tpu.memory_space<vmem>>, %arg5: memref<128x512xbf16, #tpu.memory_space<vmem>>, %arg6: memref<128x512xbf16, #tpu.memory_space<vmem>>, %arg7: memref<128x128xbf16, #tpu.memory_space<vmem>>) attributes {dimension_semantics = [#tpu.dimension_semantics<parallel>, #tpu.dimension_semantics<arbitrary>], iteration_bounds = array<i64: 1, 1>, scalar_prefetch = 0 : i64, scratch_operands = 1 : i64, tpu.core_type = #tpu.core_type<tc>, window_params = [{transform_indices = @transform_0, window_bounds = array<i64: 128, 128>}, {pipeline_mode = #tpu.pipeline_mode<synchronous>, transform_indices = @transform_1, window_bounds = array<i64: 1, 128>}, {pipeline_mode = #tpu.pipeline_mode<synchronous>, transform_indices = @transform_2, window_bounds = array<i64: 1, 128>}, {transform_indices = @transform_3, window_bounds = array<i64: 128, 512>}, {transform_indices = @transform_4, window_bounds = array<i64: 128, 512>}]} {
    %c0_i32 = arith.constant 0 : i32
    %0 = arith.cmpi eq, %arg1, %c0_i32 : i32
    %1 = arith.extui %0 : i1 to i32
    %c0_i32_0 = arith.constant 0 : i32
    %2 = arith.cmpi ne, %1, %c0_i32_0 : i32
    scf.if %2 {
      %c0_6 = arith.constant 0 : index
      %c0_7 = arith.constant 0 : index
      %8 = vector.load %arg2[%c0_6, %c0_7] : memref<128x128xbf16, #tpu.memory_space<vmem>>, vector<128x128xbf16>
      %9 = arith.extf %8 : vector<128x128xbf16> to vector<128x128xf32>
      %c0_8 = arith.constant 0 : index
      %c0_9 = arith.constant 0 : index
      %10 = vector.load %arg3[%c0_8, %c0_9] : memref<1x128xf32, #tpu.memory_space<vmem>>, vector<1x128xf32>
      %c0_10 = arith.constant 0 : index
      %c0_11 = arith.constant 0 : index
      %11 = vector.load %arg4[%c0_10, %c0_11] : memref<1x128xf32, #tpu.memory_space<vmem>>, vector<1x128xf32>
      %cst_12 = arith.constant dense<0.000000e+00> : vector<128xf32>
      %12 = vector.multi_reduction <add>, %9, %cst_12 [1] : vector<128x128xf32> to vector<128xf32>
      %13 = vector.shape_cast %12 : vector<128xf32> to vector<128x1xf32>
      %cst_13 = arith.constant 1.280000e+02 : f32
      %14 = vector.broadcast %cst_13 : f32 to vector<128x1xf32>
      %15 = arith.divf %13, %14 : vector<128x1xf32>
      %16 = vector.broadcast %15 : vector<128x1xf32> to vector<128x128xf32>
      %17 = arith.subf %9, %16 : vector<128x128xf32>
      %18 = arith.mulf %17, %17 : vector<128x128xf32>
      %cst_14 = arith.constant dense<0.000000e+00> : vector<128xf32>
      %19 = vector.multi_reduction <add>, %18, %cst_14 [1] : vector<128x128xf32> to vector<128xf32>
      %20 = vector.shape_cast %19 : vector<128xf32> to vector<128x1xf32>
      %cst_15 = arith.constant 1.280000e+02 : f32
      %21 = vector.broadcast %cst_15 : f32 to vector<128x1xf32>
      %22 = arith.divf %20, %21 : vector<128x1xf32>
      %23 = vector.broadcast %15 : vector<128x1xf32> to vector<128x128xf32>
      %24 = arith.subf %9, %23 : vector<128x128xf32>
      %cst_16 = arith.constant 9.99999974E-6 : f32
      %25 = vector.broadcast %cst_16 : f32 to vector<128x1xf32>
      %26 = arith.addf %22, %25 : vector<128x1xf32>
      %27 = math.rsqrt %26 : vector<128x1xf32>
      %28 = vector.broadcast %27 : vector<128x1xf32> to vector<128x128xf32>
      %29 = arith.mulf %24, %28 : vector<128x128xf32>
      %30 = vector.broadcast %10 : vector<1x128xf32> to vector<128x128xf32>
      %31 = arith.mulf %29, %30 : vector<128x128xf32>
      %32 = vector.broadcast %11 : vector<1x128xf32> to vector<128x128xf32>
      %33 = arith.addf %31, %32 : vector<128x128xf32>
      %34 = arith.truncf %33 : vector<128x128xf32> to vector<128x128xbf16>
      %c0_17 = arith.constant 0 : index
      %c0_18 = arith.constant 0 : index
      %35 = vector.load %arg7[%c0_17, %c0_18] : memref<128x128xbf16, #tpu.memory_space<vmem>>, vector<128x128xbf16>
      tpu.vector_store %arg7[%c0_17, %c0_18], %34 {strides = array<i32>} : memref<128x128xbf16, #tpu.memory_space<vmem>>, vector<128x128xbf16>,
    } else {
    }
    %c0 = arith.constant 0 : index
    %c0_1 = arith.constant 0 : index
    %3 = vector.load %arg7[%c0, %c0_1] : memref<128x128xbf16, #tpu.memory_space<vmem>>, vector<128x128xbf16>
    %c0_2 = arith.constant 0 : index
    %c0_3 = arith.constant 0 : index
    %4 = vector.load %arg5[%c0_2, %c0_3] : memref<128x512xbf16, #tpu.memory_space<vmem>>, vector<128x512xbf16>
    %cst = arith.constant dense<0.000000e+00> : vector<128x512xf32>
    %5 = tpu.matmul %3, %4, %cst {dimension_numbers = #tpu.dot_dimension_numbers<[1], [0], [0], [1], [0, 0, 1, 1], [], []>} : vector<128x128xbf16>, vector<128x512xbf16>, vector<128x512xf32> -> vector<128x512xf32>
    %6 = arith.truncf %5 : vector<128x512xf32> to vector<128x512xbf16>
    %c0_4 = arith.constant 0 : index
    %c0_5 = arith.constant 0 : index
    %7 = vector.load %arg6[%c0_4, %c0_5] : memref<128x512xbf16, #tpu.memory_space<vmem>>, vector<128x512xbf16>
    tpu.vector_store %arg6[%c0_4, %c0_5], %6 {strides = array<i32>} : memref<128x512xbf16, #tpu.memory_space<vmem>>, vector<128x512xbf16>,
    return
  }
  func.func @transform_0(%arg0: i32, %arg1: i32) -> (i32, i32) {
    %c0_i32 = arith.constant 0 : i32
    %c0_i32_0 = arith.constant 0 : i32
    return %arg0, %c0_i32 : i32, i32
  }
  func.func @transform_1(%arg0: i32, %arg1: i32) -> (i32, i32) {
    %c0_i32 = arith.constant 0 : i32
    %c0_i32_0 = arith.constant 0 : i32
    %c0_i32_1 = arith.constant 0 : i32
    return %c0_i32, %c0_i32_0 : i32, i32
  }
  func.func @transform_2(%arg0: i32, %arg1: i32) -> (i32, i32) {
    %c0_i32 = arith.constant 0 : i32
    %c0_i32_0 = arith.constant 0 : i32
    %c0_i32_1 = arith.constant 0 : i32
    return %c0_i32, %c0_i32_0 : i32, i32
  }
  func.func @transform_3(%arg0: i32, %arg1: i32) -> (i32, i32) {
    %c0_i32 = arith.constant 0 : i32
    %c0_i32_0 = arith.constant 0 : i32
    return %c0_i32, %arg1 : i32, i32
  }
  func.func @transform_4(%arg0: i32, %arg1: i32) -> (i32, i32) {
    %c0_i32 = arith.constant 0 : i32
    return %arg0, %arg1 : i32, i32
  }
}

</mosaic_0001>

<llo_original>
// kernel: _lambda_.13
$region0: #{_lambda_.13}
  #allocation0 [shape = 'u32[]', space=smem, size = 0x4, offset = 0x4, fixed_abs, tag = 'smem constant byte address 0x4 - core index']
  #allocation1 [shape = 'u32[144,128]{1,0:T(1,128)}', space=vmem, size = 0x12000, scoped, tag = 'internal scratch']
  #allocation2 [shape = 'f32[128,128]{1,0:T(8,128)}', space=vmem, size = 0x10000, scoped, tag = 'scratch operand']
  %s0 = inlined_call_operand.vmem [shape: bf16[1,128,128], index: 0, kind: input, shape index: {}]
  %s1 = inlined_call_operand.vmem [shape: bf16[1,128,128], index: 1, kind: input, shape index: {}]
  %s2 = inlined_call_operand.vmem [shape: f32[1,128], index: 2, kind: input, shape index: {}]
  %s3 = inlined_call_operand.vmem [shape: bf16[128,128], index: 3, kind: input, shape index: {}]
  %s4 = inlined_call_operand.vmem [shape: bf16[128,128], index: 4, kind: output, shape index: {}]
  %s5 = sld [smem:[#allocation0]]
  $region34: #{_lambda_.13} parent=0
    _
  %s7 = ssub.s32 1, %s5
  %s8 = scalar_select 0, %s7, %s5
  // Predicated region
  $region2: #{_lambda_.13} parent=0 // pred_check
    _
  $region3: #{_lambda_.13} parent=0 // pred_check_branch
    %10 = sbr.rel (0) target = $region5
  $region4: #{_lambda_.13} parent=0 // pred_region
    _
  $region5: #{_lambda_.13} parent=0 // pred_fallthru
    _
  // Predicated region
  $region6: #{_lambda_.13} parent=0 // pred_check
    _
  $region7: #{_lambda_.13} parent=0 // pred_check_branch
    %12 = sbr.rel (0) target = $region9
  $region8: #{_lambda_.13} parent=0 // pred_region
    _
  $region9: #{_lambda_.13} parent=0 // pred_fallthru
    _
  // Predicated region
  $region10: #{_lambda_.13} parent=0 // pred_check
    _
  $region11: #{_lambda_.13} parent=0 // pred_check_branch
    %14 = sbr.rel (0) target = $region13
  $region12: #{_lambda_.13} parent=0 // pred_region
    _
  $region13: #{_lambda_.13} parent=0 // pred_fallthru
    _
  // Predicated region
  $region14: #{_lambda_.13} parent=0 // pred_check
    _
  $region15: #{_lambda_.13} parent=0 // pred_check_branch
    %16 = sbr.rel (0) target = $region17
  $region16: #{_lambda_.13} parent=0 // pred_region
    _
  $region17: #{_lambda_.13} parent=0 // pred_fallthru
    _
  %p18 = scmp.eq.s32.totalorder 0, 0
  // Predicated region
  $region18: #{_lambda_.13} parent=0 // pred_check
    %p19 = pneg %p18
  $region19: #{_lambda_.13} parent=0 // pred_check_branch
    %21 = sbr.rel (%p19) target = $region21
  $region20: #{_lambda_.13} parent=0 // pred_region
    %22 = vst [vmem:[#allocation2] sm:$0xff] 0.0
    %23 = vst [vmem:[#allocation2 + $0x8] sm:$0xff] 0.0
    %24 = vst [vmem:[#allocation2 + $0x10] sm:$0xff] 0.0
    %25 = vst [vmem:[#allocation2 + $0x18] sm:$0xff] 0.0
    %26 = vst [vmem:[#allocation2 + $0x20] sm:$0xff] 0.0
    %27 = vst [vmem:[#allocation2 + $0x28] sm:$0xff] 0.0
    %28 = vst [vmem:[#allocation2 + $0x30] sm:$0xff] 0.0
    %29 = vst [vmem:[#allocation2 + $0x38] sm:$0xff] 0.0
    %30 = vst [vmem:[#allocation2 + $0x40] sm:$0xff] 0.0
    %31 = vst [vmem:[#allocation2 + $0x48] sm:$0xff] 0.0
    %32 = vst [vmem:[#allocation2 + $0x50] sm:$0xff] 0.0
    %33 = vst [vmem:[#allocation2 + $0x58] sm:$0xff] 0.0
    %34 = vst [vmem:[#allocation2 + $0x60] sm:$0xff] 0.0
    %35 = vst [vmem:[#allocation2 + $0x68] sm:$0xff] 0.0
    %36 = vst [vmem:[#allocation2 + $0x70] sm:$0xff] 0.0
    %37 = vst [vmem:[#allocation2 + $0x78] sm:$0xff] 0.0
  $region21: #{_lambda_.13} parent=0 // pred_fallthru
    _
  %v38 = vld [vmem:[#allocation2] sm:$0xff]
  %v39 = vld [vmem:[#allocation2 + $0x8] sm:$0xff]
  %v40 = vld [vmem:[#allocation2 + $0x10] sm:$0xff]
  %v41 = vld [vmem:[#allocation2 + $0x18] sm:$0xff]
  %v42 = vld [vmem:[#allocation2 + $0x20] sm:$0xff]
  %v43 = vld [vmem:[#allocation2 + $0x28] sm:$0xff]
  %v44 = vld [vmem:[#allocation2 + $0x30] sm:$0xff]
  %v45 = vld [vmem:[#allocation2 + $0x38] sm:$0xff]
  %v46 = vld [vmem:[#allocation2 + $0x40] sm:$0xff]
  %v47 = vld [vmem:[#allocation2 + $0x48] sm:$0xff]
  %v48 = vld [vmem:[#allocation2 + $0x50] sm:$0xff]
  %v49 = vld [vmem:[#allocation2 + $0x58] sm:$0xff]
  %v50 = vld [vmem:[#allocation2 + $0x60] sm:$0xff]
  %v51 = vld [vmem:[#allocation2 + $0x68] sm:$0xff]
  %v52 = vld [vmem:[#allocation2 + $0x70] sm:$0xff]
  %v53 = vld [vmem:[#allocation2 + $0x78] sm:$0xff]
  %v54 = vld [vmem:[%s0] sm:$0xf]
  %v55 = vld [vmem:[%s0 + $0x4] sm:$0xf]
  %v56 = vld [vmem:[%s0 + $0x8] sm:$0xf]
  %v57 = vld [vmem:[%s0 + $0xc] sm:$0xf]
  %v58 = vld [vmem:[%s0 + $0x10] sm:$0xf]
  %v59 = vld [vmem:[%s0 + $0x14] sm:$0xf]
  %v60 = vld [vmem:[%s0 + $0x18] sm:$0xf]
  %v61 = vld [vmem:[%s0 + $0x1c] sm:$0xf]
  %v62 = vld [vmem:[%s0 + $0x20] sm:$0xf]
  %v63 = vld [vmem:[%s0 + $0x24] sm:$0xf]
  %v64 = vld [vmem:[%s0 + $0x28] sm:$0xf]
  %v65 = vld [vmem:[%s0 + $0x2c] sm:$0xf]
  %v66 = vld [vmem:[%s0 + $0x30] sm:$0xf]
  %v67 = vld [vmem:[%s0 + $0x34] sm:$0xf]
  %v68 = vld [vmem:[%s0 + $0x38] sm:$0xf]
  %v69 = vld [vmem:[%s0 + $0x3c] sm:$0xf]
  %v70 = vld [vmem:[%s1] sm:$0xf]
  %v71 = vld [vmem:[%s1 + $0x4] sm:$0xf]
  %v72 = vld [vmem:[%s1 + $0x8] sm:$0xf]
  %v73 = vld [vmem:[%s1 + $0xc] sm:$0xf]
  %v74 = vld [vmem:[%s1 + $0x10] sm:$0xf]
  %v75 = vld [vmem:[%s1 + $0x14] sm:$0xf]
  %v76 = vld [vmem:[%s1 + $0x18] sm:$0xf]
  %v77 = vld [vmem:[%s1 + $0x1c] sm:$0xf]
  %v78 = vld [vmem:[%s1 + $0x20] sm:$0xf]
  %v79 = vld [vmem:[%s1 + $0x24] sm:$0xf]
  %v80 = vld [vmem:[%s1 + $0x28] sm:$0xf]
  %v81 = vld [vmem:[%s1 + $0x2c] sm:$0xf]
  %v82 = vld [vmem:[%s1 + $0x30] sm:$0xf]
  %v83 = vld [vmem:[%s1 + $0x34] sm:$0xf]
  %v84 = vld [vmem:[%s1 + $0x38] sm:$0xf]
  %v85 = vld [vmem:[%s1 + $0x3c] sm:$0xf]
  %v102 = vunpack.c.l.b16 %v54
  %v103 = vunpack.c.l.b16 %v55
  %v104 = vunpack.c.l.b16 %v56
  %v105 = vunpack.c.l.b16 %v57
  %v106 = vunpack.c.l.b16 %v58
  %v107 = vunpack.c.l.b16 %v59
  %v108 = vunpack.c.l.b16 %v60
  %v109 = vunpack.c.l.b16 %v61
  %v110 = vunpack.c.l.b16 %v62
  %v111 = vunpack.c.l.b16 %v63
  %v112 = vunpack.c.l.b16 %v64
  %v113 = vunpack.c.l.b16 %v65
  %v114 = vunpack.c.l.b16 %v66
  %v115 = vunpack.c.l.b16 %v67
  %v116 = vunpack.c.l.b16 %v68
  %v117 = vunpack.c.l.b16 %v69
  %v118 = vpack.c.b16 %v103, %v102
  %v119 = vpack.c.b16 %v105, %v104
  %v120 = vpack.c.b16 %v107, %v106
  %v121 = vpack.c.b16 %v109, %v108
  %v122 = vpack.c.b16 %v111, %v110
  %v123 = vpack.c.b16 %v113, %v112
  %v124 = vpack.c.b16 %v115, %v114
  %v125 = vpack.c.b16 %v117, %v116
  %v150 = vunpack.c.l.b16 %v70
  %v151 = vunpack.c.l.b16 %v71
  %v152 = vunpack.c.l.b16 %v72
  %v153 = vunpack.c.l.b16 %v73
  %v154 = vunpack.c.l.b16 %v74
  %v155 = vunpack.c.l.b16 %v75
  %v156 = vunpack.c.l.b16 %v76
  %v157 = vunpack.c.l.b16 %v77
  %v158 = vunpack.c.l.b16 %v78
  %v159 = vunpack.c.l.b16 %v79
  %v160 = vunpack.c.l.b16 %v80
  %v161 = vunpack.c.l.b16 %v81
  %v162 = vunpack.c.l.b16 %v82
  %v163 = vunpack.c.l.b16 %v83
  %v164 = vunpack.c.l.b16 %v84
  %v165 = vunpack.c.l.b16 %v85
  %v166 = vpack.c.b16 %v151, %v150
  %v167 = vpack.c.b16 %v153, %v152
  %v168 = vpack.c.b16 %v155, %v154
  %v169 = vpack.c.b16 %v157, %v156
  %v170 = vpack.c.b16 %v159, %v158
  %v171 = vpack.c.b16 %v161, %v160
  %v172 = vpack.c.b16 %v163, %v162
  %v173 = vpack.c.b16 %v165, %v164
  %182 = vmatprep.subr.bf16.mxu0 0
  %183 = vmatpush1.bf16.msra.mxu0 %v173
  %184 = vmatprep.subr.bf16.mxu0 0
  %185 = vmatpush1.bf16.msra.mxu0 %v172
  %186 = vmatprep.subr.bf16.mxu0 0
  %187 = vmatpush1.bf16.msra.mxu0 %v171
  %188 = vmatprep.subr.bf16.mxu0 0
  %189 = vmatpush1.bf16.msra.mxu0 %v170
  %190 = vmatprep.subr.bf16.mxu0 0
  %191 = vmatpush1.bf16.msra.mxu0 %v169
  %192 = vmatprep.subr.bf16.mxu0 0
  %193 = vmatpush1.bf16.msra.mxu0 %v168
  %194 = vmatprep.subr.bf16.mxu0 0
  %195 = vmatpush1.bf16.msra.mxu0 %v167
  %196 = vmatprep.subr.bf16.mxu0 0
  %197 = vmatpush1.bf16.msra.mxu0 %v166
  %198 = vmatprep.subr.bf16.mxu0 0
  %199 = vmatpush2.bf16.msra.mxu0 0
  %200 = vmatprep.subr.bf16.mxu0 0
  %201 = vmatpush2.bf16.msra.mxu0 0
  %202 = vmatprep.subr.bf16.mxu0 0
  %203 = vmatpush2.bf16.msra.mxu0 0
  %204 = vmatprep.subr.bf16.mxu0 0
  %205 = vmatpush2.bf16.msra.mxu0 0
  %206 = vmatprep.subr.bf16.mxu0 0
  %207 = vmatpush2.bf16.msra.mxu0 0
  %208 = vmatprep.subr.bf16.mxu0 0
  %209 = vmatpush2.bf16.msra.mxu0 0
  %210 = vmatprep.subr.bf16.mxu0 0
  %211 = vmatpush2.bf16.msra.mxu0 0
  %212 = vmatprep.subr.bf16.mxu0 0
  %213 = vmatpush2.bf16.msra.mxu0 0
  %214 = vmatprep.mubr.bf16.mxu0 0
  %215 = vmatmul.mubr.bf16.gmra.mxu0 %v118
  %v216 = vpop.f32.mrf.mxu0
  %v217 = vadd.f32 0.0, %v216
  %v218 = vpop.f32.mrf.mxu0
  %v219 = vpop.f32.mrf.mxu0
  %v220 = vadd.f32 0.0, %v219
  %v221 = vpop.f32.mrf.mxu0
  %222 = vmatprep.mubr.bf16.mxu0 0
  %223 = vmatmul.mubr.bf16.gmra.mxu0 %v119
  %v224 = vpop.f32.mrf.mxu0
  %v225 = vadd.f32 0.0, %v224
  %v226 = vpop.f32.mrf.mxu0
  %v227 = vpop.f32.mrf.mxu0
  %v228 = vadd.f32 0.0, %v227
  %v229 = vpop.f32.mrf.mxu0
  %230 = vmatprep.mubr.bf16.mxu0 0
  %231 = vmatmul.mubr.bf16.gmra.mxu0 %v120
  %v232 = vpop.f32.mrf.mxu0
  %v233 = vadd.f32 0.0, %v232
  %v234 = vpop.f32.mrf.mxu0
  %v235 = vpop.f32.mrf.mxu0
  %v236 = vadd.f32 0.0, %v235
  %v237 = vpop.f32.mrf.mxu0
  %238 = vmatprep.mubr.bf16.mxu0 0
  %239 = vmatmul.mubr.bf16.gmra.mxu0 %v121
  %v240 = vpop.f32.mrf.mxu0
  %v241 = vadd.f32 0.0, %v240
  %v242 = vpop.f32.mrf.mxu0
  %v243 = vpop.f32.mrf.mxu0
  %v244 = vadd.f32 0.0, %v243
  %v245 = vpop.f32.mrf.mxu0
  %246 = vmatprep.mubr.bf16.mxu0 0
  %247 = vmatmul.mubr.bf16.gmra.mxu0 %v122
  %v248 = vpop.f32.mrf.mxu0
  %v249 = vadd.f32 0.0, %v248
  %v250 = vpop.f32.mrf.mxu0
  %v251 = vpop.f32.mrf.mxu0
  %v252 = vadd.f32 0.0, %v251
  %v253 = vpop.f32.mrf.mxu0
  %254 = vmatprep.mubr.bf16.mxu0 0
  %255 = vmatmul.mubr.bf16.gmra.mxu0 %v123
  %v256 = vpop.f32.mrf.mxu0
  %v257 = vadd.f32 0.0, %v256
  %v258 = vpop.f32.mrf.mxu0
  %v259 = vpop.f32.mrf.mxu0
  %v260 = vadd.f32 0.0, %v259
  %v261 = vpop.f32.mrf.mxu0
  %262 = vmatprep.mubr.bf16.mxu0 0
  %263 = vmatmul.mubr.bf16.gmra.mxu0 %v124
  %v264 = vpop.f32.mrf.mxu0
  %v265 = vadd.f32 0.0, %v264
  %v266 = vpop.f32.mrf.mxu0
  %v267 = vpop.f32.mrf.mxu0
  %v268 = vadd.f32 0.0, %v267
  %v269 = vpop.f32.mrf.mxu0
  %270 = vmatprep.mubr.bf16.mxu0 0
  %271 = vmatmul.mubr.bf16.gmra.mxu0 %v125
  %v272 = vpop.f32.mrf.mxu0
  %v273 = vadd.f32 0.0, %v272
  %v274 = vpop.f32.mrf.mxu0
  %v275 = vpop.f32.mrf.mxu0
  %v276 = vadd.f32 0.0, %v275
  %v277 = vpop.f32.mrf.mxu0
  %278 = vdwg.mxu0
  %v279 = vadd.f32 %v38, %v217
  %v280 = vadd.f32 %v39, %v220
  %v281 = vadd.f32 %v40, %v225
  %v282 = vadd.f32 %v41, %v228
  %v283 = vadd.f32 %v42, %v233
  %v284 = vadd.f32 %v43, %v236
  %v285 = vadd.f32 %v44, %v241
  %v286 = vadd.f32 %v45, %v244
  %v287 = vadd.f32 %v46, %v249
  %v288 = vadd.f32 %v47, %v252
  %v289 = vadd.f32 %v48, %v257
  %v290 = vadd.f32 %v49, %v260
  %v291 = vadd.f32 %v50, %v265
  %v292 = vadd.f32 %v51, %v268
  %v293 = vadd.f32 %v52, %v273
  %v294 = vadd.f32 %v53, %v276
  %295 = vst [vmem:[#allocation2] sm:$0xff] %v279
  %296 = vst [vmem:[#allocation2 + $0x8] sm:$0xff] %v280
  %297 = vst [vmem:[#allocation2 + $0x10] sm:$0xff] %v281
  %298 = vst [vmem:[#allocation2 + $0x18] sm:$0xff] %v282
  %299 = vst [vmem:[#allocation2 + $0x20] sm:$0xff] %v283
  %300 = vst [vmem:[#allocation2 + $0x28] sm:$0xff] %v284
  %301 = vst [vmem:[#allocation2 + $0x30] sm:$0xff] %v285
  %302 = vst [vmem:[#allocation2 + $0x38] sm:$0xff] %v286
  %303 = vst [vmem:[#allocation2 + $0x40] sm:$0xff] %v287
  %304 = vst [vmem:[#allocation2 + $0x48] sm:$0xff] %v288
  %305 = vst [vmem:[#allocation2 + $0x50] sm:$0xff] %v289
  %306 = vst [vmem:[#allocation2 + $0x58] sm:$0xff] %v290
  %307 = vst [vmem:[#allocation2 + $0x60] sm:$0xff] %v291
  %308 = vst [vmem:[#allocation2 + $0x68] sm:$0xff] %v292
  %309 = vst [vmem:[#allocation2 + $0x70] sm:$0xff] %v293
  %310 = vst [vmem:[#allocation2 + $0x78] sm:$0xff] %v294
  // Predicated region
  $region22: #{_lambda_.13} parent=0 // pred_check
    %p311 = pneg %p18
  $region23: #{_lambda_.13} parent=0 // pred_check_branch
    %313 = sbr.rel (%p311) target = $region25
  $region24: #{_lambda_.13} parent=0 // pred_region
    %v314 = vld [vmem:[#allocation2] sm:$0xff]
    %v315 = vld [vmem:[#allocation2 + $0x8] sm:$0xff]
    %v316 = vld [vmem:[#allocation2 + $0x10] sm:$0xff]
    %v317 = vld [vmem:[#allocation2 + $0x18] sm:$0xff]
    %v318 = vld [vmem:[#allocation2 + $0x20] sm:$0xff]
    %v319 = vld [vmem:[#allocation2 + $0x28] sm:$0xff]
    %v320 = vld [vmem:[#allocation2 + $0x30] sm:$0xff]
    %v321 = vld [vmem:[#allocation2 + $0x38] sm:$0xff]
    %v322 = vld [vmem:[#allocation2 + $0x40] sm:$0xff]
    %v323 = vld [vmem:[#allocation2 + $0x48] sm:$0xff]
    %v324 = vld [vmem:[#allocation2 + $0x50] sm:$0xff]
    %v325 = vld [vmem:[#allocation2 + $0x58] sm:$0xff]
    %v326 = vld [vmem:[#allocation2 + $0x60] sm:$0xff]
    %v327 = vld [vmem:[#allocation2 + $0x68] sm:$0xff]
    %v328 = vld [vmem:[#allocation2 + $0x70] sm:$0xff]
    %v329 = vld [vmem:[#allocation2 + $0x78] sm:$0xff]
    %v330 = vld [vmem:[%s2] sm:$0x1]
    %v332 = vlaneseq
    %v333 = vshrl.u32 %v332, 7
    %v334 = vsub.s32 0, %v333
    %v335 = vrot.slane %v330, %v334
    %v337 = vadd.f32 %v314, %v335
    %v338 = vadd.f32 %v315, %v335
    %v339 = vadd.f32 %v316, %v335
    %v340 = vadd.f32 %v317, %v335
    %v341 = vadd.f32 %v318, %v335
    %v342 = vadd.f32 %v319, %v335
    %v343 = vadd.f32 %v320, %v335
    %v344 = vadd.f32 %v321, %v335
    %v345 = vadd.f32 %v322, %v335
    %v346 = vadd.f32 %v323, %v335
    %v347 = vadd.f32 %v324, %v335
    %v348 = vadd.f32 %v325, %v335
    %v349 = vadd.f32 %v326, %v335
    %v350 = vadd.f32 %v327, %v335
    %v351 = vadd.f32 %v328, %v335
    %v352 = vadd.f32 %v329, %v335
    %v353 = vld [vmem:[%s3] sm:$0xf]
    %v354 = vld [vmem:[%s3 + $0x4] sm:$0xf]
    %v355 = vld [vmem:[%s3 + $0x8] sm:$0xf]
    %v356 = vld [vmem:[%s3 + $0xc] sm:$0xf]
    %v357 = vld [vmem:[%s3 + $0x10] sm:$0xf]
    %v358 = vld [vmem:[%s3 + $0x14] sm:$0xf]
    %v359 = vld [vmem:[%s3 + $0x18] sm:$0xf]
    %v360 = vld [vmem:[%s3 + $0x1c] sm:$0xf]
    %v361 = vld [vmem:[%s3 + $0x20] sm:$0xf]
    %v362 = vld [vmem:[%s3 + $0x24] sm:$0xf]
    %v363 = vld [vmem:[%s3 + $0x28] sm:$0xf]
    %v364 = vld [vmem:[%s3 + $0x2c] sm:$0xf]
    %v365 = vld [vmem:[%s3 + $0x30] sm:$0xf]
    %v366 = vld [vmem:[%s3 + $0x34] sm:$0xf]
    %v367 = vld [vmem:[%s3 + $0x38] sm:$0xf]
    %v368 = vld [vmem:[%s3 + $0x3c] sm:$0xf]
    %v369 = vunpack.c.l.bf16 %v353
    %v370 = vunpack.c.l.bf16 %v354
    %v371 = vunpack.c.l.bf16 %v355
    %v372 = vunpack.c.l.bf16 %v356
    %v373 = vunpack.c.l.bf16 %v357
    %v374 = vunpack.c.l.bf16 %v358
    %v375 = vunpack.c.l.bf16 %v359
    %v376 = vunpack.c.l.bf16 %v360
    %v377 = vunpack.c.l.bf16 %v361
    %v378 = vunpack.c.l.bf16 %v362
    %v379 = vunpack.c.l.bf16 %v363
    %v380 = vunpack.c.l.bf16 %v364
    %v381 = vunpack.c.l.bf16 %v365
    %v382 = vunpack.c.l.bf16 %v366
    %v383 = vunpack.c.l.bf16 %v367
    %v384 = vunpack.c.l.bf16 %v368
    %v385 = vadd.f32 %v337, %v369
    %v386 = vadd.f32 %v338, %v370
    %v387 = vadd.f32 %v339, %v371
    %v388 = vadd.f32 %v340, %v372
    %v389 = vadd.f32 %v341, %v373
    %v390 = vadd.f32 %v342, %v374
    %v391 = vadd.f32 %v343, %v375
    %v392 = vadd.f32 %v344, %v376
    %v393 = vadd.f32 %v345, %v377
    %v394 = vadd.f32 %v346, %v378
    %v395 = vadd.f32 %v347, %v379
    %v396 = vadd.f32 %v348, %v380
    %v397 = vadd.f32 %v349, %v381
    %v398 = vadd.f32 %v350, %v382
    %v399 = vadd.f32 %v351, %v383
    %v400 = vadd.f32 %v352, %v384
    %v401 = vpack.c.bf16 %v386, %v385
    %v402 = vpack.c.bf16 %v388, %v387
    %v403 = vpack.c.bf16 %v390, %v389
    %v404 = vpack.c.bf16 %v392, %v391
    %v405 = vpack.c.bf16 %v394, %v393
    %v406 = vpack.c.bf16 %v396, %v395
    %v407 = vpack.c.bf16 %v398, %v397
    %v408 = vpack.c.bf16 %v400, %v399
    %v417 = vunpack.c.l.b16 %v401
    %v418 = vunpack.c.h.b16 %v401
    %v419 = vunpack.c.l.b16 %v402
    %v420 = vunpack.c.h.b16 %v402
    %v421 = vunpack.c.l.b16 %v403
    %v422 = vunpack.c.h.b16 %v403
    %v423 = vunpack.c.l.b16 %v404
    %v424 = vunpack.c.h.b16 %v404
    %v425 = vunpack.c.l.b16 %v405
    %v426 = vunpack.c.h.b16 %v405
    %v427 = vunpack.c.l.b16 %v406
    %v428 = vunpack.c.h.b16 %v406
    %v429 = vunpack.c.l.b16 %v407
    %v430 = vunpack.c.h.b16 %v407
    %v431 = vunpack.c.l.b16 %v408
    %v432 = vunpack.c.h.b16 %v408
    %v433 = vpack.c.b16 %v417, %v417
    %v434 = vpack.c.b16 %v418, %v418
    %v435 = vpack.c.b16 %v419, %v419
    %v436 = vpack.c.b16 %v420, %v420
    %v437 = vpack.c.b16 %v421, %v421
    %v438 = vpack.c.b16 %v422, %v422
    %v439 = vpack.c.b16 %v423, %v423
    %v440 = vpack.c.b16 %v424, %v424
    %v441 = vpack.c.b16 %v425, %v425
    %v442 = vpack.c.b16 %v426, %v426
    %v443 = vpack.c.b16 %v427, %v427
    %v444 = vpack.c.b16 %v428, %v428
    %v445 = vpack.c.b16 %v429, %v429
    %v446 = vpack.c.b16 %v430, %v430
    %v447 = vpack.c.b16 %v431, %v431
    %v448 = vpack.c.b16 %v432, %v432
    %465 = vst [vmem:[%s4] sm:$0xf] %v433
    %466 = vst [vmem:[%s4 + $0x4] sm:$0xf] %v434
    %467 = vst [vmem:[%s4 + $0x8] sm:$0xf] %v435
    %468 = vst [vmem:[%s4 + $0xc] sm:$0xf] %v436
    %469 = vst [vmem:[%s4 + $0x10] sm:$0xf] %v437
    %470 = vst [vmem:[%s4 + $0x14] sm:$0xf] %v438
    %471 = vst [vmem:[%s4 + $0x18] sm:$0xf] %v439
    %472 = vst [vmem:[%s4 + $0x1c] sm:$0xf] %v440
    %473 = vst [vmem:[%s4 + $0x20] sm:$0xf] %v441
    %474 = vst [vmem:[%s4 + $0x24] sm:$0xf] %v442
    %475 = vst [vmem:[%s4 + $0x28] sm:$0xf] %v443
    %476 = vst [vmem:[%s4 + $0x2c] sm:$0xf] %v444
    %477 = vst [vmem:[%s4 + $0x30] sm:$0xf] %v445
    %478 = vst [vmem:[%s4 + $0x34] sm:$0xf] %v446
    %479 = vst [vmem:[%s4 + $0x38] sm:$0xf] %v447
    %480 = vst [vmem:[%s4 + $0x3c] sm:$0xf] %v448
  $region25: #{_lambda_.13} parent=0 // pred_fallthru
    _
  // Predicated region
  $region26: #{_lambda_.13} parent=0 // pred_check
    _
  $region27: #{_lambda_.13} parent=0 // pred_check_branch
    %482 = sbr.rel (0) target = $region29
  $region28: #{_lambda_.13} parent=0 // pred_region
    _
  $region29: #{_lambda_.13} parent=0 // pred_fallthru
    _
  // Predicated region
  $region30: #{_lambda_.13} parent=0 // pred_check
    _
  $region31: #{_lambda_.13} parent=0 // pred_check_branch
    %484 = sbr.rel (0) target = $region33
  $region32: #{_lambda_.13} parent=0 // pred_region
    _
  $region33: #{_lambda_.13} parent=0 // pred_fallthru
    _

// kernel: _lambda_.11
$region0: #{_lambda_.11}
  #allocation0 [shape = 'u32[]', space=smem, size = 0x4, offset = 0x4, fixed_abs, tag = 'smem constant byte address 0x4 - core index']
  #allocation1 [shape = 'u32[144,128]{1,0:T(1,128)}', space=vmem, size = 0x12000, scoped, tag = 'internal scratch']
  #allocation2 [shape = 'bf16[128,128]{1,0:T(8,128)(2,1)}', space=vmem, size = 0x8000, scoped, tag = 'scratch operand']
  %s0 = inlined_call_operand.vmem [shape: bf16[128,128], index: 0, kind: input, shape index: {}]
  %s1 = inlined_call_operand.vmem [shape: f32[1,128], index: 1, kind: input, shape index: {}]
  %s2 = inlined_call_operand.vmem [shape: f32[1,128], index: 2, kind: input, shape index: {}]
  %s3 = inlined_call_operand.vmem [shape: bf16[1,128,384], index: 3, kind: input, shape index: {}]
  %s4 = inlined_call_operand.vmem [shape: f32[1,1,384], index: 4, kind: input, shape index: {}]
  %s5 = inlined_call_operand.vmem [shape: bf16[1,128,128], index: 5, kind: output, shape index: {0}]
  %s6 = inlined_call_operand.vmem [shape: bf16[1,128,128], index: 6, kind: output, shape index: {1}]
  %s7 = inlined_call_operand.vmem [shape: bf16[1,128,128], index: 7, kind: output, shape index: {2}]
  %8 = xla_tuple %s5, %s6, %s7
  %s9 = sld [smem:[#allocation0]]
  $region50: #{_lambda_.11} parent=0
    _
  %s11 = ssub.s32 1, %s9
  %s12 = scalar_select 0, %s11, %s9
  // Predicated region
  $region2: #{_lambda_.11} parent=0 // pred_check
    _
  $region3: #{_lambda_.11} parent=0 // pred_check_branch
    %14 = sbr.rel (0) target = $region5
  $region4: #{_lambda_.11} parent=0 // pred_region
    _
  $region5: #{_lambda_.11} parent=0 // pred_fallthru
    _
  // Predicated region
  $region6: #{_lambda_.11} parent=0 // pred_check
    _
  $region7: #{_lambda_.11} parent=0 // pred_check_branch
    %16 = sbr.rel (0) target = $region9
  $region8: #{_lambda_.11} parent=0 // pred_region
    _
  $region9: #{_lambda_.11} parent=0 // pred_fallthru
    _
  // Predicated region
  $region10: #{_lambda_.11} parent=0 // pred_check
    _
  $region11: #{_lambda_.11} parent=0 // pred_check_branch
    %18 = sbr.rel (0) target = $region13
  $region12: #{_lambda_.11} parent=0 // pred_region
    _
  $region13: #{_lambda_.11} parent=0 // pred_fallthru
    _
  // Predicated region
  $region14: #{_lambda_.11} parent=0 // pred_check
    _
  $region15: #{_lambda_.11} parent=0 // pred_check_branch
    %20 = sbr.rel (0) target = $region17
  $region16: #{_lambda_.11} parent=0 // pred_region
    _
  $region17: #{_lambda_.11} parent=0 // pred_fallthru
    _
  // Predicated region
  $region18: #{_lambda_.11} parent=0 // pred_check
    _
  $region19: #{_lambda_.11} parent=0 // pred_check_branch
    %22 = sbr.rel (0) target = $region21
  $region20: #{_lambda_.11} parent=0 // pred_region
    _
  $region21: #{_lambda_.11} parent=0 // pred_fallthru
    _
  %p24 = scmp.eq.s32.totalorder 0, 0
  // Predicated region
  $region22: #{_lambda_.11} parent=0 // pred_check
    %p25 = pneg %p24
  $region23: #{_lambda_.11} parent=0 // pred_check_branch
    %27 = sbr.rel (%p25) target = $region25
  $region24: #{_lambda_.11} parent=0 // pred_region
    %v28 = vld [vmem:[%s0] sm:$0xf]
    %v29 = vld [vmem:[%s0 + $0x4] sm:$0xf]
    %v30 = vld [vmem:[%s0 + $0x8] sm:$0xf]
    %v31 = vld [vmem:[%s0 + $0xc] sm:$0xf]
    %v32 = vld [vmem:[%s0 + $0x10] sm:$0xf]
    %v33 = vld [vmem:[%s0 + $0x14] sm:$0xf]
    %v34 = vld [vmem:[%s0 + $0x18] sm:$0xf]
    %v35 = vld [vmem:[%s0 + $0x1c] sm:$0xf]
    %v36 = vld [vmem:[%s0 + $0x20] sm:$0xf]
    %v37 = vld [vmem:[%s0 + $0x24] sm:$0xf]
    %v38 = vld [vmem:[%s0 + $0x28] sm:$0xf]
    %v39 = vld [vmem:[%s0 + $0x2c] sm:$0xf]
    %v40 = vld [vmem:[%s0 + $0x30] sm:$0xf]
    %v41 = vld [vmem:[%s0 + $0x34] sm:$0xf]
    %v42 = vld [vmem:[%s0 + $0x38] sm:$0xf]
    %v43 = vld [vmem:[%s0 + $0x3c] sm:$0xf]
    %v44 = vunpack.c.l.bf16 %v28
    %v45 = vunpack.c.l.bf16 %v29
    %v46 = vunpack.c.l.bf16 %v30
    %v47 = vunpack.c.l.bf16 %v31
    %v48 = vunpack.c.l.bf16 %v32
    %v49 = vunpack.c.l.bf16 %v33
    %v50 = vunpack.c.l.bf16 %v34
    %v51 = vunpack.c.l.bf16 %v35
    %v52 = vunpack.c.l.bf16 %v36
    %v53 = vunpack.c.l.bf16 %v37
    %v54 = vunpack.c.l.bf16 %v38
    %v55 = vunpack.c.l.bf16 %v39
    %v56 = vunpack.c.l.bf16 %v40
    %v57 = vunpack.c.l.bf16 %v41
    %v58 = vunpack.c.l.bf16 %v42
    %v59 = vunpack.c.l.bf16 %v43
    %v60 = vld [vmem:[%s1] sm:$0x1]
    %v61 = vld [vmem:[%s2] sm:$0x1]
    %62 = vadd.xlane.f32.xlu0 %v44
    %v63 = vpop.xlane.xlu0 %62
    %64 = vadd.xlane.f32.xlu0 %v45
    %v65 = vpop.xlane.xlu0 %64
    %66 = vadd.xlane.f32.xlu0 %v46
    %v67 = vpop.xlane.xlu0 %66
    %68 = vadd.xlane.f32.xlu0 %v47
    %v69 = vpop.xlane.xlu0 %68
    %70 = vadd.xlane.f32.xlu0 %v48
    %v71 = vpop.xlane.xlu0 %70
    %72 = vadd.xlane.f32.xlu0 %v49
    %v73 = vpop.xlane.xlu0 %72
    %74 = vadd.xlane.f32.xlu0 %v50
    %v75 = vpop.xlane.xlu0 %74
    %76 = vadd.xlane.f32.xlu0 %v51
    %v77 = vpop.xlane.xlu0 %76
    %78 = vadd.xlane.f32.xlu0 %v52
    %v79 = vpop.xlane.xlu0 %78
    %80 = vadd.xlane.f32.xlu0 %v53
    %v81 = vpop.xlane.xlu0 %80
    %82 = vadd.xlane.f32.xlu0 %v54
    %v83 = vpop.xlane.xlu0 %82
    %84 = vadd.xlane.f32.xlu0 %v55
    %v85 = vpop.xlane.xlu0 %84
    %86 = vadd.xlane.f32.xlu0 %v56
    %v87 = vpop.xlane.xlu0 %86
    %88 = vadd.xlane.f32.xlu0 %v57
    %v89 = vpop.xlane.xlu0 %88
    %90 = vadd.xlane.f32.xlu0 %v58
    %v91 = vpop.xlane.xlu0 %90
    %92 = vadd.xlane.f32.xlu0 %v59
    %v93 = vpop.xlane.xlu0 %92
    %v94 = vrcp.pop 128.0
    %v95 = vmul.f32 %v63, %v94
    %v96 = vmul.f32 %v65, %v94
    %v97 = vmul.f32 %v67, %v94
    %v98 = vmul.f32 %v69, %v94
    %v99 = vmul.f32 %v71, %v94
    %v100 = vmul.f32 %v73, %v94
    %v101 = vmul.f32 %v75, %v94
    %v102 = vmul.f32 %v77, %v94
    %v103 = vmul.f32 %v79, %v94
    %v104 = vmul.f32 %v81, %v94
    %v105 = vmul.f32 %v83, %v94
    %v106 = vmul.f32 %v85, %v94
    %v107 = vmul.f32 %v87, %v94
    %v108 = vmul.f32 %v89, %v94
    %v109 = vmul.f32 %v91, %v94
    %v110 = vmul.f32 %v93, %v94
    %v111 = vsub.f32 %v44, %v95
    %v112 = vsub.f32 %v45, %v96
    %v113 = vsub.f32 %v46, %v97
    %v114 = vsub.f32 %v47, %v98
    %v115 = vsub.f32 %v48, %v99
    %v116 = vsub.f32 %v49, %v100
    %v117 = vsub.f32 %v50, %v101
    %v118 = vsub.f32 %v51, %v102
    %v119 = vsub.f32 %v52, %v103
    %v120 = vsub.f32 %v53, %v104
    %v121 = vsub.f32 %v54, %v105
    %v122 = vsub.f32 %v55, %v106
    %v123 = vsub.f32 %v56, %v107
    %v124 = vsub.f32 %v57, %v108
    %v125 = vsub.f32 %v58, %v109
    %v126 = vsub.f32 %v59, %v110
    %v127 = vmul.f32 %v111, %v111
    %v128 = vmul.f32 %v112, %v112
    %v129 = vmul.f32 %v113, %v113
    %v130 = vmul.f32 %v114, %v114
    %v131 = vmul.f32 %v115, %v115
    %v132 = vmul.f32 %v116, %v116
    %v133 = vmul.f32 %v117, %v117
    %v134 = vmul.f32 %v118, %v118
    %v135 = vmul.f32 %v119, %v119
    %v136 = vmul.f32 %v120, %v120
    %v137 = vmul.f32 %v121, %v121
    %v138 = vmul.f32 %v122, %v122
    %v139 = vmul.f32 %v123, %v123
    %v140 = vmul.f32 %v124, %v124
    %v141 = vmul.f32 %v125, %v125
    %v142 = vmul.f32 %v126, %v126
    %143 = vadd.xlane.f32.xlu0 %v127
    %v144 = vpop.xlane.xlu0 %143
    %145 = vadd.xlane.f32.xlu0 %v128
    %v146 = vpop.xlane.xlu0 %145
    %147 = vadd.xlane.f32.xlu0 %v129
    %v148 = vpop.xlane.xlu0 %147
    %149 = vadd.xlane.f32.xlu0 %v130
    %v150 = vpop.xlane.xlu0 %149
    %151 = vadd.xlane.f32.xlu0 %v131
    %v152 = vpop.xlane.xlu0 %151
    %153 = vadd.xlane.f32.xlu0 %v132
    %v154 = vpop.xlane.xlu0 %153
    %155 = vadd.xlane.f32.xlu0 %v133
    %v156 = vpop.xlane.xlu0 %155
    %157 = vadd.xlane.f32.xlu0 %v134
    %v158 = vpop.xlane.xlu0 %157
    %159 = vadd.xlane.f32.xlu0 %v135
    %v160 = vpop.xlane.xlu0 %159
    %161 = vadd.xlane.f32.xlu0 %v136
    %v162 = vpop.xlane.xlu0 %161
    %163 = vadd.xlane.f32.xlu0 %v137
    %v164 = vpop.xlane.xlu0 %163
    %165 = vadd.xlane.f32.xlu0 %v138
    %v166 = vpop.xlane.xlu0 %165
    %167 = vadd.xlane.f32.xlu0 %v139
    %v168 = vpop.xlane.xlu0 %167
    %169 = vadd.xlane.f32.xlu0 %v140
    %v170 = vpop.xlane.xlu0 %169
    %171 = vadd.xlane.f32.xlu0 %v141
    %v172 = vpop.xlane.xlu0 %171
    %173 = vadd.xlane.f32.xlu0 %v142
    %v174 = vpop.xlane.xlu0 %173
    %v175 = vmul.f32 %v144, %v94
    %v176 = vmul.f32 %v146, %v94
    %v177 = vmul.f32 %v148, %v94
    %v178 = vmul.f32 %v150, %v94
    %v179 = vmul.f32 %v152, %v94
    %v180 = vmul.f32 %v154, %v94
    %v181 = vmul.f32 %v156, %v94
    %v182 = vmul.f32 %v158, %v94
    %v183 = vmul.f32 %v160, %v94
    %v184 = vmul.f32 %v162, %v94
    %v185 = vmul.f32 %v164, %v94
    %v186 = vmul.f32 %v166, %v94
    %v187 = vmul.f32 %v168, %v94
    %v188 = vmul.f32 %v170, %v94
    %v189 = vmul.f32 %v172, %v94
    %v190 = vmul.f32 %v174, %v94
    %v191 = vadd.f32 %v175, 1e-05
    %v192 = vadd.f32 %v176, 1e-05
    %v193 = vadd.f32 %v177, 1e-05
    %v194 = vadd.f32 %v178, 1e-05
    %v195 = vadd.f32 %v179, 1e-05
    %v196 = vadd.f32 %v180, 1e-05
    %v197 = vadd.f32 %v181, 1e-05
    %v198 = vadd.f32 %v182, 1e-05
    %v199 = vadd.f32 %v183, 1e-05
    %v200 = vadd.f32 %v184, 1e-05
    %v201 = vadd.f32 %v185, 1e-05
    %v202 = vadd.f32 %v186, 1e-05
    %v203 = vadd.f32 %v187, 1e-05
    %v204 = vadd.f32 %v188, 1e-05
    %v205 = vadd.f32 %v189, 1e-05
    %v206 = vadd.f32 %v190, 1e-05
    %v207 = vrsqrt.pop %v191
    %v208 = vrsqrt.pop %v192
    %v209 = vrsqrt.pop %v193
    %v210 = vrsqrt.pop %v194
    %v211 = vrsqrt.pop %v195
    %v212 = vrsqrt.pop %v196
    %v213 = vrsqrt.pop %v197
    %v214 = vrsqrt.pop %v198
    %v215 = vrsqrt.pop %v199
    %v216 = vrsqrt.pop %v200
    %v217 = vrsqrt.pop %v201
    %v218 = vrsqrt.pop %v202
    %v219 = vrsqrt.pop %v203
    %v220 = vrsqrt.pop %v204
    %v221 = vrsqrt.pop %v205
    %v222 = vrsqrt.pop %v206
    %v223 = vmul.f32 %v111, %v207
    %v224 = vmul.f32 %v112, %v208
    %v225 = vmul.f32 %v113, %v209
    %v226 = vmul.f32 %v114, %v210
    %v227 = vmul.f32 %v115, %v211
    %v228 = vmul.f32 %v116, %v212
    %v229 = vmul.f32 %v117, %v213
    %v230 = vmul.f32 %v118, %v214
    %v231 = vmul.f32 %v119, %v215
    %v232 = vmul.f32 %v120, %v216
    %v233 = vmul.f32 %v121, %v217
    %v234 = vmul.f32 %v122, %v218
    %v235 = vmul.f32 %v123, %v219
    %v236 = vmul.f32 %v124, %v220
    %v237 = vmul.f32 %v125, %v221
    %v238 = vmul.f32 %v126, %v222
    %v240 = vlaneseq
    %v241 = vshrl.u32 %v240, 7
    %v242 = vsub.s32 0, %v241
    %v243 = vrot.slane %v60, %v242
    %v245 = vmul.f32 %v223, %v243
    %v246 = vmul.f32 %v224, %v243
    %v247 = vmul.f32 %v225, %v243
    %v248 = vmul.f32 %v226, %v243
    %v249 = vmul.f32 %v227, %v243
    %v250 = vmul.f32 %v228, %v243
    %v251 = vmul.f32 %v229, %v243
    %v252 = vmul.f32 %v230, %v243
    %v253 = vmul.f32 %v231, %v243
    %v254 = vmul.f32 %v232, %v243
    %v255 = vmul.f32 %v233, %v243
    %v256 = vmul.f32 %v234, %v243
    %v257 = vmul.f32 %v235, %v243
    %v258 = vmul.f32 %v236, %v243
    %v259 = vmul.f32 %v237, %v243
    %v260 = vmul.f32 %v238, %v243
    %v262 = vlaneseq
    %v263 = vshrl.u32 %v262, 7
    %v264 = vsub.s32 0, %v263
    %v265 = vrot.slane %v61, %v264
    %v267 = vadd.f32 %v245, %v265
    %v268 = vadd.f32 %v246, %v265
    %v269 = vadd.f32 %v247, %v265
    %v270 = vadd.f32 %v248, %v265
    %v271 = vadd.f32 %v249, %v265
    %v272 = vadd.f32 %v250, %v265
    %v273 = vadd.f32 %v251, %v265
    %v274 = vadd.f32 %v252, %v265
    %v275 = vadd.f32 %v253, %v265
    %v276 = vadd.f32 %v254, %v265
    %v277 = vadd.f32 %v255, %v265
    %v278 = vadd.f32 %v256, %v265
    %v279 = vadd.f32 %v257, %v265
    %v280 = vadd.f32 %v258, %v265
    %v281 = vadd.f32 %v259, %v265
    %v282 = vadd.f32 %v260, %v265
    %v283 = vpack.c.bf16 %v268, %v267
    %v284 = vpack.c.bf16 %v270, %v269
    %v285 = vpack.c.bf16 %v272, %v271
    %v286 = vpack.c.bf16 %v274, %v273
    %v287 = vpack.c.bf16 %v276, %v275
    %v288 = vpack.c.bf16 %v278, %v277
    %v289 = vpack.c.bf16 %v280, %v279
    %v290 = vpack.c.bf16 %v282, %v281
    %v299 = vunpack.c.l.b16 %v283
    %v300 = vunpack.c.h.b16 %v283
    %v301 = vunpack.c.l.b16 %v284
    %v302 = vunpack.c.h.b16 %v284
    %v303 = vunpack.c.l.b16 %v285
    %v304 = vunpack.c.h.b16 %v285
    %v305 = vunpack.c.l.b16 %v286
    %v306 = vunpack.c.h.b16 %v286
    %v307 = vunpack.c.l.b16 %v287
    %v308 = vunpack.c.h.b16 %v287
    %v309 = vunpack.c.l.b16 %v288
    %v310 = vunpack.c.h.b16 %v288
    %v311 = vunpack.c.l.b16 %v289
    %v312 = vunpack.c.h.b16 %v289
    %v313 = vunpack.c.l.b16 %v290
    %v314 = vunpack.c.h.b16 %v290
    %v315 = vpack.c.b16 %v299, %v299
    %v316 = vpack.c.b16 %v300, %v300
    %v317 = vpack.c.b16 %v301, %v301
    %v318 = vpack.c.b16 %v302, %v302
    %v319 = vpack.c.b16 %v303, %v303
    %v320 = vpack.c.b16 %v304, %v304
    %v321 = vpack.c.b16 %v305, %v305
    %v322 = vpack.c.b16 %v306, %v306
    %v323 = vpack.c.b16 %v307, %v307
    %v324 = vpack.c.b16 %v308, %v308
    %v325 = vpack.c.b16 %v309, %v309
    %v326 = vpack.c.b16 %v310, %v310
    %v327 = vpack.c.b16 %v311, %v311
    %v328 = vpack.c.b16 %v312, %v312
    %v329 = vpack.c.b16 %v313, %v313
    %v330 = vpack.c.b16 %v314, %v314
    %347 = vst [vmem:[#allocation2] sm:$0xf] %v315
    %348 = vst [vmem:[#allocation2 + $0x4] sm:$0xf] %v316
    %349 = vst [vmem:[#allocation2 + $0x8] sm:$0xf] %v317
    %350 = vst [vmem:[#allocation2 + $0xc] sm:$0xf] %v318
    %351 = vst [vmem:[#allocation2 + $0x10] sm:$0xf] %v319
    %352 = vst [vmem:[#allocation2 + $0x14] sm:$0xf] %v320
    %353 = vst [vmem:[#allocation2 + $0x18] sm:$0xf] %v321
    %354 = vst [vmem:[#allocation2 + $0x1c] sm:$0xf] %v322
    %355 = vst [vmem:[#allocation2 + $0x20] sm:$0xf] %v323
    %356 = vst [vmem:[#allocation2 + $0x24] sm:$0xf] %v324
    %357 = vst [vmem:[#allocation2 + $0x28] sm:$0xf] %v325
    %358 = vst [vmem:[#allocation2 + $0x2c] sm:$0xf] %v326
    %359 = vst [vmem:[#allocation2 + $0x30] sm:$0xf] %v327
    %360 = vst [vmem:[#allocation2 + $0x34] sm:$0xf] %v328
    %361 = vst [vmem:[#allocation2 + $0x38] sm:$0xf] %v329
    %362 = vst [vmem:[#allocation2 + $0x3c] sm:$0xf] %v330
  $region25: #{_lambda_.11} parent=0 // pred_fallthru
    _
  %v363 = vld [vmem:[#allocation2] sm:$0xf]
  %v364 = vld [vmem:[#allocation2 + $0x4] sm:$0xf]
  %v365 = vld [vmem:[#allocation2 + $0x8] sm:$0xf]
  %v366 = vld [vmem:[#allocation2 + $0xc] sm:$0xf]
  %v367 = vld [vmem:[#allocation2 + $0x10] sm:$0xf]
  %v368 = vld [vmem:[#allocation2 + $0x14] sm:$0xf]
  %v369 = vld [vmem:[#allocation2 + $0x18] sm:$0xf]
  %v370 = vld [vmem:[#allocation2 + $0x1c] sm:$0xf]
  %v371 = vld [vmem:[#allocation2 + $0x20] sm:$0xf]
  %v372 = vld [vmem:[#allocation2 + $0x24] sm:$0xf]
  %v373 = vld [vmem:[#allocation2 + $0x28] sm:$0xf]
  %v374 = vld [vmem:[#allocation2 + $0x2c] sm:$0xf]
  %v375 = vld [vmem:[#allocation2 + $0x30] sm:$0xf]
  %v376 = vld [vmem:[#allocation2 + $0x34] sm:$0xf]
  %v377 = vld [vmem:[#allocation2 + $0x38] sm:$0xf]
  %v378 = vld [vmem:[#allocation2 + $0x3c] sm:$0xf]
  %v379 = vld [vmem:[%s3] sm:$0xff]
  %v380 = vld [vmem:[%s3 + $0x8] sm:$0xf]
  %v381 = vld [vmem:[%s3 + $0xc] sm:$0xff]
  %v382 = vld [vmem:[%s3 + $0x14] sm:$0xf]
  %v383 = vld [vmem:[%s3 + $0x18] sm:$0xff]
  %v384 = vld [vmem:[%s3 + $0x20] sm:$0xf]
  %v385 = vld [vmem:[%s3 + $0x24] sm:$0xff]
  %v386 = vld [vmem:[%s3 + $0x2c] sm:$0xf]
  %v387 = vld [vmem:[%s3 + $0x30] sm:$0xff]
  %v388 = vld [vmem:[%s3 + $0x38] sm:$0xf]
  %v389 = vld [vmem:[%s3 + $0x3c] sm:$0xff]
  %v390 = vld [vmem:[%s3 + $0x44] sm:$0xf]
  %v391 = vld [vmem:[%s3 + $0x48] sm:$0xff]
  %v392 = vld [vmem:[%s3 + $0x50] sm:$0xf]
  %v393 = vld [vmem:[%s3 + $0x54] sm:$0xff]
  %v394 = vld [vmem:[%s3 + $0x5c] sm:$0xf]
  %v395 = vld [vmem:[%s3 + $0x60] sm:$0xff]
  %v396 = vld [vmem:[%s3 + $0x68] sm:$0xf]
  %v397 = vld [vmem:[%s3 + $0x6c] sm:$0xff]
  %v398 = vld [vmem:[%s3 + $0x74] sm:$0xf]
  %v399 = vld [vmem:[%s3 + $0x78] sm:$0xff]
  %v400 = vld [vmem:[%s3 + $0x80] sm:$0xf]
  %v401 = vld [vmem:[%s3 + $0x84] sm:$0xff]
  %v402 = vld [vmem:[%s3 + $0x8c] sm:$0xf]
  %v403 = vld [vmem:[%s3 + $0x90] sm:$0xff]
  %v404 = vld [vmem:[%s3 + $0x98] sm:$0xf]
  %v405 = vld [vmem:[%s3 + $0x9c] sm:$0xff]
  %v406 = vld [vmem:[%s3 + $0xa4] sm:$0xf]
  %v407 = vld [vmem:[%s3 + $0xa8] sm:$0xff]
  %v408 = vld [vmem:[%s3 + $0xb0] sm:$0xf]
  %v409 = vld [vmem:[%s3 + $0xb4] sm:$0xff]
  %v410 = vld [vmem:[%s3 + $0xbc] sm:$0xf]
  %v411 = vld [vmem:[%s4] sm:$0x7]
  %v413 = vlaneseq
  %v414 = vshrl.u32 %v413, 7
  %v415 = vsub.s32 0, %v414
  %v416 = vrot.slane %v411, %v415
  %v417 = vlaneseq
  %v418 = vshrl.u32 %v417, 7
  %v419 = vsub.s32 1, %v418
  %v420 = vrot.slane %v411, %v419
  %v421 = vlaneseq
  %v422 = vshrl.u32 %v421, 7
  %v423 = vsub.s32 2, %v422
  %v424 = vrot.slane %v411, %v423
  %v444 = vunpack.c.l.b16 %v363
  %v445 = vunpack.c.l.b16 %v364
  %v446 = vunpack.c.l.b16 %v365
  %v447 = vunpack.c.l.b16 %v366
  %v448 = vunpack.c.l.b16 %v367
  %v449 = vunpack.c.l.b16 %v368
  %v450 = vunpack.c.l.b16 %v369
  %v451 = vunpack.c.l.b16 %v370
  %v452 = vunpack.c.l.b16 %v371
  %v453 = vunpack.c.l.b16 %v372
  %v454 = vunpack.c.l.b16 %v373
  %v455 = vunpack.c.l.b16 %v374
  %v456 = vunpack.c.l.b16 %v375
  %v457 = vunpack.c.l.b16 %v376
  %v458 = vunpack.c.l.b16 %v377
  %v459 = vunpack.c.l.b16 %v378
  %v460 = vpack.c.b16 %v445, %v444
  %v461 = vpack.c.b16 %v447, %v446
  %v462 = vpack.c.b16 %v449, %v448
  %v463 = vpack.c.b16 %v451, %v450
  %v464 = vpack.c.b16 %v453, %v452
  %v465 = vpack.c.b16 %v455, %v454
  %v466 = vpack.c.b16 %v457, %v456
  %v467 = vpack.c.b16 %v459, %v458
  %v508 = vunpack.c.l.b16 %v379
  %v509 = vunpack.c.h.b16 %v379
  %v510 = vunpack.c.l.b16 %v380
  %v511 = vunpack.c.l.b16 %v381
  %v512 = vunpack.c.h.b16 %v381
  %v513 = vunpack.c.l.b16 %v382
  %v514 = vunpack.c.l.b16 %v383
  %v515 = vunpack.c.h.b16 %v383
  %v516 = vunpack.c.l.b16 %v384
  %v517 = vunpack.c.l.b16 %v385
  %v518 = vunpack.c.h.b16 %v385
  %v519 = vunpack.c.l.b16 %v386
  %v520 = vunpack.c.l.b16 %v387
  %v521 = vunpack.c.h.b16 %v387
  %v522 = vunpack.c.l.b16 %v388
  %v523 = vunpack.c.l.b16 %v389
  %v524 = vunpack.c.h.b16 %v389
  %v525 = vunpack.c.l.b16 %v390
  %v526 = vunpack.c.l.b16 %v391
  %v527 = vunpack.c.h.b16 %v391
  %v528 = vunpack.c.l.b16 %v392
  %v529 = vunpack.c.l.b16 %v393
  %v530 = vunpack.c.h.b16 %v393
  %v531 = vunpack.c.l.b16 %v394
  %v532 = vunpack.c.l.b16 %v395
  %v533 = vunpack.c.h.b16 %v395
  %v534 = vunpack.c.l.b16 %v396
  %v535 = vunpack.c.l.b16 %v397
  %v536 = vunpack.c.h.b16 %v397
  %v537 = vunpack.c.l.b16 %v398
  %v538 = vunpack.c.l.b16 %v399
  %v539 = vunpack.c.h.b16 %v399
  %v540 = vunpack.c.l.b16 %v400
  %v541 = vunpack.c.l.b16 %v401
  %v542 = vunpack.c.h.b16 %v401
  %v543 = vunpack.c.l.b16 %v402
  %v544 = vunpack.c.l.b16 %v403
  %v545 = vunpack.c.h.b16 %v403
  %v546 = vunpack.c.l.b16 %v404
  %v547 = vunpack.c.l.b16 %v405
  %v548 = vunpack.c.h.b16 %v405
  %v549 = vunpack.c.l.b16 %v406
  %v550 = vunpack.c.l.b16 %v407
  %v551 = vunpack.c.h.b16 %v407
  %v552 = vunpack.c.l.b16 %v408
  %v553 = vunpack.c.l.b16 %v409
  %v554 = vunpack.c.h.b16 %v409
  %v555 = vunpack.c.l.b16 %v410
  %v556 = vpack.c.b16 %v511, %v508
  %v557 = vpack.c.b16 %v512, %v509
  %v558 = vpack.c.b16 %v513, %v510
  %v559 = vpack.c.b16 %v517, %v514
  %v560 = vpack.c.b16 %v518, %v515
  %v561 = vpack.c.b16 %v519, %v516
  %v562 = vpack.c.b16 %v523, %v520
  %v563 = vpack.c.b16 %v524, %v521
  %v564 = vpack.c.b16 %v525, %v522
  %v565 = vpack.c.b16 %v529, %v526
  %v566 = vpack.c.b16 %v530, %v527
  %v567 = vpack.c.b16 %v531, %v528
  %v568 = vpack.c.b16 %v535, %v532
  %v569 = vpack.c.b16 %v536, %v533
  %v570 = vpack.c.b16 %v537, %v534
  %v571 = vpack.c.b16 %v541, %v538
  %v572 = vpack.c.b16 %v542, %v539
  %v573 = vpack.c.b16 %v543, %v540
  %v574 = vpack.c.b16 %v547, %v544
  %v575 = vpack.c.b16 %v548, %v545
  %v576 = vpack.c.b16 %v549, %v546
  %v577 = vpack.c.b16 %v553, %v550
  %v578 = vpack.c.b16 %v554, %v551
  %v579 = vpack.c.b16 %v555, %v552
  %604 = vmatprep.subr.bf16.mxu0 %v578
  %605 = vmatpush1.bf16.msra.mxu0 %v577
  %606 = vmatprep.subr.bf16.mxu0 %v575
  %607 = vmatpush1.bf16.msra.mxu0 %v574
  %608 = vmatprep.subr.bf16.mxu0 %v572
  %609 = vmatpush1.bf16.msra.mxu0 %v571
  %610 = vmatprep.subr.bf16.mxu0 %v569
  %611 = vmatpush1.bf16.msra.mxu0 %v568
  %612 = vmatprep.subr.bf16.mxu0 %v566
  %613 = vmatpush1.bf16.msra.mxu0 %v565
  %614 = vmatprep.subr.bf16.mxu0 %v563
  %615 = vmatpush1.bf16.msra.mxu0 %v562
  %616 = vmatprep.subr.bf16.mxu0 %v560
  %617 = vmatpush1.bf16.msra.mxu0 %v559
  %618 = vmatprep.subr.bf16.mxu0 %v557
  %619 = vmatpush1.bf16.msra.mxu0 %v556
  %620 = vmatprep.subr.bf16.mxu0 0
  %621 = vmatpush2.bf16.msra.mxu0 0
  %622 = vmatprep.subr.bf16.mxu0 0
  %623 = vmatpush2.bf16.msra.mxu0 0
  %624 = vmatprep.subr.bf16.mxu0 0
  %625 = vmatpush2.bf16.msra.mxu0 0
  %626 = vmatprep.subr.bf16.mxu0 0
  %627 = vmatpush2.bf16.msra.mxu0 0
  %628 = vmatprep.subr.bf16.mxu0 0
  %629 = vmatpush2.bf16.msra.mxu0 0
  %630 = vmatprep.subr.bf16.mxu0 0
  %631 = vmatpush2.bf16.msra.mxu0 0
  %632 = vmatprep.subr.bf16.mxu0 0
  %633 = vmatpush2.bf16.msra.mxu0 0
  %634 = vmatprep.subr.bf16.mxu0 0
  %635 = vmatpush2.bf16.msra.mxu0 0
  %636 = vmatprep.mubr.bf16.mxu0 0
  %637 = vmatmul.mubr.bf16.gmra.mxu0 %v460
  %v638 = vpop.f32.mrf.mxu0
  %v639 = vadd.f32 %v416, %v638
  %v640 = vpop.f32.mrf.mxu0
  %v641 = vadd.f32 %v420, %v640
  %v642 = vpop.f32.mrf.mxu0
  %v643 = vadd.f32 %v416, %v642
  %v644 = vpop.f32.mrf.mxu0
  %v645 = vadd.f32 %v420, %v644
  %646 = vmatprep.mubr.bf16.mxu0 0
  %647 = vmatmul.mubr.bf16.gmra.mxu0 %v461
  %v648 = vpop.f32.mrf.mxu0
  %v649 = vadd.f32 %v416, %v648
  %v650 = vpop.f32.mrf.mxu0
  %v651 = vadd.f32 %v420, %v650
  %v652 = vpop.f32.mrf.mxu0
  %v653 = vadd.f32 %v416, %v652
  %v654 = vpop.f32.mrf.mxu0
  %v655 = vadd.f32 %v420, %v654
  %656 = vmatprep.mubr.bf16.mxu0 0
  %657 = vmatmul.mubr.bf16.gmra.mxu0 %v462
  %v658 = vpop.f32.mrf.mxu0
  %v659 = vadd.f32 %v416, %v658
  %v660 = vpop.f32.mrf.mxu0
  %v661 = vadd.f32 %v420, %v660
  %v662 = vpop.f32.mrf.mxu0
  %v663 = vadd.f32 %v416, %v662
  %v664 = vpop.f32.mrf.mxu0
  %v665 = vadd.f32 %v420, %v664
  %666 = vmatprep.mubr.bf16.mxu0 0
  %667 = vmatmul.mubr.bf16.gmra.mxu0 %v463
  %v668 = vpop.f32.mrf.mxu0
  %v669 = vadd.f32 %v416, %v668
  %v670 = vpop.f32.mrf.mxu0
  %v671 = vadd.f32 %v420, %v670
  %v672 = vpop.f32.mrf.mxu0
  %v673 = vadd.f32 %v416, %v672
  %v674 = vpop.f32.mrf.mxu0
  %v675 = vadd.f32 %v420, %v674
  %676 = vmatprep.mubr.bf16.mxu0 0
  %677 = vmatmul.mubr.bf16.gmra.mxu0 %v464
  %v678 = vpop.f32.mrf.mxu0
  %v679 = vadd.f32 %v416, %v678
  %v680 = vpop.f32.mrf.mxu0
  %v681 = vadd.f32 %v420, %v680
  %v682 = vpop.f32.mrf.mxu0
  %v683 = vadd.f32 %v416, %v682
  %v684 = vpop.f32.mrf.mxu0
  %v685 = vadd.f32 %v420, %v684
  %686 = vmatprep.mubr.bf16.mxu0 0
  %687 = vmatmul.mubr.bf16.gmra.mxu0 %v465
  %v688 = vpop.f32.mrf.mxu0
  %v689 = vadd.f32 %v416, %v688
  %v690 = vpop.f32.mrf.mxu0
  %v691 = vadd.f32 %v420, %v690
  %v692 = vpop.f32.mrf.mxu0
  %v693 = vadd.f32 %v416, %v692
  %v694 = vpop.f32.mrf.mxu0
  %v695 = vadd.f32 %v420, %v694
  %696 = vmatprep.mubr.bf16.mxu0 0
  %697 = vmatmul.mubr.bf16.gmra.mxu0 %v466
  %v698 = vpop.f32.mrf.mxu0
  %v699 = vadd.f32 %v416, %v698
  %v700 = vpop.f32.mrf.mxu0
  %v701 = vadd.f32 %v420, %v700
  %v702 = vpop.f32.mrf.mxu0
  %v703 = vadd.f32 %v416, %v702
  %v704 = vpop.f32.mrf.mxu0
  %v705 = vadd.f32 %v420, %v704
  %706 = vmatprep.mubr.bf16.mxu0 0
  %707 = vmatmul.mubr.bf16.gmra.mxu0 %v467
  %v708 = vpop.f32.mrf.mxu0
  %v709 = vadd.f32 %v416, %v708
  %v710 = vpop.f32.mrf.mxu0
  %v711 = vadd.f32 %v420, %v710
  %v712 = vpop.f32.mrf.mxu0
  %v713 = vadd.f32 %v416, %v712
  %v714 = vpop.f32.mrf.mxu0
  %v715 = vadd.f32 %v420, %v714
  %716 = vdwg.mxu0
  %717 = vmatprep.subr.bf16.mxu0 0
  %718 = vmatpush1.bf16.msra.mxu0 %v579
  %719 = vmatprep.subr.bf16.mxu0 0
  %720 = vmatpush1.bf16.msra.mxu0 %v576
  %721 = vmatprep.subr.bf16.mxu0 0
  %722 = vmatpush1.bf16.msra.mxu0 %v573
  %723 = vmatprep.subr.bf16.mxu0 0
  %724 = vmatpush1.bf16.msra.mxu0 %v570
  %725 = vmatprep.subr.bf16.mxu0 0
  %726 = vmatpush1.bf16.msra.mxu0 %v567
  %727 = vmatprep.subr.bf16.mxu0 0
  %728 = vmatpush1.bf16.msra.mxu0 %v564
  %729 = vmatprep.subr.bf16.mxu0 0
  %730 = vmatpush1.bf16.msra.mxu0 %v561
  %731 = vmatprep.subr.bf16.mxu0 0
  %732 = vmatpush1.bf16.msra.mxu0 %v558
  %733 = vmatprep.subr.bf16.mxu0 0
  %734 = vmatpush2.bf16.msra.mxu0 0
  %735 = vmatprep.subr.bf16.mxu0 0
  %736 = vmatpush2.bf16.msra.mxu0 0
  %737 = vmatprep.subr.bf16.mxu0 0
  %738 = vmatpush2.bf16.msra.mxu0 0
  %739 = vmatprep.subr.bf16.mxu0 0
  %740 = vmatpush2.bf16.msra.mxu0 0
  %741 = vmatprep.subr.bf16.mxu0 0
  %742 = vmatpush2.bf16.msra.mxu0 0
  %743 = vmatprep.subr.bf16.mxu0 0
  %744 = vmatpush2.bf16.msra.mxu0 0
  %745 = vmatprep.subr.bf16.mxu0 0
  %746 = vmatpush2.bf16.msra.mxu0 0
  %747 = vmatprep.subr.bf16.mxu0 0
  %748 = vmatpush2.bf16.msra.mxu0 0
  %749 = vmatprep.mubr.bf16.mxu0 0
  %750 = vmatmul.mubr.bf16.gmra.mxu0 %v460
  %v751 = vpop.f32.mrf.mxu0
  %v752 = vadd.f32 %v424, %v751
  %v753 = vpop.f32.mrf.mxu0
  %v754 = vpop.f32.mrf.mxu0
  %v755 = vadd.f32 %v424, %v754
  %v756 = vpop.f32.mrf.mxu0
  %757 = vmatprep.mubr.bf16.mxu0 0
  %758 = vmatmul.mubr.bf16.gmra.mxu0 %v461
  %v759 = vpop.f32.mrf.mxu0
  %v760 = vadd.f32 %v424, %v759
  %v761 = vpop.f32.mrf.mxu0
  %v762 = vpop.f32.mrf.mxu0
  %v763 = vadd.f32 %v424, %v762
  %v764 = vpop.f32.mrf.mxu0
  %765 = vmatprep.mubr.bf16.mxu0 0
  %766 = vmatmul.mubr.bf16.gmra.mxu0 %v462
  %v767 = vpop.f32.mrf.mxu0
  %v768 = vadd.f32 %v424, %v767
  %v769 = vpop.f32.mrf.mxu0
  %v770 = vpop.f32.mrf.mxu0
  %v771 = vadd.f32 %v424, %v770
  %v772 = vpop.f32.mrf.mxu0
  %773 = vmatprep.mubr.bf16.mxu0 0
  %774 = vmatmul.mubr.bf16.gmra.mxu0 %v463
  %v775 = vpop.f32.mrf.mxu0
  %v776 = vadd.f32 %v424, %v775
  %v777 = vpop.f32.mrf.mxu0
  %v778 = vpop.f32.mrf.mxu0
  %v779 = vadd.f32 %v424, %v778
  %v780 = vpop.f32.mrf.mxu0
  %781 = vmatprep.mubr.bf16.mxu0 0
  %782 = vmatmul.mubr.bf16.gmra.mxu0 %v464
  %v783 = vpop.f32.mrf.mxu0
  %v784 = vadd.f32 %v424, %v783
  %v785 = vpop.f32.mrf.mxu0
  %v786 = vpop.f32.mrf.mxu0
  %v787 = vadd.f32 %v424, %v786
  %v788 = vpop.f32.mrf.mxu0
  %789 = vmatprep.mubr.bf16.mxu0 0
  %790 = vmatmul.mubr.bf16.gmra.mxu0 %v465
  %v791 = vpop.f32.mrf.mxu0
  %v792 = vadd.f32 %v424, %v791
  %v793 = vpop.f32.mrf.mxu0
  %v794 = vpop.f32.mrf.mxu0
  %v795 = vadd.f32 %v424, %v794
  %v796 = vpop.f32.mrf.mxu0
  %797 = vmatprep.mubr.bf16.mxu0 0
  %798 = vmatmul.mubr.bf16.gmra.mxu0 %v466
  %v799 = vpop.f32.mrf.mxu0
  %v800 = vadd.f32 %v424, %v799
  %v801 = vpop.f32.mrf.mxu0
  %v802 = vpop.f32.mrf.mxu0
  %v803 = vadd.f32 %v424, %v802
  %v804 = vpop.f32.mrf.mxu0
  %805 = vmatprep.mubr.bf16.mxu0 0
  %806 = vmatmul.mubr.bf16.gmra.mxu0 %v467
  %v807 = vpop.f32.mrf.mxu0
  %v808 = vadd.f32 %v424, %v807
  %v809 = vpop.f32.mrf.mxu0
  %v810 = vpop.f32.mrf.mxu0
  %v811 = vadd.f32 %v424, %v810
  %v812 = vpop.f32.mrf.mxu0
  %813 = vdwg.mxu0
  %v814 = vmul.f32 %v639, 0.17677669
  %v815 = vmul.f32 %v643, 0.17677669
  %v816 = vmul.f32 %v649, 0.17677669
  %v817 = vmul.f32 %v653, 0.17677669
  %v818 = vmul.f32 %v659, 0.17677669
  %v819 = vmul.f32 %v663, 0.17677669
  %v820 = vmul.f32 %v669, 0.17677669
  %v821 = vmul.f32 %v673, 0.17677669
  %v822 = vmul.f32 %v679, 0.17677669
  %v823 = vmul.f32 %v683, 0.17677669
  %v824 = vmul.f32 %v689, 0.17677669
  %v825 = vmul.f32 %v693, 0.17677669
  %v826 = vmul.f32 %v699, 0.17677669
  %v827 = vmul.f32 %v703, 0.17677669
  %v828 = vmul.f32 %v709, 0.17677669
  %v829 = vmul.f32 %v713, 0.17677669
  %v830 = vpack.c.bf16 %v815, %v814
  %v831 = vpack.c.bf16 %v817, %v816
  %v832 = vpack.c.bf16 %v819, %v818
  %v833 = vpack.c.bf16 %v821, %v820
  %v834 = vpack.c.bf16 %v823, %v822
  %v835 = vpack.c.bf16 %v825, %v824
  %v836 = vpack.c.bf16 %v827, %v826
  %v837 = vpack.c.bf16 %v829, %v828
  %v846 = vunpack.c.l.b16 %v830
  %v847 = vunpack.c.h.b16 %v830
  %v848 = vunpack.c.l.b16 %v831
  %v849 = vunpack.c.h.b16 %v831
  %v850 = vunpack.c.l.b16 %v832
  %v851 = vunpack.c.h.b16 %v832
  %v852 = vunpack.c.l.b16 %v833
  %v853 = vunpack.c.h.b16 %v833
  %v854 = vunpack.c.l.b16 %v834
  %v855 = vunpack.c.h.b16 %v834
  %v856 = vunpack.c.l.b16 %v835
  %v857 = vunpack.c.h.b16 %v835
  %v858 = vunpack.c.l.b16 %v836
  %v859 = vunpack.c.h.b16 %v836
  %v860 = vunpack.c.l.b16 %v837
  %v861 = vunpack.c.h.b16 %v837
  %v862 = vpack.c.b16 %v846, %v846
  %v863 = vpack.c.b16 %v847, %v847
  %v864 = vpack.c.b16 %v848, %v848
  %v865 = vpack.c.b16 %v849, %v849
  %v866 = vpack.c.b16 %v850, %v850
  %v867 = vpack.c.b16 %v851, %v851
  %v868 = vpack.c.b16 %v852, %v852
  %v869 = vpack.c.b16 %v853, %v853
  %v870 = vpack.c.b16 %v854, %v854
  %v871 = vpack.c.b16 %v855, %v855
  %v872 = vpack.c.b16 %v856, %v856
  %v873 = vpack.c.b16 %v857, %v857
  %v874 = vpack.c.b16 %v858, %v858
  %v875 = vpack.c.b16 %v859, %v859
  %v876 = vpack.c.b16 %v860, %v860
  %v877 = vpack.c.b16 %v861, %v861
  %894 = vst [vmem:[%s5] sm:$0xf] %v862
  %895 = vst [vmem:[%s5 + $0x4] sm:$0xf] %v863
  %896 = vst [vmem:[%s5 + $0x8] sm:$0xf] %v864
  %897 = vst [vmem:[%s5 + $0xc] sm:$0xf] %v865
  %898 = vst [vmem:[%s5 + $0x10] sm:$0xf] %v866
  %899 = vst [vmem:[%s5 + $0x14] sm:$0xf] %v867
  %900 = vst [vmem:[%s5 + $0x18] sm:$0xf] %v868
  %901 = vst [vmem:[%s5 + $0x1c] sm:$0xf] %v869
  %902 = vst [vmem:[%s5 + $0x20] sm:$0xf] %v870
  %903 = vst [vmem:[%s5 + $0x24] sm:$0xf] %v871
  %904 = vst [vmem:[%s5 + $0x28] sm:$0xf] %v872
  %905 = vst [vmem:[%s5 + $0x2c] sm:$0xf] %v873
  %906 = vst [vmem:[%s5 + $0x30] sm:$0xf] %v874
  %907 = vst [vmem:[%s5 + $0x34] sm:$0xf] %v875
  %908 = vst [vmem:[%s5 + $0x38] sm:$0xf] %v876
  %909 = vst [vmem:[%s5 + $0x3c] sm:$0xf] %v877
  %v910 = vpack.c.bf16 %v645, %v641
  %v911 = vpack.c.bf16 %v655, %v651
  %v912 = vpack.c.bf16 %v665, %v661
  %v913 = vpack.c.bf16 %v675, %v671
  %v914 = vpack.c.bf16 %v685, %v681
  %v915 = vpack.c.bf16 %v695, %v691
  %v916 = vpack.c.bf16 %v705, %v701
  %v917 = vpack.c.bf16 %v715, %v711
  %v926 = vunpack.c.l.b16 %v910
  %v927 = vunpack.c.h.b16 %v910
  %v928 = vunpack.c.l.b16 %v911
  %v929 = vunpack.c.h.b16 %v911
  %v930 = vunpack.c.l.b16 %v912
  %v931 = vunpack.c.h.b16 %v912
  %v932 = vunpack.c.l.b16 %v913
  %v933 = vunpack.c.h.b16 %v913
  %v934 = vunpack.c.l.b16 %v914
  %v935 = vunpack.c.h.b16 %v914
  %v936 = vunpack.c.l.b16 %v915
  %v937 = vunpack.c.h.b16 %v915
  %v938 = vunpack.c.l.b16 %v916
  %v939 = vunpack.c.h.b16 %v916
  %v940 = vunpack.c.l.b16 %v917
  %v941 = vunpack.c.h.b16 %v917
  %v942 = vpack.c.b16 %v926, %v926
  %v943 = vpack.c.b16 %v927, %v927
  %v944 = vpack.c.b16 %v928, %v928
  %v945 = vpack.c.b16 %v929, %v929
  %v946 = vpack.c.b16 %v930, %v930
  %v947 = vpack.c.b16 %v931, %v931
  %v948 = vpack.c.b16 %v932, %v932
  %v949 = vpack.c.b16 %v933, %v933
  %v950 = vpack.c.b16 %v934, %v934
  %v951 = vpack.c.b16 %v935, %v935
  %v952 = vpack.c.b16 %v936, %v936
  %v953 = vpack.c.b16 %v937, %v937
  %v954 = vpack.c.b16 %v938, %v938
  %v955 = vpack.c.b16 %v939, %v939
  %v956 = vpack.c.b16 %v940, %v940
  %v957 = vpack.c.b16 %v941, %v941
  %974 = vst [vmem:[%s6] sm:$0xf] %v942
  %975 = vst [vmem:[%s6 + $0x4] sm:$0xf] %v943
  %976 = vst [vmem:[%s6 + $0x8] sm:$0xf] %v944
  %977 = vst [vmem:[%s6 + $0xc] sm:$0xf] %v945
  %978 = vst [vmem:[%s6 + $0x10] sm:$0xf] %v946
  %979 = vst [vmem:[%s6 + $0x14] sm:$0xf] %v947
  %980 = vst [vmem:[%s6 + $0x18] sm:$0xf] %v948
  %981 = vst [vmem:[%s6 + $0x1c] sm:$0xf] %v949
  %982 = vst [vmem:[%s6 + $0x20] sm:$0xf] %v950
  %983 = vst [vmem:[%s6 + $0x24] sm:$0xf] %v951
  %984 = vst [vmem:[%s6 + $0x28] sm:$0xf] %v952
  %985 = vst [vmem:[%s6 + $0x2c] sm:$0xf] %v953
  %986 = vst [vmem:[%s6 + $0x30] sm:$0xf] %v954
  %987 = vst [vmem:[%s6 + $0x34] sm:$0xf] %v955
  %988 = vst [vmem:[%s6 + $0x38] sm:$0xf] %v956
  %989 = vst [vmem:[%s6 + $0x3c] sm:$0xf] %v957
  %v990 = vpack.c.bf16 %v755, %v752
  %v991 = vpack.c.bf16 %v763, %v760
  %v992 = vpack.c.bf16 %v771, %v768
  %v993 = vpack.c.bf16 %v779, %v776
  %v994 = vpack.c.bf16 %v787, %v784
  %v995 = vpack.c.bf16 %v795, %v792
  %v996 = vpack.c.bf16 %v803, %v800
  %v997 = vpack.c.bf16 %v811, %v808
  %v1006 = vunpack.c.l.b16 %v990
  %v1007 = vunpack.c.h.b16 %v990
  %v1008 = vunpack.c.l.b16 %v991
  %v1009 = vunpack.c.h.b16 %v991
  %v1010 = vunpack.c.l.b16 %v992
  %v1011 = vunpack.c.h.b16 %v992
  %v1012 = vunpack.c.l.b16 %v993
  %v1013 = vunpack.c.h.b16 %v993
  %v1014 = vunpack.c.l.b16 %v994
  %v1015 = vunpack.c.h.b16 %v994
  %v1016 = vunpack.c.l.b16 %v995
  %v1017 = vunpack.c.h.b16 %v995
  %v1018 = vunpack.c.l.b16 %v996
  %v1019 = vunpack.c.h.b16 %v996
  %v1020 = vunpack.c.l.b16 %v997
  %v1021 = vunpack.c.h.b16 %v997
  %v1022 = vpack.c.b16 %v1006, %v1006
  %v1023 = vpack.c.b16 %v1007, %v1007
  %v1024 = vpack.c.b16 %v1008, %v1008
  %v1025 = vpack.c.b16 %v1009, %v1009
  %v1026 = vpack.c.b16 %v1010, %v1010
  %v1027 = vpack.c.b16 %v1011, %v1011
  %v1028 = vpack.c.b16 %v1012, %v1012
  %v1029 = vpack.c.b16 %v1013, %v1013
  %v1030 = vpack.c.b16 %v1014, %v1014
  %v1031 = vpack.c.b16 %v1015, %v1015
  %v1032 = vpack.c.b16 %v1016, %v1016
  %v1033 = vpack.c.b16 %v1017, %v1017
  %v1034 = vpack.c.b16 %v1018, %v1018
  %v1035 = vpack.c.b16 %v1019, %v1019
  %v1036 = vpack.c.b16 %v1020, %v1020
  %v1037 = vpack.c.b16 %v1021, %v1021
  %1054 = vst [vmem:[%s7] sm:$0xf] %v1022
  %1055 = vst [vmem:[%s7 + $0x4] sm:$0xf] %v1023
  %1056 = vst [vmem:[%s7 + $0x8] sm:$0xf] %v1024
  %1057 = vst [vmem:[%s7 + $0xc] sm:$0xf] %v1025
  %1058 = vst [vmem:[%s7 + $0x10] sm:$0xf] %v1026
  %1059 = vst [vmem:[%s7 + $0x14] sm:$0xf] %v1027
  %1060 = vst [vmem:[%s7 + $0x18] sm:$0xf] %v1028
  %1061 = vst [vmem:[%s7 + $0x1c] sm:$0xf] %v1029
  %1062 = vst [vmem:[%s7 + $0x20] sm:$0xf] %v1030
  %1063 = vst [vmem:[%s7 + $0x24] sm:$0xf] %v1031
  %1064 = vst [vmem:[%s7 + $0x28] sm:$0xf] %v1032
  %1065 = vst [vmem:[%s7 + $0x2c] sm:$0xf] %v1033
  %1066 = vst [vmem:[%s7 + $0x30] sm:$0xf] %v1034
  %1067 = vst [vmem:[%s7 + $0x34] sm:$0xf] %v1035
  %1068 = vst [vmem:[%s7 + $0x38] sm:$0xf] %v1036
  %1069 = vst [vmem:[%s7 + $0x3c] sm:$0xf] %v1037
  // Predicated region
  $region26: #{_lambda_.11} parent=0 // pred_check
    _
  $region27: #{_lambda_.11} parent=0 // pred_check_branch
    %1071 = sbr.rel (0) target = $region29
  $region28: #{_lambda_.11} parent=0 // pred_region
    _
  $region29: #{_lambda_.11} parent=0 // pred_fallthru
    _
  // Predicated region
  $region30: #{_lambda_.11} parent=0 // pred_check
    _
  $region31: #{_lambda_.11} parent=0 // pred_check_branch
    %1073 = sbr.rel (0) target = $region33
  $region32: #{_lambda_.11} parent=0 // pred_region
    _
  $region33: #{_lambda_.11} parent=0 // pred_fallthru
    _
  // Predicated region
  $region34: #{_lambda_.11} parent=0 // pred_check
    _
  $region35: #{_lambda_.11} parent=0 // pred_check_branch
    %1075 = sbr.rel (0) target = $region37
  $region36: #{_lambda_.11} parent=0 // pred_region
    _
  $region37: #{_lambda_.11} parent=0 // pred_fallthru
    _
  // Predicated region
  $region38: #{_lambda_.11} parent=0 // pred_check
    _
  $region39: #{_lambda_.11} parent=0 // pred_check_branch
    %1077 = sbr.rel (0) target = $region41
  $region40: #{_lambda_.11} parent=0 // pred_region
    _
  $region41: #{_lambda_.11} parent=0 // pred_fallthru
    _
  // Predicated region
  $region42: #{_lambda_.11} parent=0 // pred_check
    _
  $region43: #{_lambda_.11} parent=0 // pred_check_branch
    %1079 = sbr.rel (0) target = $region45
  $region44: #{_lambda_.11} parent=0 // pred_region
    _
  $region45: #{_lambda_.11} parent=0 // pred_fallthru
    _
  // Predicated region
  $region46: #{_lambda_.11} parent=0 // pred_check
    _
  $region47: #{_lambda_.11} parent=0 // pred_check_branch
    %1081 = sbr.rel (0) target = $region49
  $region48: #{_lambda_.11} parent=0 // pred_region
    _
  $region49: #{_lambda_.11} parent=0 // pred_fallthru
    _

// kernel: _lambda_.14
$region0: #{_lambda_.14}
  #allocation0 [shape = 'u32[]', space=smem, size = 0x4, offset = 0x4, fixed_abs, tag = 'smem constant byte address 0x4 - core index']
  #allocation1 [shape = 'u32[144,128]{1,0:T(1,128)}', space=vmem, size = 0x12000, scoped, tag = 'internal scratch']
  #allocation2 [shape = 'bf16[128,128]{1,0:T(8,128)(2,1)}', space=vmem, size = 0x8000, scoped, tag = 'scratch operand']
  %s0 = inlined_call_operand.vmem [shape: bf16[128,128], index: 0, kind: input, shape index: {}]
  %s1 = inlined_call_operand.vmem [shape: f32[1,128], index: 1, kind: input, shape index: {}]
  %s2 = inlined_call_operand.vmem [shape: f32[1,128], index: 2, kind: input, shape index: {}]
  %s3 = inlined_call_operand.vmem [shape: bf16[128,512], index: 3, kind: input, shape index: {}]
  %s4 = inlined_call_operand.vmem [shape: f32[1,512], index: 4, kind: input, shape index: {}]
  %s5 = inlined_call_operand.vmem [shape: bf16[128,512], index: 5, kind: output, shape index: {}]
  %s6 = sld [smem:[#allocation0]]
  $region34: #{_lambda_.14} parent=0
    _
  %s8 = ssub.s32 1, %s6
  %s9 = scalar_select 0, %s8, %s6
  // Predicated region
  $region2: #{_lambda_.14} parent=0 // pred_check
    _
  $region3: #{_lambda_.14} parent=0 // pred_check_branch
    %11 = sbr.rel (0) target = $region5
  $region4: #{_lambda_.14} parent=0 // pred_region
    _
  $region5: #{_lambda_.14} parent=0 // pred_fallthru
    _
  // Predicated region
  $region6: #{_lambda_.14} parent=0 // pred_check
    _
  $region7: #{_lambda_.14} parent=0 // pred_check_branch
    %13 = sbr.rel (0) target = $region9
  $region8: #{_lambda_.14} parent=0 // pred_region
    _
  $region9: #{_lambda_.14} parent=0 // pred_fallthru
    _
  // Predicated region
  $region10: #{_lambda_.14} parent=0 // pred_check
    _
  $region11: #{_lambda_.14} parent=0 // pred_check_branch
    %15 = sbr.rel (0) target = $region13
  $region12: #{_lambda_.14} parent=0 // pred_region
    _
  $region13: #{_lambda_.14} parent=0 // pred_fallthru
    _
  // Predicated region
  $region14: #{_lambda_.14} parent=0 // pred_check
    _
  $region15: #{_lambda_.14} parent=0 // pred_check_branch
    %17 = sbr.rel (0) target = $region17
  $region16: #{_lambda_.14} parent=0 // pred_region
    _
  $region17: #{_lambda_.14} parent=0 // pred_fallthru
    _
  // Predicated region
  $region18: #{_lambda_.14} parent=0 // pred_check
    _
  $region19: #{_lambda_.14} parent=0 // pred_check_branch
    %19 = sbr.rel (0) target = $region21
  $region20: #{_lambda_.14} parent=0 // pred_region
    _
  $region21: #{_lambda_.14} parent=0 // pred_fallthru
    _
  %p21 = scmp.eq.s32.totalorder 0, 0
  // Predicated region
  $region22: #{_lambda_.14} parent=0 // pred_check
    %p22 = pneg %p21
  $region23: #{_lambda_.14} parent=0 // pred_check_branch
    %24 = sbr.rel (%p22) target = $region25
  $region24: #{_lambda_.14} parent=0 // pred_region
    %v25 = vld [vmem:[%s0] sm:$0xf]
    %v26 = vld [vmem:[%s0 + $0x4] sm:$0xf]
    %v27 = vld [vmem:[%s0 + $0x8] sm:$0xf]
    %v28 = vld [vmem:[%s0 + $0xc] sm:$0xf]
    %v29 = vld [vmem:[%s0 + $0x10] sm:$0xf]
    %v30 = vld [vmem:[%s0 + $0x14] sm:$0xf]
    %v31 = vld [vmem:[%s0 + $0x18] sm:$0xf]
    %v32 = vld [vmem:[%s0 + $0x1c] sm:$0xf]
    %v33 = vld [vmem:[%s0 + $0x20] sm:$0xf]
    %v34 = vld [vmem:[%s0 + $0x24] sm:$0xf]
    %v35 = vld [vmem:[%s0 + $0x28] sm:$0xf]
    %v36 = vld [vmem:[%s0 + $0x2c] sm:$0xf]
    %v37 = vld [vmem:[%s0 + $0x30] sm:$0xf]
    %v38 = vld [vmem:[%s0 + $0x34] sm:$0xf]
    %v39 = vld [vmem:[%s0 + $0x38] sm:$0xf]
    %v40 = vld [vmem:[%s0 + $0x3c] sm:$0xf]
    %v41 = vunpack.c.l.bf16 %v25
    %v42 = vunpack.c.l.bf16 %v26
    %v43 = vunpack.c.l.bf16 %v27
    %v44 = vunpack.c.l.bf16 %v28
    %v45 = vunpack.c.l.bf16 %v29
    %v46 = vunpack.c.l.bf16 %v30
    %v47 = vunpack.c.l.bf16 %v31
    %v48 = vunpack.c.l.bf16 %v32
    %v49 = vunpack.c.l.bf16 %v33
    %v50 = vunpack.c.l.bf16 %v34
    %v51 = vunpack.c.l.bf16 %v35
    %v52 = vunpack.c.l.bf16 %v36
    %v53 = vunpack.c.l.bf16 %v37
    %v54 = vunpack.c.l.bf16 %v38
    %v55 = vunpack.c.l.bf16 %v39
    %v56 = vunpack.c.l.bf16 %v40
    %v57 = vld [vmem:[%s1] sm:$0x1]
    %v58 = vld [vmem:[%s2] sm:$0x1]
    %59 = vadd.xlane.f32.xlu0 %v41
    %v60 = vpop.xlane.xlu0 %59
    %61 = vadd.xlane.f32.xlu0 %v42
    %v62 = vpop.xlane.xlu0 %61
    %63 = vadd.xlane.f32.xlu0 %v43
    %v64 = vpop.xlane.xlu0 %63
    %65 = vadd.xlane.f32.xlu0 %v44
    %v66 = vpop.xlane.xlu0 %65
    %67 = vadd.xlane.f32.xlu0 %v45
    %v68 = vpop.xlane.xlu0 %67
    %69 = vadd.xlane.f32.xlu0 %v46
    %v70 = vpop.xlane.xlu0 %69
    %71 = vadd.xlane.f32.xlu0 %v47
    %v72 = vpop.xlane.xlu0 %71
    %73 = vadd.xlane.f32.xlu0 %v48
    %v74 = vpop.xlane.xlu0 %73
    %75 = vadd.xlane.f32.xlu0 %v49
    %v76 = vpop.xlane.xlu0 %75
    %77 = vadd.xlane.f32.xlu0 %v50
    %v78 = vpop.xlane.xlu0 %77
    %79 = vadd.xlane.f32.xlu0 %v51
    %v80 = vpop.xlane.xlu0 %79
    %81 = vadd.xlane.f32.xlu0 %v52
    %v82 = vpop.xlane.xlu0 %81
    %83 = vadd.xlane.f32.xlu0 %v53
    %v84 = vpop.xlane.xlu0 %83
    %85 = vadd.xlane.f32.xlu0 %v54
    %v86 = vpop.xlane.xlu0 %85
    %87 = vadd.xlane.f32.xlu0 %v55
    %v88 = vpop.xlane.xlu0 %87
    %89 = vadd.xlane.f32.xlu0 %v56
    %v90 = vpop.xlane.xlu0 %89
    %v91 = vrcp.pop 128.0
    %v92 = vmul.f32 %v60, %v91
    %v93 = vmul.f32 %v62, %v91
    %v94 = vmul.f32 %v64, %v91
    %v95 = vmul.f32 %v66, %v91
    %v96 = vmul.f32 %v68, %v91
    %v97 = vmul.f32 %v70, %v91
    %v98 = vmul.f32 %v72, %v91
    %v99 = vmul.f32 %v74, %v91
    %v100 = vmul.f32 %v76, %v91
    %v101 = vmul.f32 %v78, %v91
    %v102 = vmul.f32 %v80, %v91
    %v103 = vmul.f32 %v82, %v91
    %v104 = vmul.f32 %v84, %v91
    %v105 = vmul.f32 %v86, %v91
    %v106 = vmul.f32 %v88, %v91
    %v107 = vmul.f32 %v90, %v91
    %v108 = vsub.f32 %v41, %v92
    %v109 = vsub.f32 %v42, %v93
    %v110 = vsub.f32 %v43, %v94
    %v111 = vsub.f32 %v44, %v95
    %v112 = vsub.f32 %v45, %v96
    %v113 = vsub.f32 %v46, %v97
    %v114 = vsub.f32 %v47, %v98
    %v115 = vsub.f32 %v48, %v99
    %v116 = vsub.f32 %v49, %v100
    %v117 = vsub.f32 %v50, %v101
    %v118 = vsub.f32 %v51, %v102
    %v119 = vsub.f32 %v52, %v103
    %v120 = vsub.f32 %v53, %v104
    %v121 = vsub.f32 %v54, %v105
    %v122 = vsub.f32 %v55, %v106
    %v123 = vsub.f32 %v56, %v107
    %v124 = vmul.f32 %v108, %v108
    %v125 = vmul.f32 %v109, %v109
    %v126 = vmul.f32 %v110, %v110
    %v127 = vmul.f32 %v111, %v111
    %v128 = vmul.f32 %v112, %v112
    %v129 = vmul.f32 %v113, %v113
    %v130 = vmul.f32 %v114, %v114
    %v131 = vmul.f32 %v115, %v115
    %v132 = vmul.f32 %v116, %v116
    %v133 = vmul.f32 %v117, %v117
    %v134 = vmul.f32 %v118, %v118
    %v135 = vmul.f32 %v119, %v119
    %v136 = vmul.f32 %v120, %v120
    %v137 = vmul.f32 %v121, %v121
    %v138 = vmul.f32 %v122, %v122
    %v139 = vmul.f32 %v123, %v123
    %140 = vadd.xlane.f32.xlu0 %v124
    %v141 = vpop.xlane.xlu0 %140
    %142 = vadd.xlane.f32.xlu0 %v125
    %v143 = vpop.xlane.xlu0 %142
    %144 = vadd.xlane.f32.xlu0 %v126
    %v145 = vpop.xlane.xlu0 %144
    %146 = vadd.xlane.f32.xlu0 %v127
    %v147 = vpop.xlane.xlu0 %146
    %148 = vadd.xlane.f32.xlu0 %v128
    %v149 = vpop.xlane.xlu0 %148
    %150 = vadd.xlane.f32.xlu0 %v129
    %v151 = vpop.xlane.xlu0 %150
    %152 = vadd.xlane.f32.xlu0 %v130
    %v153 = vpop.xlane.xlu0 %152
    %154 = vadd.xlane.f32.xlu0 %v131
    %v155 = vpop.xlane.xlu0 %154
    %156 = vadd.xlane.f32.xlu0 %v132
    %v157 = vpop.xlane.xlu0 %156
    %158 = vadd.xlane.f32.xlu0 %v133
    %v159 = vpop.xlane.xlu0 %158
    %160 = vadd.xlane.f32.xlu0 %v134
    %v161 = vpop.xlane.xlu0 %160
    %162 = vadd.xlane.f32.xlu0 %v135
    %v163 = vpop.xlane.xlu0 %162
    %164 = vadd.xlane.f32.xlu0 %v136
    %v165 = vpop.xlane.xlu0 %164
    %166 = vadd.xlane.f32.xlu0 %v137
    %v167 = vpop.xlane.xlu0 %166
    %168 = vadd.xlane.f32.xlu0 %v138
    %v169 = vpop.xlane.xlu0 %168
    %170 = vadd.xlane.f32.xlu0 %v139
    %v171 = vpop.xlane.xlu0 %170
    %v172 = vmul.f32 %v141, %v91
    %v173 = vmul.f32 %v143, %v91
    %v174 = vmul.f32 %v145, %v91
    %v175 = vmul.f32 %v147, %v91
    %v176 = vmul.f32 %v149, %v91
    %v177 = vmul.f32 %v151, %v91
    %v178 = vmul.f32 %v153, %v91
    %v179 = vmul.f32 %v155, %v91
    %v180 = vmul.f32 %v157, %v91
    %v181 = vmul.f32 %v159, %v91
    %v182 = vmul.f32 %v161, %v91
    %v183 = vmul.f32 %v163, %v91
    %v184 = vmul.f32 %v165, %v91
    %v185 = vmul.f32 %v167, %v91
    %v186 = vmul.f32 %v169, %v91
    %v187 = vmul.f32 %v171, %v91
    %v188 = vadd.f32 %v172, 1e-05
    %v189 = vadd.f32 %v173, 1e-05
    %v190 = vadd.f32 %v174, 1e-05
    %v191 = vadd.f32 %v175, 1e-05
    %v192 = vadd.f32 %v176, 1e-05
    %v193 = vadd.f32 %v177, 1e-05
    %v194 = vadd.f32 %v178, 1e-05
    %v195 = vadd.f32 %v179, 1e-05
    %v196 = vadd.f32 %v180, 1e-05
    %v197 = vadd.f32 %v181, 1e-05
    %v198 = vadd.f32 %v182, 1e-05
    %v199 = vadd.f32 %v183, 1e-05
    %v200 = vadd.f32 %v184, 1e-05
    %v201 = vadd.f32 %v185, 1e-05
    %v202 = vadd.f32 %v186, 1e-05
    %v203 = vadd.f32 %v187, 1e-05
    %v204 = vrsqrt.pop %v188
    %v205 = vrsqrt.pop %v189
    %v206 = vrsqrt.pop %v190
    %v207 = vrsqrt.pop %v191
    %v208 = vrsqrt.pop %v192
    %v209 = vrsqrt.pop %v193
    %v210 = vrsqrt.pop %v194
    %v211 = vrsqrt.pop %v195
    %v212 = vrsqrt.pop %v196
    %v213 = vrsqrt.pop %v197
    %v214 = vrsqrt.pop %v198
    %v215 = vrsqrt.pop %v199
    %v216 = vrsqrt.pop %v200
    %v217 = vrsqrt.pop %v201
    %v218 = vrsqrt.pop %v202
    %v219 = vrsqrt.pop %v203
    %v220 = vmul.f32 %v108, %v204
    %v221 = vmul.f32 %v109, %v205
    %v222 = vmul.f32 %v110, %v206
    %v223 = vmul.f32 %v111, %v207
    %v224 = vmul.f32 %v112, %v208
    %v225 = vmul.f32 %v113, %v209
    %v226 = vmul.f32 %v114, %v210
    %v227 = vmul.f32 %v115, %v211
    %v228 = vmul.f32 %v116, %v212
    %v229 = vmul.f32 %v117, %v213
    %v230 = vmul.f32 %v118, %v214
    %v231 = vmul.f32 %v119, %v215
    %v232 = vmul.f32 %v120, %v216
    %v233 = vmul.f32 %v121, %v217
    %v234 = vmul.f32 %v122, %v218
    %v235 = vmul.f32 %v123, %v219
    %v237 = vlaneseq
    %v238 = vshrl.u32 %v237, 7
    %v239 = vsub.s32 0, %v238
    %v240 = vrot.slane %v57, %v239
    %v242 = vmul.f32 %v220, %v240
    %v243 = vmul.f32 %v221, %v240
    %v244 = vmul.f32 %v222, %v240
    %v245 = vmul.f32 %v223, %v240
    %v246 = vmul.f32 %v224, %v240
    %v247 = vmul.f32 %v225, %v240
    %v248 = vmul.f32 %v226, %v240
    %v249 = vmul.f32 %v227, %v240
    %v250 = vmul.f32 %v228, %v240
    %v251 = vmul.f32 %v229, %v240
    %v252 = vmul.f32 %v230, %v240
    %v253 = vmul.f32 %v231, %v240
    %v254 = vmul.f32 %v232, %v240
    %v255 = vmul.f32 %v233, %v240
    %v256 = vmul.f32 %v234, %v240
    %v257 = vmul.f32 %v235, %v240
    %v259 = vlaneseq
    %v260 = vshrl.u32 %v259, 7
    %v261 = vsub.s32 0, %v260
    %v262 = vrot.slane %v58, %v261
    %v264 = vadd.f32 %v242, %v262
    %v265 = vadd.f32 %v243, %v262
    %v266 = vadd.f32 %v244, %v262
    %v267 = vadd.f32 %v245, %v262
    %v268 = vadd.f32 %v246, %v262
    %v269 = vadd.f32 %v247, %v262
    %v270 = vadd.f32 %v248, %v262
    %v271 = vadd.f32 %v249, %v262
    %v272 = vadd.f32 %v250, %v262
    %v273 = vadd.f32 %v251, %v262
    %v274 = vadd.f32 %v252, %v262
    %v275 = vadd.f32 %v253, %v262
    %v276 = vadd.f32 %v254, %v262
    %v277 = vadd.f32 %v255, %v262
    %v278 = vadd.f32 %v256, %v262
    %v279 = vadd.f32 %v257, %v262
    %v280 = vpack.c.bf16 %v265, %v264
    %v281 = vpack.c.bf16 %v267, %v266
    %v282 = vpack.c.bf16 %v269, %v268
    %v283 = vpack.c.bf16 %v271, %v270
    %v284 = vpack.c.bf16 %v273, %v272
    %v285 = vpack.c.bf16 %v275, %v274
    %v286 = vpack.c.bf16 %v277, %v276
    %v287 = vpack.c.bf16 %v279, %v278
    %v296 = vunpack.c.l.b16 %v280
    %v297 = vunpack.c.h.b16 %v280
    %v298 = vunpack.c.l.b16 %v281
    %v299 = vunpack.c.h.b16 %v281
    %v300 = vunpack.c.l.b16 %v282
    %v301 = vunpack.c.h.b16 %v282
    %v302 = vunpack.c.l.b16 %v283
    %v303 = vunpack.c.h.b16 %v283
    %v304 = vunpack.c.l.b16 %v284
    %v305 = vunpack.c.h.b16 %v284
    %v306 = vunpack.c.l.b16 %v285
    %v307 = vunpack.c.h.b16 %v285
    %v308 = vunpack.c.l.b16 %v286
    %v309 = vunpack.c.h.b16 %v286
    %v310 = vunpack.c.l.b16 %v287
    %v311 = vunpack.c.h.b16 %v287
    %v312 = vpack.c.b16 %v296, %v296
    %v313 = vpack.c.b16 %v297, %v297
    %v314 = vpack.c.b16 %v298, %v298
    %v315 = vpack.c.b16 %v299, %v299
    %v316 = vpack.c.b16 %v300, %v300
    %v317 = vpack.c.b16 %v301, %v301
    %v318 = vpack.c.b16 %v302, %v302
    %v319 = vpack.c.b16 %v303, %v303
    %v320 = vpack.c.b16 %v304, %v304
    %v321 = vpack.c.b16 %v305, %v305
    %v322 = vpack.c.b16 %v306, %v306
    %v323 = vpack.c.b16 %v307, %v307
    %v324 = vpack.c.b16 %v308, %v308
    %v325 = vpack.c.b16 %v309, %v309
    %v326 = vpack.c.b16 %v310, %v310
    %v327 = vpack.c.b16 %v311, %v311
    %344 = vst [vmem:[#allocation2] sm:$0xf] %v312
    %345 = vst [vmem:[#allocation2 + $0x4] sm:$0xf] %v313
    %346 = vst [vmem:[#allocation2 + $0x8] sm:$0xf] %v314
    %347 = vst [vmem:[#allocation2 + $0xc] sm:$0xf] %v315
    %348 = vst [vmem:[#allocation2 + $0x10] sm:$0xf] %v316
    %349 = vst [vmem:[#allocation2 + $0x14] sm:$0xf] %v317
    %350 = vst [vmem:[#allocation2 + $0x18] sm:$0xf] %v318
    %351 = vst [vmem:[#allocation2 + $0x1c] sm:$0xf] %v319
    %352 = vst [vmem:[#allocation2 + $0x20] sm:$0xf] %v320
    %353 = vst [vmem:[#allocation2 + $0x24] sm:$0xf] %v321
    %354 = vst [vmem:[#allocation2 + $0x28] sm:$0xf] %v322
    %355 = vst [vmem:[#allocation2 + $0x2c] sm:$0xf] %v323
    %356 = vst [vmem:[#allocation2 + $0x30] sm:$0xf] %v324
    %357 = vst [vmem:[#allocation2 + $0x34] sm:$0xf] %v325
    %358 = vst [vmem:[#allocation2 + $0x38] sm:$0xf] %v326
    %359 = vst [vmem:[#allocation2 + $0x3c] sm:$0xf] %v327
  $region25: #{_lambda_.14} parent=0 // pred_fallthru
    _
  %v360 = vld [vmem:[#allocation2] sm:$0xf]
  %v361 = vld [vmem:[#allocation2 + $0x4] sm:$0xf]
  %v362 = vld [vmem:[#allocation2 + $0x8] sm:$0xf]
  %v363 = vld [vmem:[#allocation2 + $0xc] sm:$0xf]
  %v364 = vld [vmem:[#allocation2 + $0x10] sm:$0xf]
  %v365 = vld [vmem:[#allocation2 + $0x14] sm:$0xf]
  %v366 = vld [vmem:[#allocation2 + $0x18] sm:$0xf]
  %v367 = vld [vmem:[#allocation2 + $0x1c] sm:$0xf]
  %v368 = vld [vmem:[#allocation2 + $0x20] sm:$0xf]
  %v369 = vld [vmem:[#allocation2 + $0x24] sm:$0xf]
  %v370 = vld [vmem:[#allocation2 + $0x28] sm:$0xf]
  %v371 = vld [vmem:[#allocation2 + $0x2c] sm:$0xf]
  %v372 = vld [vmem:[#allocation2 + $0x30] sm:$0xf]
  %v373 = vld [vmem:[#allocation2 + $0x34] sm:$0xf]
  %v374 = vld [vmem:[#allocation2 + $0x38] sm:$0xf]
  %v375 = vld [vmem:[#allocation2 + $0x3c] sm:$0xf]
  %v376 = vld [vmem:[%s3] sm:$0xff]
  %v377 = vld [vmem:[%s3 + $0x8] sm:$0xff]
  %v378 = vld [vmem:[%s3 + $0x10] sm:$0xff]
  %v379 = vld [vmem:[%s3 + $0x18] sm:$0xff]
  %v380 = vld [vmem:[%s3 + $0x20] sm:$0xff]
  %v381 = vld [vmem:[%s3 + $0x28] sm:$0xff]
  %v382 = vld [vmem:[%s3 + $0x30] sm:$0xff]
  %v383 = vld [vmem:[%s3 + $0x38] sm:$0xff]
  %v384 = vld [vmem:[%s3 + $0x40] sm:$0xff]
  %v385 = vld [vmem:[%s3 + $0x48] sm:$0xff]
  %v386 = vld [vmem:[%s3 + $0x50] sm:$0xff]
  %v387 = vld [vmem:[%s3 + $0x58] sm:$0xff]
  %v388 = vld [vmem:[%s3 + $0x60] sm:$0xff]
  %v389 = vld [vmem:[%s3 + $0x68] sm:$0xff]
  %v390 = vld [vmem:[%s3 + $0x70] sm:$0xff]
  %v391 = vld [vmem:[%s3 + $0x78] sm:$0xff]
  %v392 = vld [vmem:[%s3 + $0x80] sm:$0xff]
  %v393 = vld [vmem:[%s3 + $0x88] sm:$0xff]
  %v394 = vld [vmem:[%s3 + $0x90] sm:$0xff]
  %v395 = vld [vmem:[%s3 + $0x98] sm:$0xff]
  %v396 = vld [vmem:[%s3 + $0xa0] sm:$0xff]
  %v397 = vld [vmem:[%s3 + $0xa8] sm:$0xff]
  %v398 = vld [vmem:[%s3 + $0xb0] sm:$0xff]
  %v399 = vld [vmem:[%s3 + $0xb8] sm:$0xff]
  %v400 = vld [vmem:[%s3 + $0xc0] sm:$0xff]
  %v401 = vld [vmem:[%s3 + $0xc8] sm:$0xff]
  %v402 = vld [vmem:[%s3 + $0xd0] sm:$0xff]
  %v403 = vld [vmem:[%s3 + $0xd8] sm:$0xff]
  %v404 = vld [vmem:[%s3 + $0xe0] sm:$0xff]
  %v405 = vld [vmem:[%s3 + $0xe8] sm:$0xff]
  %v406 = vld [vmem:[%s3 + $0xf0] sm:$0xff]
  %v407 = vld [vmem:[%s3 + $0xf8] sm:$0xff]
  %v408 = vld [vmem:[%s4] sm:$0xf]
  %v410 = vlaneseq
  %v411 = vshrl.u32 %v410, 7
  %v412 = vsub.s32 0, %v411
  %v413 = vrot.slane %v408, %v412
  %v414 = vlaneseq
  %v415 = vshrl.u32 %v414, 7
  %v416 = vsub.s32 1, %v415
  %v417 = vrot.slane %v408, %v416
  %v418 = vlaneseq
  %v419 = vshrl.u32 %v418, 7
  %v420 = vsub.s32 2, %v419
  %v421 = vrot.slane %v408, %v420
  %v422 = vlaneseq
  %v423 = vshrl.u32 %v422, 7
  %v424 = vsub.s32 3, %v423
  %v425 = vrot.slane %v408, %v424
  %v446 = vunpack.c.l.b16 %v360
  %v447 = vunpack.c.l.b16 %v361
  %v448 = vunpack.c.l.b16 %v362
  %v449 = vunpack.c.l.b16 %v363
  %v450 = vunpack.c.l.b16 %v364
  %v451 = vunpack.c.l.b16 %v365
  %v452 = vunpack.c.l.b16 %v366
  %v453 = vunpack.c.l.b16 %v367
  %v454 = vunpack.c.l.b16 %v368
  %v455 = vunpack.c.l.b16 %v369
  %v456 = vunpack.c.l.b16 %v370
  %v457 = vunpack.c.l.b16 %v371
  %v458 = vunpack.c.l.b16 %v372
  %v459 = vunpack.c.l.b16 %v373
  %v460 = vunpack.c.l.b16 %v374
  %v461 = vunpack.c.l.b16 %v375
  %v462 = vpack.c.b16 %v447, %v446
  %v463 = vpack.c.b16 %v449, %v448
  %v464 = vpack.c.b16 %v451, %v450
  %v465 = vpack.c.b16 %v453, %v452
  %v466 = vpack.c.b16 %v455, %v454
  %v467 = vpack.c.b16 %v457, %v456
  %v468 = vpack.c.b16 %v459, %v458
  %v469 = vpack.c.b16 %v461, %v460
  %v510 = vunpack.c.l.b16 %v376
  %v511 = vunpack.c.h.b16 %v376
  %v512 = vunpack.c.l.b16 %v377
  %v513 = vunpack.c.h.b16 %v377
  %v514 = vunpack.c.l.b16 %v378
  %v515 = vunpack.c.h.b16 %v378
  %v516 = vunpack.c.l.b16 %v379
  %v517 = vunpack.c.h.b16 %v379
  %v518 = vunpack.c.l.b16 %v380
  %v519 = vunpack.c.h.b16 %v380
  %v520 = vunpack.c.l.b16 %v381
  %v521 = vunpack.c.h.b16 %v381
  %v522 = vunpack.c.l.b16 %v382
  %v523 = vunpack.c.h.b16 %v382
  %v524 = vunpack.c.l.b16 %v383
  %v525 = vunpack.c.h.b16 %v383
  %v526 = vunpack.c.l.b16 %v384
  %v527 = vunpack.c.h.b16 %v384
  %v528 = vunpack.c.l.b16 %v385
  %v529 = vunpack.c.h.b16 %v385
  %v530 = vunpack.c.l.b16 %v386
  %v531 = vunpack.c.h.b16 %v386
  %v532 = vunpack.c.l.b16 %v387
  %v533 = vunpack.c.h.b16 %v387
  %v534 = vunpack.c.l.b16 %v388
  %v535 = vunpack.c.h.b16 %v388
  %v536 = vunpack.c.l.b16 %v389
  %v537 = vunpack.c.h.b16 %v389
  %v538 = vunpack.c.l.b16 %v390
  %v539 = vunpack.c.h.b16 %v390
  %v540 = vunpack.c.l.b16 %v391
  %v541 = vunpack.c.h.b16 %v391
  %v542 = vunpack.c.l.b16 %v392
  %v543 = vunpack.c.h.b16 %v392
  %v544 = vunpack.c.l.b16 %v393
  %v545 = vunpack.c.h.b16 %v393
  %v546 = vunpack.c.l.b16 %v394
  %v547 = vunpack.c.h.b16 %v394
  %v548 = vunpack.c.l.b16 %v395
  %v549 = vunpack.c.h.b16 %v395
  %v550 = vunpack.c.l.b16 %v396
  %v551 = vunpack.c.h.b16 %v396
  %v552 = vunpack.c.l.b16 %v397
  %v553 = vunpack.c.h.b16 %v397
  %v554 = vunpack.c.l.b16 %v398
  %v555 = vunpack.c.h.b16 %v398
  %v556 = vunpack.c.l.b16 %v399
  %v557 = vunpack.c.h.b16 %v399
  %v558 = vunpack.c.l.b16 %v400
  %v559 = vunpack.c.h.b16 %v400
  %v560 = vunpack.c.l.b16 %v401
  %v561 = vunpack.c.h.b16 %v401
  %v562 = vunpack.c.l.b16 %v402
  %v563 = vunpack.c.h.b16 %v402
  %v564 = vunpack.c.l.b16 %v403
  %v565 = vunpack.c.h.b16 %v403
  %v566 = vunpack.c.l.b16 %v404
  %v567 = vunpack.c.h.b16 %v404
  %v568 = vunpack.c.l.b16 %v405
  %v569 = vunpack.c.h.b16 %v405
  %v570 = vunpack.c.l.b16 %v406
  %v571 = vunpack.c.h.b16 %v406
  %v572 = vunpack.c.l.b16 %v407
  %v573 = vunpack.c.h.b16 %v407
  %v574 = vpack.c.b16 %v514, %v510
  %v575 = vpack.c.b16 %v515, %v511
  %v576 = vpack.c.b16 %v516, %v512
  %v577 = vpack.c.b16 %v517, %v513
  %v578 = vpack.c.b16 %v522, %v518
  %v579 = vpack.c.b16 %v523, %v519
  %v580 = vpack.c.b16 %v524, %v520
  %v581 = vpack.c.b16 %v525, %v521
  %v582 = vpack.c.b16 %v530, %v526
  %v583 = vpack.c.b16 %v531, %v527
  %v584 = vpack.c.b16 %v532, %v528
  %v585 = vpack.c.b16 %v533, %v529
  %v586 = vpack.c.b16 %v538, %v534
  %v587 = vpack.c.b16 %v539, %v535
  %v588 = vpack.c.b16 %v540, %v536
  %v589 = vpack.c.b16 %v541, %v537
  %v590 = vpack.c.b16 %v546, %v542
  %v591 = vpack.c.b16 %v547, %v543
  %v592 = vpack.c.b16 %v548, %v544
  %v593 = vpack.c.b16 %v549, %v545
  %v594 = vpack.c.b16 %v554, %v550
  %v595 = vpack.c.b16 %v555, %v551
  %v596 = vpack.c.b16 %v556, %v552
  %v597 = vpack.c.b16 %v557, %v553
  %v598 = vpack.c.b16 %v562, %v558
  %v599 = vpack.c.b16 %v563, %v559
  %v600 = vpack.c.b16 %v564, %v560
  %v601 = vpack.c.b16 %v565, %v561
  %v602 = vpack.c.b16 %v570, %v566
  %v603 = vpack.c.b16 %v571, %v567
  %v604 = vpack.c.b16 %v572, %v568
  %v605 = vpack.c.b16 %v573, %v569
  %638 = vmatprep.subr.bf16.mxu0 %v603
  %639 = vmatpush1.bf16.msra.mxu0 %v602
  %640 = vmatprep.subr.bf16.mxu0 %v599
  %641 = vmatpush1.bf16.msra.mxu0 %v598
  %642 = vmatprep.subr.bf16.mxu0 %v595
  %643 = vmatpush1.bf16.msra.mxu0 %v594
  %644 = vmatprep.subr.bf16.mxu0 %v591
  %645 = vmatpush1.bf16.msra.mxu0 %v590
  %646 = vmatprep.subr.bf16.mxu0 %v587
  %647 = vmatpush1.bf16.msra.mxu0 %v586
  %648 = vmatprep.subr.bf16.mxu0 %v583
  %649 = vmatpush1.bf16.msra.mxu0 %v582
  %650 = vmatprep.subr.bf16.mxu0 %v579
  %651 = vmatpush1.bf16.msra.mxu0 %v578
  %652 = vmatprep.subr.bf16.mxu0 %v575
  %653 = vmatpush1.bf16.msra.mxu0 %v574
  %654 = vmatprep.subr.bf16.mxu0 0
  %655 = vmatpush2.bf16.msra.mxu0 0
  %656 = vmatprep.subr.bf16.mxu0 0
  %657 = vmatpush2.bf16.msra.mxu0 0
  %658 = vmatprep.subr.bf16.mxu0 0
  %659 = vmatpush2.bf16.msra.mxu0 0
  %660 = vmatprep.subr.bf16.mxu0 0
  %661 = vmatpush2.bf16.msra.mxu0 0
  %662 = vmatprep.subr.bf16.mxu0 0
  %663 = vmatpush2.bf16.msra.mxu0 0
  %664 = vmatprep.subr.bf16.mxu0 0
  %665 = vmatpush2.bf16.msra.mxu0 0
  %666 = vmatprep.subr.bf16.mxu0 0
  %667 = vmatpush2.bf16.msra.mxu0 0
  %668 = vmatprep.subr.bf16.mxu0 0
  %669 = vmatpush2.bf16.msra.mxu0 0
  %670 = vmatprep.mubr.bf16.mxu0 0
  %671 = vmatmul.mubr.bf16.gmra.mxu0 %v462
  %v672 = vpop.f32.mrf.mxu0
  %v673 = vadd.f32 %v413, %v672
  %v674 = vpop.f32.mrf.mxu0
  %v675 = vadd.f32 %v417, %v674
  %v676 = vpop.f32.mrf.mxu0
  %v677 = vadd.f32 %v413, %v676
  %v678 = vpop.f32.mrf.mxu0
  %v679 = vadd.f32 %v417, %v678
  %680 = vmatprep.mubr.bf16.mxu0 0
  %681 = vmatmul.mubr.bf16.gmra.mxu0 %v463
  %v682 = vpop.f32.mrf.mxu0
  %v683 = vadd.f32 %v413, %v682
  %v684 = vpop.f32.mrf.mxu0
  %v685 = vadd.f32 %v417, %v684
  %v686 = vpop.f32.mrf.mxu0
  %v687 = vadd.f32 %v413, %v686
  %v688 = vpop.f32.mrf.mxu0
  %v689 = vadd.f32 %v417, %v688
  %690 = vmatprep.mubr.bf16.mxu0 0
  %691 = vmatmul.mubr.bf16.gmra.mxu0 %v464
  %v692 = vpop.f32.mrf.mxu0
  %v693 = vadd.f32 %v413, %v692
  %v694 = vpop.f32.mrf.mxu0
  %v695 = vadd.f32 %v417, %v694
  %v696 = vpop.f32.mrf.mxu0
  %v697 = vadd.f32 %v413, %v696
  %v698 = vpop.f32.mrf.mxu0
  %v699 = vadd.f32 %v417, %v698
  %700 = vmatprep.mubr.bf16.mxu0 0
  %701 = vmatmul.mubr.bf16.gmra.mxu0 %v465
  %v702 = vpop.f32.mrf.mxu0
  %v703 = vadd.f32 %v413, %v702
  %v704 = vpop.f32.mrf.mxu0
  %v705 = vadd.f32 %v417, %v704
  %v706 = vpop.f32.mrf.mxu0
  %v707 = vadd.f32 %v413, %v706
  %v708 = vpop.f32.mrf.mxu0
  %v709 = vadd.f32 %v417, %v708
  %710 = vmatprep.mubr.bf16.mxu0 0
  %711 = vmatmul.mubr.bf16.gmra.mxu0 %v466
  %v712 = vpop.f32.mrf.mxu0
  %v713 = vadd.f32 %v413, %v712
  %v714 = vpop.f32.mrf.mxu0
  %v715 = vadd.f32 %v417, %v714
  %v716 = vpop.f32.mrf.mxu0
  %v717 = vadd.f32 %v413, %v716
  %v718 = vpop.f32.mrf.mxu0
  %v719 = vadd.f32 %v417, %v718
  %720 = vmatprep.mubr.bf16.mxu0 0
  %721 = vmatmul.mubr.bf16.gmra.mxu0 %v467
  %v722 = vpop.f32.mrf.mxu0
  %v723 = vadd.f32 %v413, %v722
  %v724 = vpop.f32.mrf.mxu0
  %v725 = vadd.f32 %v417, %v724
  %v726 = vpop.f32.mrf.mxu0
  %v727 = vadd.f32 %v413, %v726
  %v728 = vpop.f32.mrf.mxu0
  %v729 = vadd.f32 %v417, %v728
  %730 = vmatprep.mubr.bf16.mxu0 0
  %731 = vmatmul.mubr.bf16.gmra.mxu0 %v468
  %v732 = vpop.f32.mrf.mxu0
  %v733 = vadd.f32 %v413, %v732
  %v734 = vpop.f32.mrf.mxu0
  %v735 = vadd.f32 %v417, %v734
  %v736 = vpop.f32.mrf.mxu0
  %v737 = vadd.f32 %v413, %v736
  %v738 = vpop.f32.mrf.mxu0
  %v739 = vadd.f32 %v417, %v738
  %740 = vmatprep.mubr.bf16.mxu0 0
  %741 = vmatmul.mubr.bf16.gmra.mxu0 %v469
  %v742 = vpop.f32.mrf.mxu0
  %v743 = vadd.f32 %v413, %v742
  %v744 = vpop.f32.mrf.mxu0
  %v745 = vadd.f32 %v417, %v744
  %v746 = vpop.f32.mrf.mxu0
  %v747 = vadd.f32 %v413, %v746
  %v748 = vpop.f32.mrf.mxu0
  %v749 = vadd.f32 %v417, %v748
  %750 = vdwg.mxu0
  %751 = vmatprep.subr.bf16.mxu0 %v605
  %752 = vmatpush1.bf16.msra.mxu0 %v604
  %753 = vmatprep.subr.bf16.mxu0 %v601
  %754 = vmatpush1.bf16.msra.mxu0 %v600
  %755 = vmatprep.subr.bf16.mxu0 %v597
  %756 = vmatpush1.bf16.msra.mxu0 %v596
  %757 = vmatprep.subr.bf16.mxu0 %v593
  %758 = vmatpush1.bf16.msra.mxu0 %v592
  %759 = vmatprep.subr.bf16.mxu0 %v589
  %760 = vmatpush1.bf16.msra.mxu0 %v588
  %761 = vmatprep.subr.bf16.mxu0 %v585
  %762 = vmatpush1.bf16.msra.mxu0 %v584
  %763 = vmatprep.subr.bf16.mxu0 %v581
  %764 = vmatpush1.bf16.msra.mxu0 %v580
  %765 = vmatprep.subr.bf16.mxu0 %v577
  %766 = vmatpush1.bf16.msra.mxu0 %v576
  %767 = vmatprep.subr.bf16.mxu0 0
  %768 = vmatpush2.bf16.msra.mxu0 0
  %769 = vmatprep.subr.bf16.mxu0 0
  %770 = vmatpush2.bf16.msra.mxu0 0
  %771 = vmatprep.subr.bf16.mxu0 0
  %772 = vmatpush2.bf16.msra.mxu0 0
  %773 = vmatprep.subr.bf16.mxu0 0
  %774 = vmatpush2.bf16.msra.mxu0 0
  %775 = vmatprep.subr.bf16.mxu0 0
  %776 = vmatpush2.bf16.msra.mxu0 0
  %777 = vmatprep.subr.bf16.mxu0 0
  %778 = vmatpush2.bf16.msra.mxu0 0
  %779 = vmatprep.subr.bf16.mxu0 0
  %780 = vmatpush2.bf16.msra.mxu0 0
  %781 = vmatprep.subr.bf16.mxu0 0
  %782 = vmatpush2.bf16.msra.mxu0 0
  %783 = vmatprep.mubr.bf16.mxu0 0
  %784 = vmatmul.mubr.bf16.gmra.mxu0 %v462
  %v785 = vpop.f32.mrf.mxu0
  %v786 = vadd.f32 %v421, %v785
  %v787 = vpop.f32.mrf.mxu0
  %v788 = vadd.f32 %v425, %v787
  %v789 = vpop.f32.mrf.mxu0
  %v790 = vadd.f32 %v421, %v789
  %v791 = vpop.f32.mrf.mxu0
  %v792 = vadd.f32 %v425, %v791
  %793 = vmatprep.mubr.bf16.mxu0 0
  %794 = vmatmul.mubr.bf16.gmra.mxu0 %v463
  %v795 = vpop.f32.mrf.mxu0
  %v796 = vadd.f32 %v421, %v795
  %v797 = vpop.f32.mrf.mxu0
  %v798 = vadd.f32 %v425, %v797
  %v799 = vpop.f32.mrf.mxu0
  %v800 = vadd.f32 %v421, %v799
  %v801 = vpop.f32.mrf.mxu0
  %v802 = vadd.f32 %v425, %v801
  %803 = vmatprep.mubr.bf16.mxu0 0
  %804 = vmatmul.mubr.bf16.gmra.mxu0 %v464
  %v805 = vpop.f32.mrf.mxu0
  %v806 = vadd.f32 %v421, %v805
  %v807 = vpop.f32.mrf.mxu0
  %v808 = vadd.f32 %v425, %v807
  %v809 = vpop.f32.mrf.mxu0
  %v810 = vadd.f32 %v421, %v809
  %v811 = vpop.f32.mrf.mxu0
  %v812 = vadd.f32 %v425, %v811
  %813 = vmatprep.mubr.bf16.mxu0 0
  %814 = vmatmul.mubr.bf16.gmra.mxu0 %v465
  %v815 = vpop.f32.mrf.mxu0
  %v816 = vadd.f32 %v421, %v815
  %v817 = vpop.f32.mrf.mxu0
  %v818 = vadd.f32 %v425, %v817
  %v819 = vpop.f32.mrf.mxu0
  %v820 = vadd.f32 %v421, %v819
  %v821 = vpop.f32.mrf.mxu0
  %v822 = vadd.f32 %v425, %v821
  %823 = vmatprep.mubr.bf16.mxu0 0
  %824 = vmatmul.mubr.bf16.gmra.mxu0 %v466
  %v825 = vpop.f32.mrf.mxu0
  %v826 = vadd.f32 %v421, %v825
  %v827 = vpop.f32.mrf.mxu0
  %v828 = vadd.f32 %v425, %v827
  %v829 = vpop.f32.mrf.mxu0
  %v830 = vadd.f32 %v421, %v829
  %v831 = vpop.f32.mrf.mxu0
  %v832 = vadd.f32 %v425, %v831
  %833 = vmatprep.mubr.bf16.mxu0 0
  %834 = vmatmul.mubr.bf16.gmra.mxu0 %v467
  %v835 = vpop.f32.mrf.mxu0
  %v836 = vadd.f32 %v421, %v835
  %v837 = vpop.f32.mrf.mxu0
  %v838 = vadd.f32 %v425, %v837
  %v839 = vpop.f32.mrf.mxu0
  %v840 = vadd.f32 %v421, %v839
  %v841 = vpop.f32.mrf.mxu0
  %v842 = vadd.f32 %v425, %v841
  %843 = vmatprep.mubr.bf16.mxu0 0
  %844 = vmatmul.mubr.bf16.gmra.mxu0 %v468
  %v845 = vpop.f32.mrf.mxu0
  %v846 = vadd.f32 %v421, %v845
  %v847 = vpop.f32.mrf.mxu0
  %v848 = vadd.f32 %v425, %v847
  %v849 = vpop.f32.mrf.mxu0
  %v850 = vadd.f32 %v421, %v849
  %v851 = vpop.f32.mrf.mxu0
  %v852 = vadd.f32 %v425, %v851
  %853 = vmatprep.mubr.bf16.mxu0 0
  %854 = vmatmul.mubr.bf16.gmra.mxu0 %v469
  %v855 = vpop.f32.mrf.mxu0
  %v856 = vadd.f32 %v421, %v855
  %v857 = vpop.f32.mrf.mxu0
  %v858 = vadd.f32 %v425, %v857
  %v859 = vpop.f32.mrf.mxu0
  %v860 = vadd.f32 %v421, %v859
  %v861 = vpop.f32.mrf.mxu0
  %v862 = vadd.f32 %v425, %v861
  %863 = vdwg.mxu0
  %v864 = vmul.f32 %v673, 0.5
  %v865 = vmul.f32 %v675, 0.5
  %v866 = vmul.f32 %v786, 0.5
  %v867 = vmul.f32 %v788, 0.5
  %v868 = vmul.f32 %v677, 0.5
  %v869 = vmul.f32 %v679, 0.5
  %v870 = vmul.f32 %v790, 0.5
  %v871 = vmul.f32 %v792, 0.5
  %v872 = vmul.f32 %v683, 0.5
  %v873 = vmul.f32 %v685, 0.5
  %v874 = vmul.f32 %v796, 0.5
  %v875 = vmul.f32 %v798, 0.5
  %v876 = vmul.f32 %v687, 0.5
  %v877 = vmul.f32 %v689, 0.5
  %v878 = vmul.f32 %v800, 0.5
  %v879 = vmul.f32 %v802, 0.5
  %v880 = vmul.f32 %v693, 0.5
  %v881 = vmul.f32 %v695, 0.5
  %v882 = vmul.f32 %v806, 0.5
  %v883 = vmul.f32 %v808, 0.5
  %v884 = vmul.f32 %v697, 0.5
  %v885 = vmul.f32 %v699, 0.5
  %v886 = vmul.f32 %v810, 0.5
  %v887 = vmul.f32 %v812, 0.5
  %v888 = vmul.f32 %v703, 0.5
  %v889 = vmul.f32 %v705, 0.5
  %v890 = vmul.f32 %v816, 0.5
  %v891 = vmul.f32 %v818, 0.5
  %v892 = vmul.f32 %v707, 0.5
  %v893 = vmul.f32 %v709, 0.5
  %v894 = vmul.f32 %v820, 0.5
  %v895 = vmul.f32 %v822, 0.5
  %v896 = vmul.f32 %v713, 0.5
  %v897 = vmul.f32 %v715, 0.5
  %v898 = vmul.f32 %v826, 0.5
  %v899 = vmul.f32 %v828, 0.5
  %v900 = vmul.f32 %v717, 0.5
  %v901 = vmul.f32 %v719, 0.5
  %v902 = vmul.f32 %v830, 0.5
  %v903 = vmul.f32 %v832, 0.5
  %v904 = vmul.f32 %v723, 0.5
  %v905 = vmul.f32 %v725, 0.5
  %v906 = vmul.f32 %v836, 0.5
  %v907 = vmul.f32 %v838, 0.5
  %v908 = vmul.f32 %v727, 0.5
  %v909 = vmul.f32 %v729, 0.5
  %v910 = vmul.f32 %v840, 0.5
  %v911 = vmul.f32 %v842, 0.5
  %v912 = vmul.f32 %v733, 0.5
  %v913 = vmul.f32 %v735, 0.5
  %v914 = vmul.f32 %v846, 0.5
  %v915 = vmul.f32 %v848, 0.5
  %v916 = vmul.f32 %v737, 0.5
  %v917 = vmul.f32 %v739, 0.5
  %v918 = vmul.f32 %v850, 0.5
  %v919 = vmul.f32 %v852, 0.5
  %v920 = vmul.f32 %v743, 0.5
  %v921 = vmul.f32 %v745, 0.5
  %v922 = vmul.f32 %v856, 0.5
  %v923 = vmul.f32 %v858, 0.5
  %v924 = vmul.f32 %v747, 0.5
  %v925 = vmul.f32 %v749, 0.5
  %v926 = vmul.f32 %v860, 0.5
  %v927 = vmul.f32 %v862, 0.5
  %v928 = vmul.f32 %v673, 0.044715
  %v929 = vmul.f32 %v675, 0.044715
  %v930 = vmul.f32 %v786, 0.044715
  %v931 = vmul.f32 %v788, 0.044715
  %v932 = vmul.f32 %v677, 0.044715
  %v933 = vmul.f32 %v679, 0.044715
  %v934 = vmul.f32 %v790, 0.044715
  %v935 = vmul.f32 %v792, 0.044715
  %v936 = vmul.f32 %v683, 0.044715
  %v937 = vmul.f32 %v685, 0.044715
  %v938 = vmul.f32 %v796, 0.044715
  %v939 = vmul.f32 %v798, 0.044715
  %v940 = vmul.f32 %v687, 0.044715
  %v941 = vmul.f32 %v689, 0.044715
  %v942 = vmul.f32 %v800, 0.044715
  %v943 = vmul.f32 %v802, 0.044715
  %v944 = vmul.f32 %v693, 0.044715
  %v945 = vmul.f32 %v695, 0.044715
  %v946 = vmul.f32 %v806, 0.044715
  %v947 = vmul.f32 %v808, 0.044715
  %v948 = vmul.f32 %v697, 0.044715
  %v949 = vmul.f32 %v699, 0.044715
  %v950 = vmul.f32 %v810, 0.044715
  %v951 = vmul.f32 %v812, 0.044715
  %v952 = vmul.f32 %v703, 0.044715
  %v953 = vmul.f32 %v705, 0.044715
  %v954 = vmul.f32 %v816, 0.044715
  %v955 = vmul.f32 %v818, 0.044715
  %v956 = vmul.f32 %v707, 0.044715
  %v957 = vmul.f32 %v709, 0.044715
  %v958 = vmul.f32 %v820, 0.044715
  %v959 = vmul.f32 %v822, 0.044715
  %v960 = vmul.f32 %v713, 0.044715
  %v961 = vmul.f32 %v715, 0.044715
  %v962 = vmul.f32 %v826, 0.044715
  %v963 = vmul.f32 %v828, 0.044715
  %v964 = vmul.f32 %v717, 0.044715
  %v965 = vmul.f32 %v719, 0.044715
  %v966 = vmul.f32 %v830, 0.044715
  %v967 = vmul.f32 %v832, 0.044715
  %v968 = vmul.f32 %v723, 0.044715
  %v969 = vmul.f32 %v725, 0.044715
  %v970 = vmul.f32 %v836, 0.044715
  %v971 = vmul.f32 %v838, 0.044715
  %v972 = vmul.f32 %v727, 0.044715
  %v973 = vmul.f32 %v729, 0.044715
  %v974 = vmul.f32 %v840, 0.044715
  %v975 = vmul.f32 %v842, 0.044715
  %v976 = vmul.f32 %v733, 0.044715
  %v977 = vmul.f32 %v735, 0.044715
  %v978 = vmul.f32 %v846, 0.044715
  %v979 = vmul.f32 %v848, 0.044715
  %v980 = vmul.f32 %v737, 0.044715
  %v981 = vmul.f32 %v739, 0.044715
  %v982 = vmul.f32 %v850, 0.044715
  %v983 = vmul.f32 %v852, 0.044715
  %v984 = vmul.f32 %v743, 0.044715
  %v985 = vmul.f32 %v745, 0.044715
  %v986 = vmul.f32 %v856, 0.044715
  %v987 = vmul.f32 %v858, 0.044715
  %v988 = vmul.f32 %v747, 0.044715
  %v989 = vmul.f32 %v749, 0.044715
  %v990 = vmul.f32 %v860, 0.044715
  %v991 = vmul.f32 %v862, 0.044715
  %v992 = vmul.f32 %v928, %v673
  %v993 = vmul.f32 %v929, %v675
  %v994 = vmul.f32 %v930, %v786
  %v995 = vmul.f32 %v931, %v788
  %v996 = vmul.f32 %v932, %v677
  %v997 = vmul.f32 %v933, %v679
  %v998 = vmul.f32 %v934, %v790
  %v999 = vmul.f32 %v935, %v792
  %v1000 = vmul.f32 %v936, %v683
  %v1001 = vmul.f32 %v937, %v685
  %v1002 = vmul.f32 %v938, %v796
  %v1003 = vmul.f32 %v939, %v798
  %v1004 = vmul.f32 %v940, %v687
  %v1005 = vmul.f32 %v941, %v689
  %v1006 = vmul.f32 %v942, %v800
  %v1007 = vmul.f32 %v943, %v802
  %v1008 = vmul.f32 %v944, %v693
  %v1009 = vmul.f32 %v945, %v695
  %v1010 = vmul.f32 %v946, %v806
  %v1011 = vmul.f32 %v947, %v808
  %v1012 = vmul.f32 %v948, %v697
  %v1013 = vmul.f32 %v949, %v699
  %v1014 = vmul.f32 %v950, %v810
  %v1015 = vmul.f32 %v951, %v812
  %v1016 = vmul.f32 %v952, %v703
  %v1017 = vmul.f32 %v953, %v705
  %v1018 = vmul.f32 %v954, %v816
  %v1019 = vmul.f32 %v955, %v818
  %v1020 = vmul.f32 %v956, %v707
  %v1021 = vmul.f32 %v957, %v709
  %v1022 = vmul.f32 %v958, %v820
  %v1023 = vmul.f32 %v959, %v822
  %v1024 = vmul.f32 %v960, %v713
  %v1025 = vmul.f32 %v961, %v715
  %v1026 = vmul.f32 %v962, %v826
  %v1027 = vmul.f32 %v963, %v828
  %v1028 = vmul.f32 %v964, %v717
  %v1029 = vmul.f32 %v965, %v719
  %v1030 = vmul.f32 %v966, %v830
  %v1031 = vmul.f32 %v967, %v832
  %v1032 = vmul.f32 %v968, %v723
  %v1033 = vmul.f32 %v969, %v725
  %v1034 = vmul.f32 %v970, %v836
  %v1035 = vmul.f32 %v971, %v838
  %v1036 = vmul.f32 %v972, %v727
  %v1037 = vmul.f32 %v973, %v729
  %v1038 = vmul.f32 %v974, %v840
  %v1039 = vmul.f32 %v975, %v842
  %v1040 = vmul.f32 %v976, %v733
  %v1041 = vmul.f32 %v977, %v735
  %v1042 = vmul.f32 %v978, %v846
  %v1043 = vmul.f32 %v979, %v848
  %v1044 = vmul.f32 %v980, %v737
  %v1045 = vmul.f32 %v981, %v739
  %v1046 = vmul.f32 %v982, %v850
  %v1047 = vmul.f32 %v983, %v852
  %v1048 = vmul.f32 %v984, %v743
  %v1049 = vmul.f32 %v985, %v745
  %v1050 = vmul.f32 %v986, %v856
  %v1051 = vmul.f32 %v987, %v858
  %v1052 = vmul.f32 %v988, %v747
  %v1053 = vmul.f32 %v989, %v749
  %v1054 = vmul.f32 %v990, %v860
  %v1055 = vmul.f32 %v991, %v862
  %v1056 = vmul.f32 %v992, %v673
  %v1057 = vmul.f32 %v993, %v675
  %v1058 = vmul.f32 %v994, %v786
  %v1059 = vmul.f32 %v995, %v788
  %v1060 = vmul.f32 %v996, %v677
  %v1061 = vmul.f32 %v997, %v679
  %v1062 = vmul.f32 %v998, %v790
  %v1063 = vmul.f32 %v999, %v792
  %v1064 = vmul.f32 %v1000, %v683
  %v1065 = vmul.f32 %v1001, %v685
  %v1066 = vmul.f32 %v1002, %v796
  %v1067 = vmul.f32 %v1003, %v798
  %v1068 = vmul.f32 %v1004, %v687
  %v1069 = vmul.f32 %v1005, %v689
  %v1070 = vmul.f32 %v1006, %v800
  %v1071 = vmul.f32 %v1007, %v802
  %v1072 = vmul.f32 %v1008, %v693
  %v1073 = vmul.f32 %v1009, %v695
  %v1074 = vmul.f32 %v1010, %v806
  %v1075 = vmul.f32 %v1011, %v808
  %v1076 = vmul.f32 %v1012, %v697
  %v1077 = vmul.f32 %v1013, %v699
  %v1078 = vmul.f32 %v1014, %v810
  %v1079 = vmul.f32 %v1015, %v812
  %v1080 = vmul.f32 %v1016, %v703
  %v1081 = vmul.f32 %v1017, %v705
  %v1082 = vmul.f32 %v1018, %v816
  %v1083 = vmul.f32 %v1019, %v818
  %v1084 = vmul.f32 %v1020, %v707
  %v1085 = vmul.f32 %v1021, %v709
  %v1086 = vmul.f32 %v1022, %v820
  %v1087 = vmul.f32 %v1023, %v822
  %v1088 = vmul.f32 %v1024, %v713
  %v1089 = vmul.f32 %v1025, %v715
  %v1090 = vmul.f32 %v1026, %v826
  %v1091 = vmul.f32 %v1027, %v828
  %v1092 = vmul.f32 %v1028, %v717
  %v1093 = vmul.f32 %v1029, %v719
  %v1094 = vmul.f32 %v1030, %v830
  %v1095 = vmul.f32 %v1031, %v832
  %v1096 = vmul.f32 %v1032, %v723
  %v1097 = vmul.f32 %v1033, %v725
  %v1098 = vmul.f32 %v1034, %v836
  %v1099 = vmul.f32 %v1035, %v838
  %v1100 = vmul.f32 %v1036, %v727
  %v1101 = vmul.f32 %v1037, %v729
  %v1102 = vmul.f32 %v1038, %v840
  %v1103 = vmul.f32 %v1039, %v842
  %v1104 = vmul.f32 %v1040, %v733
  %v1105 = vmul.f32 %v1041, %v735
  %v1106 = vmul.f32 %v1042, %v846
  %v1107 = vmul.f32 %v1043, %v848
  %v1108 = vmul.f32 %v1044, %v737
  %v1109 = vmul.f32 %v1045, %v739
  %v1110 = vmul.f32 %v1046, %v850
  %v1111 = vmul.f32 %v1047, %v852
  %v1112 = vmul.f32 %v1048, %v743
  %v1113 = vmul.f32 %v1049, %v745
  %v1114 = vmul.f32 %v1050, %v856
  %v1115 = vmul.f32 %v1051, %v858
  %v1116 = vmul.f32 %v1052, %v747
  %v1117 = vmul.f32 %v1053, %v749
  %v1118 = vmul.f32 %v1054, %v860
  %v1119 = vmul.f32 %v1055, %v862
  %v1120 = vadd.f32 %v673, %v1056
  %v1121 = vadd.f32 %v675, %v1057
  %v1122 = vadd.f32 %v786, %v1058
  %v1123 = vadd.f32 %v788, %v1059
  %v1124 = vadd.f32 %v677, %v1060
  %v1125 = vadd.f32 %v679, %v1061
  %v1126 = vadd.f32 %v790, %v1062
  %v1127 = vadd.f32 %v792, %v1063
  %v1128 = vadd.f32 %v683, %v1064
  %v1129 = vadd.f32 %v685, %v1065
  %v1130 = vadd.f32 %v796, %v1066
  %v1131 = vadd.f32 %v798, %v1067
  %v1132 = vadd.f32 %v687, %v1068
  %v1133 = vadd.f32 %v689, %v1069
  %v1134 = vadd.f32 %v800, %v1070
  %v1135 = vadd.f32 %v802, %v1071
  %v1136 = vadd.f32 %v693, %v1072
  %v1137 = vadd.f32 %v695, %v1073
  %v1138 = vadd.f32 %v806, %v1074
  %v1139 = vadd.f32 %v808, %v1075
  %v1140 = vadd.f32 %v697, %v1076
  %v1141 = vadd.f32 %v699, %v1077
  %v1142 = vadd.f32 %v810, %v1078
  %v1143 = vadd.f32 %v812, %v1079
  %v1144 = vadd.f32 %v703, %v1080
  %v1145 = vadd.f32 %v705, %v1081
  %v1146 = vadd.f32 %v816, %v1082
  %v1147 = vadd.f32 %v818, %v1083
  %v1148 = vadd.f32 %v707, %v1084
  %v1149 = vadd.f32 %v709, %v1085
  %v1150 = vadd.f32 %v820, %v1086
  %v1151 = vadd.f32 %v822, %v1087
  %v1152 = vadd.f32 %v713, %v1088
  %v1153 = vadd.f32 %v715, %v1089
  %v1154 = vadd.f32 %v826, %v1090
  %v1155 = vadd.f32 %v828, %v1091
  %v1156 = vadd.f32 %v717, %v1092
  %v1157 = vadd.f32 %v719, %v1093
  %v1158 = vadd.f32 %v830, %v1094
  %v1159 = vadd.f32 %v832, %v1095
  %v1160 = vadd.f32 %v723, %v1096
  %v1161 = vadd.f32 %v725, %v1097
  %v1162 = vadd.f32 %v836, %v1098
  %v1163 = vadd.f32 %v838, %v1099
  %v1164 = vadd.f32 %v727, %v1100
  %v1165 = vadd.f32 %v729, %v1101
  %v1166 = vadd.f32 %v840, %v1102
  %v1167 = vadd.f32 %v842, %v1103
  %v1168 = vadd.f32 %v733, %v1104
  %v1169 = vadd.f32 %v735, %v1105
  %v1170 = vadd.f32 %v846, %v1106
  %v1171 = vadd.f32 %v848, %v1107
  %v1172 = vadd.f32 %v737, %v1108
  %v1173 = vadd.f32 %v739, %v1109
  %v1174 = vadd.f32 %v850, %v1110
  %v1175 = vadd.f32 %v852, %v1111
  %v1176 = vadd.f32 %v743, %v1112
  %v1177 = vadd.f32 %v745, %v1113
  %v1178 = vadd.f32 %v856, %v1114
  %v1179 = vadd.f32 %v858, %v1115
  %v1180 = vadd.f32 %v747, %v1116
  %v1181 = vadd.f32 %v749, %v1117
  %v1182 = vadd.f32 %v860, %v1118
  %v1183 = vadd.f32 %v862, %v1119
  %v1184 = vmul.f32 %v1120, 0.7978846
  %v1185 = vmul.f32 %v1121, 0.7978846
  %v1186 = vmul.f32 %v1122, 0.7978846
  %v1187 = vmul.f32 %v1123, 0.7978846
  %v1188 = vmul.f32 %v1124, 0.7978846
  %v1189 = vmul.f32 %v1125, 0.7978846
  %v1190 = vmul.f32 %v1126, 0.7978846
  %v1191 = vmul.f32 %v1127, 0.7978846
  %v1192 = vmul.f32 %v1128, 0.7978846
  %v1193 = vmul.f32 %v1129, 0.7978846
  %v1194 = vmul.f32 %v1130, 0.7978846
  %v1195 = vmul.f32 %v1131, 0.7978846
  %v1196 = vmul.f32 %v1132, 0.7978846
  %v1197 = vmul.f32 %v1133, 0.7978846
  %v1198 = vmul.f32 %v1134, 0.7978846
  %v1199 = vmul.f32 %v1135, 0.7978846
  %v1200 = vmul.f32 %v1136, 0.7978846
  %v1201 = vmul.f32 %v1137, 0.7978846
  %v1202 = vmul.f32 %v1138, 0.7978846
  %v1203 = vmul.f32 %v1139, 0.7978846
  %v1204 = vmul.f32 %v1140, 0.7978846
  %v1205 = vmul.f32 %v1141, 0.7978846
  %v1206 = vmul.f32 %v1142, 0.7978846
  %v1207 = vmul.f32 %v1143, 0.7978846
  %v1208 = vmul.f32 %v1144, 0.7978846
  %v1209 = vmul.f32 %v1145, 0.7978846
  %v1210 = vmul.f32 %v1146, 0.7978846
  %v1211 = vmul.f32 %v1147, 0.7978846
  %v1212 = vmul.f32 %v1148, 0.7978846
  %v1213 = vmul.f32 %v1149, 0.7978846
  %v1214 = vmul.f32 %v1150, 0.7978846
  %v1215 = vmul.f32 %v1151, 0.7978846
  %v1216 = vmul.f32 %v1152, 0.7978846
  %v1217 = vmul.f32 %v1153, 0.7978846
  %v1218 = vmul.f32 %v1154, 0.7978846
  %v1219 = vmul.f32 %v1155, 0.7978846
  %v1220 = vmul.f32 %v1156, 0.7978846
  %v1221 = vmul.f32 %v1157, 0.7978846
  %v1222 = vmul.f32 %v1158, 0.7978846
  %v1223 = vmul.f32 %v1159, 0.7978846
  %v1224 = vmul.f32 %v1160, 0.7978846
  %v1225 = vmul.f32 %v1161, 0.7978846
  %v1226 = vmul.f32 %v1162, 0.7978846
  %v1227 = vmul.f32 %v1163, 0.7978846
  %v1228 = vmul.f32 %v1164, 0.7978846
  %v1229 = vmul.f32 %v1165, 0.7978846
  %v1230 = vmul.f32 %v1166, 0.7978846
  %v1231 = vmul.f32 %v1167, 0.7978846
  %v1232 = vmul.f32 %v1168, 0.7978846
  %v1233 = vmul.f32 %v1169, 0.7978846
  %v1234 = vmul.f32 %v1170, 0.7978846
  %v1235 = vmul.f32 %v1171, 0.7978846
  %v1236 = vmul.f32 %v1172, 0.7978846
  %v1237 = vmul.f32 %v1173, 0.7978846
  %v1238 = vmul.f32 %v1174, 0.7978846
  %v1239 = vmul.f32 %v1175, 0.7978846
  %v1240 = vmul.f32 %v1176, 0.7978846
  %v1241 = vmul.f32 %v1177, 0.7978846
  %v1242 = vmul.f32 %v1178, 0.7978846
  %v1243 = vmul.f32 %v1179, 0.7978846
  %v1244 = vmul.f32 %v1180, 0.7978846
  %v1245 = vmul.f32 %v1181, 0.7978846
  %v1246 = vmul.f32 %v1182, 0.7978846
  %v1247 = vmul.f32 %v1183, 0.7978846
  %v1248 = vtanh.pop %v1184
  %v1249 = vtanh.pop %v1185
  %v1250 = vtanh.pop %v1186
  %v1251 = vtanh.pop %v1187
  %v1252 = vtanh.pop %v1188
  %v1253 = vtanh.pop %v1189
  %v1254 = vtanh.pop %v1190
  %v1255 = vtanh.pop %v1191
  %v1256 = vtanh.pop %v1192
  %v1257 = vtanh.pop %v1193
  %v1258 = vtanh.pop %v1194
  %v1259 = vtanh.pop %v1195
  %v1260 = vtanh.pop %v1196
  %v1261 = vtanh.pop %v1197
  %v1262 = vtanh.pop %v1198
  %v1263 = vtanh.pop %v1199
  %v1264 = vtanh.pop %v1200
  %v1265 = vtanh.pop %v1201
  %v1266 = vtanh.pop %v1202
  %v1267 = vtanh.pop %v1203
  %v1268 = vtanh.pop %v1204
  %v1269 = vtanh.pop %v1205
  %v1270 = vtanh.pop %v1206
  %v1271 = vtanh.pop %v1207
  %v1272 = vtanh.pop %v1208
  %v1273 = vtanh.pop %v1209
  %v1274 = vtanh.pop %v1210
  %v1275 = vtanh.pop %v1211
  %v1276 = vtanh.pop %v1212
  %v1277 = vtanh.pop %v1213
  %v1278 = vtanh.pop %v1214
  %v1279 = vtanh.pop %v1215
  %v1280 = vtanh.pop %v1216
  %v1281 = vtanh.pop %v1217
  %v1282 = vtanh.pop %v1218
  %v1283 = vtanh.pop %v1219
  %v1284 = vtanh.pop %v1220
  %v1285 = vtanh.pop %v1221
  %v1286 = vtanh.pop %v1222
  %v1287 = vtanh.pop %v1223
  %v1288 = vtanh.pop %v1224
  %v1289 = vtanh.pop %v1225
  %v1290 = vtanh.pop %v1226
  %v1291 = vtanh.pop %v1227
  %v1292 = vtanh.pop %v1228
  %v1293 = vtanh.pop %v1229
  %v1294 = vtanh.pop %v1230
  %v1295 = vtanh.pop %v1231
  %v1296 = vtanh.pop %v1232
  %v1297 = vtanh.pop %v1233
  %v1298 = vtanh.pop %v1234
  %v1299 = vtanh.pop %v1235
  %v1300 = vtanh.pop %v1236
  %v1301 = vtanh.pop %v1237
  %v1302 = vtanh.pop %v1238
  %v1303 = vtanh.pop %v1239
  %v1304 = vtanh.pop %v1240
  %v1305 = vtanh.pop %v1241
  %v1306 = vtanh.pop %v1242
  %v1307 = vtanh.pop %v1243
  %v1308 = vtanh.pop %v1244
  %v1309 = vtanh.pop %v1245
  %v1310 = vtanh.pop %v1246
  %v1311 = vtanh.pop %v1247
  %v1312 = vadd.f32 %v1248, 1.0
  %v1313 = vadd.f32 %v1249, 1.0
  %v1314 = vadd.f32 %v1250, 1.0
  %v1315 = vadd.f32 %v1251, 1.0
  %v1316 = vadd.f32 %v1252, 1.0
  %v1317 = vadd.f32 %v1253, 1.0
  %v1318 = vadd.f32 %v1254, 1.0
  %v1319 = vadd.f32 %v1255, 1.0
  %v1320 = vadd.f32 %v1256, 1.0
  %v1321 = vadd.f32 %v1257, 1.0
  %v1322 = vadd.f32 %v1258, 1.0
  %v1323 = vadd.f32 %v1259, 1.0
  %v1324 = vadd.f32 %v1260, 1.0
  %v1325 = vadd.f32 %v1261, 1.0
  %v1326 = vadd.f32 %v1262, 1.0
  %v1327 = vadd.f32 %v1263, 1.0
  %v1328 = vadd.f32 %v1264, 1.0
  %v1329 = vadd.f32 %v1265, 1.0
  %v1330 = vadd.f32 %v1266, 1.0
  %v1331 = vadd.f32 %v1267, 1.0
  %v1332 = vadd.f32 %v1268, 1.0
  %v1333 = vadd.f32 %v1269, 1.0
  %v1334 = vadd.f32 %v1270, 1.0
  %v1335 = vadd.f32 %v1271, 1.0
  %v1336 = vadd.f32 %v1272, 1.0
  %v1337 = vadd.f32 %v1273, 1.0
  %v1338 = vadd.f32 %v1274, 1.0
  %v1339 = vadd.f32 %v1275, 1.0
  %v1340 = vadd.f32 %v1276, 1.0
  %v1341 = vadd.f32 %v1277, 1.0
  %v1342 = vadd.f32 %v1278, 1.0
  %v1343 = vadd.f32 %v1279, 1.0
  %v1344 = vadd.f32 %v1280, 1.0
  %v1345 = vadd.f32 %v1281, 1.0
  %v1346 = vadd.f32 %v1282, 1.0
  %v1347 = vadd.f32 %v1283, 1.0
  %v1348 = vadd.f32 %v1284, 1.0
  %v1349 = vadd.f32 %v1285, 1.0
  %v1350 = vadd.f32 %v1286, 1.0
  %v1351 = vadd.f32 %v1287, 1.0
  %v1352 = vadd.f32 %v1288, 1.0
  %v1353 = vadd.f32 %v1289, 1.0
  %v1354 = vadd.f32 %v1290, 1.0
  %v1355 = vadd.f32 %v1291, 1.0
  %v1356 = vadd.f32 %v1292, 1.0
  %v1357 = vadd.f32 %v1293, 1.0
  %v1358 = vadd.f32 %v1294, 1.0
  %v1359 = vadd.f32 %v1295, 1.0
  %v1360 = vadd.f32 %v1296, 1.0
  %v1361 = vadd.f32 %v1297, 1.0
  %v1362 = vadd.f32 %v1298, 1.0
  %v1363 = vadd.f32 %v1299, 1.0
  %v1364 = vadd.f32 %v1300, 1.0
  %v1365 = vadd.f32 %v1301, 1.0
  %v1366 = vadd.f32 %v1302, 1.0
  %v1367 = vadd.f32 %v1303, 1.0
  %v1368 = vadd.f32 %v1304, 1.0
  %v1369 = vadd.f32 %v1305, 1.0
  %v1370 = vadd.f32 %v1306, 1.0
  %v1371 = vadd.f32 %v1307, 1.0
  %v1372 = vadd.f32 %v1308, 1.0
  %v1373 = vadd.f32 %v1309, 1.0
  %v1374 = vadd.f32 %v1310, 1.0
  %v1375 = vadd.f32 %v1311, 1.0
  %v1376 = vmul.f32 %v864, %v1312
  %v1377 = vmul.f32 %v865, %v1313
  %v1378 = vmul.f32 %v866, %v1314
  %v1379 = vmul.f32 %v867, %v1315
  %v1380 = vmul.f32 %v868, %v1316
  %v1381 = vmul.f32 %v869, %v1317
  %v1382 = vmul.f32 %v870, %v1318
  %v1383 = vmul.f32 %v871, %v1319
  %v1384 = vmul.f32 %v872, %v1320
  %v1385 = vmul.f32 %v873, %v1321
  %v1386 = vmul.f32 %v874, %v1322
  %v1387 = vmul.f32 %v875, %v1323
  %v1388 = vmul.f32 %v876, %v1324
  %v1389 = vmul.f32 %v877, %v1325
  %v1390 = vmul.f32 %v878, %v1326
  %v1391 = vmul.f32 %v879, %v1327
  %v1392 = vmul.f32 %v880, %v1328
  %v1393 = vmul.f32 %v881, %v1329
  %v1394 = vmul.f32 %v882, %v1330
  %v1395 = vmul.f32 %v883, %v1331
  %v1396 = vmul.f32 %v884, %v1332
  %v1397 = vmul.f32 %v885, %v1333
  %v1398 = vmul.f32 %v886, %v1334
  %v1399 = vmul.f32 %v887, %v1335
  %v1400 = vmul.f32 %v888, %v1336
  %v1401 = vmul.f32 %v889, %v1337
  %v1402 = vmul.f32 %v890, %v1338
  %v1403 = vmul.f32 %v891, %v1339
  %v1404 = vmul.f32 %v892, %v1340
  %v1405 = vmul.f32 %v893, %v1341
  %v1406 = vmul.f32 %v894, %v1342
  %v1407 = vmul.f32 %v895, %v1343
  %v1408 = vmul.f32 %v896, %v1344
  %v1409 = vmul.f32 %v897, %v1345
  %v1410 = vmul.f32 %v898, %v1346
  %v1411 = vmul.f32 %v899, %v1347
  %v1412 = vmul.f32 %v900, %v1348
  %v1413 = vmul.f32 %v901, %v1349
  %v1414 = vmul.f32 %v902, %v1350
  %v1415 = vmul.f32 %v903, %v1351
  %v1416 = vmul.f32 %v904, %v1352
  %v1417 = vmul.f32 %v905, %v1353
  %v1418 = vmul.f32 %v906, %v1354
  %v1419 = vmul.f32 %v907, %v1355
  %v1420 = vmul.f32 %v908, %v1356
  %v1421 = vmul.f32 %v909, %v1357
  %v1422 = vmul.f32 %v910, %v1358
  %v1423 = vmul.f32 %v911, %v1359
  %v1424 = vmul.f32 %v912, %v1360
  %v1425 = vmul.f32 %v913, %v1361
  %v1426 = vmul.f32 %v914, %v1362
  %v1427 = vmul.f32 %v915, %v1363
  %v1428 = vmul.f32 %v916, %v1364
  %v1429 = vmul.f32 %v917, %v1365
  %v1430 = vmul.f32 %v918, %v1366
  %v1431 = vmul.f32 %v919, %v1367
  %v1432 = vmul.f32 %v920, %v1368
  %v1433 = vmul.f32 %v921, %v1369
  %v1434 = vmul.f32 %v922, %v1370
  %v1435 = vmul.f32 %v923, %v1371
  %v1436 = vmul.f32 %v924, %v1372
  %v1437 = vmul.f32 %v925, %v1373
  %v1438 = vmul.f32 %v926, %v1374
  %v1439 = vmul.f32 %v927, %v1375
  %v1440 = vpack.c.bf16 %v1380, %v1376
  %v1441 = vpack.c.bf16 %v1381, %v1377
  %v1442 = vpack.c.bf16 %v1382, %v1378
  %v1443 = vpack.c.bf16 %v1383, %v1379
  %v1444 = vpack.c.bf16 %v1388, %v1384
  %v1445 = vpack.c.bf16 %v1389, %v1385
  %v1446 = vpack.c.bf16 %v1390, %v1386
  %v1447 = vpack.c.bf16 %v1391, %v1387
  %v1448 = vpack.c.bf16 %v1396, %v1392
  %v1449 = vpack.c.bf16 %v1397, %v1393
  %v1450 = vpack.c.bf16 %v1398, %v1394
  %v1451 = vpack.c.bf16 %v1399, %v1395
  %v1452 = vpack.c.bf16 %v1404, %v1400
  %v1453 = vpack.c.bf16 %v1405, %v1401
  %v1454 = vpack.c.bf16 %v1406, %v1402
  %v1455 = vpack.c.bf16 %v1407, %v1403
  %v1456 = vpack.c.bf16 %v1412, %v1408
  %v1457 = vpack.c.bf16 %v1413, %v1409
  %v1458 = vpack.c.bf16 %v1414, %v1410
  %v1459 = vpack.c.bf16 %v1415, %v1411
  %v1460 = vpack.c.bf16 %v1420, %v1416
  %v1461 = vpack.c.bf16 %v1421, %v1417
  %v1462 = vpack.c.bf16 %v1422, %v1418
  %v1463 = vpack.c.bf16 %v1423, %v1419
  %v1464 = vpack.c.bf16 %v1428, %v1424
  %v1465 = vpack.c.bf16 %v1429, %v1425
  %v1466 = vpack.c.bf16 %v1430, %v1426
  %v1467 = vpack.c.bf16 %v1431, %v1427
  %v1468 = vpack.c.bf16 %v1436, %v1432
  %v1469 = vpack.c.bf16 %v1437, %v1433
  %v1470 = vpack.c.bf16 %v1438, %v1434
  %v1471 = vpack.c.bf16 %v1439, %v1435
  %v1504 = vunpack.c.l.b16 %v1440
  %v1505 = vunpack.c.l.b16 %v1441
  %v1506 = vunpack.c.l.b16 %v1442
  %v1507 = vunpack.c.l.b16 %v1443
  %v1508 = vunpack.c.h.b16 %v1440
  %v1509 = vunpack.c.h.b16 %v1441
  %v1510 = vunpack.c.h.b16 %v1442
  %v1511 = vunpack.c.h.b16 %v1443
  %v1512 = vunpack.c.l.b16 %v1444
  %v1513 = vunpack.c.l.b16 %v1445
  %v1514 = vunpack.c.l.b16 %v1446
  %v1515 = vunpack.c.l.b16 %v1447
  %v1516 = vunpack.c.h.b16 %v1444
  %v1517 = vunpack.c.h.b16 %v1445
  %v1518 = vunpack.c.h.b16 %v1446
  %v1519 = vunpack.c.h.b16 %v1447
  %v1520 = vunpack.c.l.b16 %v1448
  %v1521 = vunpack.c.l.b16 %v1449
  %v1522 = vunpack.c.l.b16 %v1450
  %v1523 = vunpack.c.l.b16 %v1451
  %v1524 = vunpack.c.h.b16 %v1448
  %v1525 = vunpack.c.h.b16 %v1449
  %v1526 = vunpack.c.h.b16 %v1450
  %v1527 = vunpack.c.h.b16 %v1451
  %v1528 = vunpack.c.l.b16 %v1452
  %v1529 = vunpack.c.l.b16 %v1453
  %v1530 = vunpack.c.l.b16 %v1454
  %v1531 = vunpack.c.l.b16 %v1455
  %v1532 = vunpack.c.h.b16 %v1452
  %v1533 = vunpack.c.h.b16 %v1453
  %v1534 = vunpack.c.h.b16 %v1454
  %v1535 = vunpack.c.h.b16 %v1455
  %v1536 = vunpack.c.l.b16 %v1456
  %v1537 = vunpack.c.l.b16 %v1457
  %v1538 = vunpack.c.l.b16 %v1458
  %v1539 = vunpack.c.l.b16 %v1459
  %v1540 = vunpack.c.h.b16 %v1456
  %v1541 = vunpack.c.h.b16 %v1457
  %v1542 = vunpack.c.h.b16 %v1458
  %v1543 = vunpack.c.h.b16 %v1459
  %v1544 = vunpack.c.l.b16 %v1460
  %v1545 = vunpack.c.l.b16 %v1461
  %v1546 = vunpack.c.l.b16 %v1462
  %v1547 = vunpack.c.l.b16 %v1463
  %v1548 = vunpack.c.h.b16 %v1460
  %v1549 = vunpack.c.h.b16 %v1461
  %v1550 = vunpack.c.h.b16 %v1462
  %v1551 = vunpack.c.h.b16 %v1463
  %v1552 = vunpack.c.l.b16 %v1464
  %v1553 = vunpack.c.l.b16 %v1465
  %v1554 = vunpack.c.l.b16 %v1466
  %v1555 = vunpack.c.l.b16 %v1467
  %v1556 = vunpack.c.h.b16 %v1464
  %v1557 = vunpack.c.h.b16 %v1465
  %v1558 = vunpack.c.h.b16 %v1466
  %v1559 = vunpack.c.h.b16 %v1467
  %v1560 = vunpack.c.l.b16 %v1468
  %v1561 = vunpack.c.l.b16 %v1469
  %v1562 = vunpack.c.l.b16 %v1470
  %v1563 = vunpack.c.l.b16 %v1471
  %v1564 = vunpack.c.h.b16 %v1468
  %v1565 = vunpack.c.h.b16 %v1469
  %v1566 = vunpack.c.h.b16 %v1470
  %v1567 = vunpack.c.h.b16 %v1471
  %v1568 = vpack.c.b16 %v1505, %v1504
  %v1569 = vpack.c.b16 %v1507, %v1506
  %v1570 = vpack.c.b16 %v1509, %v1508
  %v1571 = vpack.c.b16 %v1511, %v1510
  %v1572 = vpack.c.b16 %v1513, %v1512
  %v1573 = vpack.c.b16 %v1515, %v1514
  %v1574 = vpack.c.b16 %v1517, %v1516
  %v1575 = vpack.c.b16 %v1519, %v1518
  %v1576 = vpack.c.b16 %v1521, %v1520
  %v1577 = vpack.c.b16 %v1523, %v1522
  %v1578 = vpack.c.b16 %v1525, %v1524
  %v1579 = vpack.c.b16 %v1527, %v1526
  %v1580 = vpack.c.b16 %v1529, %v1528
  %v1581 = vpack.c.b16 %v1531, %v1530
  %v1582 = vpack.c.b16 %v1533, %v1532
  %v1583 = vpack.c.b16 %v1535, %v1534
  %v1584 = vpack.c.b16 %v1537, %v1536
  %v1585 = vpack.c.b16 %v1539, %v1538
  %v1586 = vpack.c.b16 %v1541, %v1540
  %v1587 = vpack.c.b16 %v1543, %v1542
  %v1588 = vpack.c.b16 %v1545, %v1544
  %v1589 = vpack.c.b16 %v1547, %v1546
  %v1590 = vpack.c.b16 %v1549, %v1548
  %v1591 = vpack.c.b16 %v1551, %v1550
  %v1592 = vpack.c.b16 %v1553, %v1552
  %v1593 = vpack.c.b16 %v1555, %v1554
  %v1594 = vpack.c.b16 %v1557, %v1556
  %v1595 = vpack.c.b16 %v1559, %v1558
  %v1596 = vpack.c.b16 %v1561, %v1560
  %v1597 = vpack.c.b16 %v1563, %v1562
  %v1598 = vpack.c.b16 %v1565, %v1564
  %v1599 = vpack.c.b16 %v1567, %v1566
  %1632 = vst [vmem:[%s5] sm:$0xff] %v1568
  %1633 = vst [vmem:[%s5 + $0x8] sm:$0xff] %v1569
  %1634 = vst [vmem:[%s5 + $0x10] sm:$0xff] %v1570
  %1635 = vst [vmem:[%s5 + $0x18] sm:$0xff] %v1571
  %1636 = vst [vmem:[%s5 + $0x20] sm:$0xff] %v1572
  %1637 = vst [vmem:[%s5 + $0x28] sm:$0xff] %v1573
  %1638 = vst [vmem:[%s5 + $0x30] sm:$0xff] %v1574
  %1639 = vst [vmem:[%s5 + $0x38] sm:$0xff] %v1575
  %1640 = vst [vmem:[%s5 + $0x40] sm:$0xff] %v1576
  %1641 = vst [vmem:[%s5 + $0x48] sm:$0xff] %v1577
  %1642 = vst [vmem:[%s5 + $0x50] sm:$0xff] %v1578
  %1643 = vst [vmem:[%s5 + $0x58] sm:$0xff] %v1579
  %1644 = vst [vmem:[%s5 + $0x60] sm:$0xff] %v1580
  %1645 = vst [vmem:[%s5 + $0x68] sm:$0xff] %v1581
  %1646 = vst [vmem:[%s5 + $0x70] sm:$0xff] %v1582
  %1647 = vst [vmem:[%s5 + $0x78] sm:$0xff] %v1583
  %1648 = vst [vmem:[%s5 + $0x80] sm:$0xff] %v1584
  %1649 = vst [vmem:[%s5 + $0x88] sm:$0xff] %v1585
  %1650 = vst [vmem:[%s5 + $0x90] sm:$0xff] %v1586
  %1651 = vst [vmem:[%s5 + $0x98] sm:$0xff] %v1587
  %1652 = vst [vmem:[%s5 + $0xa0] sm:$0xff] %v1588
  %1653 = vst [vmem:[%s5 + $0xa8] sm:$0xff] %v1589
  %1654 = vst [vmem:[%s5 + $0xb0] sm:$0xff] %v1590
  %1655 = vst [vmem:[%s5 + $0xb8] sm:$0xff] %v1591
  %1656 = vst [vmem:[%s5 + $0xc0] sm:$0xff] %v1592
  %1657 = vst [vmem:[%s5 + $0xc8] sm:$0xff] %v1593
  %1658 = vst [vmem:[%s5 + $0xd0] sm:$0xff] %v1594
  %1659 = vst [vmem:[%s5 + $0xd8] sm:$0xff] %v1595
  %1660 = vst [vmem:[%s5 + $0xe0] sm:$0xff] %v1596
  %1661 = vst [vmem:[%s5 + $0xe8] sm:$0xff] %v1597
  %1662 = vst [vmem:[%s5 + $0xf0] sm:$0xff] %v1598
  %1663 = vst [vmem:[%s5 + $0xf8] sm:$0xff] %v1599
  // Predicated region
  $region26: #{_lambda_.14} parent=0 // pred_check
    _
  $region27: #{_lambda_.14} parent=0 // pred_check_branch
    %1665 = sbr.rel (0) target = $region29
  $region28: #{_lambda_.14} parent=0 // pred_region
    _
  $region29: #{_lambda_.14} parent=0 // pred_fallthru
    _
  // Predicated region
  $region30: #{_lambda_.14} parent=0 // pred_check
    _
  $region31: #{_lambda_.14} parent=0 // pred_check_branch
    %1667 = sbr.rel (0) target = $region33
  $region32: #{_lambda_.14} parent=0 // pred_region
    _
  $region33: #{_lambda_.14} parent=0 // pred_fallthru
    _

// kernel: _lambda_.15
$region0: #{_lambda_.15}
  #allocation0 [shape = 'u32[]', space=smem, size = 0x4, offset = 0x4, fixed_abs, tag = 'smem constant byte address 0x4 - core index']
  #allocation1 [shape = 'u32[144,128]{1,0:T(1,128)}', space=vmem, size = 0x12000, scoped, tag = 'internal scratch']
  #allocation2 [shape = 'f32[128,128]{1,0:T(8,128)}', space=vmem, size = 0x10000, scoped, tag = 'scratch operand']
  %s0 = inlined_call_operand.vmem [shape: bf16[128,512], index: 0, kind: input, shape index: {}]
  %s1 = inlined_call_operand.vmem [shape: bf16[512,128], index: 1, kind: input, shape index: {}]
  %s2 = inlined_call_operand.vmem [shape: f32[1,128], index: 2, kind: input, shape index: {}]
  %s3 = inlined_call_operand.vmem [shape: bf16[128,128], index: 3, kind: input, shape index: {}]
  %s4 = inlined_call_operand.vmem [shape: bf16[128,128], index: 4, kind: output, shape index: {}]
  %s5 = sld [smem:[#allocation0]]
  $region34: #{_lambda_.15} parent=0
    _
  %s7 = ssub.s32 1, %s5
  %s8 = scalar_select 0, %s7, %s5
  // Predicated region
  $region2: #{_lambda_.15} parent=0 // pred_check
    _
  $region3: #{_lambda_.15} parent=0 // pred_check_branch
    %10 = sbr.rel (0) target = $region5
  $region4: #{_lambda_.15} parent=0 // pred_region
    _
  $region5: #{_lambda_.15} parent=0 // pred_fallthru
    _
  // Predicated region
  $region6: #{_lambda_.15} parent=0 // pred_check
    _
  $region7: #{_lambda_.15} parent=0 // pred_check_branch
    %12 = sbr.rel (0) target = $region9
  $region8: #{_lambda_.15} parent=0 // pred_region
    _
  $region9: #{_lambda_.15} parent=0 // pred_fallthru
    _
  // Predicated region
  $region10: #{_lambda_.15} parent=0 // pred_check
    _
  $region11: #{_lambda_.15} parent=0 // pred_check_branch
    %14 = sbr.rel (0) target = $region13
  $region12: #{_lambda_.15} parent=0 // pred_region
    _
  $region13: #{_lambda_.15} parent=0 // pred_fallthru
    _
  // Predicated region
  $region14: #{_lambda_.15} parent=0 // pred_check
    _
  $region15: #{_lambda_.15} parent=0 // pred_check_branch
    %16 = sbr.rel (0) target = $region17
  $region16: #{_lambda_.15} parent=0 // pred_region
    _
  $region17: #{_lambda_.15} parent=0 // pred_fallthru
    _
  %p18 = scmp.eq.s32.totalorder 0, 0
  // Predicated region
  $region18: #{_lambda_.15} parent=0 // pred_check
    %p19 = pneg %p18
  $region19: #{_lambda_.15} parent=0 // pred_check_branch
    %21 = sbr.rel (%p19) target = $region21
  $region20: #{_lambda_.15} parent=0 // pred_region
    %22 = vst [vmem:[#allocation2] sm:$0xff] 0.0
    %23 = vst [vmem:[#allocation2 + $0x8] sm:$0xff] 0.0
    %24 = vst [vmem:[#allocation2 + $0x10] sm:$0xff] 0.0
    %25 = vst [vmem:[#allocation2 + $0x18] sm:$0xff] 0.0
    %26 = vst [vmem:[#allocation2 + $0x20] sm:$0xff] 0.0
    %27 = vst [vmem:[#allocation2 + $0x28] sm:$0xff] 0.0
    %28 = vst [vmem:[#allocation2 + $0x30] sm:$0xff] 0.0
    %29 = vst [vmem:[#allocation2 + $0x38] sm:$0xff] 0.0
    %30 = vst [vmem:[#allocation2 + $0x40] sm:$0xff] 0.0
    %31 = vst [vmem:[#allocation2 + $0x48] sm:$0xff] 0.0
    %32 = vst [vmem:[#allocation2 + $0x50] sm:$0xff] 0.0
    %33 = vst [vmem:[#allocation2 + $0x58] sm:$0xff] 0.0
    %34 = vst [vmem:[#allocation2 + $0x60] sm:$0xff] 0.0
    %35 = vst [vmem:[#allocation2 + $0x68] sm:$0xff] 0.0
    %36 = vst [vmem:[#allocation2 + $0x70] sm:$0xff] 0.0
    %37 = vst [vmem:[#allocation2 + $0x78] sm:$0xff] 0.0
  $region21: #{_lambda_.15} parent=0 // pred_fallthru
    _
  %v38 = vld [vmem:[#allocation2] sm:$0xff]
  %v39 = vld [vmem:[#allocation2 + $0x8] sm:$0xff]
  %v40 = vld [vmem:[#allocation2 + $0x10] sm:$0xff]
  %v41 = vld [vmem:[#allocation2 + $0x18] sm:$0xff]
  %v42 = vld [vmem:[#allocation2 + $0x20] sm:$0xff]
  %v43 = vld [vmem:[#allocation2 + $0x28] sm:$0xff]
  %v44 = vld [vmem:[#allocation2 + $0x30] sm:$0xff]
  %v45 = vld [vmem:[#allocation2 + $0x38] sm:$0xff]
  %v46 = vld [vmem:[#allocation2 + $0x40] sm:$0xff]
  %v47 = vld [vmem:[#allocation2 + $0x48] sm:$0xff]
  %v48 = vld [vmem:[#allocation2 + $0x50] sm:$0xff]
  %v49 = vld [vmem:[#allocation2 + $0x58] sm:$0xff]
  %v50 = vld [vmem:[#allocation2 + $0x60] sm:$0xff]
  %v51 = vld [vmem:[#allocation2 + $0x68] sm:$0xff]
  %v52 = vld [vmem:[#allocation2 + $0x70] sm:$0xff]
  %v53 = vld [vmem:[#allocation2 + $0x78] sm:$0xff]
  %v54 = vld [vmem:[%s0] sm:$0xff]
  %v55 = vld [vmem:[%s0 + $0x8] sm:$0xff]
  %v56 = vld [vmem:[%s0 + $0x10] sm:$0xff]
  %v57 = vld [vmem:[%s0 + $0x18] sm:$0xff]
  %v58 = vld [vmem:[%s0 + $0x20] sm:$0xff]
  %v59 = vld [vmem:[%s0 + $0x28] sm:$0xff]
  %v60 = vld [vmem:[%s0 + $0x30] sm:$0xff]
  %v61 = vld [vmem:[%s0 + $0x38] sm:$0xff]
  %v62 = vld [vmem:[%s0 + $0x40] sm:$0xff]
  %v63 = vld [vmem:[%s0 + $0x48] sm:$0xff]
  %v64 = vld [vmem:[%s0 + $0x50] sm:$0xff]
  %v65 = vld [vmem:[%s0 + $0x58] sm:$0xff]
  %v66 = vld [vmem:[%s0 + $0x60] sm:$0xff]
  %v67 = vld [vmem:[%s0 + $0x68] sm:$0xff]
  %v68 = vld [vmem:[%s0 + $0x70] sm:$0xff]
  %v69 = vld [vmem:[%s0 + $0x78] sm:$0xff]
  %v70 = vld [vmem:[%s0 + $0x80] sm:$0xff]
  %v71 = vld [vmem:[%s0 + $0x88] sm:$0xff]
  %v72 = vld [vmem:[%s0 + $0x90] sm:$0xff]
  %v73 = vld [vmem:[%s0 + $0x98] sm:$0xff]
  %v74 = vld [vmem:[%s0 + $0xa0] sm:$0xff]
  %v75 = vld [vmem:[%s0 + $0xa8] sm:$0xff]
  %v76 = vld [vmem:[%s0 + $0xb0] sm:$0xff]
  %v77 = vld [vmem:[%s0 + $0xb8] sm:$0xff]
  %v78 = vld [vmem:[%s0 + $0xc0] sm:$0xff]
  %v79 = vld [vmem:[%s0 + $0xc8] sm:$0xff]
  %v80 = vld [vmem:[%s0 + $0xd0] sm:$0xff]
  %v81 = vld [vmem:[%s0 + $0xd8] sm:$0xff]
  %v82 = vld [vmem:[%s0 + $0xe0] sm:$0xff]
  %v83 = vld [vmem:[%s0 + $0xe8] sm:$0xff]
  %v84 = vld [vmem:[%s0 + $0xf0] sm:$0xff]
  %v85 = vld [vmem:[%s0 + $0xf8] sm:$0xff]
  %v86 = vld [vmem:[%s1] sm:$0xf]
  %v87 = vld [vmem:[%s1 + $0x4] sm:$0xf]
  %v88 = vld [vmem:[%s1 + $0x8] sm:$0xf]
  %v89 = vld [vmem:[%s1 + $0xc] sm:$0xf]
  %v90 = vld [vmem:[%s1 + $0x10] sm:$0xf]
  %v91 = vld [vmem:[%s1 + $0x14] sm:$0xf]
  %v92 = vld [vmem:[%s1 + $0x18] sm:$0xf]
  %v93 = vld [vmem:[%s1 + $0x1c] sm:$0xf]
  %v94 = vld [vmem:[%s1 + $0x20] sm:$0xf]
  %v95 = vld [vmem:[%s1 + $0x24] sm:$0xf]
  %v96 = vld [vmem:[%s1 + $0x28] sm:$0xf]
  %v97 = vld [vmem:[%s1 + $0x2c] sm:$0xf]
  %v98 = vld [vmem:[%s1 + $0x30] sm:$0xf]
  %v99 = vld [vmem:[%s1 + $0x34] sm:$0xf]
  %v100 = vld [vmem:[%s1 + $0x38] sm:$0xf]
  %v101 = vld [vmem:[%s1 + $0x3c] sm:$0xf]
  %v102 = vld [vmem:[%s1 + $0x40] sm:$0xf]
  %v103 = vld [vmem:[%s1 + $0x44] sm:$0xf]
  %v104 = vld [vmem:[%s1 + $0x48] sm:$0xf]
  %v105 = vld [vmem:[%s1 + $0x4c] sm:$0xf]
  %v106 = vld [vmem:[%s1 + $0x50] sm:$0xf]
  %v107 = vld [vmem:[%s1 + $0x54] sm:$0xf]
  %v108 = vld [vmem:[%s1 + $0x58] sm:$0xf]
  %v109 = vld [vmem:[%s1 + $0x5c] sm:$0xf]
  %v110 = vld [vmem:[%s1 + $0x60] sm:$0xf]
  %v111 = vld [vmem:[%s1 + $0x64] sm:$0xf]
  %v112 = vld [vmem:[%s1 + $0x68] sm:$0xf]
  %v113 = vld [vmem:[%s1 + $0x6c] sm:$0xf]
  %v114 = vld [vmem:[%s1 + $0x70] sm:$0xf]
  %v115 = vld [vmem:[%s1 + $0x74] sm:$0xf]
  %v116 = vld [vmem:[%s1 + $0x78] sm:$0xf]
  %v117 = vld [vmem:[%s1 + $0x7c] sm:$0xf]
  %v118 = vld [vmem:[%s1 + $0x80] sm:$0xf]
  %v119 = vld [vmem:[%s1 + $0x84] sm:$0xf]
  %v120 = vld [vmem:[%s1 + $0x88] sm:$0xf]
  %v121 = vld [vmem:[%s1 + $0x8c] sm:$0xf]
  %v122 = vld [vmem:[%s1 + $0x90] sm:$0xf]
  %v123 = vld [vmem:[%s1 + $0x94] sm:$0xf]
  %v124 = vld [vmem:[%s1 + $0x98] sm:$0xf]
  %v125 = vld [vmem:[%s1 + $0x9c] sm:$0xf]
  %v126 = vld [vmem:[%s1 + $0xa0] sm:$0xf]
  %v127 = vld [vmem:[%s1 + $0xa4] sm:$0xf]
  %v128 = vld [vmem:[%s1 + $0xa8] sm:$0xf]
  %v129 = vld [vmem:[%s1 + $0xac] sm:$0xf]
  %v130 = vld [vmem:[%s1 + $0xb0] sm:$0xf]
  %v131 = vld [vmem:[%s1 + $0xb4] sm:$0xf]
  %v132 = vld [vmem:[%s1 + $0xb8] sm:$0xf]
  %v133 = vld [vmem:[%s1 + $0xbc] sm:$0xf]
  %v134 = vld [vmem:[%s1 + $0xc0] sm:$0xf]
  %v135 = vld [vmem:[%s1 + $0xc4] sm:$0xf]
  %v136 = vld [vmem:[%s1 + $0xc8] sm:$0xf]
  %v137 = vld [vmem:[%s1 + $0xcc] sm:$0xf]
  %v138 = vld [vmem:[%s1 + $0xd0] sm:$0xf]
  %v139 = vld [vmem:[%s1 + $0xd4] sm:$0xf]
  %v140 = vld [vmem:[%s1 + $0xd8] sm:$0xf]
  %v141 = vld [vmem:[%s1 + $0xdc] sm:$0xf]
  %v142 = vld [vmem:[%s1 + $0xe0] sm:$0xf]
  %v143 = vld [vmem:[%s1 + $0xe4] sm:$0xf]
  %v144 = vld [vmem:[%s1 + $0xe8] sm:$0xf]
  %v145 = vld [vmem:[%s1 + $0xec] sm:$0xf]
  %v146 = vld [vmem:[%s1 + $0xf0] sm:$0xf]
  %v147 = vld [vmem:[%s1 + $0xf4] sm:$0xf]
  %v148 = vld [vmem:[%s1 + $0xf8] sm:$0xf]
  %v149 = vld [vmem:[%s1 + $0xfc] sm:$0xf]
  %v182 = vunpack.c.l.b16 %v54
  %v183 = vunpack.c.h.b16 %v54
  %v184 = vunpack.c.l.b16 %v55
  %v185 = vunpack.c.h.b16 %v55
  %v186 = vunpack.c.l.b16 %v56
  %v187 = vunpack.c.h.b16 %v56
  %v188 = vunpack.c.l.b16 %v57
  %v189 = vunpack.c.h.b16 %v57
  %v190 = vunpack.c.l.b16 %v58
  %v191 = vunpack.c.h.b16 %v58
  %v192 = vunpack.c.l.b16 %v59
  %v193 = vunpack.c.h.b16 %v59
  %v194 = vunpack.c.l.b16 %v60
  %v195 = vunpack.c.h.b16 %v60
  %v196 = vunpack.c.l.b16 %v61
  %v197 = vunpack.c.h.b16 %v61
  %v198 = vunpack.c.l.b16 %v62
  %v199 = vunpack.c.h.b16 %v62
  %v200 = vunpack.c.l.b16 %v63
  %v201 = vunpack.c.h.b16 %v63
  %v202 = vunpack.c.l.b16 %v64
  %v203 = vunpack.c.h.b16 %v64
  %v204 = vunpack.c.l.b16 %v65
  %v205 = vunpack.c.h.b16 %v65
  %v206 = vunpack.c.l.b16 %v66
  %v207 = vunpack.c.h.b16 %v66
  %v208 = vunpack.c.l.b16 %v67
  %v209 = vunpack.c.h.b16 %v67
  %v210 = vunpack.c.l.b16 %v68
  %v211 = vunpack.c.h.b16 %v68
  %v212 = vunpack.c.l.b16 %v69
  %v213 = vunpack.c.h.b16 %v69
  %v214 = vunpack.c.l.b16 %v70
  %v215 = vunpack.c.h.b16 %v70
  %v216 = vunpack.c.l.b16 %v71
  %v217 = vunpack.c.h.b16 %v71
  %v218 = vunpack.c.l.b16 %v72
  %v219 = vunpack.c.h.b16 %v72
  %v220 = vunpack.c.l.b16 %v73
  %v221 = vunpack.c.h.b16 %v73
  %v222 = vunpack.c.l.b16 %v74
  %v223 = vunpack.c.h.b16 %v74
  %v224 = vunpack.c.l.b16 %v75
  %v225 = vunpack.c.h.b16 %v75
  %v226 = vunpack.c.l.b16 %v76
  %v227 = vunpack.c.h.b16 %v76
  %v228 = vunpack.c.l.b16 %v77
  %v229 = vunpack.c.h.b16 %v77
  %v230 = vunpack.c.l.b16 %v78
  %v231 = vunpack.c.h.b16 %v78
  %v232 = vunpack.c.l.b16 %v79
  %v233 = vunpack.c.h.b16 %v79
  %v234 = vunpack.c.l.b16 %v80
  %v235 = vunpack.c.h.b16 %v80
  %v236 = vunpack.c.l.b16 %v81
  %v237 = vunpack.c.h.b16 %v81
  %v238 = vunpack.c.l.b16 %v82
  %v239 = vunpack.c.h.b16 %v82
  %v240 = vunpack.c.l.b16 %v83
  %v241 = vunpack.c.h.b16 %v83
  %v242 = vunpack.c.l.b16 %v84
  %v243 = vunpack.c.h.b16 %v84
  %v244 = vunpack.c.l.b16 %v85
  %v245 = vunpack.c.h.b16 %v85
  %v246 = vpack.c.b16 %v186, %v182
  %v247 = vpack.c.b16 %v187, %v183
  %v248 = vpack.c.b16 %v188, %v184
  %v249 = vpack.c.b16 %v189, %v185
  %v250 = vpack.c.b16 %v194, %v190
  %v251 = vpack.c.b16 %v195, %v191
  %v252 = vpack.c.b16 %v196, %v192
  %v253 = vpack.c.b16 %v197, %v193
  %v254 = vpack.c.b16 %v202, %v198
  %v255 = vpack.c.b16 %v203, %v199
  %v256 = vpack.c.b16 %v204, %v200
  %v257 = vpack.c.b16 %v205, %v201
  %v258 = vpack.c.b16 %v210, %v206
  %v259 = vpack.c.b16 %v211, %v207
  %v260 = vpack.c.b16 %v212, %v208
  %v261 = vpack.c.b16 %v213, %v209
  %v262 = vpack.c.b16 %v218, %v214
  %v263 = vpack.c.b16 %v219, %v215
  %v264 = vpack.c.b16 %v220, %v216
  %v265 = vpack.c.b16 %v221, %v217
  %v266 = vpack.c.b16 %v226, %v222
  %v267 = vpack.c.b16 %v227, %v223
  %v268 = vpack.c.b16 %v228, %v224
  %v269 = vpack.c.b16 %v229, %v225
  %v270 = vpack.c.b16 %v234, %v230
  %v271 = vpack.c.b16 %v235, %v231
  %v272 = vpack.c.b16 %v236, %v232
  %v273 = vpack.c.b16 %v237, %v233
  %v274 = vpack.c.b16 %v242, %v238
  %v275 = vpack.c.b16 %v243, %v239
  %v276 = vpack.c.b16 %v244, %v240
  %v277 = vpack.c.b16 %v245, %v241
  %v374 = vunpack.c.l.b16 %v86
  %v375 = vunpack.c.l.b16 %v87
  %v376 = vunpack.c.l.b16 %v88
  %v377 = vunpack.c.l.b16 %v89
  %v378 = vunpack.c.l.b16 %v90
  %v379 = vunpack.c.l.b16 %v91
  %v380 = vunpack.c.l.b16 %v92
  %v381 = vunpack.c.l.b16 %v93
  %v382 = vunpack.c.l.b16 %v94
  %v383 = vunpack.c.l.b16 %v95
  %v384 = vunpack.c.l.b16 %v96
  %v385 = vunpack.c.l.b16 %v97
  %v386 = vunpack.c.l.b16 %v98
  %v387 = vunpack.c.l.b16 %v99
  %v388 = vunpack.c.l.b16 %v100
  %v389 = vunpack.c.l.b16 %v101
  %v390 = vunpack.c.l.b16 %v102
  %v391 = vunpack.c.l.b16 %v103
  %v392 = vunpack.c.l.b16 %v104
  %v393 = vunpack.c.l.b16 %v105
  %v394 = vunpack.c.l.b16 %v106
  %v395 = vunpack.c.l.b16 %v107
  %v396 = vunpack.c.l.b16 %v108
  %v397 = vunpack.c.l.b16 %v109
  %v398 = vunpack.c.l.b16 %v110
  %v399 = vunpack.c.l.b16 %v111
  %v400 = vunpack.c.l.b16 %v112
  %v401 = vunpack.c.l.b16 %v113
  %v402 = vunpack.c.l.b16 %v114
  %v403 = vunpack.c.l.b16 %v115
  %v404 = vunpack.c.l.b16 %v116
  %v405 = vunpack.c.l.b16 %v117
  %v406 = vunpack.c.l.b16 %v118
  %v407 = vunpack.c.l.b16 %v119
  %v408 = vunpack.c.l.b16 %v120
  %v409 = vunpack.c.l.b16 %v121
  %v410 = vunpack.c.l.b16 %v122
  %v411 = vunpack.c.l.b16 %v123
  %v412 = vunpack.c.l.b16 %v124
  %v413 = vunpack.c.l.b16 %v125
  %v414 = vunpack.c.l.b16 %v126
  %v415 = vunpack.c.l.b16 %v127
  %v416 = vunpack.c.l.b16 %v128
  %v417 = vunpack.c.l.b16 %v129
  %v418 = vunpack.c.l.b16 %v130
  %v419 = vunpack.c.l.b16 %v131
  %v420 = vunpack.c.l.b16 %v132
  %v421 = vunpack.c.l.b16 %v133
  %v422 = vunpack.c.l.b16 %v134
  %v423 = vunpack.c.l.b16 %v135
  %v424 = vunpack.c.l.b16 %v136
  %v425 = vunpack.c.l.b16 %v137
  %v426 = vunpack.c.l.b16 %v138
  %v427 = vunpack.c.l.b16 %v139
  %v428 = vunpack.c.l.b16 %v140
  %v429 = vunpack.c.l.b16 %v141
  %v430 = vunpack.c.l.b16 %v142
  %v431 = vunpack.c.l.b16 %v143
  %v432 = vunpack.c.l.b16 %v144
  %v433 = vunpack.c.l.b16 %v145
  %v434 = vunpack.c.l.b16 %v146
  %v435 = vunpack.c.l.b16 %v147
  %v436 = vunpack.c.l.b16 %v148
  %v437 = vunpack.c.l.b16 %v149
  %v438 = vpack.c.b16 %v375, %v374
  %v439 = vpack.c.b16 %v377, %v376
  %v440 = vpack.c.b16 %v379, %v378
  %v441 = vpack.c.b16 %v381, %v380
  %v442 = vpack.c.b16 %v383, %v382
  %v443 = vpack.c.b16 %v385, %v384
  %v444 = vpack.c.b16 %v387, %v386
  %v445 = vpack.c.b16 %v389, %v388
  %v446 = vpack.c.b16 %v391, %v390
  %v447 = vpack.c.b16 %v393, %v392
  %v448 = vpack.c.b16 %v395, %v394
  %v449 = vpack.c.b16 %v397, %v396
  %v450 = vpack.c.b16 %v399, %v398
  %v451 = vpack.c.b16 %v401, %v400
  %v452 = vpack.c.b16 %v403, %v402
  %v453 = vpack.c.b16 %v405, %v404
  %v454 = vpack.c.b16 %v407, %v406
  %v455 = vpack.c.b16 %v409, %v408
  %v456 = vpack.c.b16 %v411, %v410
  %v457 = vpack.c.b16 %v413, %v412
  %v458 = vpack.c.b16 %v415, %v414
  %v459 = vpack.c.b16 %v417, %v416
  %v460 = vpack.c.b16 %v419, %v418
  %v461 = vpack.c.b16 %v421, %v420
  %v462 = vpack.c.b16 %v423, %v422
  %v463 = vpack.c.b16 %v425, %v424
  %v464 = vpack.c.b16 %v427, %v426
  %v465 = vpack.c.b16 %v429, %v428
  %v466 = vpack.c.b16 %v431, %v430
  %v467 = vpack.c.b16 %v433, %v432
  %v468 = vpack.c.b16 %v435, %v434
  %v469 = vpack.c.b16 %v437, %v436
  %502 = vmatprep.subr.bf16.mxu0 0
  %503 = vmatpush1.bf16.msra.mxu0 %v445
  %504 = vmatprep.subr.bf16.mxu0 0
  %505 = vmatpush1.bf16.msra.mxu0 %v444
  %506 = vmatprep.subr.bf16.mxu0 0
  %507 = vmatpush1.bf16.msra.mxu0 %v443
  %508 = vmatprep.subr.bf16.mxu0 0
  %509 = vmatpush1.bf16.msra.mxu0 %v442
  %510 = vmatprep.subr.bf16.mxu0 0
  %511 = vmatpush1.bf16.msra.mxu0 %v441
  %512 = vmatprep.subr.bf16.mxu0 0
  %513 = vmatpush1.bf16.msra.mxu0 %v440
  %514 = vmatprep.subr.bf16.mxu0 0
  %515 = vmatpush1.bf16.msra.mxu0 %v439
  %516 = vmatprep.subr.bf16.mxu0 0
  %517 = vmatpush1.bf16.msra.mxu0 %v438
  %518 = vmatprep.subr.bf16.mxu0 0
  %519 = vmatpush2.bf16.msra.mxu0 %v453
  %520 = vmatprep.subr.bf16.mxu0 0
  %521 = vmatpush2.bf16.msra.mxu0 %v452
  %522 = vmatprep.subr.bf16.mxu0 0
  %523 = vmatpush2.bf16.msra.mxu0 %v451
  %524 = vmatprep.subr.bf16.mxu0 0
  %525 = vmatpush2.bf16.msra.mxu0 %v450
  %526 = vmatprep.subr.bf16.mxu0 0
  %527 = vmatpush2.bf16.msra.mxu0 %v449
  %528 = vmatprep.subr.bf16.mxu0 0
  %529 = vmatpush2.bf16.msra.mxu0 %v448
  %530 = vmatprep.subr.bf16.mxu0 0
  %531 = vmatpush2.bf16.msra.mxu0 %v447
  %532 = vmatprep.subr.bf16.mxu0 0
  %533 = vmatpush2.bf16.msra.mxu0 %v446
  %534 = vmatprep.mubr.bf16.mxu0 %v247
  %535 = vmatmul.mubr.bf16.gmra.mxu0 %v246
  %v536 = vpop.f32.mrf.mxu0
  %v537 = vadd.f32 0.0, %v536
  %v538 = vpop.f32.mrf.mxu0
  %v539 = vpop.f32.mrf.mxu0
  %v540 = vadd.f32 0.0, %v539
  %v541 = vpop.f32.mrf.mxu0
  %542 = vmatprep.mubr.bf16.mxu0 %v251
  %543 = vmatmul.mubr.bf16.gmra.mxu0 %v250
  %v544 = vpop.f32.mrf.mxu0
  %v545 = vadd.f32 0.0, %v544
  %v546 = vpop.f32.mrf.mxu0
  %v547 = vpop.f32.mrf.mxu0
  %v548 = vadd.f32 0.0, %v547
  %v549 = vpop.f32.mrf.mxu0
  %550 = vmatprep.mubr.bf16.mxu0 %v255
  %551 = vmatmul.mubr.bf16.gmra.mxu0 %v254
  %v552 = vpop.f32.mrf.mxu0
  %v553 = vadd.f32 0.0, %v552
  %v554 = vpop.f32.mrf.mxu0
  %v555 = vpop.f32.mrf.mxu0
  %v556 = vadd.f32 0.0, %v555
  %v557 = vpop.f32.mrf.mxu0
  %558 = vmatprep.mubr.bf16.mxu0 %v259
  %559 = vmatmul.mubr.bf16.gmra.mxu0 %v258
  %v560 = vpop.f32.mrf.mxu0
  %v561 = vadd.f32 0.0, %v560
  %v562 = vpop.f32.mrf.mxu0
  %v563 = vpop.f32.mrf.mxu0
  %v564 = vadd.f32 0.0, %v563
  %v565 = vpop.f32.mrf.mxu0
  %566 = vmatprep.mubr.bf16.mxu0 %v263
  %567 = vmatmul.mubr.bf16.gmra.mxu0 %v262
  %v568 = vpop.f32.mrf.mxu0
  %v569 = vadd.f32 0.0, %v568
  %v570 = vpop.f32.mrf.mxu0
  %v571 = vpop.f32.mrf.mxu0
  %v572 = vadd.f32 0.0, %v571
  %v573 = vpop.f32.mrf.mxu0
  %574 = vmatprep.mubr.bf16.mxu0 %v267
  %575 = vmatmul.mubr.bf16.gmra.mxu0 %v266
  %v576 = vpop.f32.mrf.mxu0
  %v577 = vadd.f32 0.0, %v576
  %v578 = vpop.f32.mrf.mxu0
  %v579 = vpop.f32.mrf.mxu0
  %v580 = vadd.f32 0.0, %v579
  %v581 = vpop.f32.mrf.mxu0
  %582 = vmatprep.mubr.bf16.mxu0 %v271
  %583 = vmatmul.mubr.bf16.gmra.mxu0 %v270
  %v584 = vpop.f32.mrf.mxu0
  %v585 = vadd.f32 0.0, %v584
  %v586 = vpop.f32.mrf.mxu0
  %v587 = vpop.f32.mrf.mxu0
  %v588 = vadd.f32 0.0, %v587
  %v589 = vpop.f32.mrf.mxu0
  %590 = vmatprep.mubr.bf16.mxu0 %v275
  %591 = vmatmul.mubr.bf16.gmra.mxu0 %v274
  %v592 = vpop.f32.mrf.mxu0
  %v593 = vadd.f32 0.0, %v592
  %v594 = vpop.f32.mrf.mxu0
  %v595 = vpop.f32.mrf.mxu0
  %v596 = vadd.f32 0.0, %v595
  %v597 = vpop.f32.mrf.mxu0
  %598 = vdwg.mxu0
  %599 = vmatprep.subr.bf16.mxu0 0
  %600 = vmatpush1.bf16.msra.mxu0 %v461
  %601 = vmatprep.subr.bf16.mxu0 0
  %602 = vmatpush1.bf16.msra.mxu0 %v460
  %603 = vmatprep.subr.bf16.mxu0 0
  %604 = vmatpush1.bf16.msra.mxu0 %v459
  %605 = vmatprep.subr.bf16.mxu0 0
  %606 = vmatpush1.bf16.msra.mxu0 %v458
  %607 = vmatprep.subr.bf16.mxu0 0
  %608 = vmatpush1.bf16.msra.mxu0 %v457
  %609 = vmatprep.subr.bf16.mxu0 0
  %610 = vmatpush1.bf16.msra.mxu0 %v456
  %611 = vmatprep.subr.bf16.mxu0 0
  %612 = vmatpush1.bf16.msra.mxu0 %v455
  %613 = vmatprep.subr.bf16.mxu0 0
  %614 = vmatpush1.bf16.msra.mxu0 %v454
  %615 = vmatprep.subr.bf16.mxu0 0
  %616 = vmatpush2.bf16.msra.mxu0 %v469
  %617 = vmatprep.subr.bf16.mxu0 0
  %618 = vmatpush2.bf16.msra.mxu0 %v468
  %619 = vmatprep.subr.bf16.mxu0 0
  %620 = vmatpush2.bf16.msra.mxu0 %v467
  %621 = vmatprep.subr.bf16.mxu0 0
  %622 = vmatpush2.bf16.msra.mxu0 %v466
  %623 = vmatprep.subr.bf16.mxu0 0
  %624 = vmatpush2.bf16.msra.mxu0 %v465
  %625 = vmatprep.subr.bf16.mxu0 0
  %626 = vmatpush2.bf16.msra.mxu0 %v464
  %627 = vmatprep.subr.bf16.mxu0 0
  %628 = vmatpush2.bf16.msra.mxu0 %v463
  %629 = vmatprep.subr.bf16.mxu0 0
  %630 = vmatpush2.bf16.msra.mxu0 %v462
  %631 = vmatprep.mubr.bf16.mxu0 %v249
  %632 = vmatmul.mubr.bf16.gmra.mxu0 %v248
  %v633 = vpop.f32.mrf.mxu0
  %v634 = vadd.f32 %v537, %v633
  %v635 = vpop.f32.mrf.mxu0
  %v636 = vpop.f32.mrf.mxu0
  %v637 = vadd.f32 %v540, %v636
  %v638 = vpop.f32.mrf.mxu0
  %639 = vmatprep.mubr.bf16.mxu0 %v253
  %640 = vmatmul.mubr.bf16.gmra.mxu0 %v252
  %v641 = vpop.f32.mrf.mxu0
  %v642 = vadd.f32 %v545, %v641
  %v643 = vpop.f32.mrf.mxu0
  %v644 = vpop.f32.mrf.mxu0
  %v645 = vadd.f32 %v548, %v644
  %v646 = vpop.f32.mrf.mxu0
  %647 = vmatprep.mubr.bf16.mxu0 %v257
  %648 = vmatmul.mubr.bf16.gmra.mxu0 %v256
  %v649 = vpop.f32.mrf.mxu0
  %v650 = vadd.f32 %v553, %v649
  %v651 = vpop.f32.mrf.mxu0
  %v652 = vpop.f32.mrf.mxu0
  %v653 = vadd.f32 %v556, %v652
  %v654 = vpop.f32.mrf.mxu0
  %655 = vmatprep.mubr.bf16.mxu0 %v261
  %656 = vmatmul.mubr.bf16.gmra.mxu0 %v260
  %v657 = vpop.f32.mrf.mxu0
  %v658 = vadd.f32 %v561, %v657
  %v659 = vpop.f32.mrf.mxu0
  %v660 = vpop.f32.mrf.mxu0
  %v661 = vadd.f32 %v564, %v660
  %v662 = vpop.f32.mrf.mxu0
  %663 = vmatprep.mubr.bf16.mxu0 %v265
  %664 = vmatmul.mubr.bf16.gmra.mxu0 %v264
  %v665 = vpop.f32.mrf.mxu0
  %v666 = vadd.f32 %v569, %v665
  %v667 = vpop.f32.mrf.mxu0
  %v668 = vpop.f32.mrf.mxu0
  %v669 = vadd.f32 %v572, %v668
  %v670 = vpop.f32.mrf.mxu0
  %671 = vmatprep.mubr.bf16.mxu0 %v269
  %672 = vmatmul.mubr.bf16.gmra.mxu0 %v268
  %v673 = vpop.f32.mrf.mxu0
  %v674 = vadd.f32 %v577, %v673
  %v675 = vpop.f32.mrf.mxu0
  %v676 = vpop.f32.mrf.mxu0
  %v677 = vadd.f32 %v580, %v676
  %v678 = vpop.f32.mrf.mxu0
  %679 = vmatprep.mubr.bf16.mxu0 %v273
  %680 = vmatmul.mubr.bf16.gmra.mxu0 %v272
  %v681 = vpop.f32.mrf.mxu0
  %v682 = vadd.f32 %v585, %v681
  %v683 = vpop.f32.mrf.mxu0
  %v684 = vpop.f32.mrf.mxu0
  %v685 = vadd.f32 %v588, %v684
  %v686 = vpop.f32.mrf.mxu0
  %687 = vmatprep.mubr.bf16.mxu0 %v277
  %688 = vmatmul.mubr.bf16.gmra.mxu0 %v276
  %v689 = vpop.f32.mrf.mxu0
  %v690 = vadd.f32 %v593, %v689
  %v691 = vpop.f32.mrf.mxu0
  %v692 = vpop.f32.mrf.mxu0
  %v693 = vadd.f32 %v596, %v692
  %v694 = vpop.f32.mrf.mxu0
  %695 = vdwg.mxu0
  %v696 = vadd.f32 %v38, %v634
  %v697 = vadd.f32 %v39, %v637
  %v698 = vadd.f32 %v40, %v642
  %v699 = vadd.f32 %v41, %v645
  %v700 = vadd.f32 %v42, %v650
  %v701 = vadd.f32 %v43, %v653
  %v702 = vadd.f32 %v44, %v658
  %v703 = vadd.f32 %v45, %v661
  %v704 = vadd.f32 %v46, %v666
  %v705 = vadd.f32 %v47, %v669
  %v706 = vadd.f32 %v48, %v674
  %v707 = vadd.f32 %v49, %v677
  %v708 = vadd.f32 %v50, %v682
  %v709 = vadd.f32 %v51, %v685
  %v710 = vadd.f32 %v52, %v690
  %v711 = vadd.f32 %v53, %v693
  %712 = vst [vmem:[#allocation2] sm:$0xff] %v696
  %713 = vst [vmem:[#allocation2 + $0x8] sm:$0xff] %v697
  %714 = vst [vmem:[#allocation2 + $0x10] sm:$0xff] %v698
  %715 = vst [vmem:[#allocation2 + $0x18] sm:$0xff] %v699
  %716 = vst [vmem:[#allocation2 + $0x20] sm:$0xff] %v700
  %717 = vst [vmem:[#allocation2 + $0x28] sm:$0xff] %v701
  %718 = vst [vmem:[#allocation2 + $0x30] sm:$0xff] %v702
  %719 = vst [vmem:[#allocation2 + $0x38] sm:$0xff] %v703
  %720 = vst [vmem:[#allocation2 + $0x40] sm:$0xff] %v704
  %721 = vst [vmem:[#allocation2 + $0x48] sm:$0xff] %v705
  %722 = vst [vmem:[#allocation2 + $0x50] sm:$0xff] %v706
  %723 = vst [vmem:[#allocation2 + $0x58] sm:$0xff] %v707
  %724 = vst [vmem:[#allocation2 + $0x60] sm:$0xff] %v708
  %725 = vst [vmem:[#allocation2 + $0x68] sm:$0xff] %v709
  %726 = vst [vmem:[#allocation2 + $0x70] sm:$0xff] %v710
  %727 = vst [vmem:[#allocation2 + $0x78] sm:$0xff] %v711
  // Predicated region
  $region22: #{_lambda_.15} parent=0 // pred_check
    %p728 = pneg %p18
  $region23: #{_lambda_.15} parent=0 // pred_check_branch
    %730 = sbr.rel (%p728) target = $region25
  $region24: #{_lambda_.15} parent=0 // pred_region
    %v731 = vld [vmem:[#allocation2] sm:$0xff]
    %v732 = vld [vmem:[#allocation2 + $0x8] sm:$0xff]
    %v733 = vld [vmem:[#allocation2 + $0x10] sm:$0xff]
    %v734 = vld [vmem:[#allocation2 + $0x18] sm:$0xff]
    %v735 = vld [vmem:[#allocation2 + $0x20] sm:$0xff]
    %v736 = vld [vmem:[#allocation2 + $0x28] sm:$0xff]
    %v737 = vld [vmem:[#allocation2 + $0x30] sm:$0xff]
    %v738 = vld [vmem:[#allocation2 + $0x38] sm:$0xff]
    %v739 = vld [vmem:[#allocation2 + $0x40] sm:$0xff]
    %v740 = vld [vmem:[#allocation2 + $0x48] sm:$0xff]
    %v741 = vld [vmem:[#allocation2 + $0x50] sm:$0xff]
    %v742 = vld [vmem:[#allocation2 + $0x58] sm:$0xff]
    %v743 = vld [vmem:[#allocation2 + $0x60] sm:$0xff]
    %v744 = vld [vmem:[#allocation2 + $0x68] sm:$0xff]
    %v745 = vld [vmem:[#allocation2 + $0x70] sm:$0xff]
    %v746 = vld [vmem:[#allocation2 + $0x78] sm:$0xff]
    %v747 = vld [vmem:[%s2] sm:$0x1]
    %v749 = vlaneseq
    %v750 = vshrl.u32 %v749, 7
    %v751 = vsub.s32 0, %v750
    %v752 = vrot.slane %v747, %v751
    %v754 = vadd.f32 %v731, %v752
    %v755 = vadd.f32 %v732, %v752
    %v756 = vadd.f32 %v733, %v752
    %v757 = vadd.f32 %v734, %v752
    %v758 = vadd.f32 %v735, %v752
    %v759 = vadd.f32 %v736, %v752
    %v760 = vadd.f32 %v737, %v752
    %v761 = vadd.f32 %v738, %v752
    %v762 = vadd.f32 %v739, %v752
    %v763 = vadd.f32 %v740, %v752
    %v764 = vadd.f32 %v741, %v752
    %v765 = vadd.f32 %v742, %v752
    %v766 = vadd.f32 %v743, %v752
    %v767 = vadd.f32 %v744, %v752
    %v768 = vadd.f32 %v745, %v752
    %v769 = vadd.f32 %v746, %v752
    %v770 = vld [vmem:[%s3] sm:$0xf]
    %v771 = vld [vmem:[%s3 + $0x4] sm:$0xf]
    %v772 = vld [vmem:[%s3 + $0x8] sm:$0xf]
    %v773 = vld [vmem:[%s3 + $0xc] sm:$0xf]
    %v774 = vld [vmem:[%s3 + $0x10] sm:$0xf]
    %v775 = vld [vmem:[%s3 + $0x14] sm:$0xf]
    %v776 = vld [vmem:[%s3 + $0x18] sm:$0xf]
    %v777 = vld [vmem:[%s3 + $0x1c] sm:$0xf]
    %v778 = vld [vmem:[%s3 + $0x20] sm:$0xf]
    %v779 = vld [vmem:[%s3 + $0x24] sm:$0xf]
    %v780 = vld [vmem:[%s3 + $0x28] sm:$0xf]
    %v781 = vld [vmem:[%s3 + $0x2c] sm:$0xf]
    %v782 = vld [vmem:[%s3 + $0x30] sm:$0xf]
    %v783 = vld [vmem:[%s3 + $0x34] sm:$0xf]
    %v784 = vld [vmem:[%s3 + $0x38] sm:$0xf]
    %v785 = vld [vmem:[%s3 + $0x3c] sm:$0xf]
    %v786 = vunpack.c.l.bf16 %v770
    %v787 = vunpack.c.l.bf16 %v771
    %v788 = vunpack.c.l.bf16 %v772
    %v789 = vunpack.c.l.bf16 %v773
    %v790 = vunpack.c.l.bf16 %v774
    %v791 = vunpack.c.l.bf16 %v775
    %v792 = vunpack.c.l.bf16 %v776
    %v793 = vunpack.c.l.bf16 %v777
    %v794 = vunpack.c.l.bf16 %v778
    %v795 = vunpack.c.l.bf16 %v779
    %v796 = vunpack.c.l.bf16 %v780
    %v797 = vunpack.c.l.bf16 %v781
    %v798 = vunpack.c.l.bf16 %v782
    %v799 = vunpack.c.l.bf16 %v783
    %v800 = vunpack.c.l.bf16 %v784
    %v801 = vunpack.c.l.bf16 %v785
    %v802 = vadd.f32 %v754, %v786
    %v803 = vadd.f32 %v755, %v787
    %v804 = vadd.f32 %v756, %v788
    %v805 = vadd.f32 %v757, %v789
    %v806 = vadd.f32 %v758, %v790
    %v807 = vadd.f32 %v759, %v791
    %v808 = vadd.f32 %v760, %v792
    %v809 = vadd.f32 %v761, %v793
    %v810 = vadd.f32 %v762, %v794
    %v811 = vadd.f32 %v763, %v795
    %v812 = vadd.f32 %v764, %v796
    %v813 = vadd.f32 %v765, %v797
    %v814 = vadd.f32 %v766, %v798
    %v815 = vadd.f32 %v767, %v799
    %v816 = vadd.f32 %v768, %v800
    %v817 = vadd.f32 %v769, %v801
    %v818 = vpack.c.bf16 %v803, %v802
    %v819 = vpack.c.bf16 %v805, %v804
    %v820 = vpack.c.bf16 %v807, %v806
    %v821 = vpack.c.bf16 %v809, %v808
    %v822 = vpack.c.bf16 %v811, %v810
    %v823 = vpack.c.bf16 %v813, %v812
    %v824 = vpack.c.bf16 %v815, %v814
    %v825 = vpack.c.bf16 %v817, %v816
    %v834 = vunpack.c.l.b16 %v818
    %v835 = vunpack.c.h.b16 %v818
    %v836 = vunpack.c.l.b16 %v819
    %v837 = vunpack.c.h.b16 %v819
    %v838 = vunpack.c.l.b16 %v820
    %v839 = vunpack.c.h.b16 %v820
    %v840 = vunpack.c.l.b16 %v821
    %v841 = vunpack.c.h.b16 %v821
    %v842 = vunpack.c.l.b16 %v822
    %v843 = vunpack.c.h.b16 %v822
    %v844 = vunpack.c.l.b16 %v823
    %v845 = vunpack.c.h.b16 %v823
    %v846 = vunpack.c.l.b16 %v824
    %v847 = vunpack.c.h.b16 %v824
    %v848 = vunpack.c.l.b16 %v825
    %v849 = vunpack.c.h.b16 %v825
    %v850 = vpack.c.b16 %v834, %v834
    %v851 = vpack.c.b16 %v835, %v835
    %v852 = vpack.c.b16 %v836, %v836
    %v853 = vpack.c.b16 %v837, %v837
    %v854 = vpack.c.b16 %v838, %v838
    %v855 = vpack.c.b16 %v839, %v839
    %v856 = vpack.c.b16 %v840, %v840
    %v857 = vpack.c.b16 %v841, %v841
    %v858 = vpack.c.b16 %v842, %v842
    %v859 = vpack.c.b16 %v843, %v843
    %v860 = vpack.c.b16 %v844, %v844
    %v861 = vpack.c.b16 %v845, %v845
    %v862 = vpack.c.b16 %v846, %v846
    %v863 = vpack.c.b16 %v847, %v847
    %v864 = vpack.c.b16 %v848, %v848
    %v865 = vpack.c.b16 %v849, %v849
    %882 = vst [vmem:[%s4] sm:$0xf] %v850
    %883 = vst [vmem:[%s4 + $0x4] sm:$0xf] %v851
    %884 = vst [vmem:[%s4 + $0x8] sm:$0xf] %v852
    %885 = vst [vmem:[%s4 + $0xc] sm:$0xf] %v853
    %886 = vst [vmem:[%s4 + $0x10] sm:$0xf] %v854
    %887 = vst [vmem:[%s4 + $0x14] sm:$0xf] %v855
    %888 = vst [vmem:[%s4 + $0x18] sm:$0xf] %v856
    %889 = vst [vmem:[%s4 + $0x1c] sm:$0xf] %v857
    %890 = vst [vmem:[%s4 + $0x20] sm:$0xf] %v858
    %891 = vst [vmem:[%s4 + $0x24] sm:$0xf] %v859
    %892 = vst [vmem:[%s4 + $0x28] sm:$0xf] %v860
    %893 = vst [vmem:[%s4 + $0x2c] sm:$0xf] %v861
    %894 = vst [vmem:[%s4 + $0x30] sm:$0xf] %v862
    %895 = vst [vmem:[%s4 + $0x34] sm:$0xf] %v863
    %896 = vst [vmem:[%s4 + $0x38] sm:$0xf] %v864
    %897 = vst [vmem:[%s4 + $0x3c] sm:$0xf] %v865
  $region25: #{_lambda_.15} parent=0 // pred_fallthru
    _
  // Predicated region
  $region26: #{_lambda_.15} parent=0 // pred_check
    _
  $region27: #{_lambda_.15} parent=0 // pred_check_branch
    %899 = sbr.rel (0) target = $region29
  $region28: #{_lambda_.15} parent=0 // pred_region
    _
  $region29: #{_lambda_.15} parent=0 // pred_fallthru
    _
  // Predicated region
  $region30: #{_lambda_.15} parent=0 // pred_check
    _
  $region31: #{_lambda_.15} parent=0 // pred_check_branch
    %901 = sbr.rel (0) target = $region33
  $region32: #{_lambda_.15} parent=0 // pred_region
    _
  $region33: #{_lambda_.15} parent=0 // pred_fallthru
    _

// kernel: _lambda_.21
$region0: #{_lambda_.21}
  #allocation0 [shape = 'u32[]', space=smem, size = 0x4, offset = 0x4, fixed_abs, tag = 'smem constant byte address 0x4 - core index']
  #allocation1 [shape = 'u32[144,128]{1,0:T(1,128)}', space=vmem, size = 0x12000, scoped, tag = 'internal scratch']
  #allocation2 [shape = 'bf16[128,128]{1,0:T(8,128)(2,1)}', space=vmem, size = 0x8000, scoped, tag = 'scratch operand']
  %s0 = inlined_call_operand.vmem [shape: bf16[128,128], index: 0, kind: input, shape index: {}]
  %s1 = inlined_call_operand.vmem [shape: f32[1,128], index: 1, kind: input, shape index: {}]
  %s2 = inlined_call_operand.vmem [shape: f32[1,128], index: 2, kind: input, shape index: {}]
  %s3 = inlined_call_operand.vmem [shape: bf16[128,512], index: 3, kind: input, shape index: {}]
  %s4 = inlined_call_operand.hbm [shape: bf16[128,512], index: 4, kind: output, shape index: {}]
  %s5 = sld [smem:[#allocation0]]
  $region30: #{_lambda_.21} parent=0
    _
  %s7 = ssub.s32 1, %s5
  %s8 = scalar_select 0, %s7, %s5
  $region1: #{_lambda_.21} parent=0
    #allocation3 [shape = 'u8[131072]{0}', space=vmem, size = 0x20000, scoped, tag = 'output window, operand 0, single buffered']
    #allocation4 [shape = 's32[1]{0}', space=sflag, size = 0x4, scoped, tag = 'scoped memory for _lambda_.21']
    %9 = vsyncpa [#allocation4], 0
    // Predicated region
    $region2: #{_lambda_.21} parent=1 // pred_check
      _
    $region3: #{_lambda_.21} parent=1 // pred_check_branch
      %11 = sbr.rel (0) target = $region5
    $region4: #{_lambda_.21} parent=1 // pred_region
      _
    $region5: #{_lambda_.21} parent=1 // pred_fallthru
      _
    // Predicated region
    $region6: #{_lambda_.21} parent=1 // pred_check
      _
    $region7: #{_lambda_.21} parent=1 // pred_check_branch
      %13 = sbr.rel (0) target = $region9
    $region8: #{_lambda_.21} parent=1 // pred_region
      _
    $region9: #{_lambda_.21} parent=1 // pred_fallthru
      _
    // Predicated region
    $region10: #{_lambda_.21} parent=1 // pred_check
      _
    $region11: #{_lambda_.21} parent=1 // pred_check_branch
      %15 = sbr.rel (0) target = $region13
    $region12: #{_lambda_.21} parent=1 // pred_region
      _
    $region13: #{_lambda_.21} parent=1 // pred_fallthru
      _
    // Predicated region
    $region14: #{_lambda_.21} parent=1 // pred_check
      _
    $region15: #{_lambda_.21} parent=1 // pred_check_branch
      %17 = sbr.rel (0) target = $region17
    $region16: #{_lambda_.21} parent=1 // pred_region
      _
    $region17: #{_lambda_.21} parent=1 // pred_fallthru
      _
    %p19 = scmp.eq.s32.totalorder 0, 0
    // Predicated region
    $region18: #{_lambda_.21} parent=1 // pred_check
      %p20 = pneg %p19
    $region19: #{_lambda_.21} parent=1 // pred_check_branch
      %22 = sbr.rel (%p20) target = $region21
    $region20: #{_lambda_.21} parent=1 // pred_region
      %v23 = vld [vmem:[%s0] sm:$0xf]
      %v24 = vld [vmem:[%s0 + $0x4] sm:$0xf]
      %v25 = vld [vmem:[%s0 + $0x8] sm:$0xf]
      %v26 = vld [vmem:[%s0 + $0xc] sm:$0xf]
      %v27 = vld [vmem:[%s0 + $0x10] sm:$0xf]
      %v28 = vld [vmem:[%s0 + $0x14] sm:$0xf]
      %v29 = vld [vmem:[%s0 + $0x18] sm:$0xf]
      %v30 = vld [vmem:[%s0 + $0x1c] sm:$0xf]
      %v31 = vld [vmem:[%s0 + $0x20] sm:$0xf]
      %v32 = vld [vmem:[%s0 + $0x24] sm:$0xf]
      %v33 = vld [vmem:[%s0 + $0x28] sm:$0xf]
      %v34 = vld [vmem:[%s0 + $0x2c] sm:$0xf]
      %v35 = vld [vmem:[%s0 + $0x30] sm:$0xf]
      %v36 = vld [vmem:[%s0 + $0x34] sm:$0xf]
      %v37 = vld [vmem:[%s0 + $0x38] sm:$0xf]
      %v38 = vld [vmem:[%s0 + $0x3c] sm:$0xf]
      %v39 = vunpack.c.l.bf16 %v23
      %v40 = vunpack.c.l.bf16 %v24
      %v41 = vunpack.c.l.bf16 %v25
      %v42 = vunpack.c.l.bf16 %v26
      %v43 = vunpack.c.l.bf16 %v27
      %v44 = vunpack.c.l.bf16 %v28
      %v45 = vunpack.c.l.bf16 %v29
      %v46 = vunpack.c.l.bf16 %v30
      %v47 = vunpack.c.l.bf16 %v31
      %v48 = vunpack.c.l.bf16 %v32
      %v49 = vunpack.c.l.bf16 %v33
      %v50 = vunpack.c.l.bf16 %v34
      %v51 = vunpack.c.l.bf16 %v35
      %v52 = vunpack.c.l.bf16 %v36
      %v53 = vunpack.c.l.bf16 %v37
      %v54 = vunpack.c.l.bf16 %v38
      %v55 = vld [vmem:[%s1] sm:$0x1]
      %v56 = vld [vmem:[%s2] sm:$0x1]
      %57 = vadd.xlane.f32.xlu0 %v39
      %v58 = vpop.xlane.xlu0 %57
      %59 = vadd.xlane.f32.xlu0 %v40
      %v60 = vpop.xlane.xlu0 %59
      %61 = vadd.xlane.f32.xlu0 %v41
      %v62 = vpop.xlane.xlu0 %61
      %63 = vadd.xlane.f32.xlu0 %v42
      %v64 = vpop.xlane.xlu0 %63
      %65 = vadd.xlane.f32.xlu0 %v43
      %v66 = vpop.xlane.xlu0 %65
      %67 = vadd.xlane.f32.xlu0 %v44
      %v68 = vpop.xlane.xlu0 %67
      %69 = vadd.xlane.f32.xlu0 %v45
      %v70 = vpop.xlane.xlu0 %69
      %71 = vadd.xlane.f32.xlu0 %v46
      %v72 = vpop.xlane.xlu0 %71
      %73 = vadd.xlane.f32.xlu0 %v47
      %v74 = vpop.xlane.xlu0 %73
      %75 = vadd.xlane.f32.xlu0 %v48
      %v76 = vpop.xlane.xlu0 %75
      %77 = vadd.xlane.f32.xlu0 %v49
      %v78 = vpop.xlane.xlu0 %77
      %79 = vadd.xlane.f32.xlu0 %v50
      %v80 = vpop.xlane.xlu0 %79
      %81 = vadd.xlane.f32.xlu0 %v51
      %v82 = vpop.xlane.xlu0 %81
      %83 = vadd.xlane.f32.xlu0 %v52
      %v84 = vpop.xlane.xlu0 %83
      %85 = vadd.xlane.f32.xlu0 %v53
      %v86 = vpop.xlane.xlu0 %85
      %87 = vadd.xlane.f32.xlu0 %v54
      %v88 = vpop.xlane.xlu0 %87
      %v89 = vrcp.pop 128.0
      %v90 = vmul.f32 %v58, %v89
      %v91 = vmul.f32 %v60, %v89
      %v92 = vmul.f32 %v62, %v89
      %v93 = vmul.f32 %v64, %v89
      %v94 = vmul.f32 %v66, %v89
      %v95 = vmul.f32 %v68, %v89
      %v96 = vmul.f32 %v70, %v89
      %v97 = vmul.f32 %v72, %v89
      %v98 = vmul.f32 %v74, %v89
      %v99 = vmul.f32 %v76, %v89
      %v100 = vmul.f32 %v78, %v89
      %v101 = vmul.f32 %v80, %v89
      %v102 = vmul.f32 %v82, %v89
      %v103 = vmul.f32 %v84, %v89
      %v104 = vmul.f32 %v86, %v89
      %v105 = vmul.f32 %v88, %v89
      %v106 = vsub.f32 %v39, %v90
      %v107 = vsub.f32 %v40, %v91
      %v108 = vsub.f32 %v41, %v92
      %v109 = vsub.f32 %v42, %v93
      %v110 = vsub.f32 %v43, %v94
      %v111 = vsub.f32 %v44, %v95
      %v112 = vsub.f32 %v45, %v96
      %v113 = vsub.f32 %v46, %v97
      %v114 = vsub.f32 %v47, %v98
      %v115 = vsub.f32 %v48, %v99
      %v116 = vsub.f32 %v49, %v100
      %v117 = vsub.f32 %v50, %v101
      %v118 = vsub.f32 %v51, %v102
      %v119 = vsub.f32 %v52, %v103
      %v120 = vsub.f32 %v53, %v104
      %v121 = vsub.f32 %v54, %v105
      %v122 = vmul.f32 %v106, %v106
      %v123 = vmul.f32 %v107, %v107
      %v124 = vmul.f32 %v108, %v108
      %v125 = vmul.f32 %v109, %v109
      %v126 = vmul.f32 %v110, %v110
      %v127 = vmul.f32 %v111, %v111
      %v128 = vmul.f32 %v112, %v112
      %v129 = vmul.f32 %v113, %v113
      %v130 = vmul.f32 %v114, %v114
      %v131 = vmul.f32 %v115, %v115
      %v132 = vmul.f32 %v116, %v116
      %v133 = vmul.f32 %v117, %v117
      %v134 = vmul.f32 %v118, %v118
      %v135 = vmul.f32 %v119, %v119
      %v136 = vmul.f32 %v120, %v120
      %v137 = vmul.f32 %v121, %v121
      %138 = vadd.xlane.f32.xlu0 %v122
      %v139 = vpop.xlane.xlu0 %138
      %140 = vadd.xlane.f32.xlu0 %v123
      %v141 = vpop.xlane.xlu0 %140
      %142 = vadd.xlane.f32.xlu0 %v124
      %v143 = vpop.xlane.xlu0 %142
      %144 = vadd.xlane.f32.xlu0 %v125
      %v145 = vpop.xlane.xlu0 %144
      %146 = vadd.xlane.f32.xlu0 %v126
      %v147 = vpop.xlane.xlu0 %146
      %148 = vadd.xlane.f32.xlu0 %v127
      %v149 = vpop.xlane.xlu0 %148
      %150 = vadd.xlane.f32.xlu0 %v128
      %v151 = vpop.xlane.xlu0 %150
      %152 = vadd.xlane.f32.xlu0 %v129
      %v153 = vpop.xlane.xlu0 %152
      %154 = vadd.xlane.f32.xlu0 %v130
      %v155 = vpop.xlane.xlu0 %154
      %156 = vadd.xlane.f32.xlu0 %v131
      %v157 = vpop.xlane.xlu0 %156
      %158 = vadd.xlane.f32.xlu0 %v132
      %v159 = vpop.xlane.xlu0 %158
      %160 = vadd.xlane.f32.xlu0 %v133
      %v161 = vpop.xlane.xlu0 %160
      %162 = vadd.xlane.f32.xlu0 %v134
      %v163 = vpop.xlane.xlu0 %162
      %164 = vadd.xlane.f32.xlu0 %v135
      %v165 = vpop.xlane.xlu0 %164
      %166 = vadd.xlane.f32.xlu0 %v136
      %v167 = vpop.xlane.xlu0 %166
      %168 = vadd.xlane.f32.xlu0 %v137
      %v169 = vpop.xlane.xlu0 %168
      %v170 = vmul.f32 %v139, %v89
      %v171 = vmul.f32 %v141, %v89
      %v172 = vmul.f32 %v143, %v89
      %v173 = vmul.f32 %v145, %v89
      %v174 = vmul.f32 %v147, %v89
      %v175 = vmul.f32 %v149, %v89
      %v176 = vmul.f32 %v151, %v89
      %v177 = vmul.f32 %v153, %v89
      %v178 = vmul.f32 %v155, %v89
      %v179 = vmul.f32 %v157, %v89
      %v180 = vmul.f32 %v159, %v89
      %v181 = vmul.f32 %v161, %v89
      %v182 = vmul.f32 %v163, %v89
      %v183 = vmul.f32 %v165, %v89
      %v184 = vmul.f32 %v167, %v89
      %v185 = vmul.f32 %v169, %v89
      %v186 = vadd.f32 %v170, 1e-05
      %v187 = vadd.f32 %v171, 1e-05
      %v188 = vadd.f32 %v172, 1e-05
      %v189 = vadd.f32 %v173, 1e-05
      %v190 = vadd.f32 %v174, 1e-05
      %v191 = vadd.f32 %v175, 1e-05
      %v192 = vadd.f32 %v176, 1e-05
      %v193 = vadd.f32 %v177, 1e-05
      %v194 = vadd.f32 %v178, 1e-05
      %v195 = vadd.f32 %v179, 1e-05
      %v196 = vadd.f32 %v180, 1e-05
      %v197 = vadd.f32 %v181, 1e-05
      %v198 = vadd.f32 %v182, 1e-05
      %v199 = vadd.f32 %v183, 1e-05
      %v200 = vadd.f32 %v184, 1e-05
      %v201 = vadd.f32 %v185, 1e-05
      %v202 = vrsqrt.pop %v186
      %v203 = vrsqrt.pop %v187
      %v204 = vrsqrt.pop %v188
      %v205 = vrsqrt.pop %v189
      %v206 = vrsqrt.pop %v190
      %v207 = vrsqrt.pop %v191
      %v208 = vrsqrt.pop %v192
      %v209 = vrsqrt.pop %v193
      %v210 = vrsqrt.pop %v194
      %v211 = vrsqrt.pop %v195
      %v212 = vrsqrt.pop %v196
      %v213 = vrsqrt.pop %v197
      %v214 = vrsqrt.pop %v198
      %v215 = vrsqrt.pop %v199
      %v216 = vrsqrt.pop %v200
      %v217 = vrsqrt.pop %v201
      %v218 = vmul.f32 %v106, %v202
      %v219 = vmul.f32 %v107, %v203
      %v220 = vmul.f32 %v108, %v204
      %v221 = vmul.f32 %v109, %v205
      %v222 = vmul.f32 %v110, %v206
      %v223 = vmul.f32 %v111, %v207
      %v224 = vmul.f32 %v112, %v208
      %v225 = vmul.f32 %v113, %v209
      %v226 = vmul.f32 %v114, %v210
      %v227 = vmul.f32 %v115, %v211
      %v228 = vmul.f32 %v116, %v212
      %v229 = vmul.f32 %v117, %v213
      %v230 = vmul.f32 %v118, %v214
      %v231 = vmul.f32 %v119, %v215
      %v232 = vmul.f32 %v120, %v216
      %v233 = vmul.f32 %v121, %v217
      %v235 = vlaneseq
      %v236 = vshrl.u32 %v235, 7
      %v237 = vsub.s32 0, %v236
      %v238 = vrot.slane %v55, %v237
      %v240 = vmul.f32 %v218, %v238
      %v241 = vmul.f32 %v219, %v238
      %v242 = vmul.f32 %v220, %v238
      %v243 = vmul.f32 %v221, %v238
      %v244 = vmul.f32 %v222, %v238
      %v245 = vmul.f32 %v223, %v238
      %v246 = vmul.f32 %v224, %v238
      %v247 = vmul.f32 %v225, %v238
      %v248 = vmul.f32 %v226, %v238
      %v249 = vmul.f32 %v227, %v238
      %v250 = vmul.f32 %v228, %v238
      %v251 = vmul.f32 %v229, %v238
      %v252 = vmul.f32 %v230, %v238
      %v253 = vmul.f32 %v231, %v238
      %v254 = vmul.f32 %v232, %v238
      %v255 = vmul.f32 %v233, %v238
      %v257 = vlaneseq
      %v258 = vshrl.u32 %v257, 7
      %v259 = vsub.s32 0, %v258
      %v260 = vrot.slane %v56, %v259
      %v262 = vadd.f32 %v240, %v260
      %v263 = vadd.f32 %v241, %v260
      %v264 = vadd.f32 %v242, %v260
      %v265 = vadd.f32 %v243, %v260
      %v266 = vadd.f32 %v244, %v260
      %v267 = vadd.f32 %v245, %v260
      %v268 = vadd.f32 %v246, %v260
      %v269 = vadd.f32 %v247, %v260
      %v270 = vadd.f32 %v248, %v260
      %v271 = vadd.f32 %v249, %v260
      %v272 = vadd.f32 %v250, %v260
      %v273 = vadd.f32 %v251, %v260
      %v274 = vadd.f32 %v252, %v260
      %v275 = vadd.f32 %v253, %v260
      %v276 = vadd.f32 %v254, %v260
      %v277 = vadd.f32 %v255, %v260
      %v278 = vpack.c.bf16 %v263, %v262
      %v279 = vpack.c.bf16 %v265, %v264
      %v280 = vpack.c.bf16 %v267, %v266
      %v281 = vpack.c.bf16 %v269, %v268
      %v282 = vpack.c.bf16 %v271, %v270
      %v283 = vpack.c.bf16 %v273, %v272
      %v284 = vpack.c.bf16 %v275, %v274
      %v285 = vpack.c.bf16 %v277, %v276
      %v294 = vunpack.c.l.b16 %v278
      %v295 = vunpack.c.h.b16 %v278
      %v296 = vunpack.c.l.b16 %v279
      %v297 = vunpack.c.h.b16 %v279
      %v298 = vunpack.c.l.b16 %v280
      %v299 = vunpack.c.h.b16 %v280
      %v300 = vunpack.c.l.b16 %v281
      %v301 = vunpack.c.h.b16 %v281
      %v302 = vunpack.c.l.b16 %v282
      %v303 = vunpack.c.h.b16 %v282
      %v304 = vunpack.c.l.b16 %v283
      %v305 = vunpack.c.h.b16 %v283
      %v306 = vunpack.c.l.b16 %v284
      %v307 = vunpack.c.h.b16 %v284
      %v308 = vunpack.c.l.b16 %v285
      %v309 = vunpack.c.h.b16 %v285
      %v310 = vpack.c.b16 %v294, %v294
      %v311 = vpack.c.b16 %v295, %v295
      %v312 = vpack.c.b16 %v296, %v296
      %v313 = vpack.c.b16 %v297, %v297
      %v314 = vpack.c.b16 %v298, %v298
      %v315 = vpack.c.b16 %v299, %v299
      %v316 = vpack.c.b16 %v300, %v300
      %v317 = vpack.c.b16 %v301, %v301
      %v318 = vpack.c.b16 %v302, %v302
      %v319 = vpack.c.b16 %v303, %v303
      %v320 = vpack.c.b16 %v304, %v304
      %v321 = vpack.c.b16 %v305, %v305
      %v322 = vpack.c.b16 %v306, %v306
      %v323 = vpack.c.b16 %v307, %v307
      %v324 = vpack.c.b16 %v308, %v308
      %v325 = vpack.c.b16 %v309, %v309
      %342 = vst [vmem:[#allocation2] sm:$0xf] %v310
      %343 = vst [vmem:[#allocation2 + $0x4] sm:$0xf] %v311
      %344 = vst [vmem:[#allocation2 + $0x8] sm:$0xf] %v312
      %345 = vst [vmem:[#allocation2 + $0xc] sm:$0xf] %v313
      %346 = vst [vmem:[#allocation2 + $0x10] sm:$0xf] %v314
      %347 = vst [vmem:[#allocation2 + $0x14] sm:$0xf] %v315
      %348 = vst [vmem:[#allocation2 + $0x18] sm:$0xf] %v316
      %349 = vst [vmem:[#allocation2 + $0x1c] sm:$0xf] %v317
      %350 = vst [vmem:[#allocation2 + $0x20] sm:$0xf] %v318
      %351 = vst [vmem:[#allocation2 + $0x24] sm:$0xf] %v319
      %352 = vst [vmem:[#allocation2 + $0x28] sm:$0xf] %v320
      %353 = vst [vmem:[#allocation2 + $0x2c] sm:$0xf] %v321
      %354 = vst [vmem:[#allocation2 + $0x30] sm:$0xf] %v322
      %355 = vst [vmem:[#allocation2 + $0x34] sm:$0xf] %v323
      %356 = vst [vmem:[#allocation2 + $0x38] sm:$0xf] %v324
      %357 = vst [vmem:[#allocation2 + $0x3c] sm:$0xf] %v325
    $region21: #{_lambda_.21} parent=1 // pred_fallthru
      _
    %v358 = vld [vmem:[#allocation2] sm:$0xf]
    %v359 = vld [vmem:[#allocation2 + $0x4] sm:$0xf]
    %v360 = vld [vmem:[#allocation2 + $0x8] sm:$0xf]
    %v361 = vld [vmem:[#allocation2 + $0xc] sm:$0xf]
    %v362 = vld [vmem:[#allocation2 + $0x10] sm:$0xf]
    %v363 = vld [vmem:[#allocation2 + $0x14] sm:$0xf]
    %v364 = vld [vmem:[#allocation2 + $0x18] sm:$0xf]
    %v365 = vld [vmem:[#allocation2 + $0x1c] sm:$0xf]
    %v366 = vld [vmem:[#allocation2 + $0x20] sm:$0xf]
    %v367 = vld [vmem:[#allocation2 + $0x24] sm:$0xf]
    %v368 = vld [vmem:[#allocation2 + $0x28] sm:$0xf]
    %v369 = vld [vmem:[#allocation2 + $0x2c] sm:$0xf]
    %v370 = vld [vmem:[#allocation2 + $0x30] sm:$0xf]
    %v371 = vld [vmem:[#allocation2 + $0x34] sm:$0xf]
    %v372 = vld [vmem:[#allocation2 + $0x38] sm:$0xf]
    %v373 = vld [vmem:[#allocation2 + $0x3c] sm:$0xf]
    %v374 = vld [vmem:[%s3] sm:$0xff]
    %v375 = vld [vmem:[%s3 + $0x8] sm:$0xff]
    %v376 = vld [vmem:[%s3 + $0x10] sm:$0xff]
    %v377 = vld [vmem:[%s3 + $0x18] sm:$0xff]
    %v378 = vld [vmem:[%s3 + $0x20] sm:$0xff]
    %v379 = vld [vmem:[%s3 + $0x28] sm:$0xff]
    %v380 = vld [vmem:[%s3 + $0x30] sm:$0xff]
    %v381 = vld [vmem:[%s3 + $0x38] sm:$0xff]
    %v382 = vld [vmem:[%s3 + $0x40] sm:$0xff]
    %v383 = vld [vmem:[%s3 + $0x48] sm:$0xff]
    %v384 = vld [vmem:[%s3 + $0x50] sm:$0xff]
    %v385 = vld [vmem:[%s3 + $0x58] sm:$0xff]
    %v386 = vld [vmem:[%s3 + $0x60] sm:$0xff]
    %v387 = vld [vmem:[%s3 + $0x68] sm:$0xff]
    %v388 = vld [vmem:[%s3 + $0x70] sm:$0xff]
    %v389 = vld [vmem:[%s3 + $0x78] sm:$0xff]
    %v390 = vld [vmem:[%s3 + $0x80] sm:$0xff]
    %v391 = vld [vmem:[%s3 + $0x88] sm:$0xff]
    %v392 = vld [vmem:[%s3 + $0x90] sm:$0xff]
    %v393 = vld [vmem:[%s3 + $0x98] sm:$0xff]
    %v394 = vld [vmem:[%s3 + $0xa0] sm:$0xff]
    %v395 = vld [vmem:[%s3 + $0xa8] sm:$0xff]
    %v396 = vld [vmem:[%s3 + $0xb0] sm:$0xff]
    %v397 = vld [vmem:[%s3 + $0xb8] sm:$0xff]
    %v398 = vld [vmem:[%s3 + $0xc0] sm:$0xff]
    %v399 = vld [vmem:[%s3 + $0xc8] sm:$0xff]
    %v400 = vld [vmem:[%s3 + $0xd0] sm:$0xff]
    %v401 = vld [vmem:[%s3 + $0xd8] sm:$0xff]
    %v402 = vld [vmem:[%s3 + $0xe0] sm:$0xff]
    %v403 = vld [vmem:[%s3 + $0xe8] sm:$0xff]
    %v404 = vld [vmem:[%s3 + $0xf0] sm:$0xff]
    %v405 = vld [vmem:[%s3 + $0xf8] sm:$0xff]
    %v422 = vunpack.c.l.b16 %v358
    %v423 = vunpack.c.l.b16 %v359
    %v424 = vunpack.c.l.b16 %v360
    %v425 = vunpack.c.l.b16 %v361
    %v426 = vunpack.c.l.b16 %v362
    %v427 = vunpack.c.l.b16 %v363
    %v428 = vunpack.c.l.b16 %v364
    %v429 = vunpack.c.l.b16 %v365
    %v430 = vunpack.c.l.b16 %v366
    %v431 = vunpack.c.l.b16 %v367
    %v432 = vunpack.c.l.b16 %v368
    %v433 = vunpack.c.l.b16 %v369
    %v434 = vunpack.c.l.b16 %v370
    %v435 = vunpack.c.l.b16 %v371
    %v436 = vunpack.c.l.b16 %v372
    %v437 = vunpack.c.l.b16 %v373
    %v438 = vpack.c.b16 %v423, %v422
    %v439 = vpack.c.b16 %v425, %v424
    %v440 = vpack.c.b16 %v427, %v426
    %v441 = vpack.c.b16 %v429, %v428
    %v442 = vpack.c.b16 %v431, %v430
    %v443 = vpack.c.b16 %v433, %v432
    %v444 = vpack.c.b16 %v435, %v434
    %v445 = vpack.c.b16 %v437, %v436
    %v486 = vunpack.c.l.b16 %v374
    %v487 = vunpack.c.h.b16 %v374
    %v488 = vunpack.c.l.b16 %v375
    %v489 = vunpack.c.h.b16 %v375
    %v490 = vunpack.c.l.b16 %v376
    %v491 = vunpack.c.h.b16 %v376
    %v492 = vunpack.c.l.b16 %v377
    %v493 = vunpack.c.h.b16 %v377
    %v494 = vunpack.c.l.b16 %v378
    %v495 = vunpack.c.h.b16 %v378
    %v496 = vunpack.c.l.b16 %v379
    %v497 = vunpack.c.h.b16 %v379
    %v498 = vunpack.c.l.b16 %v380
    %v499 = vunpack.c.h.b16 %v380
    %v500 = vunpack.c.l.b16 %v381
    %v501 = vunpack.c.h.b16 %v381
    %v502 = vunpack.c.l.b16 %v382
    %v503 = vunpack.c.h.b16 %v382
    %v504 = vunpack.c.l.b16 %v383
    %v505 = vunpack.c.h.b16 %v383
    %v506 = vunpack.c.l.b16 %v384
    %v507 = vunpack.c.h.b16 %v384
    %v508 = vunpack.c.l.b16 %v385
    %v509 = vunpack.c.h.b16 %v385
    %v510 = vunpack.c.l.b16 %v386
    %v511 = vunpack.c.h.b16 %v386
    %v512 = vunpack.c.l.b16 %v387
    %v513 = vunpack.c.h.b16 %v387
    %v514 = vunpack.c.l.b16 %v388
    %v515 = vunpack.c.h.b16 %v388
    %v516 = vunpack.c.l.b16 %v389
    %v517 = vunpack.c.h.b16 %v389
    %v518 = vunpack.c.l.b16 %v390
    %v519 = vunpack.c.h.b16 %v390
    %v520 = vunpack.c.l.b16 %v391
    %v521 = vunpack.c.h.b16 %v391
    %v522 = vunpack.c.l.b16 %v392
    %v523 = vunpack.c.h.b16 %v392
    %v524 = vunpack.c.l.b16 %v393
    %v525 = vunpack.c.h.b16 %v393
    %v526 = vunpack.c.l.b16 %v394
    %v527 = vunpack.c.h.b16 %v394
    %v528 = vunpack.c.l.b16 %v395
    %v529 = vunpack.c.h.b16 %v395
    %v530 = vunpack.c.l.b16 %v396
    %v531 = vunpack.c.h.b16 %v396
    %v532 = vunpack.c.l.b16 %v397
    %v533 = vunpack.c.h.b16 %v397
    %v534 = vunpack.c.l.b16 %v398
    %v535 = vunpack.c.h.b16 %v398
    %v536 = vunpack.c.l.b16 %v399
    %v537 = vunpack.c.h.b16 %v399
    %v538 = vunpack.c.l.b16 %v400
    %v539 = vunpack.c.h.b16 %v400
    %v540 = vunpack.c.l.b16 %v401
    %v541 = vunpack.c.h.b16 %v401
    %v542 = vunpack.c.l.b16 %v402
    %v543 = vunpack.c.h.b16 %v402
    %v544 = vunpack.c.l.b16 %v403
    %v545 = vunpack.c.h.b16 %v403
    %v546 = vunpack.c.l.b16 %v404
    %v547 = vunpack.c.h.b16 %v404
    %v548 = vunpack.c.l.b16 %v405
    %v549 = vunpack.c.h.b16 %v405
    %v550 = vpack.c.b16 %v490, %v486
    %v551 = vpack.c.b16 %v491, %v487
    %v552 = vpack.c.b16 %v492, %v488
    %v553 = vpack.c.b16 %v493, %v489
    %v554 = vpack.c.b16 %v498, %v494
    %v555 = vpack.c.b16 %v499, %v495
    %v556 = vpack.c.b16 %v500, %v496
    %v557 = vpack.c.b16 %v501, %v497
    %v558 = vpack.c.b16 %v506, %v502
    %v559 = vpack.c.b16 %v507, %v503
    %v560 = vpack.c.b16 %v508, %v504
    %v561 = vpack.c.b16 %v509, %v505
    %v562 = vpack.c.b16 %v514, %v510
    %v563 = vpack.c.b16 %v515, %v511
    %v564 = vpack.c.b16 %v516, %v512
    %v565 = vpack.c.b16 %v517, %v513
    %v566 = vpack.c.b16 %v522, %v518
    %v567 = vpack.c.b16 %v523, %v519
    %v568 = vpack.c.b16 %v524, %v520
    %v569 = vpack.c.b16 %v525, %v521
    %v570 = vpack.c.b16 %v530, %v526
    %v571 = vpack.c.b16 %v531, %v527
    %v572 = vpack.c.b16 %v532, %v528
    %v573 = vpack.c.b16 %v533, %v529
    %v574 = vpack.c.b16 %v538, %v534
    %v575 = vpack.c.b16 %v539, %v535
    %v576 = vpack.c.b16 %v540, %v536
    %v577 = vpack.c.b16 %v541, %v537
    %v578 = vpack.c.b16 %v546, %v542
    %v579 = vpack.c.b16 %v547, %v543
    %v580 = vpack.c.b16 %v548, %v544
    %v581 = vpack.c.b16 %v549, %v545
    %614 = vmatprep.subr.bf16.mxu0 %v579
    %615 = vmatpush1.bf16.msra.mxu0 %v578
    %616 = vmatprep.subr.bf16.mxu0 %v575
    %617 = vmatpush1.bf16.msra.mxu0 %v574
    %618 = vmatprep.subr.bf16.mxu0 %v571
    %619 = vmatpush1.bf16.msra.mxu0 %v570
    %620 = vmatprep.subr.bf16.mxu0 %v567
    %621 = vmatpush1.bf16.msra.mxu0 %v566
    %622 = vmatprep.subr.bf16.mxu0 %v563
    %623 = vmatpush1.bf16.msra.mxu0 %v562
    %624 = vmatprep.subr.bf16.mxu0 %v559
    %625 = vmatpush1.bf16.msra.mxu0 %v558
    %626 = vmatprep.subr.bf16.mxu0 %v555
    %627 = vmatpush1.bf16.msra.mxu0 %v554
    %628 = vmatprep.subr.bf16.mxu0 %v551
    %629 = vmatpush1.bf16.msra.mxu0 %v550
    %630 = vmatprep.subr.bf16.mxu0 0
    %631 = vmatpush2.bf16.msra.mxu0 0
    %632 = vmatprep.subr.bf16.mxu0 0
    %633 = vmatpush2.bf16.msra.mxu0 0
    %634 = vmatprep.subr.bf16.mxu0 0
    %635 = vmatpush2.bf16.msra.mxu0 0
    %636 = vmatprep.subr.bf16.mxu0 0
    %637 = vmatpush2.bf16.msra.mxu0 0
    %638 = vmatprep.subr.bf16.mxu0 0
    %639 = vmatpush2.bf16.msra.mxu0 0
    %640 = vmatprep.subr.bf16.mxu0 0
    %641 = vmatpush2.bf16.msra.mxu0 0
    %642 = vmatprep.subr.bf16.mxu0 0
    %643 = vmatpush2.bf16.msra.mxu0 0
    %644 = vmatprep.subr.bf16.mxu0 0
    %645 = vmatpush2.bf16.msra.mxu0 0
    %646 = vmatprep.mubr.bf16.mxu0 0
    %647 = vmatmul.mubr.bf16.gmra.mxu0 %v438
    %v648 = vpop.f32.mrf.mxu0
    %v649 = vadd.f32 0.0, %v648
    %v650 = vpop.f32.mrf.mxu0
    %v651 = vadd.f32 0.0, %v650
    %v652 = vpop.f32.mrf.mxu0
    %v653 = vadd.f32 0.0, %v652
    %v654 = vpop.f32.mrf.mxu0
    %v655 = vadd.f32 0.0, %v654
    %656 = vmatprep.mubr.bf16.mxu0 0
    %657 = vmatmul.mubr.bf16.gmra.mxu0 %v439
    %v658 = vpop.f32.mrf.mxu0
    %v659 = vadd.f32 0.0, %v658
    %v660 = vpop.f32.mrf.mxu0
    %v661 = vadd.f32 0.0, %v660
    %v662 = vpop.f32.mrf.mxu0
    %v663 = vadd.f32 0.0, %v662
    %v664 = vpop.f32.mrf.mxu0
    %v665 = vadd.f32 0.0, %v664
    %666 = vmatprep.mubr.bf16.mxu0 0
    %667 = vmatmul.mubr.bf16.gmra.mxu0 %v440
    %v668 = vpop.f32.mrf.mxu0
    %v669 = vadd.f32 0.0, %v668
    %v670 = vpop.f32.mrf.mxu0
    %v671 = vadd.f32 0.0, %v670
    %v672 = vpop.f32.mrf.mxu0
    %v673 = vadd.f32 0.0, %v672
    %v674 = vpop.f32.mrf.mxu0
    %v675 = vadd.f32 0.0, %v674
    %676 = vmatprep.mubr.bf16.mxu0 0
    %677 = vmatmul.mubr.bf16.gmra.mxu0 %v441
    %v678 = vpop.f32.mrf.mxu0
    %v679 = vadd.f32 0.0, %v678
    %v680 = vpop.f32.mrf.mxu0
    %v681 = vadd.f32 0.0, %v680
    %v682 = vpop.f32.mrf.mxu0
    %v683 = vadd.f32 0.0, %v682
    %v684 = vpop.f32.mrf.mxu0
    %v685 = vadd.f32 0.0, %v684
    %686 = vmatprep.mubr.bf16.mxu0 0
    %687 = vmatmul.mubr.bf16.gmra.mxu0 %v442
    %v688 = vpop.f32.mrf.mxu0
    %v689 = vadd.f32 0.0, %v688
    %v690 = vpop.f32.mrf.mxu0
    %v691 = vadd.f32 0.0, %v690
    %v692 = vpop.f32.mrf.mxu0
    %v693 = vadd.f32 0.0, %v692
    %v694 = vpop.f32.mrf.mxu0
    %v695 = vadd.f32 0.0, %v694
    %696 = vmatprep.mubr.bf16.mxu0 0
    %697 = vmatmul.mubr.bf16.gmra.mxu0 %v443
    %v698 = vpop.f32.mrf.mxu0
    %v699 = vadd.f32 0.0, %v698
    %v700 = vpop.f32.mrf.mxu0
    %v701 = vadd.f32 0.0, %v700
    %v702 = vpop.f32.mrf.mxu0
    %v703 = vadd.f32 0.0, %v702
    %v704 = vpop.f32.mrf.mxu0
    %v705 = vadd.f32 0.0, %v704
    %706 = vmatprep.mubr.bf16.mxu0 0
    %707 = vmatmul.mubr.bf16.gmra.mxu0 %v444
    %v708 = vpop.f32.mrf.mxu0
    %v709 = vadd.f32 0.0, %v708
    %v710 = vpop.f32.mrf.mxu0
    %v711 = vadd.f32 0.0, %v710
    %v712 = vpop.f32.mrf.mxu0
    %v713 = vadd.f32 0.0, %v712
    %v714 = vpop.f32.mrf.mxu0
    %v715 = vadd.f32 0.0, %v714
    %716 = vmatprep.mubr.bf16.mxu0 0
    %717 = vmatmul.mubr.bf16.gmra.mxu0 %v445
    %v718 = vpop.f32.mrf.mxu0
    %v719 = vadd.f32 0.0, %v718
    %v720 = vpop.f32.mrf.mxu0
    %v721 = vadd.f32 0.0, %v720
    %v722 = vpop.f32.mrf.mxu0
    %v723 = vadd.f32 0.0, %v722
    %v724 = vpop.f32.mrf.mxu0
    %v725 = vadd.f32 0.0, %v724
    %726 = vdwg.mxu0
    %727 = vmatprep.subr.bf16.mxu0 %v581
    %728 = vmatpush1.bf16.msra.mxu0 %v580
    %729 = vmatprep.subr.bf16.mxu0 %v577
    %730 = vmatpush1.bf16.msra.mxu0 %v576
    %731 = vmatprep.subr.bf16.mxu0 %v573
    %732 = vmatpush1.bf16.msra.mxu0 %v572
    %733 = vmatprep.subr.bf16.mxu0 %v569
    %734 = vmatpush1.bf16.msra.mxu0 %v568
    %735 = vmatprep.subr.bf16.mxu0 %v565
    %736 = vmatpush1.bf16.msra.mxu0 %v564
    %737 = vmatprep.subr.bf16.mxu0 %v561
    %738 = vmatpush1.bf16.msra.mxu0 %v560
    %739 = vmatprep.subr.bf16.mxu0 %v557
    %740 = vmatpush1.bf16.msra.mxu0 %v556
    %741 = vmatprep.subr.bf16.mxu0 %v553
    %742 = vmatpush1.bf16.msra.mxu0 %v552
    %743 = vmatprep.subr.bf16.mxu0 0
    %744 = vmatpush2.bf16.msra.mxu0 0
    %745 = vmatprep.subr.bf16.mxu0 0
    %746 = vmatpush2.bf16.msra.mxu0 0
    %747 = vmatprep.subr.bf16.mxu0 0
    %748 = vmatpush2.bf16.msra.mxu0 0
    %749 = vmatprep.subr.bf16.mxu0 0
    %750 = vmatpush2.bf16.msra.mxu0 0
    %751 = vmatprep.subr.bf16.mxu0 0
    %752 = vmatpush2.bf16.msra.mxu0 0
    %753 = vmatprep.subr.bf16.mxu0 0
    %754 = vmatpush2.bf16.msra.mxu0 0
    %755 = vmatprep.subr.bf16.mxu0 0
    %756 = vmatpush2.bf16.msra.mxu0 0
    %757 = vmatprep.subr.bf16.mxu0 0
    %758 = vmatpush2.bf16.msra.mxu0 0
    %759 = vmatprep.mubr.bf16.mxu0 0
    %760 = vmatmul.mubr.bf16.gmra.mxu0 %v438
    %v761 = vpop.f32.mrf.mxu0
    %v762 = vadd.f32 0.0, %v761
    %v763 = vpop.f32.mrf.mxu0
    %v764 = vadd.f32 0.0, %v763
    %v765 = vpop.f32.mrf.mxu0
    %v766 = vadd.f32 0.0, %v765
    %v767 = vpop.f32.mrf.mxu0
    %v768 = vadd.f32 0.0, %v767
    %769 = vmatprep.mubr.bf16.mxu0 0
    %770 = vmatmul.mubr.bf16.gmra.mxu0 %v439
    %v771 = vpop.f32.mrf.mxu0
    %v772 = vadd.f32 0.0, %v771
    %v773 = vpop.f32.mrf.mxu0
    %v774 = vadd.f32 0.0, %v773
    %v775 = vpop.f32.mrf.mxu0
    %v776 = vadd.f32 0.0, %v775
    %v777 = vpop.f32.mrf.mxu0
    %v778 = vadd.f32 0.0, %v777
    %779 = vmatprep.mubr.bf16.mxu0 0
    %780 = vmatmul.mubr.bf16.gmra.mxu0 %v440
    %v781 = vpop.f32.mrf.mxu0
    %v782 = vadd.f32 0.0, %v781
    %v783 = vpop.f32.mrf.mxu0
    %v784 = vadd.f32 0.0, %v783
    %v785 = vpop.f32.mrf.mxu0
    %v786 = vadd.f32 0.0, %v785
    %v787 = vpop.f32.mrf.mxu0
    %v788 = vadd.f32 0.0, %v787
    %789 = vmatprep.mubr.bf16.mxu0 0
    %790 = vmatmul.mubr.bf16.gmra.mxu0 %v441
    %v791 = vpop.f32.mrf.mxu0
    %v792 = vadd.f32 0.0, %v791
    %v793 = vpop.f32.mrf.mxu0
    %v794 = vadd.f32 0.0, %v793
    %v795 = vpop.f32.mrf.mxu0
    %v796 = vadd.f32 0.0, %v795
    %v797 = vpop.f32.mrf.mxu0
    %v798 = vadd.f32 0.0, %v797
    %799 = vmatprep.mubr.bf16.mxu0 0
    %800 = vmatmul.mubr.bf16.gmra.mxu0 %v442
    %v801 = vpop.f32.mrf.mxu0
    %v802 = vadd.f32 0.0, %v801
    %v803 = vpop.f32.mrf.mxu0
    %v804 = vadd.f32 0.0, %v803
    %v805 = vpop.f32.mrf.mxu0
    %v806 = vadd.f32 0.0, %v805
    %v807 = vpop.f32.mrf.mxu0
    %v808 = vadd.f32 0.0, %v807
    %809 = vmatprep.mubr.bf16.mxu0 0
    %810 = vmatmul.mubr.bf16.gmra.mxu0 %v443
    %v811 = vpop.f32.mrf.mxu0
    %v812 = vadd.f32 0.0, %v811
    %v813 = vpop.f32.mrf.mxu0
    %v814 = vadd.f32 0.0, %v813
    %v815 = vpop.f32.mrf.mxu0
    %v816 = vadd.f32 0.0, %v815
    %v817 = vpop.f32.mrf.mxu0
    %v818 = vadd.f32 0.0, %v817
    %819 = vmatprep.mubr.bf16.mxu0 0
    %820 = vmatmul.mubr.bf16.gmra.mxu0 %v444
    %v821 = vpop.f32.mrf.mxu0
    %v822 = vadd.f32 0.0, %v821
    %v823 = vpop.f32.mrf.mxu0
    %v824 = vadd.f32 0.0, %v823
    %v825 = vpop.f32.mrf.mxu0
    %v826 = vadd.f32 0.0, %v825
    %v827 = vpop.f32.mrf.mxu0
    %v828 = vadd.f32 0.0, %v827
    %829 = vmatprep.mubr.bf16.mxu0 0
    %830 = vmatmul.mubr.bf16.gmra.mxu0 %v445
    %v831 = vpop.f32.mrf.mxu0
    %v832 = vadd.f32 0.0, %v831
    %v833 = vpop.f32.mrf.mxu0
    %v834 = vadd.f32 0.0, %v833
    %v835 = vpop.f32.mrf.mxu0
    %v836 = vadd.f32 0.0, %v835
    %v837 = vpop.f32.mrf.mxu0
    %v838 = vadd.f32 0.0, %v837
    %839 = vdwg.mxu0
    %v840 = vpack.c.bf16 %v653, %v649
    %v841 = vpack.c.bf16 %v655, %v651
    %v842 = vpack.c.bf16 %v766, %v762
    %v843 = vpack.c.bf16 %v768, %v764
    %v844 = vpack.c.bf16 %v663, %v659
    %v845 = vpack.c.bf16 %v665, %v661
    %v846 = vpack.c.bf16 %v776, %v772
    %v847 = vpack.c.bf16 %v778, %v774
    %v848 = vpack.c.bf16 %v673, %v669
    %v849 = vpack.c.bf16 %v675, %v671
    %v850 = vpack.c.bf16 %v786, %v782
    %v851 = vpack.c.bf16 %v788, %v784
    %v852 = vpack.c.bf16 %v683, %v679
    %v853 = vpack.c.bf16 %v685, %v681
    %v854 = vpack.c.bf16 %v796, %v792
    %v855 = vpack.c.bf16 %v798, %v794
    %v856 = vpack.c.bf16 %v693, %v689
    %v857 = vpack.c.bf16 %v695, %v691
    %v858 = vpack.c.bf16 %v806, %v802
    %v859 = vpack.c.bf16 %v808, %v804
    %v860 = vpack.c.bf16 %v703, %v699
    %v861 = vpack.c.bf16 %v705, %v701
    %v862 = vpack.c.bf16 %v816, %v812
    %v863 = vpack.c.bf16 %v818, %v814
    %v864 = vpack.c.bf16 %v713, %v709
    %v865 = vpack.c.bf16 %v715, %v711
    %v866 = vpack.c.bf16 %v826, %v822
    %v867 = vpack.c.bf16 %v828, %v824
    %v868 = vpack.c.bf16 %v723, %v719
    %v869 = vpack.c.bf16 %v725, %v721
    %v870 = vpack.c.bf16 %v836, %v832
    %v871 = vpack.c.bf16 %v838, %v834
    %v904 = vunpack.c.l.b16 %v840
    %v905 = vunpack.c.l.b16 %v841
    %v906 = vunpack.c.l.b16 %v842
    %v907 = vunpack.c.l.b16 %v843
    %v908 = vunpack.c.h.b16 %v840
    %v909 = vunpack.c.h.b16 %v841
    %v910 = vunpack.c.h.b16 %v842
    %v911 = vunpack.c.h.b16 %v843
    %v912 = vunpack.c.l.b16 %v844
    %v913 = vunpack.c.l.b16 %v845
    %v914 = vunpack.c.l.b16 %v846
    %v915 = vunpack.c.l.b16 %v847
    %v916 = vunpack.c.h.b16 %v844
    %v917 = vunpack.c.h.b16 %v845
    %v918 = vunpack.c.h.b16 %v846
    %v919 = vunpack.c.h.b16 %v847
    %v920 = vunpack.c.l.b16 %v848
    %v921 = vunpack.c.l.b16 %v849
    %v922 = vunpack.c.l.b16 %v850
    %v923 = vunpack.c.l.b16 %v851
    %v924 = vunpack.c.h.b16 %v848
    %v925 = vunpack.c.h.b16 %v849
    %v926 = vunpack.c.h.b16 %v850
    %v927 = vunpack.c.h.b16 %v851
    %v928 = vunpack.c.l.b16 %v852
    %v929 = vunpack.c.l.b16 %v853
    %v930 = vunpack.c.l.b16 %v854
    %v931 = vunpack.c.l.b16 %v855
    %v932 = vunpack.c.h.b16 %v852
    %v933 = vunpack.c.h.b16 %v853
    %v934 = vunpack.c.h.b16 %v854
    %v935 = vunpack.c.h.b16 %v855
    %v936 = vunpack.c.l.b16 %v856
    %v937 = vunpack.c.l.b16 %v857
    %v938 = vunpack.c.l.b16 %v858
    %v939 = vunpack.c.l.b16 %v859
    %v940 = vunpack.c.h.b16 %v856
    %v941 = vunpack.c.h.b16 %v857
    %v942 = vunpack.c.h.b16 %v858
    %v943 = vunpack.c.h.b16 %v859
    %v944 = vunpack.c.l.b16 %v860
    %v945 = vunpack.c.l.b16 %v861
    %v946 = vunpack.c.l.b16 %v862
    %v947 = vunpack.c.l.b16 %v863
    %v948 = vunpack.c.h.b16 %v860
    %v949 = vunpack.c.h.b16 %v861
    %v950 = vunpack.c.h.b16 %v862
    %v951 = vunpack.c.h.b16 %v863
    %v952 = vunpack.c.l.b16 %v864
    %v953 = vunpack.c.l.b16 %v865
    %v954 = vunpack.c.l.b16 %v866
    %v955 = vunpack.c.l.b16 %v867
    %v956 = vunpack.c.h.b16 %v864
    %v957 = vunpack.c.h.b16 %v865
    %v958 = vunpack.c.h.b16 %v866
    %v959 = vunpack.c.h.b16 %v867
    %v960 = vunpack.c.l.b16 %v868
    %v961 = vunpack.c.l.b16 %v869
    %v962 = vunpack.c.l.b16 %v870
    %v963 = vunpack.c.l.b16 %v871
    %v964 = vunpack.c.h.b16 %v868
    %v965 = vunpack.c.h.b16 %v869
    %v966 = vunpack.c.h.b16 %v870
    %v967 = vunpack.c.h.b16 %v871
    %v968 = vpack.c.b16 %v905, %v904
    %v969 = vpack.c.b16 %v907, %v906
    %v970 = vpack.c.b16 %v909, %v908
    %v971 = vpack.c.b16 %v911, %v910
    %v972 = vpack.c.b16 %v913, %v912
    %v973 = vpack.c.b16 %v915, %v914
    %v974 = vpack.c.b16 %v917, %v916
    %v975 = vpack.c.b16 %v919, %v918
    %v976 = vpack.c.b16 %v921, %v920
    %v977 = vpack.c.b16 %v923, %v922
    %v978 = vpack.c.b16 %v925, %v924
    %v979 = vpack.c.b16 %v927, %v926
    %v980 = vpack.c.b16 %v929, %v928
    %v981 = vpack.c.b16 %v931, %v930
    %v982 = vpack.c.b16 %v933, %v932
    %v983 = vpack.c.b16 %v935, %v934
    %v984 = vpack.c.b16 %v937, %v936
    %v985 = vpack.c.b16 %v939, %v938
    %v986 = vpack.c.b16 %v941, %v940
    %v987 = vpack.c.b16 %v943, %v942
    %v988 = vpack.c.b16 %v945, %v944
    %v989 = vpack.c.b16 %v947, %v946
    %v990 = vpack.c.b16 %v949, %v948
    %v991 = vpack.c.b16 %v951, %v950
    %v992 = vpack.c.b16 %v953, %v952
    %v993 = vpack.c.b16 %v955, %v954
    %v994 = vpack.c.b16 %v957, %v956
    %v995 = vpack.c.b16 %v959, %v958
    %v996 = vpack.c.b16 %v961, %v960
    %v997 = vpack.c.b16 %v963, %v962
    %v998 = vpack.c.b16 %v965, %v964
    %v999 = vpack.c.b16 %v967, %v966
    %1032 = vst [vmem:[#allocation3] sm:$0xff] %v968
    %1033 = vst [vmem:[#allocation3 + $0x8] sm:$0xff] %v969
    %1034 = vst [vmem:[#allocation3 + $0x10] sm:$0xff] %v970
    %1035 = vst [vmem:[#allocation3 + $0x18] sm:$0xff] %v971
    %1036 = vst [vmem:[#allocation3 + $0x20] sm:$0xff] %v972
    %1037 = vst [vmem:[#allocation3 + $0x28] sm:$0xff] %v973
    %1038 = vst [vmem:[#allocation3 + $0x30] sm:$0xff] %v974
    %1039 = vst [vmem:[#allocation3 + $0x38] sm:$0xff] %v975
    %1040 = vst [vmem:[#allocation3 + $0x40] sm:$0xff] %v976
    %1041 = vst [vmem:[#allocation3 + $0x48] sm:$0xff] %v977
    %1042 = vst [vmem:[#allocation3 + $0x50] sm:$0xff] %v978
    %1043 = vst [vmem:[#allocation3 + $0x58] sm:$0xff] %v979
    %1044 = vst [vmem:[#allocation3 + $0x60] sm:$0xff] %v980
    %1045 = vst [vmem:[#allocation3 + $0x68] sm:$0xff] %v981
    %1046 = vst [vmem:[#allocation3 + $0x70] sm:$0xff] %v982
    %1047 = vst [vmem:[#allocation3 + $0x78] sm:$0xff] %v983
    %1048 = vst [vmem:[#allocation3 + $0x80] sm:$0xff] %v984
    %1049 = vst [vmem:[#allocation3 + $0x88] sm:$0xff] %v985
    %1050 = vst [vmem:[#allocation3 + $0x90] sm:$0xff] %v986
    %1051 = vst [vmem:[#allocation3 + $0x98] sm:$0xff] %v987
    %1052 = vst [vmem:[#allocation3 + $0xa0] sm:$0xff] %v988
    %1053 = vst [vmem:[#allocation3 + $0xa8] sm:$0xff] %v989
    %1054 = vst [vmem:[#allocation3 + $0xb0] sm:$0xff] %v990
    %1055 = vst [vmem:[#allocation3 + $0xb8] sm:$0xff] %v991
    %1056 = vst [vmem:[#allocation3 + $0xc0] sm:$0xff] %v992
    %1057 = vst [vmem:[#allocation3 + $0xc8] sm:$0xff] %v993
    %1058 = vst [vmem:[#allocation3 + $0xd0] sm:$0xff] %v994
    %1059 = vst [vmem:[#allocation3 + $0xd8] sm:$0xff] %v995
    %1060 = vst [vmem:[#allocation3 + $0xe0] sm:$0xff] %v996
    %1061 = vst [vmem:[#allocation3 + $0xe8] sm:$0xff] %v997
    %1062 = vst [vmem:[#allocation3 + $0xf0] sm:$0xff] %v998
    %1063 = vst [vmem:[#allocation3 + $0xf8] sm:$0xff] %v999
    // Predicated region
    $region22: #{_lambda_.21} parent=1 // pred_check
      _
    $region23: #{_lambda_.21} parent=1 // pred_check_branch
      %1065 = sbr.rel (0) target = $region25
    $region24: #{_lambda_.21} parent=1 // pred_region
      %s1067 = ssub.s32 4096, 4096
      %1068 = vsyncadd [#allocation4], %s1067
      %s1069 = sshll.u32 [#allocation3], 4
      %s1070 = int_to_ptr.vmem [resolvable:$true] %s1069
      %1075 = dma.vmem_to_hbm [thread:$0]  %s1070, 4096, %s4, [#allocation4], 256, 256, 16
    $region25: #{_lambda_.21} parent=1 // pred_fallthru
      _
    // Predicated region
    $region26: #{_lambda_.21} parent=1 // pred_check
      _
    $region27: #{_lambda_.21} parent=1 // pred_check_branch
      %1077 = sbr.rel (0) target = $region29
    $region28: #{_lambda_.21} parent=1 // pred_region
      %1078 = dma.done [#allocation4], 4096
    $region29: #{_lambda_.21} parent=1 // pred_fallthru
      _
    %1079 = vsyncpa [#allocation4], 1

// kernel: _lambda_.12
$region0: #{_lambda_.12}
  #allocation0 [shape = 'u32[]', space=smem, size = 0x4, offset = 0x4, fixed_abs, tag = 'smem constant byte address 0x4 - core index']
  #allocation1 [shape = 'u32[144,128]{1,0:T(1,128)}', space=vmem, size = 0x12000, scoped, tag = 'internal scratch']
  #allocation2 [shape = 'f32[4,64,1]{2,1,0:T(8,128)}', space=vmem, size = 0x20000, scoped, tag = 'scratch operand']
  #allocation3 [shape = 'f32[4,64,1]{2,1,0:T(8,128)}', space=vmem, size = 0x20000, scoped, tag = 'scratch operand']
  #allocation4 [shape = 'f32[4,64,32]{2,1,0:T(8,128)}', space=vmem, size = 0x20000, scoped, tag = 'scratch operand']
  %s0 = inlined_call_operand.vmem [shape: bf16[1,2,64,128], index: 0, kind: input, shape index: {}]
  %s1 = inlined_call_operand.vmem [shape: bf16[1,2,64,128], index: 1, kind: input, shape index: {}]
  %s2 = inlined_call_operand.vmem [shape: bf16[1,2,64,128], index: 2, kind: input, shape index: {}]
  %s3 = inlined_call_operand.vmem [shape: bf16[1,2,64,128], index: 3, kind: output, shape index: {}]
  %s4 = sld [smem:[#allocation0]]
  $region61: #{_lambda_.12} parent=0
    _
  %s6 = ssub.s32 1, %s4
  %s7 = scalar_select 0, %s6, %s4
  loop: start=0, step=1, limit=4
  $region2: #{_lambda_.12} parent=0 // loop_pre_header
    _
  $region3: #{_lambda_.12} parent=0 // loop_header
    %s9 = sphi 0, %s13
    %p10 = scmp.ge.s32.totalorder %s9, 4
    %s16 = sphi 0, %s42
    %s17 = sphi 0, %s38
    %s18 = sphi 0, %s34
    %s19 = sphi 0, %s30
    %s20 = sphi 0, %s16
    %s21 = sphi 0, %s17
    %s22 = sphi 0, %s18
    %s23 = sphi 0, %s19
    %s24 = sphi 0, %s20
    %s25 = sphi 0, %s21
    %s26 = sphi 0, %s22
    %s27 = sphi 0, %s23
    %s49 = sphi 0, %s51
    %s52 = sphi 0, %s49
    %s53 = sphi 0, %s52
    %s69 = sphi 0, %s53
    %s83 = sphi 0, %s85
    %s86 = sphi 0, %s83
    %s87 = sphi 0, %s86
    %s103 = sphi 0, %s87
    %s117 = sphi 0, %s119
    %s120 = sphi 0, %s117
    %s121 = sphi 0, %s120
    %s137 = sphi 0, %s121
    %s147 = sphi 0, %s149
    %s150 = sphi 0, %s147
    %s151 = sphi 0, %s150
    %s167 = sphi 0, %s151
  $region4: #{_lambda_.12} parent=0 // loop_header_branch
    %12 = sbr.rel (%p10) target = $region8
  $region5: #{_lambda_.12} parent=0 // loop_body
    %s14 = ssub.s32 %s9, 1
    %s15 = ssub.s32 %s9, 2
    %s28 = sadd.s32 1, %s19
    %p29 = scmp.ge.s32.totalorder %s28, 1
    %s30 = scalar_select %p29, 0, %s28
    %s31 = sadd.s32 1, %s18
    %s32 = scalar_select %p29, %s31, %s18
    %p33 = scmp.ge.s32.totalorder %s32, 1
    %s34 = scalar_select %p33, 0, %s32
    %s35 = sadd.s32 1, %s17
    %s36 = scalar_select %p33, %s35, %s17
    %p37 = scmp.ge.s32.totalorder %s36, 1
    %s38 = scalar_select %p37, 0, %s36
    %s39 = sadd.s32 1, %s16
    %s40 = scalar_select %p37, %s39, %s16
    %p41 = scmp.ge.s32.totalorder %s40, 2
    %s42 = scalar_select %p41, 0, %s40
    %s43 = ssub.s32 %s17, %s38
    %s44 = ssub.s32 %s16, %s42
    %s45 = sor.u32 %s43, %s44
    %s46 = ssub.s32 %s18, %s34
    %s47 = sor.u32 %s45, %s46
    %p48 = scmp.eq.s32.totalorder %s47, 0
    %s50 = sadd.s32 %s49, 1
    %s51 = scalar_select %p48, %s49, %s50
    %p54 = pneg %p48
    %p55 = scmp.eq.s32.totalorder %s9, 1
    %p56 = por %p54, %p55
    %p57 = scmp.ne.s32.totalorder %s49, %s52
    %p58 = scmp.eq.s32.totalorder %s9, 0
    %p59 = por %p57, %p58
    %p60 = scmp.ne.s32.totalorder %s49, %s52
    %p61 = scmp.eq.s32.totalorder %s14, 1
    %p62 = por %p60, %p61
    %p63 = scmp.ne.s32.totalorder %s52, %s53
    %p64 = scmp.eq.s32.totalorder %s14, 0
    %p65 = por %p63, %p64
    %p66 = scmp.ne.s32.totalorder %s52, %s53
    %p67 = scmp.eq.s32.totalorder %s15, 1
    %p68 = por %p66, %p67
    %p70 = scmp.ne.s32.totalorder %s53, %s69
    %p71 = scmp.eq.s32.totalorder %s15, 0
    %p72 = por %p70, %p71
    %p73 = scmp.lt.s32.totalorder %s19, %s18
    %s74 = scalar_select %p73, %s19, %s18
    %p75 = scmp.lt.s32.totalorder %s30, %s34
    %s76 = scalar_select %p75, %s30, %s34
    %s77 = ssub.s32 %s17, %s38
    %s78 = ssub.s32 %s16, %s42
    %s79 = sor.u32 %s77, %s78
    %s80 = ssub.s32 %s74, %s76
    %s81 = sor.u32 %s79, %s80
    %p82 = scmp.eq.s32.totalorder %s81, 0
    %s84 = sadd.s32 %s83, 1
    %s85 = scalar_select %p82, %s83, %s84
    %p88 = pneg %p82
    %p89 = scmp.eq.s32.totalorder %s9, 1
    %p90 = por %p88, %p89
    %p91 = scmp.ne.s32.totalorder %s83, %s86
    %p92 = scmp.eq.s32.totalorder %s9, 0
    %p93 = por %p91, %p92
    %p94 = scmp.ne.s32.totalorder %s83, %s86
    %p95 = scmp.eq.s32.totalorder %s14, 1
    %p96 = por %p94, %p95
    %p97 = scmp.ne.s32.totalorder %s86, %s87
    %p98 = scmp.eq.s32.totalorder %s14, 0
    %p99 = por %p97, %p98
    %p100 = scmp.ne.s32.totalorder %s86, %s87
    %p101 = scmp.eq.s32.totalorder %s15, 1
    %p102 = por %p100, %p101
    %p104 = scmp.ne.s32.totalorder %s87, %s103
    %p105 = scmp.eq.s32.totalorder %s15, 0
    %p106 = por %p104, %p105
    %p107 = scmp.lt.s32.totalorder %s19, %s18
    %s108 = scalar_select %p107, %s19, %s18
    %p109 = scmp.lt.s32.totalorder %s30, %s34
    %s110 = scalar_select %p109, %s30, %s34
    %s111 = ssub.s32 %s17, %s38
    %s112 = ssub.s32 %s16, %s42
    %s113 = sor.u32 %s111, %s112
    %s114 = ssub.s32 %s108, %s110
    %s115 = sor.u32 %s113, %s114
    %p116 = scmp.eq.s32.totalorder %s115, 0
    %s118 = sadd.s32 %s117, 1
    %s119 = scalar_select %p116, %s117, %s118
    %p122 = pneg %p116
    %p123 = scmp.eq.s32.totalorder %s9, 1
    %p124 = por %p122, %p123
    %p125 = scmp.ne.s32.totalorder %s117, %s120
    %p126 = scmp.eq.s32.totalorder %s9, 0
    %p127 = por %p125, %p126
    %p128 = scmp.ne.s32.totalorder %s117, %s120
    %p129 = scmp.eq.s32.totalorder %s14, 1
    %p130 = por %p128, %p129
    %p131 = scmp.ne.s32.totalorder %s120, %s121
    %p132 = scmp.eq.s32.totalorder %s14, 0
    %p133 = por %p131, %p132
    %p134 = scmp.ne.s32.totalorder %s120, %s121
    %p135 = scmp.eq.s32.totalorder %s15, 1
    %p136 = por %p134, %p135
    %p138 = scmp.ne.s32.totalorder %s121, %s137
    %p139 = scmp.eq.s32.totalorder %s15, 0
    %p140 = por %p138, %p139
    %s141 = ssub.s32 %s17, %s38
    %s142 = ssub.s32 %s16, %s42
    %s143 = sor.u32 %s141, %s142
    %s144 = ssub.s32 %s18, %s34
    %s145 = sor.u32 %s143, %s144
    %p146 = scmp.eq.s32.totalorder %s145, 0
    %s148 = sadd.s32 %s147, 1
    %s149 = scalar_select %p146, %s147, %s148
    %p152 = pneg %p146
    %p153 = scmp.eq.s32.totalorder %s9, 1
    %p154 = por %p152, %p153
    %p155 = scmp.ne.s32.totalorder %s147, %s150
    %p156 = scmp.eq.s32.totalorder %s9, 0
    %p157 = por %p155, %p156
    %p158 = scmp.ne.s32.totalorder %s147, %s150
    %p159 = scmp.eq.s32.totalorder %s14, 1
    %p160 = por %p158, %p159
    %p161 = scmp.ne.s32.totalorder %s150, %s151
    %p162 = scmp.eq.s32.totalorder %s14, 0
    %p163 = por %p161, %p162
    %p164 = scmp.ne.s32.totalorder %s150, %s151
    %p165 = scmp.eq.s32.totalorder %s15, 1
    %p166 = por %p164, %p165
    %p168 = scmp.ne.s32.totalorder %s151, %s167
    %p169 = scmp.eq.s32.totalorder %s15, 0
    %p170 = por %p168, %p169
    %p171 = scmp.le.s32.totalorder 1, %s9
    %p172 = scmp.lt.s32.totalorder %s9, 3
    %p173 = pnand %p171, %p172
    %p174 = pneg %p173
    // Predicated region
    $region9: #{_lambda_.12} parent=5 // pred_check
      _
    $region10: #{_lambda_.12} parent=5 // pred_check_branch
      %176 = sbr.rel (%p173) target = $region12
    $region11: #{_lambda_.12} parent=5 // pred_region
      %s177 = ssub.s32 %s9, 1
    $region12: #{_lambda_.12} parent=5 // pred_fallthru
      _
    %p178 = scmp.lt.s32.totalorder %s9, 2
    // Predicated region
    $region13: #{_lambda_.12} parent=5 // pred_check
      %p179 = pneg %p178
    $region14: #{_lambda_.12} parent=5 // pred_check_branch
      %181 = sbr.rel (%p179) target = $region16
    $region15: #{_lambda_.12} parent=5 // pred_region
      // Predicated region
      $region17: #{_lambda_.12} parent=15 // pred_check
        %p182 = pneg %p59
      $region18: #{_lambda_.12} parent=15 // pred_check_branch
        %184 = sbr.rel (%p182) target = $region20
      $region19: #{_lambda_.12} parent=15 // pred_region
        %s185 = smul.u32 8, %s18
        %p186 = scmp.lt.s32.totalorder %s17, 0
        %s187 = scalar_select %p186, %s17, 0
        %p188 = scmp.lt.s32.totalorder %s16, 1
        %s189 = scalar_select %p188, %s16, 1
        %p190 = scmp.lt.s32.totalorder %s185, 7
        %s191 = scalar_select %p190, %s185, 7
        %s192 = smul.addr %s189, 8
        %s193 = sadd.s32 %s191, %s192
        %s194 = smul.addr %s187, 16
        %s195 = sadd.s32 %s193, %s194
        %s196 = smul.addr %s195, 4
        %s197 = scalar_lea.vmem %s0, %s196
        %s198 = smul.u32 8, %s18
      $region20: #{_lambda_.12} parent=15 // pred_fallthru
        _
      // Predicated region
      $region21: #{_lambda_.12} parent=15 // pred_check
        %p199 = pneg %p93
      $region22: #{_lambda_.12} parent=15 // pred_check_branch
        %201 = sbr.rel (%p199) target = $region24
      $region23: #{_lambda_.12} parent=15 // pred_region
        %p202 = scmp.lt.s32.totalorder %s19, %s18
        %s203 = scalar_select %p202, %s19, %s18
        %s204 = smul.u32 8, %s203
        %p205 = scmp.lt.s32.totalorder %s17, 0
        %s206 = scalar_select %p205, %s17, 0
        %p207 = scmp.lt.s32.totalorder %s16, 1
        %s208 = scalar_select %p207, %s16, 1
        %p209 = scmp.lt.s32.totalorder %s204, 7
        %s210 = scalar_select %p209, %s204, 7
        %s211 = smul.addr %s208, 8
        %s212 = sadd.s32 %s210, %s211
        %s213 = smul.addr %s206, 16
        %s214 = sadd.s32 %s212, %s213
        %s215 = smul.addr %s214, 4
        %s216 = scalar_lea.vmem %s1, %s215
        %p217 = scmp.lt.s32.totalorder %s19, %s18
        %s218 = scalar_select %p217, %s19, %s18
        %s219 = smul.u32 8, %s218
      $region24: #{_lambda_.12} parent=15 // pred_fallthru
        _
      // Predicated region
      $region25: #{_lambda_.12} parent=15 // pred_check
        %p220 = pneg %p127
      $region26: #{_lambda_.12} parent=15 // pred_check_branch
        %222 = sbr.rel (%p220) target = $region28
      $region27: #{_lambda_.12} parent=15 // pred_region
        %p223 = scmp.lt.s32.totalorder %s19, %s18
        %s224 = scalar_select %p223, %s19, %s18
        %s225 = smul.u32 8, %s224
        %p226 = scmp.lt.s32.totalorder %s17, 0
        %s227 = scalar_select %p226, %s17, 0
        %p228 = scmp.lt.s32.totalorder %s16, 1
        %s229 = scalar_select %p228, %s16, 1
        %p230 = scmp.lt.s32.totalorder %s225, 7
        %s231 = scalar_select %p230, %s225, 7
        %s232 = smul.addr %s229, 8
        %s233 = sadd.s32 %s231, %s232
        %s234 = smul.addr %s227, 16
        %s235 = sadd.s32 %s233, %s234
        %s236 = smul.addr %s235, 4
        %s237 = scalar_lea.vmem %s2, %s236
        %p238 = scmp.lt.s32.totalorder %s19, %s18
        %s239 = scalar_select %p238, %s19, %s18
        %s240 = smul.u32 8, %s239
      $region28: #{_lambda_.12} parent=15 // pred_fallthru
        _
    $region16: #{_lambda_.12} parent=5 // pred_fallthru
      _
    %p241 = scmp.le.s32.totalorder 1, %s9
    %p242 = scmp.lt.s32.totalorder %s9, 3
    %p243 = pnand %p241, %p242
    %p244 = pneg %p243
    // Predicated region
    $region29: #{_lambda_.12} parent=5 // pred_check
      _
    $region30: #{_lambda_.12} parent=5 // pred_check_branch
      %246 = sbr.rel (%p243) target = $region32
    $region31: #{_lambda_.12} parent=5 // pred_region
      %s247 = ssub.s32 %s9, 1
      %s248 = smul.u32 8, %s22
      %p249 = scmp.lt.s32.totalorder %s21, 0
      %s250 = scalar_select %p249, %s21, 0
      %p251 = scmp.lt.s32.totalorder %s20, 1
      %s252 = scalar_select %p251, %s20, 1
      %p253 = scmp.lt.s32.totalorder %s248, 7
      %s254 = scalar_select %p253, %s248, 7
      %s255 = smul.addr %s252, 8
      %s256 = sadd.s32 %s254, %s255
      %s257 = smul.addr %s250, 16
      %s258 = sadd.s32 %s256, %s257
      %s259 = smul.addr %s258, 4
      %s260 = scalar_lea.vmem %s0, %s259
      %p261 = pneg %p65
      %p262 = pneg %p62
      %p263 = scmp.lt.s32.totalorder %s23, %s22
      %s264 = scalar_select %p263, %s23, %s22
      %s265 = smul.u32 8, %s264
      %p266 = scmp.lt.s32.totalorder %s21, 0
      %s267 = scalar_select %p266, %s21, 0
      %p268 = scmp.lt.s32.totalorder %s20, 1
      %s269 = scalar_select %p268, %s20, 1
      %p270 = scmp.lt.s32.totalorder %s265, 7
      %s271 = scalar_select %p270, %s265, 7
      %s272 = smul.addr %s269, 8
      %s273 = sadd.s32 %s271, %s272
      %s274 = smul.addr %s267, 16
      %s275 = sadd.s32 %s273, %s274
      %s276 = smul.addr %s275, 4
      %s277 = scalar_lea.vmem %s1, %s276
      %p278 = pneg %p99
      %p279 = pneg %p96
      %p280 = scmp.lt.s32.totalorder %s23, %s22
      %s281 = scalar_select %p280, %s23, %s22
      %s282 = smul.u32 8, %s281
      %p283 = scmp.lt.s32.totalorder %s21, 0
      %s284 = scalar_select %p283, %s21, 0
      %p285 = scmp.lt.s32.totalorder %s20, 1
      %s286 = scalar_select %p285, %s20, 1
      %p287 = scmp.lt.s32.totalorder %s282, 7
      %s288 = scalar_select %p287, %s282, 7
      %s289 = smul.addr %s286, 8
      %s290 = sadd.s32 %s288, %s289
      %s291 = smul.addr %s284, 16
      %s292 = sadd.s32 %s290, %s291
      %s293 = smul.addr %s292, 4
      %s294 = scalar_lea.vmem %s2, %s293
      %p295 = pneg %p133
      %p296 = pneg %p130
      %p297 = pneg %p163
      %p298 = pneg %p160
      %s299 = smul.u32 8, %s22
      %p300 = scmp.lt.s32.totalorder %s21, 0
      %s301 = scalar_select %p300, %s21, 0
      %p302 = scmp.lt.s32.totalorder %s20, 1
      %s303 = scalar_select %p302, %s20, 1
      %p304 = scmp.lt.s32.totalorder %s299, 7
      %s305 = scalar_select %p304, %s299, 7
      %s306 = smul.addr %s303, 8
      %s307 = sadd.s32 %s305, %s306
      %s308 = smul.addr %s301, 16
      %s309 = sadd.s32 %s307, %s308
      %s310 = smul.addr %s309, 4
      %s311 = scalar_lea.vmem %s3, %s310
      %s312 = smul.u32 8, %s22
      %p313 = scmp.lt.s32.totalorder %s21, 0
      %s314 = scalar_select %p313, %s21, 0
      %p315 = scmp.lt.s32.totalorder %s20, 1
      %s316 = scalar_select %p315, %s20, 1
      %p317 = scmp.lt.s32.totalorder %s312, 7
      %s318 = scalar_select %p317, %s312, 7
      %s319 = smul.addr %s316, 8
      %s320 = sadd.s32 %s318, %s319
      %s321 = smul.addr %s314, 16
      %s322 = sadd.s32 %s320, %s321
      %s323 = smul.addr %s322, 4
      %s324 = scalar_lea.vmem %s0, %s323
      %s325 = smul.u32 8, %s22
      %p326 = scmp.lt.s32.totalorder %s23, %s22
      %s327 = scalar_select %p326, %s23, %s22
      %s328 = smul.u32 8, %s327
      %p329 = scmp.lt.s32.totalorder %s21, 0
      %s330 = scalar_select %p329, %s21, 0
      %p331 = scmp.lt.s32.totalorder %s20, 1
      %s332 = scalar_select %p331, %s20, 1
      %p333 = scmp.lt.s32.totalorder %s328, 7
      %s334 = scalar_select %p333, %s328, 7
      %s335 = smul.addr %s332, 8
      %s336 = sadd.s32 %s334, %s335
      %s337 = smul.addr %s330, 16
      %s338 = sadd.s32 %s336, %s337
      %s339 = smul.addr %s338, 4
      %s340 = scalar_lea.vmem %s1, %s339
      %p341 = scmp.lt.s32.totalorder %s23, %s22
      %s342 = scalar_select %p341, %s23, %s22
      %s343 = smul.u32 8, %s342
      %p344 = scmp.lt.s32.totalorder %s23, %s22
      %s345 = scalar_select %p344, %s23, %s22
      %s346 = smul.u32 8, %s345
      %p347 = scmp.lt.s32.totalorder %s21, 0
      %s348 = scalar_select %p347, %s21, 0
      %p349 = scmp.lt.s32.totalorder %s20, 1
      %s350 = scalar_select %p349, %s20, 1
      %p351 = scmp.lt.s32.totalorder %s346, 7
      %s352 = scalar_select %p351, %s346, 7
      %s353 = smul.addr %s350, 8
      %s354 = sadd.s32 %s352, %s353
      %s355 = smul.addr %s348, 16
      %s356 = sadd.s32 %s354, %s355
      %s357 = smul.addr %s356, 4
      %s358 = scalar_lea.vmem %s2, %s357
      %p359 = scmp.lt.s32.totalorder %s23, %s22
      %s360 = scalar_select %p359, %s23, %s22
      %s361 = smul.u32 8, %s360
      %s362 = smul.u32 8, %s22
      %p363 = scmp.lt.s32.totalorder %s21, 0
      %s364 = scalar_select %p363, %s21, 0
      %p365 = scmp.lt.s32.totalorder %s20, 1
      %s366 = scalar_select %p365, %s20, 1
      %p367 = scmp.lt.s32.totalorder %s362, 7
      %s368 = scalar_select %p367, %s362, 7
      %s369 = smul.addr %s366, 8
      %s370 = sadd.s32 %s368, %s369
      %s371 = smul.addr %s364, 16
      %s372 = sadd.s32 %s370, %s371
      %s373 = smul.addr %s372, 4
      %s374 = scalar_lea.vmem %s3, %s373
      %s375 = smul.u32 8, %s22
      %p377 = scmp.eq.s32.totalorder %s23, 0
      // Predicated region
      $region33: #{_lambda_.12} parent=31 // pred_check
        %p378 = pneg %p377
      $region34: #{_lambda_.12} parent=31 // pred_check_branch
        %380 = sbr.rel (%p378) target = $region36
      $region35: #{_lambda_.12} parent=31 // pred_region
        %vm381 = vcmask 7168
        %382 = vst.msk [vmem:[#allocation2] sm:$0xff] %vm381, -inf
        %383 = vst.msk [vmem:[#allocation2 + $0x8] sm:$0xff] %vm381, -inf
        %384 = vst.msk [vmem:[#allocation2 + $0x10] sm:$0xff] %vm381, -inf
        %385 = vst.msk [vmem:[#allocation2 + $0x18] sm:$0xff] %vm381, -inf
        %386 = vst.msk [vmem:[#allocation2 + $0x20] sm:$0xff] %vm381, -inf
        %387 = vst.msk [vmem:[#allocation2 + $0x28] sm:$0xff] %vm381, -inf
        %388 = vst.msk [vmem:[#allocation2 + $0x30] sm:$0xff] %vm381, -inf
        %389 = vst.msk [vmem:[#allocation2 + $0x38] sm:$0xff] %vm381, -inf
        %390 = vst.msk [vmem:[#allocation2 + $0x40] sm:$0xff] %vm381, -inf
        %391 = vst.msk [vmem:[#allocation2 + $0x48] sm:$0xff] %vm381, -inf
        %392 = vst.msk [vmem:[#allocation2 + $0x50] sm:$0xff] %vm381, -inf
        %393 = vst.msk [vmem:[#allocation2 + $0x58] sm:$0xff] %vm381, -inf
        %394 = vst.msk [vmem:[#allocation2 + $0x60] sm:$0xff] %vm381, -inf
        %395 = vst.msk [vmem:[#allocation2 + $0x68] sm:$0xff] %vm381, -inf
        %396 = vst.msk [vmem:[#allocation2 + $0x70] sm:$0xff] %vm381, -inf
        %397 = vst.msk [vmem:[#allocation2 + $0x78] sm:$0xff] %vm381, -inf
        %398 = vst.msk [vmem:[#allocation2 + $0x80] sm:$0xff] %vm381, -inf
        %399 = vst.msk [vmem:[#allocation2 + $0x88] sm:$0xff] %vm381, -inf
        %400 = vst.msk [vmem:[#allocation2 + $0x90] sm:$0xff] %vm381, -inf
        %401 = vst.msk [vmem:[#allocation2 + $0x98] sm:$0xff] %vm381, -inf
        %402 = vst.msk [vmem:[#allocation2 + $0xa0] sm:$0xff] %vm381, -inf
        %403 = vst.msk [vmem:[#allocation2 + $0xa8] sm:$0xff] %vm381, -inf
        %404 = vst.msk [vmem:[#allocation2 + $0xb0] sm:$0xff] %vm381, -inf
        %405 = vst.msk [vmem:[#allocation2 + $0xb8] sm:$0xff] %vm381, -inf
        %406 = vst.msk [vmem:[#allocation2 + $0xc0] sm:$0xff] %vm381, -inf
        %407 = vst.msk [vmem:[#allocation2 + $0xc8] sm:$0xff] %vm381, -inf
        %408 = vst.msk [vmem:[#allocation2 + $0xd0] sm:$0xff] %vm381, -inf
        %409 = vst.msk [vmem:[#allocation2 + $0xd8] sm:$0xff] %vm381, -inf
        %410 = vst.msk [vmem:[#allocation2 + $0xe0] sm:$0xff] %vm381, -inf
        %411 = vst.msk [vmem:[#allocation2 + $0xe8] sm:$0xff] %vm381, -inf
        %412 = vst.msk [vmem:[#allocation2 + $0xf0] sm:$0xff] %vm381, -inf
        %413 = vst.msk [vmem:[#allocation2 + $0xf8] sm:$0xff] %vm381, -inf
        %414 = vst.msk [vmem:[#allocation3] sm:$0xff] %vm381, 0.0
        %415 = vst.msk [vmem:[#allocation3 + $0x8] sm:$0xff] %vm381, 0.0
        %416 = vst.msk [vmem:[#allocation3 + $0x10] sm:$0xff] %vm381, 0.0
        %417 = vst.msk [vmem:[#allocation3 + $0x18] sm:$0xff] %vm381, 0.0
        %418 = vst.msk [vmem:[#allocation3 + $0x20] sm:$0xff] %vm381, 0.0
        %419 = vst.msk [vmem:[#allocation3 + $0x28] sm:$0xff] %vm381, 0.0
        %420 = vst.msk [vmem:[#allocation3 + $0x30] sm:$0xff] %vm381, 0.0
        %421 = vst.msk [vmem:[#allocation3 + $0x38] sm:$0xff] %vm381, 0.0
        %422 = vst.msk [vmem:[#allocation3 + $0x40] sm:$0xff] %vm381, 0.0
        %423 = vst.msk [vmem:[#allocation3 + $0x48] sm:$0xff] %vm381, 0.0
        %424 = vst.msk [vmem:[#allocation3 + $0x50] sm:$0xff] %vm381, 0.0
        %425 = vst.msk [vmem:[#allocation3 + $0x58] sm:$0xff] %vm381, 0.0
        %426 = vst.msk [vmem:[#allocation3 + $0x60] sm:$0xff] %vm381, 0.0
        %427 = vst.msk [vmem:[#allocation3 + $0x68] sm:$0xff] %vm381, 0.0
        %428 = vst.msk [vmem:[#allocation3 + $0x70] sm:$0xff] %vm381, 0.0
        %429 = vst.msk [vmem:[#allocation3 + $0x78] sm:$0xff] %vm381, 0.0
        %430 = vst.msk [vmem:[#allocation3 + $0x80] sm:$0xff] %vm381, 0.0
        %431 = vst.msk [vmem:[#allocation3 + $0x88] sm:$0xff] %vm381, 0.0
        %432 = vst.msk [vmem:[#allocation3 + $0x90] sm:$0xff] %vm381, 0.0
        %433 = vst.msk [vmem:[#allocation3 + $0x98] sm:$0xff] %vm381, 0.0
        %434 = vst.msk [vmem:[#allocation3 + $0xa0] sm:$0xff] %vm381, 0.0
        %435 = vst.msk [vmem:[#allocation3 + $0xa8] sm:$0xff] %vm381, 0.0
        %436 = vst.msk [vmem:[#allocation3 + $0xb0] sm:$0xff] %vm381, 0.0
        %437 = vst.msk [vmem:[#allocation3 + $0xb8] sm:$0xff] %vm381, 0.0
        %438 = vst.msk [vmem:[#allocation3 + $0xc0] sm:$0xff] %vm381, 0.0
        %439 = vst.msk [vmem:[#allocation3 + $0xc8] sm:$0xff] %vm381, 0.0
        %440 = vst.msk [vmem:[#allocation3 + $0xd0] sm:$0xff] %vm381, 0.0
        %441 = vst.msk [vmem:[#allocation3 + $0xd8] sm:$0xff] %vm381, 0.0
        %442 = vst.msk [vmem:[#allocation3 + $0xe0] sm:$0xff] %vm381, 0.0
        %443 = vst.msk [vmem:[#allocation3 + $0xe8] sm:$0xff] %vm381, 0.0
        %444 = vst.msk [vmem:[#allocation3 + $0xf0] sm:$0xff] %vm381, 0.0
        %445 = vst.msk [vmem:[#allocation3 + $0xf8] sm:$0xff] %vm381, 0.0
        %vm446 = vcmask 261120
        %447 = vst.msk [vmem:[#allocation4] sm:$0xff] %vm446, 0.0
        %448 = vst.msk [vmem:[#allocation4 + $0x8] sm:$0xff] %vm446, 0.0
        %449 = vst.msk [vmem:[#allocation4 + $0x10] sm:$0xff] %vm446, 0.0
        %450 = vst.msk [vmem:[#allocation4 + $0x18] sm:$0xff] %vm446, 0.0
        %451 = vst.msk [vmem:[#allocation4 + $0x20] sm:$0xff] %vm446, 0.0
        %452 = vst.msk [vmem:[#allocation4 + $0x28] sm:$0xff] %vm446, 0.0
        %453 = vst.msk [vmem:[#allocation4 + $0x30] sm:$0xff] %vm446, 0.0
        %454 = vst.msk [vmem:[#allocation4 + $0x38] sm:$0xff] %vm446, 0.0
        %455 = vst.msk [vmem:[#allocation4 + $0x40] sm:$0xff] %vm446, 0.0
        %456 = vst.msk [vmem:[#allocation4 + $0x48] sm:$0xff] %vm446, 0.0
        %457 = vst.msk [vmem:[#allocation4 + $0x50] sm:$0xff] %vm446, 0.0
        %458 = vst.msk [vmem:[#allocation4 + $0x58] sm:$0xff] %vm446, 0.0
        %459 = vst.msk [vmem:[#allocation4 + $0x60] sm:$0xff] %vm446, 0.0
        %460 = vst.msk [vmem:[#allocation4 + $0x68] sm:$0xff] %vm446, 0.0
        %461 = vst.msk [vmem:[#allocation4 + $0x70] sm:$0xff] %vm446, 0.0
        %462 = vst.msk [vmem:[#allocation4 + $0x78] sm:$0xff] %vm446, 0.0
        %463 = vst.msk [vmem:[#allocation4 + $0x80] sm:$0xff] %vm446, 0.0
        %464 = vst.msk [vmem:[#allocation4 + $0x88] sm:$0xff] %vm446, 0.0
        %465 = vst.msk [vmem:[#allocation4 + $0x90] sm:$0xff] %vm446, 0.0
        %466 = vst.msk [vmem:[#allocation4 + $0x98] sm:$0xff] %vm446, 0.0
        %467 = vst.msk [vmem:[#allocation4 + $0xa0] sm:$0xff] %vm446, 0.0
        %468 = vst.msk [vmem:[#allocation4 + $0xa8] sm:$0xff] %vm446, 0.0
        %469 = vst.msk [vmem:[#allocation4 + $0xb0] sm:$0xff] %vm446, 0.0
        %470 = vst.msk [vmem:[#allocation4 + $0xb8] sm:$0xff] %vm446, 0.0
        %471 = vst.msk [vmem:[#allocation4 + $0xc0] sm:$0xff] %vm446, 0.0
        %472 = vst.msk [vmem:[#allocation4 + $0xc8] sm:$0xff] %vm446, 0.0
        %473 = vst.msk [vmem:[#allocation4 + $0xd0] sm:$0xff] %vm446, 0.0
        %474 = vst.msk [vmem:[#allocation4 + $0xd8] sm:$0xff] %vm446, 0.0
        %475 = vst.msk [vmem:[#allocation4 + $0xe0] sm:$0xff] %vm446, 0.0
        %476 = vst.msk [vmem:[#allocation4 + $0xe8] sm:$0xff] %vm446, 0.0
        %477 = vst.msk [vmem:[#allocation4 + $0xf0] sm:$0xff] %vm446, 0.0
        %478 = vst.msk [vmem:[#allocation4 + $0xf8] sm:$0xff] %vm446, 0.0
      $region36: #{_lambda_.12} parent=31 // pred_fallthru
        _
      %p479 = scmp.lt.s32.totalorder %s23, %s22
      // Predicated region
      $region37: #{_lambda_.12} parent=31 // pred_check
        %p480 = pneg %p479
      $region38: #{_lambda_.12} parent=31 // pred_check_branch
        %482 = sbr.rel (%p480) target = $region40
      $region39: #{_lambda_.12} parent=31 // pred_region
        %v483 = vld [vmem:[%s324] sm:$0xf]
        %v484 = vld [vmem:[%s324 + $0x4] sm:$0xf]
        %v485 = vld [vmem:[%s324 + $0x8] sm:$0xf]
        %v486 = vld [vmem:[%s324 + $0xc] sm:$0xf]
        %v487 = vld [vmem:[%s324 + $0x10] sm:$0xf]
        %v488 = vld [vmem:[%s324 + $0x14] sm:$0xf]
        %v489 = vld [vmem:[%s324 + $0x18] sm:$0xf]
        %v490 = vld [vmem:[%s324 + $0x1c] sm:$0xf]
        %v491 = vld [vmem:[%s340] sm:$0xf]
        %v492 = vld [vmem:[%s340 + $0x4] sm:$0xf]
        %v493 = vld [vmem:[%s340 + $0x8] sm:$0xf]
        %v494 = vld [vmem:[%s340 + $0xc] sm:$0xf]
        %v495 = vld [vmem:[%s340 + $0x10] sm:$0xf]
        %v496 = vld [vmem:[%s340 + $0x14] sm:$0xf]
        %v497 = vld [vmem:[%s340 + $0x18] sm:$0xf]
        %v498 = vld [vmem:[%s340 + $0x1c] sm:$0xf]
        %v499 = vld [vmem:[%s358] sm:$0xf]
        %v500 = vld [vmem:[%s358 + $0x4] sm:$0xf]
        %v501 = vld [vmem:[%s358 + $0x8] sm:$0xf]
        %v502 = vld [vmem:[%s358 + $0xc] sm:$0xf]
        %v503 = vld [vmem:[%s358 + $0x10] sm:$0xf]
        %v504 = vld [vmem:[%s358 + $0x14] sm:$0xf]
        %v505 = vld [vmem:[%s358 + $0x18] sm:$0xf]
        %v506 = vld [vmem:[%s358 + $0x1c] sm:$0xf]
        %v515 = vunpack.c.l.b16 %v483
        %v516 = vunpack.c.l.b16 %v484
        %v517 = vunpack.c.l.b16 %v485
        %v518 = vunpack.c.l.b16 %v486
        %v519 = vunpack.c.l.b16 %v487
        %v520 = vunpack.c.l.b16 %v488
        %v521 = vunpack.c.l.b16 %v489
        %v522 = vunpack.c.l.b16 %v490
        %v523 = vpack.c.b16 %v516, %v515
        %v524 = vpack.c.b16 %v518, %v517
        %v525 = vpack.c.b16 %v520, %v519
        %v526 = vpack.c.b16 %v522, %v521
        %v535 = vunpack.c.l.b16 %v491
        %v536 = vunpack.c.l.b16 %v492
        %v537 = vunpack.c.l.b16 %v493
        %v538 = vunpack.c.l.b16 %v494
        %v539 = vunpack.c.l.b16 %v495
        %v540 = vunpack.c.l.b16 %v496
        %v541 = vunpack.c.l.b16 %v497
        %v542 = vunpack.c.l.b16 %v498
        %v543 = vpack.c.b16 %v536, %v535
        %v544 = vpack.c.b16 %v538, %v537
        %v545 = vpack.c.b16 %v540, %v539
        %v546 = vpack.c.b16 %v542, %v541
        %vm547 = vcmask 261120
        %v549 = vsel %vm547, %v523, 0
        %v552 = vsel %vm547, %v524, 0
        %v555 = vsel %vm547, %v525, 0
        %v558 = vsel %vm547, %v526, 0
        %v561 = vsel %vm547, %v543, 0
        %v564 = vsel %vm547, %v544, 0
        %v567 = vsel %vm547, %v545, 0
        %v570 = vsel %vm547, %v546, 0
        %572 = vmatprep.subr.bf16.mxu0 0
        %573 = vmatpush1.bf16.xpose.msra.mxu0 0
        %574 = vmatprep.subr.bf16.mxu0 0
        %575 = vmatpush1.bf16.xpose.msra.mxu0 0
        %576 = vmatprep.subr.bf16.mxu0 0
        %577 = vmatpush1.bf16.xpose.msra.mxu0 0
        %578 = vmatprep.subr.bf16.mxu0 0
        %579 = vmatpush1.bf16.xpose.msra.mxu0 0
        %580 = vmatprep.subr.bf16.mxu0 0
        %581 = vmatpush1.bf16.xpose.msra.mxu0 %v570
        %582 = vmatprep.subr.bf16.mxu0 0
        %583 = vmatpush1.bf16.xpose.msra.mxu0 %v567
        %584 = vmatprep.subr.bf16.mxu0 0
        %585 = vmatpush1.bf16.xpose.msra.mxu0 %v564
        %586 = vmatprep.subr.bf16.mxu0 0
        %587 = vmatpush1.bf16.xpose.msra.mxu0 %v561
        %588 = vmatprep.subr.bf16.mxu0 0
        %589 = vmatpush2.bf16.xpose.msra.mxu0 0
        %590 = vmatprep.subr.bf16.mxu0 0
        %591 = vmatpush2.bf16.xpose.msra.mxu0 0
        %592 = vmatprep.subr.bf16.mxu0 0
        %593 = vmatpush2.bf16.xpose.msra.mxu0 0
        %594 = vmatprep.subr.bf16.mxu0 0
        %595 = vmatpush2.bf16.xpose.msra.mxu0 0
        %596 = vmatprep.subr.bf16.mxu0 0
        %597 = vmatpush2.bf16.xpose.msra.mxu0 0
        %598 = vmatprep.subr.bf16.mxu0 0
        %599 = vmatpush2.bf16.xpose.msra.mxu0 0
        %600 = vmatprep.subr.bf16.mxu0 0
        %601 = vmatpush2.bf16.xpose.msra.mxu0 0
        %602 = vmatprep.subr.bf16.mxu0 0
        %603 = vmatpush2.bf16.xpose.msra.mxu0 0
        %604 = vmatprep.mubr.bf16.mxu0 0
        %605 = vmatmul.mubr.bf16.gmra.mxu0 %v549
        %v606 = vpop.f32.mrf.mxu0
        %v607 = vadd.f32 0.0, %v606
        %v608 = vpop.f32.mrf.mxu0
        %v609 = vpop.f32.mrf.mxu0
        %v610 = vadd.f32 0.0, %v609
        %v611 = vpop.f32.mrf.mxu0
        %612 = vmatprep.mubr.bf16.mxu0 0
        %613 = vmatmul.mubr.bf16.gmra.mxu0 %v552
        %v614 = vpop.f32.mrf.mxu0
        %v615 = vadd.f32 0.0, %v614
        %v616 = vpop.f32.mrf.mxu0
        %v617 = vpop.f32.mrf.mxu0
        %v618 = vadd.f32 0.0, %v617
        %v619 = vpop.f32.mrf.mxu0
        %620 = vmatprep.mubr.bf16.mxu0 0
        %621 = vmatmul.mubr.bf16.gmra.mxu0 %v555
        %v622 = vpop.f32.mrf.mxu0
        %v623 = vadd.f32 0.0, %v622
        %v624 = vpop.f32.mrf.mxu0
        %v625 = vpop.f32.mrf.mxu0
        %v626 = vadd.f32 0.0, %v625
        %v627 = vpop.f32.mrf.mxu0
        %628 = vmatprep.mubr.bf16.mxu0 0
        %629 = vmatmul.mubr.bf16.gmra.mxu0 %v558
        %v630 = vpop.f32.mrf.mxu0
        %v631 = vadd.f32 0.0, %v630
        %v632 = vpop.f32.mrf.mxu0
        %v633 = vpop.f32.mrf.mxu0
        %v634 = vadd.f32 0.0, %v633
        %v635 = vpop.f32.mrf.mxu0
        %636 = vdwg.mxu0
        %v637 = vld [vmem:[#allocation2] sm:$0xff]
        %v638 = vld [vmem:[#allocation2 + $0x8] sm:$0xff]
        %v639 = vld [vmem:[#allocation2 + $0x10] sm:$0xff]
        %v640 = vld [vmem:[#allocation2 + $0x18] sm:$0xff]
        %v641 = vld [vmem:[#allocation2 + $0x20] sm:$0xff]
        %v642 = vld [vmem:[#allocation2 + $0x28] sm:$0xff]
        %v643 = vld [vmem:[#allocation2 + $0x30] sm:$0xff]
        %v644 = vld [vmem:[#allocation2 + $0x38] sm:$0xff]
        %vm645 = vcmask 523264
        %v646 = vsel %vm645, %v607, -inf
        %647 = vmax.xlane.f32.xlu0 %v646
        %v648 = vpop.xlane.xlu0 %647
        %v649 = vsel %vm645, %v610, -inf
        %650 = vmax.xlane.f32.xlu0 %v649
        %v651 = vpop.xlane.xlu0 %650
        %v652 = vsel %vm645, %v615, -inf
        %653 = vmax.xlane.f32.xlu0 %v652
        %v654 = vpop.xlane.xlu0 %653
        %v655 = vsel %vm645, %v618, -inf
        %656 = vmax.xlane.f32.xlu0 %v655
        %v657 = vpop.xlane.xlu0 %656
        %v658 = vsel %vm645, %v623, -inf
        %659 = vmax.xlane.f32.xlu0 %v658
        %v660 = vpop.xlane.xlu0 %659
        %v661 = vsel %vm645, %v626, -inf
        %662 = vmax.xlane.f32.xlu0 %v661
        %v663 = vpop.xlane.xlu0 %662
        %v664 = vsel %vm645, %v631, -inf
        %665 = vmax.xlane.f32.xlu0 %v664
        %v666 = vpop.xlane.xlu0 %665
        %v667 = vsel %vm645, %v634, -inf
        %668 = vmax.xlane.f32.xlu0 %v667
        %v669 = vpop.xlane.xlu0 %668
        %v670 = vmax.f32 %v637, %v648
        %v671 = vmax.f32 %v638, %v651
        %v672 = vmax.f32 %v639, %v654
        %v673 = vmax.f32 %v640, %v657
        %v674 = vmax.f32 %v641, %v660
        %v675 = vmax.f32 %v642, %v663
        %v676 = vmax.f32 %v643, %v666
        %v677 = vmax.f32 %v644, %v669
        %v678 = vsub.f32 %v637, %v670
        %v679 = vsub.f32 %v638, %v671
        %v680 = vsub.f32 %v639, %v672
        %v681 = vsub.f32 %v640, %v673
        %v682 = vsub.f32 %v641, %v674
        %v683 = vsub.f32 %v642, %v675
        %v684 = vsub.f32 %v643, %v676
        %v685 = vsub.f32 %v644, %v677
        %v686 = vmul.f32 %v678, 1.442695
        %v687 = vpow.pop %v686
        %v688 = vmul.f32 %v679, 1.442695
        %v689 = vpow.pop %v688
        %v690 = vmul.f32 %v680, 1.442695
        %v691 = vpow.pop %v690
        %v692 = vmul.f32 %v681, 1.442695
        %v693 = vpow.pop %v692
        %v694 = vmul.f32 %v682, 1.442695
        %v695 = vpow.pop %v694
        %v696 = vmul.f32 %v683, 1.442695
        %v697 = vpow.pop %v696
        %v698 = vmul.f32 %v684, 1.442695
        %v699 = vpow.pop %v698
        %v700 = vmul.f32 %v685, 1.442695
        %v701 = vpow.pop %v700
        %703 = vset.pattern.permute.xlu0 0
        %704 = vperm.xlu0 %703, %v670
        %v705 = vpop.permute.xlu0 %704
        %708 = vset.pattern.permute.xlu0 0
        %709 = vperm.xlu0 %708, %v671
        %v710 = vpop.permute.xlu0 %709
        %713 = vset.pattern.permute.xlu0 0
        %714 = vperm.xlu0 %713, %v672
        %v715 = vpop.permute.xlu0 %714
        %718 = vset.pattern.permute.xlu0 0
        %719 = vperm.xlu0 %718, %v673
        %v720 = vpop.permute.xlu0 %719
        %723 = vset.pattern.permute.xlu0 0
        %724 = vperm.xlu0 %723, %v674
        %v725 = vpop.permute.xlu0 %724
        %728 = vset.pattern.permute.xlu0 0
        %729 = vperm.xlu0 %728, %v675
        %v730 = vpop.permute.xlu0 %729
        %733 = vset.pattern.permute.xlu0 0
        %734 = vperm.xlu0 %733, %v676
        %v735 = vpop.permute.xlu0 %734
        %738 = vset.pattern.permute.xlu0 0
        %739 = vperm.xlu0 %738, %v677
        %v740 = vpop.permute.xlu0 %739
        %v742 = vsub.f32 %v607, %v705
        %v743 = vsub.f32 %v610, %v710
        %v744 = vsub.f32 %v615, %v715
        %v745 = vsub.f32 %v618, %v720
        %v746 = vsub.f32 %v623, %v725
        %v747 = vsub.f32 %v626, %v730
        %v748 = vsub.f32 %v631, %v735
        %v749 = vsub.f32 %v634, %v740
        %v750 = vmul.f32 %v742, 1.442695
        %v751 = vpow.pop %v750
        %v752 = vmul.f32 %v743, 1.442695
        %v753 = vpow.pop %v752
        %v754 = vmul.f32 %v744, 1.442695
        %v755 = vpow.pop %v754
        %v756 = vmul.f32 %v745, 1.442695
        %v757 = vpow.pop %v756
        %v758 = vmul.f32 %v746, 1.442695
        %v759 = vpow.pop %v758
        %v760 = vmul.f32 %v747, 1.442695
        %v761 = vpow.pop %v760
        %v762 = vmul.f32 %v748, 1.442695
        %v763 = vpow.pop %v762
        %v764 = vmul.f32 %v749, 1.442695
        %v765 = vpow.pop %v764
        %v766 = vld [vmem:[#allocation3] sm:$0xff]
        %v767 = vld [vmem:[#allocation3 + $0x8] sm:$0xff]
        %v768 = vld [vmem:[#allocation3 + $0x10] sm:$0xff]
        %v769 = vld [vmem:[#allocation3 + $0x18] sm:$0xff]
        %v770 = vld [vmem:[#allocation3 + $0x20] sm:$0xff]
        %v771 = vld [vmem:[#allocation3 + $0x28] sm:$0xff]
        %v772 = vld [vmem:[#allocation3 + $0x30] sm:$0xff]
        %v773 = vld [vmem:[#allocation3 + $0x38] sm:$0xff]
        %v774 = vmul.f32 %v687, %v766
        %v775 = vmul.f32 %v689, %v767
        %v776 = vmul.f32 %v691, %v768
        %v777 = vmul.f32 %v693, %v769
        %v778 = vmul.f32 %v695, %v770
        %v779 = vmul.f32 %v697, %v771
        %v780 = vmul.f32 %v699, %v772
        %v781 = vmul.f32 %v701, %v773
        %v782 = vsel %vm645, %v751, 0.0
        %783 = vadd.xlane.f32.xlu0 %v782
        %v784 = vpop.xlane.xlu0 %783
        %v785 = vsel %vm645, %v753, 0.0
        %786 = vadd.xlane.f32.xlu0 %v785
        %v787 = vpop.xlane.xlu0 %786
        %v788 = vsel %vm645, %v755, 0.0
        %789 = vadd.xlane.f32.xlu0 %v788
        %v790 = vpop.xlane.xlu0 %789
        %v791 = vsel %vm645, %v757, 0.0
        %792 = vadd.xlane.f32.xlu0 %v791
        %v793 = vpop.xlane.xlu0 %792
        %v794 = vsel %vm645, %v759, 0.0
        %795 = vadd.xlane.f32.xlu0 %v794
        %v796 = vpop.xlane.xlu0 %795
        %v797 = vsel %vm645, %v761, 0.0
        %798 = vadd.xlane.f32.xlu0 %v797
        %v799 = vpop.xlane.xlu0 %798
        %v800 = vsel %vm645, %v763, 0.0
        %801 = vadd.xlane.f32.xlu0 %v800
        %v802 = vpop.xlane.xlu0 %801
        %v803 = vsel %vm645, %v765, 0.0
        %804 = vadd.xlane.f32.xlu0 %v803
        %v805 = vpop.xlane.xlu0 %804
        %v806 = vadd.f32 %v774, %v784
        %v807 = vadd.f32 %v775, %v787
        %v808 = vadd.f32 %v776, %v790
        %v809 = vadd.f32 %v777, %v793
        %v810 = vadd.f32 %v778, %v796
        %v811 = vadd.f32 %v779, %v799
        %v812 = vadd.f32 %v780, %v802
        %v813 = vadd.f32 %v781, %v805
        %vm814 = vcmask 7168
        %815 = vst.msk [vmem:[#allocation3] sm:$0xff] %vm814, %v806
        %816 = vst.msk [vmem:[#allocation3 + $0x8] sm:$0xff] %vm814, %v807
        %817 = vst.msk [vmem:[#allocation3 + $0x10] sm:$0xff] %vm814, %v808
        %818 = vst.msk [vmem:[#allocation3 + $0x18] sm:$0xff] %vm814, %v809
        %819 = vst.msk [vmem:[#allocation3 + $0x20] sm:$0xff] %vm814, %v810
        %820 = vst.msk [vmem:[#allocation3 + $0x28] sm:$0xff] %vm814, %v811
        %821 = vst.msk [vmem:[#allocation3 + $0x30] sm:$0xff] %vm814, %v812
        %822 = vst.msk [vmem:[#allocation3 + $0x38] sm:$0xff] %vm814, %v813
        %v823 = vld [vmem:[#allocation4] sm:$0xff]
        %v824 = vld [vmem:[#allocation4 + $0x8] sm:$0xff]
        %v825 = vld [vmem:[#allocation4 + $0x10] sm:$0xff]
        %v826 = vld [vmem:[#allocation4 + $0x18] sm:$0xff]
        %v827 = vld [vmem:[#allocation4 + $0x20] sm:$0xff]
        %v828 = vld [vmem:[#allocation4 + $0x28] sm:$0xff]
        %v829 = vld [vmem:[#allocation4 + $0x30] sm:$0xff]
        %v830 = vld [vmem:[#allocation4 + $0x38] sm:$0xff]
        %832 = vset.pattern.permute.xlu0 0
        %833 = vperm.xlu0 %832, %v687
        %v834 = vpop.permute.xlu0 %833
        %837 = vset.pattern.permute.xlu0 0
        %838 = vperm.xlu0 %837, %v689
        %v839 = vpop.permute.xlu0 %838
        %842 = vset.pattern.permute.xlu0 0
        %843 = vperm.xlu0 %842, %v691
        %v844 = vpop.permute.xlu0 %843
        %847 = vset.pattern.permute.xlu0 0
        %848 = vperm.xlu0 %847, %v693
        %v849 = vpop.permute.xlu0 %848
        %852 = vset.pattern.permute.xlu0 0
        %853 = vperm.xlu0 %852, %v695
        %v854 = vpop.permute.xlu0 %853
        %857 = vset.pattern.permute.xlu0 0
        %858 = vperm.xlu0 %857, %v697
        %v859 = vpop.permute.xlu0 %858
        %862 = vset.pattern.permute.xlu0 0
        %863 = vperm.xlu0 %862, %v699
        %v864 = vpop.permute.xlu0 %863
        %867 = vset.pattern.permute.xlu0 0
        %868 = vperm.xlu0 %867, %v701
        %v869 = vpop.permute.xlu0 %868
        %v871 = vmul.f32 %v834, %v823
        %v872 = vmul.f32 %v839, %v824
        %v873 = vmul.f32 %v844, %v825
        %v874 = vmul.f32 %v849, %v826
        %v875 = vmul.f32 %v854, %v827
        %v876 = vmul.f32 %v859, %v828
        %v877 = vmul.f32 %v864, %v829
        %v878 = vmul.f32 %v869, %v830
        %v879 = vpack.c.bf16 %v753, %v751
        %v880 = vpack.c.bf16 %v757, %v755
        %v881 = vpack.c.bf16 %v761, %v759
        %v882 = vpack.c.bf16 %v765, %v763
        %v891 = vunpack.c.l.b16 %v499
        %v892 = vunpack.c.l.b16 %v500
        %v893 = vunpack.c.l.b16 %v501
        %v894 = vunpack.c.l.b16 %v502
        %v895 = vunpack.c.l.b16 %v503
        %v896 = vunpack.c.l.b16 %v504
        %v897 = vunpack.c.l.b16 %v505
        %v898 = vunpack.c.l.b16 %v506
        %v899 = vpack.c.b16 %v892, %v891
        %v900 = vpack.c.b16 %v894, %v893
        %v901 = vpack.c.b16 %v896, %v895
        %v902 = vpack.c.b16 %v898, %v897
        %v908 = vsel %vm645, %v879, 0
        %v911 = vsel %vm645, %v880, 0
        %v914 = vsel %vm645, %v881, 0
        %v917 = vsel %vm645, %v882, 0
        %919 = vmatprep.subr.bf16.mxu0 0
        %920 = vmatpush1.bf16.msra.mxu0 0
        %921 = vmatprep.subr.bf16.mxu0 0
        %922 = vmatpush1.bf16.msra.mxu0 0
        %923 = vmatprep.subr.bf16.mxu0 0
        %924 = vmatpush1.bf16.msra.mxu0 0
        %925 = vmatprep.subr.bf16.mxu0 0
        %926 = vmatpush1.bf16.msra.mxu0 0
        %927 = vmatprep.subr.bf16.mxu0 0
        %928 = vmatpush1.bf16.msra.mxu0 %v902
        %929 = vmatprep.subr.bf16.mxu0 0
        %930 = vmatpush1.bf16.msra.mxu0 %v901
        %931 = vmatprep.subr.bf16.mxu0 0
        %932 = vmatpush1.bf16.msra.mxu0 %v900
        %933 = vmatprep.subr.bf16.mxu0 0
        %934 = vmatpush1.bf16.msra.mxu0 %v899
        %935 = vmatprep.subr.bf16.mxu0 0
        %936 = vmatpush2.bf16.msra.mxu0 0
        %937 = vmatprep.subr.bf16.mxu0 0
        %938 = vmatpush2.bf16.msra.mxu0 0
        %939 = vmatprep.subr.bf16.mxu0 0
        %940 = vmatpush2.bf16.msra.mxu0 0
        %941 = vmatprep.subr.bf16.mxu0 0
        %942 = vmatpush2.bf16.msra.mxu0 0
        %943 = vmatprep.subr.bf16.mxu0 0
        %944 = vmatpush2.bf16.msra.mxu0 0
        %945 = vmatprep.subr.bf16.mxu0 0
        %946 = vmatpush2.bf16.msra.mxu0 0
        %947 = vmatprep.subr.bf16.mxu0 0
        %948 = vmatpush2.bf16.msra.mxu0 0
        %949 = vmatprep.subr.bf16.mxu0 0
        %950 = vmatpush2.bf16.msra.mxu0 0
        %951 = vmatprep.mubr.bf16.mxu0 0
        %952 = vmatmul.mubr.bf16.gmra.mxu0 %v908
        %v953 = vpop.f32.mrf.mxu0
        %v954 = vadd.f32 0.0, %v953
        %v955 = vpop.f32.mrf.mxu0
        %v956 = vpop.f32.mrf.mxu0
        %v957 = vadd.f32 0.0, %v956
        %v958 = vpop.f32.mrf.mxu0
        %959 = vmatprep.mubr.bf16.mxu0 0
        %960 = vmatmul.mubr.bf16.gmra.mxu0 %v911
        %v961 = vpop.f32.mrf.mxu0
        %v962 = vadd.f32 0.0, %v961
        %v963 = vpop.f32.mrf.mxu0
        %v964 = vpop.f32.mrf.mxu0
        %v965 = vadd.f32 0.0, %v964
        %v966 = vpop.f32.mrf.mxu0
        %967 = vmatprep.mubr.bf16.mxu0 0
        %968 = vmatmul.mubr.bf16.gmra.mxu0 %v914
        %v969 = vpop.f32.mrf.mxu0
        %v970 = vadd.f32 0.0, %v969
        %v971 = vpop.f32.mrf.mxu0
        %v972 = vpop.f32.mrf.mxu0
        %v973 = vadd.f32 0.0, %v972
        %v974 = vpop.f32.mrf.mxu0
        %975 = vmatprep.mubr.bf16.mxu0 0
        %976 = vmatmul.mubr.bf16.gmra.mxu0 %v917
        %v977 = vpop.f32.mrf.mxu0
        %v978 = vadd.f32 0.0, %v977
        %v979 = vpop.f32.mrf.mxu0
        %v980 = vpop.f32.mrf.mxu0
        %v981 = vadd.f32 0.0, %v980
        %v982 = vpop.f32.mrf.mxu0
        %983 = vdwg.mxu0
        %v984 = vadd.f32 %v871, %v954
        %v985 = vadd.f32 %v872, %v957
        %v986 = vadd.f32 %v873, %v962
        %v987 = vadd.f32 %v874, %v965
        %v988 = vadd.f32 %v875, %v970
        %v989 = vadd.f32 %v876, %v973
        %v990 = vadd.f32 %v877, %v978
        %v991 = vadd.f32 %v878, %v981
        %992 = vst.msk [vmem:[#allocation4] sm:$0xff] %vm547, %v984
        %993 = vst.msk [vmem:[#allocation4 + $0x8] sm:$0xff] %vm547, %v985
        %994 = vst.msk [vmem:[#allocation4 + $0x10] sm:$0xff] %vm547, %v986
        %995 = vst.msk [vmem:[#allocation4 + $0x18] sm:$0xff] %vm547, %v987
        %996 = vst.msk [vmem:[#allocation4 + $0x20] sm:$0xff] %vm547, %v988
        %997 = vst.msk [vmem:[#allocation4 + $0x28] sm:$0xff] %vm547, %v989
        %998 = vst.msk [vmem:[#allocation4 + $0x30] sm:$0xff] %vm547, %v990
        %999 = vst.msk [vmem:[#allocation4 + $0x38] sm:$0xff] %vm547, %v991
        %1000 = vst.msk [vmem:[#allocation2] sm:$0xff] %vm814, %v670
        %1001 = vst.msk [vmem:[#allocation2 + $0x8] sm:$0xff] %vm814, %v671
        %1002 = vst.msk [vmem:[#allocation2 + $0x10] sm:$0xff] %vm814, %v672
        %1003 = vst.msk [vmem:[#allocation2 + $0x18] sm:$0xff] %vm814, %v673
        %1004 = vst.msk [vmem:[#allocation2 + $0x20] sm:$0xff] %vm814, %v674
        %1005 = vst.msk [vmem:[#allocation2 + $0x28] sm:$0xff] %vm814, %v675
        %1006 = vst.msk [vmem:[#allocation2 + $0x30] sm:$0xff] %vm814, %v676
        %1007 = vst.msk [vmem:[#allocation2 + $0x38] sm:$0xff] %vm814, %v677
        %1008 = vrot.lane.b32.xlu0 %v523, 96
        %v1009 = vpop.permute.xlu0 %1008
        %1010 = vrot.lane.b32.xlu0 %v524, 96
        %v1011 = vpop.permute.xlu0 %1010
        %1012 = vrot.lane.b32.xlu0 %v525, 96
        %v1013 = vpop.permute.xlu0 %1012
        %1014 = vrot.lane.b32.xlu0 %v526, 96
        %v1015 = vpop.permute.xlu0 %1014
        %1016 = vrot.lane.b32.xlu0 %v543, 96
        %v1017 = vpop.permute.xlu0 %1016
        %1018 = vrot.lane.b32.xlu0 %v544, 96
        %v1019 = vpop.permute.xlu0 %1018
        %1020 = vrot.lane.b32.xlu0 %v545, 96
        %v1021 = vpop.permute.xlu0 %1020
        %1022 = vrot.lane.b32.xlu0 %v546, 96
        %v1023 = vpop.permute.xlu0 %1022
        %v1025 = vsel %vm547, %v1009, 0
        %v1028 = vsel %vm547, %v1011, 0
        %v1031 = vsel %vm547, %v1013, 0
        %v1034 = vsel %vm547, %v1015, 0
        %v1037 = vsel %vm547, %v1017, 0
        %v1040 = vsel %vm547, %v1019, 0
        %v1043 = vsel %vm547, %v1021, 0
        %v1046 = vsel %vm547, %v1023, 0
        %1048 = vmatprep.subr.bf16.mxu0 0
        %1049 = vmatpush1.bf16.xpose.msra.mxu0 0
        %1050 = vmatprep.subr.bf16.mxu0 0
        %1051 = vmatpush1.bf16.xpose.msra.mxu0 0
        %1052 = vmatprep.subr.bf16.mxu0 0
        %1053 = vmatpush1.bf16.xpose.msra.mxu0 0
        %1054 = vmatprep.subr.bf16.mxu0 0
        %1055 = vmatpush1.bf16.xpose.msra.mxu0 0
        %1056 = vmatprep.subr.bf16.mxu0 0
        %1057 = vmatpush1.bf16.xpose.msra.mxu0 %v1046
        %1058 = vmatprep.subr.bf16.mxu0 0
        %1059 = vmatpush1.bf16.xpose.msra.mxu0 %v1043
        %1060 = vmatprep.subr.bf16.mxu0 0
        %1061 = vmatpush1.bf16.xpose.msra.mxu0 %v1040
        %1062 = vmatprep.subr.bf16.mxu0 0
        %1063 = vmatpush1.bf16.xpose.msra.mxu0 %v1037
        %1064 = vmatprep.subr.bf16.mxu0 0
        %1065 = vmatpush2.bf16.xpose.msra.mxu0 0
        %1066 = vmatprep.subr.bf16.mxu0 0
        %1067 = vmatpush2.bf16.xpose.msra.mxu0 0
        %1068 = vmatprep.subr.bf16.mxu0 0
        %1069 = vmatpush2.bf16.xpose.msra.mxu0 0
        %1070 = vmatprep.subr.bf16.mxu0 0
        %1071 = vmatpush2.bf16.xpose.msra.mxu0 0
        %1072 = vmatprep.subr.bf16.mxu0 0
        %1073 = vmatpush2.bf16.xpose.msra.mxu0 0
        %1074 = vmatprep.subr.bf16.mxu0 0
        %1075 = vmatpush2.bf16.xpose.msra.mxu0 0
        %1076 = vmatprep.subr.bf16.mxu0 0
        %1077 = vmatpush2.bf16.xpose.msra.mxu0 0
        %1078 = vmatprep.subr.bf16.mxu0 0
        %1079 = vmatpush2.bf16.xpose.msra.mxu0 0
        %1080 = vmatprep.mubr.bf16.mxu0 0
        %1081 = vmatmul.mubr.bf16.gmra.mxu0 %v1025
        %v1082 = vpop.f32.mrf.mxu0
        %v1083 = vadd.f32 0.0, %v1082
        %v1084 = vpop.f32.mrf.mxu0
        %v1085 = vpop.f32.mrf.mxu0
        %v1086 = vadd.f32 0.0, %v1085
        %v1087 = vpop.f32.mrf.mxu0
        %1088 = vmatprep.mubr.bf16.mxu0 0
        %1089 = vmatmul.mubr.bf16.gmra.mxu0 %v1028
        %v1090 = vpop.f32.mrf.mxu0
        %v1091 = vadd.f32 0.0, %v1090
        %v1092 = vpop.f32.mrf.mxu0
        %v1093 = vpop.f32.mrf.mxu0
        %v1094 = vadd.f32 0.0, %v1093
        %v1095 = vpop.f32.mrf.mxu0
        %1096 = vmatprep.mubr.bf16.mxu0 0
        %1097 = vmatmul.mubr.bf16.gmra.mxu0 %v1031
        %v1098 = vpop.f32.mrf.mxu0
        %v1099 = vadd.f32 0.0, %v1098
        %v1100 = vpop.f32.mrf.mxu0
        %v1101 = vpop.f32.mrf.mxu0
        %v1102 = vadd.f32 0.0, %v1101
        %v1103 = vpop.f32.mrf.mxu0
        %1104 = vmatprep.mubr.bf16.mxu0 0
        %1105 = vmatmul.mubr.bf16.gmra.mxu0 %v1034
        %v1106 = vpop.f32.mrf.mxu0
        %v1107 = vadd.f32 0.0, %v1106
        %v1108 = vpop.f32.mrf.mxu0
        %v1109 = vpop.f32.mrf.mxu0
        %v1110 = vadd.f32 0.0, %v1109
        %v1111 = vpop.f32.mrf.mxu0
        %1112 = vdwg.mxu0
        %s1113 = scalar_lea.vmem [#allocation2], 64
        %v1114 = vld [vmem:[%s1113] sm:$0xff]
        %v1115 = vld [vmem:[%s1113 + $0x8] sm:$0xff]
        %v1116 = vld [vmem:[%s1113 + $0x10] sm:$0xff]
        %v1117 = vld [vmem:[%s1113 + $0x18] sm:$0xff]
        %v1118 = vld [vmem:[%s1113 + $0x20] sm:$0xff]
        %v1119 = vld [vmem:[%s1113 + $0x28] sm:$0xff]
        %v1120 = vld [vmem:[%s1113 + $0x30] sm:$0xff]
        %v1121 = vld [vmem:[%s1113 + $0x38] sm:$0xff]
        %v1122 = vsel %vm645, %v1083, -inf
        %1123 = vmax.xlane.f32.xlu0 %v1122
        %v1124 = vpop.xlane.xlu0 %1123
        %v1125 = vsel %vm645, %v1086, -inf
        %1126 = vmax.xlane.f32.xlu0 %v1125
        %v1127 = vpop.xlane.xlu0 %1126
        %v1128 = vsel %vm645, %v1091, -inf
        %1129 = vmax.xlane.f32.xlu0 %v1128
        %v1130 = vpop.xlane.xlu0 %1129
        %v1131 = vsel %vm645, %v1094, -inf
        %1132 = vmax.xlane.f32.xlu0 %v1131
        %v1133 = vpop.xlane.xlu0 %1132
        %v1134 = vsel %vm645, %v1099, -inf
        %1135 = vmax.xlane.f32.xlu0 %v1134
        %v1136 = vpop.xlane.xlu0 %1135
        %v1137 = vsel %vm645, %v1102, -inf
        %1138 = vmax.xlane.f32.xlu0 %v1137
        %v1139 = vpop.xlane.xlu0 %1138
        %v1140 = vsel %vm645, %v1107, -inf
        %1141 = vmax.xlane.f32.xlu0 %v1140
        %v1142 = vpop.xlane.xlu0 %1141
        %v1143 = vsel %vm645, %v1110, -inf
        %1144 = vmax.xlane.f32.xlu0 %v1143
        %v1145 = vpop.xlane.xlu0 %1144
        %v1146 = vmax.f32 %v1114, %v1124
        %v1147 = vmax.f32 %v1115, %v1127
        %v1148 = vmax.f32 %v1116, %v1130
        %v1149 = vmax.f32 %v1117, %v1133
        %v1150 = vmax.f32 %v1118, %v1136
        %v1151 = vmax.f32 %v1119, %v1139
        %v1152 = vmax.f32 %v1120, %v1142
        %v1153 = vmax.f32 %v1121, %v1145
        %v1154 = vsub.f32 %v1114, %v1146
        %v1155 = vsub.f32 %v1115, %v1147
        %v1156 = vsub.f32 %v1116, %v1148
        %v1157 = vsub.f32 %v1117, %v1149
        %v1158 = vsub.f32 %v1118, %v1150
        %v1159 = vsub.f32 %v1119, %v1151
        %v1160 = vsub.f32 %v1120, %v1152
        %v1161 = vsub.f32 %v1121, %v1153
        %v1162 = vmul.f32 %v1154, 1.442695
        %v1163 = vpow.pop %v1162
        %v1164 = vmul.f32 %v1155, 1.442695
        %v1165 = vpow.pop %v1164
        %v1166 = vmul.f32 %v1156, 1.442695
        %v1167 = vpow.pop %v1166
        %v1168 = vmul.f32 %v1157, 1.442695
        %v1169 = vpow.pop %v1168
        %v1170 = vmul.f32 %v1158, 1.442695
        %v1171 = vpow.pop %v1170
        %v1172 = vmul.f32 %v1159, 1.442695
        %v1173 = vpow.pop %v1172
        %v1174 = vmul.f32 %v1160, 1.442695
        %v1175 = vpow.pop %v1174
        %v1176 = vmul.f32 %v1161, 1.442695
        %v1177 = vpow.pop %v1176
        %1179 = vset.pattern.permute.xlu0 0
        %1180 = vperm.xlu0 %1179, %v1146
        %v1181 = vpop.permute.xlu0 %1180
        %1184 = vset.pattern.permute.xlu0 0
        %1185 = vperm.xlu0 %1184, %v1147
        %v1186 = vpop.permute.xlu0 %1185
        %1189 = vset.pattern.permute.xlu0 0
        %1190 = vperm.xlu0 %1189, %v1148
        %v1191 = vpop.permute.xlu0 %1190
        %1194 = vset.pattern.permute.xlu0 0
        %1195 = vperm.xlu0 %1194, %v1149
        %v1196 = vpop.permute.xlu0 %1195
        %1199 = vset.pattern.permute.xlu0 0
        %1200 = vperm.xlu0 %1199, %v1150
        %v1201 = vpop.permute.xlu0 %1200
        %1204 = vset.pattern.permute.xlu0 0
        %1205 = vperm.xlu0 %1204, %v1151
        %v1206 = vpop.permute.xlu0 %1205
        %1209 = vset.pattern.permute.xlu0 0
        %1210 = vperm.xlu0 %1209, %v1152
        %v1211 = vpop.permute.xlu0 %1210
        %1214 = vset.pattern.permute.xlu0 0
        %1215 = vperm.xlu0 %1214, %v1153
        %v1216 = vpop.permute.xlu0 %1215
        %v1218 = vsub.f32 %v1083, %v1181
        %v1219 = vsub.f32 %v1086, %v1186
        %v1220 = vsub.f32 %v1091, %v1191
        %v1221 = vsub.f32 %v1094, %v1196
        %v1222 = vsub.f32 %v1099, %v1201
        %v1223 = vsub.f32 %v1102, %v1206
        %v1224 = vsub.f32 %v1107, %v1211
        %v1225 = vsub.f32 %v1110, %v1216
        %v1226 = vmul.f32 %v1218, 1.442695
        %v1227 = vpow.pop %v1226
        %v1228 = vmul.f32 %v1219, 1.442695
        %v1229 = vpow.pop %v1228
        %v1230 = vmul.f32 %v1220, 1.442695
        %v1231 = vpow.pop %v1230
        %v1232 = vmul.f32 %v1221, 1.442695
        %v1233 = vpow.pop %v1232
        %v1234 = vmul.f32 %v1222, 1.442695
        %v1235 = vpow.pop %v1234
        %v1236 = vmul.f32 %v1223, 1.442695
        %v1237 = vpow.pop %v1236
        %v1238 = vmul.f32 %v1224, 1.442695
        %v1239 = vpow.pop %v1238
        %v1240 = vmul.f32 %v1225, 1.442695
        %v1241 = vpow.pop %v1240
        %s1242 = scalar_lea.vmem [#allocation3], 64
        %v1243 = vld [vmem:[%s1242] sm:$0xff]
        %v1244 = vld [vmem:[%s1242 + $0x8] sm:$0xff]
        %v1245 = vld [vmem:[%s1242 + $0x10] sm:$0xff]
        %v1246 = vld [vmem:[%s1242 + $0x18] sm:$0xff]
        %v1247 = vld [vmem:[%s1242 + $0x20] sm:$0xff]
        %v1248 = vld [vmem:[%s1242 + $0x28] sm:$0xff]
        %v1249 = vld [vmem:[%s1242 + $0x30] sm:$0xff]
        %v1250 = vld [vmem:[%s1242 + $0x38] sm:$0xff]
        %v1251 = vmul.f32 %v1163, %v1243
        %v1252 = vmul.f32 %v1165, %v1244
        %v1253 = vmul.f32 %v1167, %v1245
        %v1254 = vmul.f32 %v1169, %v1246
        %v1255 = vmul.f32 %v1171, %v1247
        %v1256 = vmul.f32 %v1173, %v1248
        %v1257 = vmul.f32 %v1175, %v1249
        %v1258 = vmul.f32 %v1177, %v1250
        %v1259 = vsel %vm645, %v1227, 0.0
        %1260 = vadd.xlane.f32.xlu0 %v1259
        %v1261 = vpop.xlane.xlu0 %1260
        %v1262 = vsel %vm645, %v1229, 0.0
        %1263 = vadd.xlane.f32.xlu0 %v1262
        %v1264 = vpop.xlane.xlu0 %1263
        %v1265 = vsel %vm645, %v1231, 0.0
        %1266 = vadd.xlane.f32.xlu0 %v1265
        %v1267 = vpop.xlane.xlu0 %1266
        %v1268 = vsel %vm645, %v1233, 0.0
        %1269 = vadd.xlane.f32.xlu0 %v1268
        %v1270 = vpop.xlane.xlu0 %1269
        %v1271 = vsel %vm645, %v1235, 0.0
        %1272 = vadd.xlane.f32.xlu0 %v1271
        %v1273 = vpop.xlane.xlu0 %1272
        %v1274 = vsel %vm645, %v1237, 0.0
        %1275 = vadd.xlane.f32.xlu0 %v1274
        %v1276 = vpop.xlane.xlu0 %1275
        %v1277 = vsel %vm645, %v1239, 0.0
        %1278 = vadd.xlane.f32.xlu0 %v1277
        %v1279 = vpop.xlane.xlu0 %1278
        %v1280 = vsel %vm645, %v1241, 0.0
        %1281 = vadd.xlane.f32.xlu0 %v1280
        %v1282 = vpop.xlane.xlu0 %1281
        %v1283 = vadd.f32 %v1251, %v1261
        %v1284 = vadd.f32 %v1252, %v1264
        %v1285 = vadd.f32 %v1253, %v1267
        %v1286 = vadd.f32 %v1254, %v1270
        %v1287 = vadd.f32 %v1255, %v1273
        %v1288 = vadd.f32 %v1256, %v1276
        %v1289 = vadd.f32 %v1257, %v1279
        %v1290 = vadd.f32 %v1258, %v1282
        %1291 = vst.msk [vmem:[%s1242] sm:$0xff] %vm814, %v1283
        %1292 = vst.msk [vmem:[%s1242 + $0x8] sm:$0xff] %vm814, %v1284
        %1293 = vst.msk [vmem:[%s1242 + $0x10] sm:$0xff] %vm814, %v1285
        %1294 = vst.msk [vmem:[%s1242 + $0x18] sm:$0xff] %vm814, %v1286
        %1295 = vst.msk [vmem:[%s1242 + $0x20] sm:$0xff] %vm814, %v1287
        %1296 = vst.msk [vmem:[%s1242 + $0x28] sm:$0xff] %vm814, %v1288
        %1297 = vst.msk [vmem:[%s1242 + $0x30] sm:$0xff] %vm814, %v1289
        %1298 = vst.msk [vmem:[%s1242 + $0x38] sm:$0xff] %vm814, %v1290
        %s1299 = scalar_lea.vmem [#allocation4], 64
        %v1300 = vld [vmem:[%s1299] sm:$0xff]
        %v1301 = vld [vmem:[%s1299 + $0x8] sm:$0xff]
        %v1302 = vld [vmem:[%s1299 + $0x10] sm:$0xff]
        %v1303 = vld [vmem:[%s1299 + $0x18] sm:$0xff]
        %v1304 = vld [vmem:[%s1299 + $0x20] sm:$0xff]
        %v1305 = vld [vmem:[%s1299 + $0x28] sm:$0xff]
        %v1306 = vld [vmem:[%s1299 + $0x30] sm:$0xff]
        %v1307 = vld [vmem:[%s1299 + $0x38] sm:$0xff]
        %1309 = vset.pattern.permute.xlu0 0
        %1310 = vperm.xlu0 %1309, %v1163
        %v1311 = vpop.permute.xlu0 %1310
        %1314 = vset.pattern.permute.xlu0 0
        %1315 = vperm.xlu0 %1314, %v1165
        %v1316 = vpop.permute.xlu0 %1315
        %1319 = vset.pattern.permute.xlu0 0
        %1320 = vperm.xlu0 %1319, %v1167
        %v1321 = vpop.permute.xlu0 %1320
        %1324 = vset.pattern.permute.xlu0 0
        %1325 = vperm.xlu0 %1324, %v1169
        %v1326 = vpop.permute.xlu0 %1325
        %1329 = vset.pattern.permute.xlu0 0
        %1330 = vperm.xlu0 %1329, %v1171
        %v1331 = vpop.permute.xlu0 %1330
        %1334 = vset.pattern.permute.xlu0 0
        %1335 = vperm.xlu0 %1334, %v1173
        %v1336 = vpop.permute.xlu0 %1335
        %1339 = vset.pattern.permute.xlu0 0
        %1340 = vperm.xlu0 %1339, %v1175
        %v1341 = vpop.permute.xlu0 %1340
        %1344 = vset.pattern.permute.xlu0 0
        %1345 = vperm.xlu0 %1344, %v1177
        %v1346 = vpop.permute.xlu0 %1345
        %v1348 = vmul.f32 %v1311, %v1300
        %v1349 = vmul.f32 %v1316, %v1301
        %v1350 = vmul.f32 %v1321, %v1302
        %v1351 = vmul.f32 %v1326, %v1303
        %v1352 = vmul.f32 %v1331, %v1304
        %v1353 = vmul.f32 %v1336, %v1305
        %v1354 = vmul.f32 %v1341, %v1306
        %v1355 = vmul.f32 %v1346, %v1307
        %v1356 = vpack.c.bf16 %v1229, %v1227
        %v1357 = vpack.c.bf16 %v1233, %v1231
        %v1358 = vpack.c.bf16 %v1237, %v1235
        %v1359 = vpack.c.bf16 %v1241, %v1239
        %1360 = vrot.lane.b32.xlu0 %v899, 96
        %v1361 = vpop.permute.xlu0 %1360
        %1362 = vrot.lane.b32.xlu0 %v900, 96
        %v1363 = vpop.permute.xlu0 %1362
        %1364 = vrot.lane.b32.xlu0 %v901, 96
        %v1365 = vpop.permute.xlu0 %1364
        %1366 = vrot.lane.b32.xlu0 %v902, 96
        %v1367 = vpop.permute.xlu0 %1366
        %v1373 = vsel %vm645, %v1356, 0
        %v1376 = vsel %vm645, %v1357, 0
        %v1379 = vsel %vm645, %v1358, 0
        %v1382 = vsel %vm645, %v1359, 0
        %1384 = vmatprep.subr.bf16.mxu0 0
        %1385 = vmatpush1.bf16.msra.mxu0 0
        %1386 = vmatprep.subr.bf16.mxu0 0
        %1387 = vmatpush1.bf16.msra.mxu0 0
        %1388 = vmatprep.subr.bf16.mxu0 0
        %1389 = vmatpush1.bf16.msra.mxu0 0
        %1390 = vmatprep.subr.bf16.mxu0 0
        %1391 = vmatpush1.bf16.msra.mxu0 0
        %1392 = vmatprep.subr.bf16.mxu0 0
        %1393 = vmatpush1.bf16.msra.mxu0 %v1367
        %1394 = vmatprep.subr.bf16.mxu0 0
        %1395 = vmatpush1.bf16.msra.mxu0 %v1365
        %1396 = vmatprep.subr.bf16.mxu0 0
        %1397 = vmatpush1.bf16.msra.mxu0 %v1363
        %1398 = vmatprep.subr.bf16.mxu0 0
        %1399 = vmatpush1.bf16.msra.mxu0 %v1361
        %1400 = vmatprep.subr.bf16.mxu0 0
        %1401 = vmatpush2.bf16.msra.mxu0 0
        %1402 = vmatprep.subr.bf16.mxu0 0
        %1403 = vmatpush2.bf16.msra.mxu0 0
        %1404 = vmatprep.subr.bf16.mxu0 0
        %1405 = vmatpush2.bf16.msra.mxu0 0
        %1406 = vmatprep.subr.bf16.mxu0 0
        %1407 = vmatpush2.bf16.msra.mxu0 0
        %1408 = vmatprep.subr.bf16.mxu0 0
        %1409 = vmatpush2.bf16.msra.mxu0 0
        %1410 = vmatprep.subr.bf16.mxu0 0
        %1411 = vmatpush2.bf16.msra.mxu0 0
        %1412 = vmatprep.subr.bf16.mxu0 0
        %1413 = vmatpush2.bf16.msra.mxu0 0
        %1414 = vmatprep.subr.bf16.mxu0 0
        %1415 = vmatpush2.bf16.msra.mxu0 0
        %1416 = vmatprep.mubr.bf16.mxu0 0
        %1417 = vmatmul.mubr.bf16.gmra.mxu0 %v1373
        %v1418 = vpop.f32.mrf.mxu0
        %v1419 = vadd.f32 0.0, %v1418
        %v1420 = vpop.f32.mrf.mxu0
        %v1421 = vpop.f32.mrf.mxu0
        %v1422 = vadd.f32 0.0, %v1421
        %v1423 = vpop.f32.mrf.mxu0
        %1424 = vmatprep.mubr.bf16.mxu0 0
        %1425 = vmatmul.mubr.bf16.gmra.mxu0 %v1376
        %v1426 = vpop.f32.mrf.mxu0
        %v1427 = vadd.f32 0.0, %v1426
        %v1428 = vpop.f32.mrf.mxu0
        %v1429 = vpop.f32.mrf.mxu0
        %v1430 = vadd.f32 0.0, %v1429
        %v1431 = vpop.f32.mrf.mxu0
        %1432 = vmatprep.mubr.bf16.mxu0 0
        %1433 = vmatmul.mubr.bf16.gmra.mxu0 %v1379
        %v1434 = vpop.f32.mrf.mxu0
        %v1435 = vadd.f32 0.0, %v1434
        %v1436 = vpop.f32.mrf.mxu0
        %v1437 = vpop.f32.mrf.mxu0
        %v1438 = vadd.f32 0.0, %v1437
        %v1439 = vpop.f32.mrf.mxu0
        %1440 = vmatprep.mubr.bf16.mxu0 0
        %1441 = vmatmul.mubr.bf16.gmra.mxu0 %v1382
        %v1442 = vpop.f32.mrf.mxu0
        %v1443 = vadd.f32 0.0, %v1442
        %v1444 = vpop.f32.mrf.mxu0
        %v1445 = vpop.f32.mrf.mxu0
        %v1446 = vadd.f32 0.0, %v1445
        %v1447 = vpop.f32.mrf.mxu0
        %1448 = vdwg.mxu0
        %v1449 = vadd.f32 %v1348, %v1419
        %v1450 = vadd.f32 %v1349, %v1422
        %v1451 = vadd.f32 %v1350, %v1427
        %v1452 = vadd.f32 %v1351, %v1430
        %v1453 = vadd.f32 %v1352, %v1435
        %v1454 = vadd.f32 %v1353, %v1438
        %v1455 = vadd.f32 %v1354, %v1443
        %v1456 = vadd.f32 %v1355, %v1446
        %1457 = vst.msk [vmem:[%s1299] sm:$0xff] %vm547, %v1449
        %1458 = vst.msk [vmem:[%s1299 + $0x8] sm:$0xff] %vm547, %v1450
        %1459 = vst.msk [vmem:[%s1299 + $0x10] sm:$0xff] %vm547, %v1451
        %1460 = vst.msk [vmem:[%s1299 + $0x18] sm:$0xff] %vm547, %v1452
        %1461 = vst.msk [vmem:[%s1299 + $0x20] sm:$0xff] %vm547, %v1453
        %1462 = vst.msk [vmem:[%s1299 + $0x28] sm:$0xff] %vm547, %v1454
        %1463 = vst.msk [vmem:[%s1299 + $0x30] sm:$0xff] %vm547, %v1455
        %1464 = vst.msk [vmem:[%s1299 + $0x38] sm:$0xff] %vm547, %v1456
        %1465 = vst.msk [vmem:[%s1113] sm:$0xff] %vm814, %v1146
        %1466 = vst.msk [vmem:[%s1113 + $0x8] sm:$0xff] %vm814, %v1147
        %1467 = vst.msk [vmem:[%s1113 + $0x10] sm:$0xff] %vm814, %v1148
        %1468 = vst.msk [vmem:[%s1113 + $0x18] sm:$0xff] %vm814, %v1149
        %1469 = vst.msk [vmem:[%s1113 + $0x20] sm:$0xff] %vm814, %v1150
        %1470 = vst.msk [vmem:[%s1113 + $0x28] sm:$0xff] %vm814, %v1151
        %1471 = vst.msk [vmem:[%s1113 + $0x30] sm:$0xff] %vm814, %v1152
        %1472 = vst.msk [vmem:[%s1113 + $0x38] sm:$0xff] %vm814, %v1153
        %1473 = vrot.lane.b32.xlu0 %v523, 64
        %v1474 = vpop.permute.xlu0 %1473
        %1475 = vrot.lane.b32.xlu0 %v524, 64
        %v1476 = vpop.permute.xlu0 %1475
        %1477 = vrot.lane.b32.xlu0 %v525, 64
        %v1478 = vpop.permute.xlu0 %1477
        %1479 = vrot.lane.b32.xlu0 %v526, 64
        %v1480 = vpop.permute.xlu0 %1479
        %1481 = vrot.lane.b32.xlu0 %v543, 64
        %v1482 = vpop.permute.xlu0 %1481
        %1483 = vrot.lane.b32.xlu0 %v544, 64
        %v1484 = vpop.permute.xlu0 %1483
        %1485 = vrot.lane.b32.xlu0 %v545, 64
        %v1486 = vpop.permute.xlu0 %1485
        %1487 = vrot.lane.b32.xlu0 %v546, 64
        %v1488 = vpop.permute.xlu0 %1487
        %v1490 = vsel %vm547, %v1474, 0
        %v1493 = vsel %vm547, %v1476, 0
        %v1496 = vsel %vm547, %v1478, 0
        %v1499 = vsel %vm547, %v1480, 0
        %v1502 = vsel %vm547, %v1482, 0
        %v1505 = vsel %vm547, %v1484, 0
        %v1508 = vsel %vm547, %v1486, 0
        %v1511 = vsel %vm547, %v1488, 0
        %1513 = vmatprep.subr.bf16.mxu0 0
        %1514 = vmatpush1.bf16.xpose.msra.mxu0 0
        %1515 = vmatprep.subr.bf16.mxu0 0
        %1516 = vmatpush1.bf16.xpose.msra.mxu0 0
        %1517 = vmatprep.subr.bf16.mxu0 0
        %1518 = vmatpush1.bf16.xpose.msra.mxu0 0
        %1519 = vmatprep.subr.bf16.mxu0 0
        %1520 = vmatpush1.bf16.xpose.msra.mxu0 0
        %1521 = vmatprep.subr.bf16.mxu0 0
        %1522 = vmatpush1.bf16.xpose.msra.mxu0 %v1511
        %1523 = vmatprep.subr.bf16.mxu0 0
        %1524 = vmatpush1.bf16.xpose.msra.mxu0 %v1508
        %1525 = vmatprep.subr.bf16.mxu0 0
        %1526 = vmatpush1.bf16.xpose.msra.mxu0 %v1505
        %1527 = vmatprep.subr.bf16.mxu0 0
        %1528 = vmatpush1.bf16.xpose.msra.mxu0 %v1502
        %1529 = vmatprep.subr.bf16.mxu0 0
        %1530 = vmatpush2.bf16.xpose.msra.mxu0 0
        %1531 = vmatprep.subr.bf16.mxu0 0
        %1532 = vmatpush2.bf16.xpose.msra.mxu0 0
        %1533 = vmatprep.subr.bf16.mxu0 0
        %1534 = vmatpush2.bf16.xpose.msra.mxu0 0
        %1535 = vmatprep.subr.bf16.mxu0 0
        %1536 = vmatpush2.bf16.xpose.msra.mxu0 0
        %1537 = vmatprep.subr.bf16.mxu0 0
        %1538 = vmatpush2.bf16.xpose.msra.mxu0 0
        %1539 = vmatprep.subr.bf16.mxu0 0
        %1540 = vmatpush2.bf16.xpose.msra.mxu0 0
        %1541 = vmatprep.subr.bf16.mxu0 0
        %1542 = vmatpush2.bf16.xpose.msra.mxu0 0
        %1543 = vmatprep.subr.bf16.mxu0 0
        %1544 = vmatpush2.bf16.xpose.msra.mxu0 0
        %1545 = vmatprep.mubr.bf16.mxu0 0
        %1546 = vmatmul.mubr.bf16.gmra.mxu0 %v1490
        %v1547 = vpop.f32.mrf.mxu0
        %v1548 = vadd.f32 0.0, %v1547
        %v1549 = vpop.f32.mrf.mxu0
        %v1550 = vpop.f32.mrf.mxu0
        %v1551 = vadd.f32 0.0, %v1550
        %v1552 = vpop.f32.mrf.mxu0
        %1553 = vmatprep.mubr.bf16.mxu0 0
        %1554 = vmatmul.mubr.bf16.gmra.mxu0 %v1493
        %v1555 = vpop.f32.mrf.mxu0
        %v1556 = vadd.f32 0.0, %v1555
        %v1557 = vpop.f32.mrf.mxu0
        %v1558 = vpop.f32.mrf.mxu0
        %v1559 = vadd.f32 0.0, %v1558
        %v1560 = vpop.f32.mrf.mxu0
        %1561 = vmatprep.mubr.bf16.mxu0 0
        %1562 = vmatmul.mubr.bf16.gmra.mxu0 %v1496
        %v1563 = vpop.f32.mrf.mxu0
        %v1564 = vadd.f32 0.0, %v1563
        %v1565 = vpop.f32.mrf.mxu0
        %v1566 = vpop.f32.mrf.mxu0
        %v1567 = vadd.f32 0.0, %v1566
        %v1568 = vpop.f32.mrf.mxu0
        %1569 = vmatprep.mubr.bf16.mxu0 0
        %1570 = vmatmul.mubr.bf16.gmra.mxu0 %v1499
        %v1571 = vpop.f32.mrf.mxu0
        %v1572 = vadd.f32 0.0, %v1571
        %v1573 = vpop.f32.mrf.mxu0
        %v1574 = vpop.f32.mrf.mxu0
        %v1575 = vadd.f32 0.0, %v1574
        %v1576 = vpop.f32.mrf.mxu0
        %1577 = vdwg.mxu0
        %s1578 = scalar_lea.vmem [#allocation2], 128
        %v1579 = vld [vmem:[%s1578] sm:$0xff]
        %v1580 = vld [vmem:[%s1578 + $0x8] sm:$0xff]
        %v1581 = vld [vmem:[%s1578 + $0x10] sm:$0xff]
        %v1582 = vld [vmem:[%s1578 + $0x18] sm:$0xff]
        %v1583 = vld [vmem:[%s1578 + $0x20] sm:$0xff]
        %v1584 = vld [vmem:[%s1578 + $0x28] sm:$0xff]
        %v1585 = vld [vmem:[%s1578 + $0x30] sm:$0xff]
        %v1586 = vld [vmem:[%s1578 + $0x38] sm:$0xff]
        %v1587 = vsel %vm645, %v1548, -inf
        %1588 = vmax.xlane.f32.xlu0 %v1587
        %v1589 = vpop.xlane.xlu0 %1588
        %v1590 = vsel %vm645, %v1551, -inf
        %1591 = vmax.xlane.f32.xlu0 %v1590
        %v1592 = vpop.xlane.xlu0 %1591
        %v1593 = vsel %vm645, %v1556, -inf
        %1594 = vmax.xlane.f32.xlu0 %v1593
        %v1595 = vpop.xlane.xlu0 %1594
        %v1596 = vsel %vm645, %v1559, -inf
        %1597 = vmax.xlane.f32.xlu0 %v1596
        %v1598 = vpop.xlane.xlu0 %1597
        %v1599 = vsel %vm645, %v1564, -inf
        %1600 = vmax.xlane.f32.xlu0 %v1599
        %v1601 = vpop.xlane.xlu0 %1600
        %v1602 = vsel %vm645, %v1567, -inf
        %1603 = vmax.xlane.f32.xlu0 %v1602
        %v1604 = vpop.xlane.xlu0 %1603
        %v1605 = vsel %vm645, %v1572, -inf
        %1606 = vmax.xlane.f32.xlu0 %v1605
        %v1607 = vpop.xlane.xlu0 %1606
        %v1608 = vsel %vm645, %v1575, -inf
        %1609 = vmax.xlane.f32.xlu0 %v1608
        %v1610 = vpop.xlane.xlu0 %1609
        %v1611 = vmax.f32 %v1579, %v1589
        %v1612 = vmax.f32 %v1580, %v1592
        %v1613 = vmax.f32 %v1581, %v1595
        %v1614 = vmax.f32 %v1582, %v1598
        %v1615 = vmax.f32 %v1583, %v1601
        %v1616 = vmax.f32 %v1584, %v1604
        %v1617 = vmax.f32 %v1585, %v1607
        %v1618 = vmax.f32 %v1586, %v1610
        %v1619 = vsub.f32 %v1579, %v1611
        %v1620 = vsub.f32 %v1580, %v1612
        %v1621 = vsub.f32 %v1581, %v1613
        %v1622 = vsub.f32 %v1582, %v1614
        %v1623 = vsub.f32 %v1583, %v1615
        %v1624 = vsub.f32 %v1584, %v1616
        %v1625 = vsub.f32 %v1585, %v1617
        %v1626 = vsub.f32 %v1586, %v1618
        %v1627 = vmul.f32 %v1619, 1.442695
        %v1628 = vpow.pop %v1627
        %v1629 = vmul.f32 %v1620, 1.442695
        %v1630 = vpow.pop %v1629
        %v1631 = vmul.f32 %v1621, 1.442695
        %v1632 = vpow.pop %v1631
        %v1633 = vmul.f32 %v1622, 1.442695
        %v1634 = vpow.pop %v1633
        %v1635 = vmul.f32 %v1623, 1.442695
        %v1636 = vpow.pop %v1635
        %v1637 = vmul.f32 %v1624, 1.442695
        %v1638 = vpow.pop %v1637
        %v1639 = vmul.f32 %v1625, 1.442695
        %v1640 = vpow.pop %v1639
        %v1641 = vmul.f32 %v1626, 1.442695
        %v1642 = vpow.pop %v1641
        %1644 = vset.pattern.permute.xlu0 0
        %1645 = vperm.xlu0 %1644, %v1611
        %v1646 = vpop.permute.xlu0 %1645
        %1649 = vset.pattern.permute.xlu0 0
        %1650 = vperm.xlu0 %1649, %v1612
        %v1651 = vpop.permute.xlu0 %1650
        %1654 = vset.pattern.permute.xlu0 0
        %1655 = vperm.xlu0 %1654, %v1613
        %v1656 = vpop.permute.xlu0 %1655
        %1659 = vset.pattern.permute.xlu0 0
        %1660 = vperm.xlu0 %1659, %v1614
        %v1661 = vpop.permute.xlu0 %1660
        %1664 = vset.pattern.permute.xlu0 0
        %1665 = vperm.xlu0 %1664, %v1615
        %v1666 = vpop.permute.xlu0 %1665
        %1669 = vset.pattern.permute.xlu0 0
        %1670 = vperm.xlu0 %1669, %v1616
        %v1671 = vpop.permute.xlu0 %1670
        %1674 = vset.pattern.permute.xlu0 0
        %1675 = vperm.xlu0 %1674, %v1617
        %v1676 = vpop.permute.xlu0 %1675
        %1679 = vset.pattern.permute.xlu0 0
        %1680 = vperm.xlu0 %1679, %v1618
        %v1681 = vpop.permute.xlu0 %1680
        %v1683 = vsub.f32 %v1548, %v1646
        %v1684 = vsub.f32 %v1551, %v1651
        %v1685 = vsub.f32 %v1556, %v1656
        %v1686 = vsub.f32 %v1559, %v1661
        %v1687 = vsub.f32 %v1564, %v1666
        %v1688 = vsub.f32 %v1567, %v1671
        %v1689 = vsub.f32 %v1572, %v1676
        %v1690 = vsub.f32 %v1575, %v1681
        %v1691 = vmul.f32 %v1683, 1.442695
        %v1692 = vpow.pop %v1691
        %v1693 = vmul.f32 %v1684, 1.442695
        %v1694 = vpow.pop %v1693
        %v1695 = vmul.f32 %v1685, 1.442695
        %v1696 = vpow.pop %v1695
        %v1697 = vmul.f32 %v1686, 1.442695
        %v1698 = vpow.pop %v1697
        %v1699 = vmul.f32 %v1687, 1.442695
        %v1700 = vpow.pop %v1699
        %v1701 = vmul.f32 %v1688, 1.442695
        %v1702 = vpow.pop %v1701
        %v1703 = vmul.f32 %v1689, 1.442695
        %v1704 = vpow.pop %v1703
        %v1705 = vmul.f32 %v1690, 1.442695
        %v1706 = vpow.pop %v1705
        %s1707 = scalar_lea.vmem [#allocation3], 128
        %v1708 = vld [vmem:[%s1707] sm:$0xff]
        %v1709 = vld [vmem:[%s1707 + $0x8] sm:$0xff]
        %v1710 = vld [vmem:[%s1707 + $0x10] sm:$0xff]
        %v1711 = vld [vmem:[%s1707 + $0x18] sm:$0xff]
        %v1712 = vld [vmem:[%s1707 + $0x20] sm:$0xff]
        %v1713 = vld [vmem:[%s1707 + $0x28] sm:$0xff]
        %v1714 = vld [vmem:[%s1707 + $0x30] sm:$0xff]
        %v1715 = vld [vmem:[%s1707 + $0x38] sm:$0xff]
        %v1716 = vmul.f32 %v1628, %v1708
        %v1717 = vmul.f32 %v1630, %v1709
        %v1718 = vmul.f32 %v1632, %v1710
        %v1719 = vmul.f32 %v1634, %v1711
        %v1720 = vmul.f32 %v1636, %v1712
        %v1721 = vmul.f32 %v1638, %v1713
        %v1722 = vmul.f32 %v1640, %v1714
        %v1723 = vmul.f32 %v1642, %v1715
        %v1724 = vsel %vm645, %v1692, 0.0
        %1725 = vadd.xlane.f32.xlu0 %v1724
        %v1726 = vpop.xlane.xlu0 %1725
        %v1727 = vsel %vm645, %v1694, 0.0
        %1728 = vadd.xlane.f32.xlu0 %v1727
        %v1729 = vpop.xlane.xlu0 %1728
        %v1730 = vsel %vm645, %v1696, 0.0
        %1731 = vadd.xlane.f32.xlu0 %v1730
        %v1732 = vpop.xlane.xlu0 %1731
        %v1733 = vsel %vm645, %v1698, 0.0
        %1734 = vadd.xlane.f32.xlu0 %v1733
        %v1735 = vpop.xlane.xlu0 %1734
        %v1736 = vsel %vm645, %v1700, 0.0
        %1737 = vadd.xlane.f32.xlu0 %v1736
        %v1738 = vpop.xlane.xlu0 %1737
        %v1739 = vsel %vm645, %v1702, 0.0
        %1740 = vadd.xlane.f32.xlu0 %v1739
        %v1741 = vpop.xlane.xlu0 %1740
        %v1742 = vsel %vm645, %v1704, 0.0
        %1743 = vadd.xlane.f32.xlu0 %v1742
        %v1744 = vpop.xlane.xlu0 %1743
        %v1745 = vsel %vm645, %v1706, 0.0
        %1746 = vadd.xlane.f32.xlu0 %v1745
        %v1747 = vpop.xlane.xlu0 %1746
        %v1748 = vadd.f32 %v1716, %v1726
        %v1749 = vadd.f32 %v1717, %v1729
        %v1750 = vadd.f32 %v1718, %v1732
        %v1751 = vadd.f32 %v1719, %v1735
        %v1752 = vadd.f32 %v1720, %v1738
        %v1753 = vadd.f32 %v1721, %v1741
        %v1754 = vadd.f32 %v1722, %v1744
        %v1755 = vadd.f32 %v1723, %v1747
        %1756 = vst.msk [vmem:[%s1707] sm:$0xff] %vm814, %v1748
        %1757 = vst.msk [vmem:[%s1707 + $0x8] sm:$0xff] %vm814, %v1749
        %1758 = vst.msk [vmem:[%s1707 + $0x10] sm:$0xff] %vm814, %v1750
        %1759 = vst.msk [vmem:[%s1707 + $0x18] sm:$0xff] %vm814, %v1751
        %1760 = vst.msk [vmem:[%s1707 + $0x20] sm:$0xff] %vm814, %v1752
        %1761 = vst.msk [vmem:[%s1707 + $0x28] sm:$0xff] %vm814, %v1753
        %1762 = vst.msk [vmem:[%s1707 + $0x30] sm:$0xff] %vm814, %v1754
        %1763 = vst.msk [vmem:[%s1707 + $0x38] sm:$0xff] %vm814, %v1755
        %s1764 = scalar_lea.vmem [#allocation4], 128
        %v1765 = vld [vmem:[%s1764] sm:$0xff]
        %v1766 = vld [vmem:[%s1764 + $0x8] sm:$0xff]
        %v1767 = vld [vmem:[%s1764 + $0x10] sm:$0xff]
        %v1768 = vld [vmem:[%s1764 + $0x18] sm:$0xff]
        %v1769 = vld [vmem:[%s1764 + $0x20] sm:$0xff]
        %v1770 = vld [vmem:[%s1764 + $0x28] sm:$0xff]
        %v1771 = vld [vmem:[%s1764 + $0x30] sm:$0xff]
        %v1772 = vld [vmem:[%s1764 + $0x38] sm:$0xff]
        %1774 = vset.pattern.permute.xlu0 0
        %1775 = vperm.xlu0 %1774, %v1628
        %v1776 = vpop.permute.xlu0 %1775
        %1779 = vset.pattern.permute.xlu0 0
        %1780 = vperm.xlu0 %1779, %v1630
        %v1781 = vpop.permute.xlu0 %1780
        %1784 = vset.pattern.permute.xlu0 0
        %1785 = vperm.xlu0 %1784, %v1632
        %v1786 = vpop.permute.xlu0 %1785
        %1789 = vset.pattern.permute.xlu0 0
        %1790 = vperm.xlu0 %1789, %v1634
        %v1791 = vpop.permute.xlu0 %1790
        %1794 = vset.pattern.permute.xlu0 0
        %1795 = vperm.xlu0 %1794, %v1636
        %v1796 = vpop.permute.xlu0 %1795
        %1799 = vset.pattern.permute.xlu0 0
        %1800 = vperm.xlu0 %1799, %v1638
        %v1801 = vpop.permute.xlu0 %1800
        %1804 = vset.pattern.permute.xlu0 0
        %1805 = vperm.xlu0 %1804, %v1640
        %v1806 = vpop.permute.xlu0 %1805
        %1809 = vset.pattern.permute.xlu0 0
        %1810 = vperm.xlu0 %1809, %v1642
        %v1811 = vpop.permute.xlu0 %1810
        %v1813 = vmul.f32 %v1776, %v1765
        %v1814 = vmul.f32 %v1781, %v1766
        %v1815 = vmul.f32 %v1786, %v1767
        %v1816 = vmul.f32 %v1791, %v1768
        %v1817 = vmul.f32 %v1796, %v1769
        %v1818 = vmul.f32 %v1801, %v1770
        %v1819 = vmul.f32 %v1806, %v1771
        %v1820 = vmul.f32 %v1811, %v1772
        %v1821 = vpack.c.bf16 %v1694, %v1692
        %v1822 = vpack.c.bf16 %v1698, %v1696
        %v1823 = vpack.c.bf16 %v1702, %v1700
        %v1824 = vpack.c.bf16 %v1706, %v1704
        %1825 = vrot.lane.b32.xlu0 %v899, 64
        %v1826 = vpop.permute.xlu0 %1825
        %1827 = vrot.lane.b32.xlu0 %v900, 64
        %v1828 = vpop.permute.xlu0 %1827
        %1829 = vrot.lane.b32.xlu0 %v901, 64
        %v1830 = vpop.permute.xlu0 %1829
        %1831 = vrot.lane.b32.xlu0 %v902, 64
        %v1832 = vpop.permute.xlu0 %1831
        %v1838 = vsel %vm645, %v1821, 0
        %v1841 = vsel %vm645, %v1822, 0
        %v1844 = vsel %vm645, %v1823, 0
        %v1847 = vsel %vm645, %v1824, 0
        %1849 = vmatprep.subr.bf16.mxu0 0
        %1850 = vmatpush1.bf16.msra.mxu0 0
        %1851 = vmatprep.subr.bf16.mxu0 0
        %1852 = vmatpush1.bf16.msra.mxu0 0
        %1853 = vmatprep.subr.bf16.mxu0 0
        %1854 = vmatpush1.bf16.msra.mxu0 0
        %1855 = vmatprep.subr.bf16.mxu0 0
        %1856 = vmatpush1.bf16.msra.mxu0 0
        %1857 = vmatprep.subr.bf16.mxu0 0
        %1858 = vmatpush1.bf16.msra.mxu0 %v1832
        %1859 = vmatprep.subr.bf16.mxu0 0
        %1860 = vmatpush1.bf16.msra.mxu0 %v1830
        %1861 = vmatprep.subr.bf16.mxu0 0
        %1862 = vmatpush1.bf16.msra.mxu0 %v1828
        %1863 = vmatprep.subr.bf16.mxu0 0
        %1864 = vmatpush1.bf16.msra.mxu0 %v1826
        %1865 = vmatprep.subr.bf16.mxu0 0
        %1866 = vmatpush2.bf16.msra.mxu0 0
        %1867 = vmatprep.subr.bf16.mxu0 0
        %1868 = vmatpush2.bf16.msra.mxu0 0
        %1869 = vmatprep.subr.bf16.mxu0 0
        %1870 = vmatpush2.bf16.msra.mxu0 0
        %1871 = vmatprep.subr.bf16.mxu0 0
        %1872 = vmatpush2.bf16.msra.mxu0 0
        %1873 = vmatprep.subr.bf16.mxu0 0
        %1874 = vmatpush2.bf16.msra.mxu0 0
        %1875 = vmatprep.subr.bf16.mxu0 0
        %1876 = vmatpush2.bf16.msra.mxu0 0
        %1877 = vmatprep.subr.bf16.mxu0 0
        %1878 = vmatpush2.bf16.msra.mxu0 0
        %1879 = vmatprep.subr.bf16.mxu0 0
        %1880 = vmatpush2.bf16.msra.mxu0 0
        %1881 = vmatprep.mubr.bf16.mxu0 0
        %1882 = vmatmul.mubr.bf16.gmra.mxu0 %v1838
        %v1883 = vpop.f32.mrf.mxu0
        %v1884 = vadd.f32 0.0, %v1883
        %v1885 = vpop.f32.mrf.mxu0
        %v1886 = vpop.f32.mrf.mxu0
        %v1887 = vadd.f32 0.0, %v1886
        %v1888 = vpop.f32.mrf.mxu0
        %1889 = vmatprep.mubr.bf16.mxu0 0
        %1890 = vmatmul.mubr.bf16.gmra.mxu0 %v1841
        %v1891 = vpop.f32.mrf.mxu0
        %v1892 = vadd.f32 0.0, %v1891
        %v1893 = vpop.f32.mrf.mxu0
        %v1894 = vpop.f32.mrf.mxu0
        %v1895 = vadd.f32 0.0, %v1894
        %v1896 = vpop.f32.mrf.mxu0
        %1897 = vmatprep.mubr.bf16.mxu0 0
        %1898 = vmatmul.mubr.bf16.gmra.mxu0 %v1844
        %v1899 = vpop.f32.mrf.mxu0
        %v1900 = vadd.f32 0.0, %v1899
        %v1901 = vpop.f32.mrf.mxu0
        %v1902 = vpop.f32.mrf.mxu0
        %v1903 = vadd.f32 0.0, %v1902
        %v1904 = vpop.f32.mrf.mxu0
        %1905 = vmatprep.mubr.bf16.mxu0 0
        %1906 = vmatmul.mubr.bf16.gmra.mxu0 %v1847
        %v1907 = vpop.f32.mrf.mxu0
        %v1908 = vadd.f32 0.0, %v1907
        %v1909 = vpop.f32.mrf.mxu0
        %v1910 = vpop.f32.mrf.mxu0
        %v1911 = vadd.f32 0.0, %v1910
        %v1912 = vpop.f32.mrf.mxu0
        %1913 = vdwg.mxu0
        %v1914 = vadd.f32 %v1813, %v1884
        %v1915 = vadd.f32 %v1814, %v1887
        %v1916 = vadd.f32 %v1815, %v1892
        %v1917 = vadd.f32 %v1816, %v1895
        %v1918 = vadd.f32 %v1817, %v1900
        %v1919 = vadd.f32 %v1818, %v1903
        %v1920 = vadd.f32 %v1819, %v1908
        %v1921 = vadd.f32 %v1820, %v1911
        %1922 = vst.msk [vmem:[%s1764] sm:$0xff] %vm547, %v1914
        %1923 = vst.msk [vmem:[%s1764 + $0x8] sm:$0xff] %vm547, %v1915
        %1924 = vst.msk [vmem:[%s1764 + $0x10] sm:$0xff] %vm547, %v1916
        %1925 = vst.msk [vmem:[%s1764 + $0x18] sm:$0xff] %vm547, %v1917
        %1926 = vst.msk [vmem:[%s1764 + $0x20] sm:$0xff] %vm547, %v1918
        %1927 = vst.msk [vmem:[%s1764 + $0x28] sm:$0xff] %vm547, %v1919
        %1928 = vst.msk [vmem:[%s1764 + $0x30] sm:$0xff] %vm547, %v1920
        %1929 = vst.msk [vmem:[%s1764 + $0x38] sm:$0xff] %vm547, %v1921
        %1930 = vst.msk [vmem:[%s1578] sm:$0xff] %vm814, %v1611
        %1931 = vst.msk [vmem:[%s1578 + $0x8] sm:$0xff] %vm814, %v1612
        %1932 = vst.msk [vmem:[%s1578 + $0x10] sm:$0xff] %vm814, %v1613
        %1933 = vst.msk [vmem:[%s1578 + $0x18] sm:$0xff] %vm814, %v1614
        %1934 = vst.msk [vmem:[%s1578 + $0x20] sm:$0xff] %vm814, %v1615
        %1935 = vst.msk [vmem:[%s1578 + $0x28] sm:$0xff] %vm814, %v1616
        %1936 = vst.msk [vmem:[%s1578 + $0x30] sm:$0xff] %vm814, %v1617
        %1937 = vst.msk [vmem:[%s1578 + $0x38] sm:$0xff] %vm814, %v1618
        %1938 = vrot.lane.b32.xlu0 %v523, 32
        %v1939 = vpop.permute.xlu0 %1938
        %1940 = vrot.lane.b32.xlu0 %v524, 32
        %v1941 = vpop.permute.xlu0 %1940
        %1942 = vrot.lane.b32.xlu0 %v525, 32
        %v1943 = vpop.permute.xlu0 %1942
        %1944 = vrot.lane.b32.xlu0 %v526, 32
        %v1945 = vpop.permute.xlu0 %1944
        %1946 = vrot.lane.b32.xlu0 %v543, 32
        %v1947 = vpop.permute.xlu0 %1946
        %1948 = vrot.lane.b32.xlu0 %v544, 32
        %v1949 = vpop.permute.xlu0 %1948
        %1950 = vrot.lane.b32.xlu0 %v545, 32
        %v1951 = vpop.permute.xlu0 %1950
        %1952 = vrot.lane.b32.xlu0 %v546, 32
        %v1953 = vpop.permute.xlu0 %1952
        %v1955 = vsel %vm547, %v1939, 0
        %v1958 = vsel %vm547, %v1941, 0
        %v1961 = vsel %vm547, %v1943, 0
        %v1964 = vsel %vm547, %v1945, 0
        %v1967 = vsel %vm547, %v1947, 0
        %v1970 = vsel %vm547, %v1949, 0
        %v1973 = vsel %vm547, %v1951, 0
        %v1976 = vsel %vm547, %v1953, 0
        %1978 = vmatprep.subr.bf16.mxu0 0
        %1979 = vmatpush1.bf16.xpose.msra.mxu0 0
        %1980 = vmatprep.subr.bf16.mxu0 0
        %1981 = vmatpush1.bf16.xpose.msra.mxu0 0
        %1982 = vmatprep.subr.bf16.mxu0 0
        %1983 = vmatpush1.bf16.xpose.msra.mxu0 0
        %1984 = vmatprep.subr.bf16.mxu0 0
        %1985 = vmatpush1.bf16.xpose.msra.mxu0 0
        %1986 = vmatprep.subr.bf16.mxu0 0
        %1987 = vmatpush1.bf16.xpose.msra.mxu0 %v1976
        %1988 = vmatprep.subr.bf16.mxu0 0
        %1989 = vmatpush1.bf16.xpose.msra.mxu0 %v1973
        %1990 = vmatprep.subr.bf16.mxu0 0
        %1991 = vmatpush1.bf16.xpose.msra.mxu0 %v1970
        %1992 = vmatprep.subr.bf16.mxu0 0
        %1993 = vmatpush1.bf16.xpose.msra.mxu0 %v1967
        %1994 = vmatprep.subr.bf16.mxu0 0
        %1995 = vmatpush2.bf16.xpose.msra.mxu0 0
        %1996 = vmatprep.subr.bf16.mxu0 0
        %1997 = vmatpush2.bf16.xpose.msra.mxu0 0
        %1998 = vmatprep.subr.bf16.mxu0 0
        %1999 = vmatpush2.bf16.xpose.msra.mxu0 0
        %2000 = vmatprep.subr.bf16.mxu0 0
        %2001 = vmatpush2.bf16.xpose.msra.mxu0 0
        %2002 = vmatprep.subr.bf16.mxu0 0
        %2003 = vmatpush2.bf16.xpose.msra.mxu0 0
        %2004 = vmatprep.subr.bf16.mxu0 0
        %2005 = vmatpush2.bf16.xpose.msra.mxu0 0
        %2006 = vmatprep.subr.bf16.mxu0 0
        %2007 = vmatpush2.bf16.xpose.msra.mxu0 0
        %2008 = vmatprep.subr.bf16.mxu0 0
        %2009 = vmatpush2.bf16.xpose.msra.mxu0 0
        %2010 = vmatprep.mubr.bf16.mxu0 0
        %2011 = vmatmul.mubr.bf16.gmra.mxu0 %v1955
        %v2012 = vpop.f32.mrf.mxu0
        %v2013 = vadd.f32 0.0, %v2012
        %v2014 = vpop.f32.mrf.mxu0
        %v2015 = vpop.f32.mrf.mxu0
        %v2016 = vadd.f32 0.0, %v2015
        %v2017 = vpop.f32.mrf.mxu0
        %2018 = vmatprep.mubr.bf16.mxu0 0
        %2019 = vmatmul.mubr.bf16.gmra.mxu0 %v1958
        %v2020 = vpop.f32.mrf.mxu0
        %v2021 = vadd.f32 0.0, %v2020
        %v2022 = vpop.f32.mrf.mxu0
        %v2023 = vpop.f32.mrf.mxu0
        %v2024 = vadd.f32 0.0, %v2023
        %v2025 = vpop.f32.mrf.mxu0
        %2026 = vmatprep.mubr.bf16.mxu0 0
        %2027 = vmatmul.mubr.bf16.gmra.mxu0 %v1961
        %v2028 = vpop.f32.mrf.mxu0
        %v2029 = vadd.f32 0.0, %v2028
        %v2030 = vpop.f32.mrf.mxu0
        %v2031 = vpop.f32.mrf.mxu0
        %v2032 = vadd.f32 0.0, %v2031
        %v2033 = vpop.f32.mrf.mxu0
        %2034 = vmatprep.mubr.bf16.mxu0 0
        %2035 = vmatmul.mubr.bf16.gmra.mxu0 %v1964
        %v2036 = vpop.f32.mrf.mxu0
        %v2037 = vadd.f32 0.0, %v2036
        %v2038 = vpop.f32.mrf.mxu0
        %v2039 = vpop.f32.mrf.mxu0
        %v2040 = vadd.f32 0.0, %v2039
        %v2041 = vpop.f32.mrf.mxu0
        %2042 = vdwg.mxu0
        %s2043 = scalar_lea.vmem [#allocation2], 192
        %v2044 = vld [vmem:[%s2043] sm:$0xff]
        %v2045 = vld [vmem:[%s2043 + $0x8] sm:$0xff]
        %v2046 = vld [vmem:[%s2043 + $0x10] sm:$0xff]
        %v2047 = vld [vmem:[%s2043 + $0x18] sm:$0xff]
        %v2048 = vld [vmem:[%s2043 + $0x20] sm:$0xff]
        %v2049 = vld [vmem:[%s2043 + $0x28] sm:$0xff]
        %v2050 = vld [vmem:[%s2043 + $0x30] sm:$0xff]
        %v2051 = vld [vmem:[%s2043 + $0x38] sm:$0xff]
        %v2052 = vsel %vm645, %v2013, -inf
        %2053 = vmax.xlane.f32.xlu0 %v2052
        %v2054 = vpop.xlane.xlu0 %2053
        %v2055 = vsel %vm645, %v2016, -inf
        %2056 = vmax.xlane.f32.xlu0 %v2055
        %v2057 = vpop.xlane.xlu0 %2056
        %v2058 = vsel %vm645, %v2021, -inf
        %2059 = vmax.xlane.f32.xlu0 %v2058
        %v2060 = vpop.xlane.xlu0 %2059
        %v2061 = vsel %vm645, %v2024, -inf
        %2062 = vmax.xlane.f32.xlu0 %v2061
        %v2063 = vpop.xlane.xlu0 %2062
        %v2064 = vsel %vm645, %v2029, -inf
        %2065 = vmax.xlane.f32.xlu0 %v2064
        %v2066 = vpop.xlane.xlu0 %2065
        %v2067 = vsel %vm645, %v2032, -inf
        %2068 = vmax.xlane.f32.xlu0 %v2067
        %v2069 = vpop.xlane.xlu0 %2068
        %v2070 = vsel %vm645, %v2037, -inf
        %2071 = vmax.xlane.f32.xlu0 %v2070
        %v2072 = vpop.xlane.xlu0 %2071
        %v2073 = vsel %vm645, %v2040, -inf
        %2074 = vmax.xlane.f32.xlu0 %v2073
        %v2075 = vpop.xlane.xlu0 %2074
        %v2076 = vmax.f32 %v2044, %v2054
        %v2077 = vmax.f32 %v2045, %v2057
        %v2078 = vmax.f32 %v2046, %v2060
        %v2079 = vmax.f32 %v2047, %v2063
        %v2080 = vmax.f32 %v2048, %v2066
        %v2081 = vmax.f32 %v2049, %v2069
        %v2082 = vmax.f32 %v2050, %v2072
        %v2083 = vmax.f32 %v2051, %v2075
        %v2084 = vsub.f32 %v2044, %v2076
        %v2085 = vsub.f32 %v2045, %v2077
        %v2086 = vsub.f32 %v2046, %v2078
        %v2087 = vsub.f32 %v2047, %v2079
        %v2088 = vsub.f32 %v2048, %v2080
        %v2089 = vsub.f32 %v2049, %v2081
        %v2090 = vsub.f32 %v2050, %v2082
        %v2091 = vsub.f32 %v2051, %v2083
        %v2092 = vmul.f32 %v2084, 1.442695
        %v2093 = vpow.pop %v2092
        %v2094 = vmul.f32 %v2085, 1.442695
        %v2095 = vpow.pop %v2094
        %v2096 = vmul.f32 %v2086, 1.442695
        %v2097 = vpow.pop %v2096
        %v2098 = vmul.f32 %v2087, 1.442695
        %v2099 = vpow.pop %v2098
        %v2100 = vmul.f32 %v2088, 1.442695
        %v2101 = vpow.pop %v2100
        %v2102 = vmul.f32 %v2089, 1.442695
        %v2103 = vpow.pop %v2102
        %v2104 = vmul.f32 %v2090, 1.442695
        %v2105 = vpow.pop %v2104
        %v2106 = vmul.f32 %v2091, 1.442695
        %v2107 = vpow.pop %v2106
        %2109 = vset.pattern.permute.xlu0 0
        %2110 = vperm.xlu0 %2109, %v2076
        %v2111 = vpop.permute.xlu0 %2110
        %2114 = vset.pattern.permute.xlu0 0
        %2115 = vperm.xlu0 %2114, %v2077
        %v2116 = vpop.permute.xlu0 %2115
        %2119 = vset.pattern.permute.xlu0 0
        %2120 = vperm.xlu0 %2119, %v2078
        %v2121 = vpop.permute.xlu0 %2120
        %2124 = vset.pattern.permute.xlu0 0
        %2125 = vperm.xlu0 %2124, %v2079
        %v2126 = vpop.permute.xlu0 %2125
        %2129 = vset.pattern.permute.xlu0 0
        %2130 = vperm.xlu0 %2129, %v2080
        %v2131 = vpop.permute.xlu0 %2130
        %2134 = vset.pattern.permute.xlu0 0
        %2135 = vperm.xlu0 %2134, %v2081
        %v2136 = vpop.permute.xlu0 %2135
        %2139 = vset.pattern.permute.xlu0 0
        %2140 = vperm.xlu0 %2139, %v2082
        %v2141 = vpop.permute.xlu0 %2140
        %2144 = vset.pattern.permute.xlu0 0
        %2145 = vperm.xlu0 %2144, %v2083
        %v2146 = vpop.permute.xlu0 %2145
        %v2148 = vsub.f32 %v2013, %v2111
        %v2149 = vsub.f32 %v2016, %v2116
        %v2150 = vsub.f32 %v2021, %v2121
        %v2151 = vsub.f32 %v2024, %v2126
        %v2152 = vsub.f32 %v2029, %v2131
        %v2153 = vsub.f32 %v2032, %v2136
        %v2154 = vsub.f32 %v2037, %v2141
        %v2155 = vsub.f32 %v2040, %v2146
        %v2156 = vmul.f32 %v2148, 1.442695
        %v2157 = vpow.pop %v2156
        %v2158 = vmul.f32 %v2149, 1.442695
        %v2159 = vpow.pop %v2158
        %v2160 = vmul.f32 %v2150, 1.442695
        %v2161 = vpow.pop %v2160
        %v2162 = vmul.f32 %v2151, 1.442695
        %v2163 = vpow.pop %v2162
        %v2164 = vmul.f32 %v2152, 1.442695
        %v2165 = vpow.pop %v2164
        %v2166 = vmul.f32 %v2153, 1.442695
        %v2167 = vpow.pop %v2166
        %v2168 = vmul.f32 %v2154, 1.442695
        %v2169 = vpow.pop %v2168
        %v2170 = vmul.f32 %v2155, 1.442695
        %v2171 = vpow.pop %v2170
        %s2172 = scalar_lea.vmem [#allocation3], 192
        %v2173 = vld [vmem:[%s2172] sm:$0xff]
        %v2174 = vld [vmem:[%s2172 + $0x8] sm:$0xff]
        %v2175 = vld [vmem:[%s2172 + $0x10] sm:$0xff]
        %v2176 = vld [vmem:[%s2172 + $0x18] sm:$0xff]
        %v2177 = vld [vmem:[%s2172 + $0x20] sm:$0xff]
        %v2178 = vld [vmem:[%s2172 + $0x28] sm:$0xff]
        %v2179 = vld [vmem:[%s2172 + $0x30] sm:$0xff]
        %v2180 = vld [vmem:[%s2172 + $0x38] sm:$0xff]
        %v2181 = vmul.f32 %v2093, %v2173
        %v2182 = vmul.f32 %v2095, %v2174
        %v2183 = vmul.f32 %v2097, %v2175
        %v2184 = vmul.f32 %v2099, %v2176
        %v2185 = vmul.f32 %v2101, %v2177
        %v2186 = vmul.f32 %v2103, %v2178
        %v2187 = vmul.f32 %v2105, %v2179
        %v2188 = vmul.f32 %v2107, %v2180
        %v2189 = vsel %vm645, %v2157, 0.0
        %2190 = vadd.xlane.f32.xlu0 %v2189
        %v2191 = vpop.xlane.xlu0 %2190
        %v2192 = vsel %vm645, %v2159, 0.0
        %2193 = vadd.xlane.f32.xlu0 %v2192
        %v2194 = vpop.xlane.xlu0 %2193
        %v2195 = vsel %vm645, %v2161, 0.0
        %2196 = vadd.xlane.f32.xlu0 %v2195
        %v2197 = vpop.xlane.xlu0 %2196
        %v2198 = vsel %vm645, %v2163, 0.0
        %2199 = vadd.xlane.f32.xlu0 %v2198
        %v2200 = vpop.xlane.xlu0 %2199
        %v2201 = vsel %vm645, %v2165, 0.0
        %2202 = vadd.xlane.f32.xlu0 %v2201
        %v2203 = vpop.xlane.xlu0 %2202
        %v2204 = vsel %vm645, %v2167, 0.0
        %2205 = vadd.xlane.f32.xlu0 %v2204
        %v2206 = vpop.xlane.xlu0 %2205
        %v2207 = vsel %vm645, %v2169, 0.0
        %2208 = vadd.xlane.f32.xlu0 %v2207
        %v2209 = vpop.xlane.xlu0 %2208
        %v2210 = vsel %vm645, %v2171, 0.0
        %2211 = vadd.xlane.f32.xlu0 %v2210
        %v2212 = vpop.xlane.xlu0 %2211
        %v2213 = vadd.f32 %v2181, %v2191
        %v2214 = vadd.f32 %v2182, %v2194
        %v2215 = vadd.f32 %v2183, %v2197
        %v2216 = vadd.f32 %v2184, %v2200
        %v2217 = vadd.f32 %v2185, %v2203
        %v2218 = vadd.f32 %v2186, %v2206
        %v2219 = vadd.f32 %v2187, %v2209
        %v2220 = vadd.f32 %v2188, %v2212
        %2221 = vst.msk [vmem:[%s2172] sm:$0xff] %vm814, %v2213
        %2222 = vst.msk [vmem:[%s2172 + $0x8] sm:$0xff] %vm814, %v2214
        %2223 = vst.msk [vmem:[%s2172 + $0x10] sm:$0xff] %vm814, %v2215
        %2224 = vst.msk [vmem:[%s2172 + $0x18] sm:$0xff] %vm814, %v2216
        %2225 = vst.msk [vmem:[%s2172 + $0x20] sm:$0xff] %vm814, %v2217
        %2226 = vst.msk [vmem:[%s2172 + $0x28] sm:$0xff] %vm814, %v2218
        %2227 = vst.msk [vmem:[%s2172 + $0x30] sm:$0xff] %vm814, %v2219
        %2228 = vst.msk [vmem:[%s2172 + $0x38] sm:$0xff] %vm814, %v2220
        %s2229 = scalar_lea.vmem [#allocation4], 192
        %v2230 = vld [vmem:[%s2229] sm:$0xff]
        %v2231 = vld [vmem:[%s2229 + $0x8] sm:$0xff]
        %v2232 = vld [vmem:[%s2229 + $0x10] sm:$0xff]
        %v2233 = vld [vmem:[%s2229 + $0x18] sm:$0xff]
        %v2234 = vld [vmem:[%s2229 + $0x20] sm:$0xff]
        %v2235 = vld [vmem:[%s2229 + $0x28] sm:$0xff]
        %v2236 = vld [vmem:[%s2229 + $0x30] sm:$0xff]
        %v2237 = vld [vmem:[%s2229 + $0x38] sm:$0xff]
        %2239 = vset.pattern.permute.xlu0 0
        %2240 = vperm.xlu0 %2239, %v2093
        %v2241 = vpop.permute.xlu0 %2240
        %2244 = vset.pattern.permute.xlu0 0
        %2245 = vperm.xlu0 %2244, %v2095
        %v2246 = vpop.permute.xlu0 %2245
        %2249 = vset.pattern.permute.xlu0 0
        %2250 = vperm.xlu0 %2249, %v2097
        %v2251 = vpop.permute.xlu0 %2250
        %2254 = vset.pattern.permute.xlu0 0
        %2255 = vperm.xlu0 %2254, %v2099
        %v2256 = vpop.permute.xlu0 %2255
        %2259 = vset.pattern.permute.xlu0 0
        %2260 = vperm.xlu0 %2259, %v2101
        %v2261 = vpop.permute.xlu0 %2260
        %2264 = vset.pattern.permute.xlu0 0
        %2265 = vperm.xlu0 %2264, %v2103
        %v2266 = vpop.permute.xlu0 %2265
        %2269 = vset.pattern.permute.xlu0 0
        %2270 = vperm.xlu0 %2269, %v2105
        %v2271 = vpop.permute.xlu0 %2270
        %2274 = vset.pattern.permute.xlu0 0
        %2275 = vperm.xlu0 %2274, %v2107
        %v2276 = vpop.permute.xlu0 %2275
        %v2278 = vmul.f32 %v2241, %v2230
        %v2279 = vmul.f32 %v2246, %v2231
        %v2280 = vmul.f32 %v2251, %v2232
        %v2281 = vmul.f32 %v2256, %v2233
        %v2282 = vmul.f32 %v2261, %v2234
        %v2283 = vmul.f32 %v2266, %v2235
        %v2284 = vmul.f32 %v2271, %v2236
        %v2285 = vmul.f32 %v2276, %v2237
        %v2286 = vpack.c.bf16 %v2159, %v2157
        %v2287 = vpack.c.bf16 %v2163, %v2161
        %v2288 = vpack.c.bf16 %v2167, %v2165
        %v2289 = vpack.c.bf16 %v2171, %v2169
        %2290 = vrot.lane.b32.xlu0 %v899, 32
        %v2291 = vpop.permute.xlu0 %2290
        %2292 = vrot.lane.b32.xlu0 %v900, 32
        %v2293 = vpop.permute.xlu0 %2292
        %2294 = vrot.lane.b32.xlu0 %v901, 32
        %v2295 = vpop.permute.xlu0 %2294
        %2296 = vrot.lane.b32.xlu0 %v902, 32
        %v2297 = vpop.permute.xlu0 %2296
        %v2303 = vsel %vm645, %v2286, 0
        %v2306 = vsel %vm645, %v2287, 0
        %v2309 = vsel %vm645, %v2288, 0
        %v2312 = vsel %vm645, %v2289, 0
        %2314 = vmatprep.subr.bf16.mxu0 0
        %2315 = vmatpush1.bf16.msra.mxu0 0
        %2316 = vmatprep.subr.bf16.mxu0 0
        %2317 = vmatpush1.bf16.msra.mxu0 0
        %2318 = vmatprep.subr.bf16.mxu0 0
        %2319 = vmatpush1.bf16.msra.mxu0 0
        %2320 = vmatprep.subr.bf16.mxu0 0
        %2321 = vmatpush1.bf16.msra.mxu0 0
        %2322 = vmatprep.subr.bf16.mxu0 0
        %2323 = vmatpush1.bf16.msra.mxu0 %v2297
        %2324 = vmatprep.subr.bf16.mxu0 0
        %2325 = vmatpush1.bf16.msra.mxu0 %v2295
        %2326 = vmatprep.subr.bf16.mxu0 0
        %2327 = vmatpush1.bf16.msra.mxu0 %v2293
        %2328 = vmatprep.subr.bf16.mxu0 0
        %2329 = vmatpush1.bf16.msra.mxu0 %v2291
        %2330 = vmatprep.subr.bf16.mxu0 0
        %2331 = vmatpush2.bf16.msra.mxu0 0
        %2332 = vmatprep.subr.bf16.mxu0 0
        %2333 = vmatpush2.bf16.msra.mxu0 0
        %2334 = vmatprep.subr.bf16.mxu0 0
        %2335 = vmatpush2.bf16.msra.mxu0 0
        %2336 = vmatprep.subr.bf16.mxu0 0
        %2337 = vmatpush2.bf16.msra.mxu0 0
        %2338 = vmatprep.subr.bf16.mxu0 0
        %2339 = vmatpush2.bf16.msra.mxu0 0
        %2340 = vmatprep.subr.bf16.mxu0 0
        %2341 = vmatpush2.bf16.msra.mxu0 0
        %2342 = vmatprep.subr.bf16.mxu0 0
        %2343 = vmatpush2.bf16.msra.mxu0 0
        %2344 = vmatprep.subr.bf16.mxu0 0
        %2345 = vmatpush2.bf16.msra.mxu0 0
        %2346 = vmatprep.mubr.bf16.mxu0 0
        %2347 = vmatmul.mubr.bf16.gmra.mxu0 %v2303
        %v2348 = vpop.f32.mrf.mxu0
        %v2349 = vadd.f32 0.0, %v2348
        %v2350 = vpop.f32.mrf.mxu0
        %v2351 = vpop.f32.mrf.mxu0
        %v2352 = vadd.f32 0.0, %v2351
        %v2353 = vpop.f32.mrf.mxu0
        %2354 = vmatprep.mubr.bf16.mxu0 0
        %2355 = vmatmul.mubr.bf16.gmra.mxu0 %v2306
        %v2356 = vpop.f32.mrf.mxu0
        %v2357 = vadd.f32 0.0, %v2356
        %v2358 = vpop.f32.mrf.mxu0
        %v2359 = vpop.f32.mrf.mxu0
        %v2360 = vadd.f32 0.0, %v2359
        %v2361 = vpop.f32.mrf.mxu0
        %2362 = vmatprep.mubr.bf16.mxu0 0
        %2363 = vmatmul.mubr.bf16.gmra.mxu0 %v2309
        %v2364 = vpop.f32.mrf.mxu0
        %v2365 = vadd.f32 0.0, %v2364
        %v2366 = vpop.f32.mrf.mxu0
        %v2367 = vpop.f32.mrf.mxu0
        %v2368 = vadd.f32 0.0, %v2367
        %v2369 = vpop.f32.mrf.mxu0
        %2370 = vmatprep.mubr.bf16.mxu0 0
        %2371 = vmatmul.mubr.bf16.gmra.mxu0 %v2312
        %v2372 = vpop.f32.mrf.mxu0
        %v2373 = vadd.f32 0.0, %v2372
        %v2374 = vpop.f32.mrf.mxu0
        %v2375 = vpop.f32.mrf.mxu0
        %v2376 = vadd.f32 0.0, %v2375
        %v2377 = vpop.f32.mrf.mxu0
        %2378 = vdwg.mxu0
        %v2379 = vadd.f32 %v2278, %v2349
        %v2380 = vadd.f32 %v2279, %v2352
        %v2381 = vadd.f32 %v2280, %v2357
        %v2382 = vadd.f32 %v2281, %v2360
        %v2383 = vadd.f32 %v2282, %v2365
        %v2384 = vadd.f32 %v2283, %v2368
        %v2385 = vadd.f32 %v2284, %v2373
        %v2386 = vadd.f32 %v2285, %v2376
        %2387 = vst.msk [vmem:[%s2229] sm:$0xff] %vm547, %v2379
        %2388 = vst.msk [vmem:[%s2229 + $0x8] sm:$0xff] %vm547, %v2380
        %2389 = vst.msk [vmem:[%s2229 + $0x10] sm:$0xff] %vm547, %v2381
        %2390 = vst.msk [vmem:[%s2229 + $0x18] sm:$0xff] %vm547, %v2382
        %2391 = vst.msk [vmem:[%s2229 + $0x20] sm:$0xff] %vm547, %v2383
        %2392 = vst.msk [vmem:[%s2229 + $0x28] sm:$0xff] %vm547, %v2384
        %2393 = vst.msk [vmem:[%s2229 + $0x30] sm:$0xff] %vm547, %v2385
        %2394 = vst.msk [vmem:[%s2229 + $0x38] sm:$0xff] %vm547, %v2386
        %2395 = vst.msk [vmem:[%s2043] sm:$0xff] %vm814, %v2076
        %2396 = vst.msk [vmem:[%s2043 + $0x8] sm:$0xff] %vm814, %v2077
        %2397 = vst.msk [vmem:[%s2043 + $0x10] sm:$0xff] %vm814, %v2078
        %2398 = vst.msk [vmem:[%s2043 + $0x18] sm:$0xff] %vm814, %v2079
        %2399 = vst.msk [vmem:[%s2043 + $0x20] sm:$0xff] %vm814, %v2080
        %2400 = vst.msk [vmem:[%s2043 + $0x28] sm:$0xff] %vm814, %v2081
        %2401 = vst.msk [vmem:[%s2043 + $0x30] sm:$0xff] %vm814, %v2082
        %2402 = vst.msk [vmem:[%s2043 + $0x38] sm:$0xff] %vm814, %v2083
      $region40: #{_lambda_.12} parent=31 // pred_fallthru
        _
      %p2403 = scmp.eq.s32.totalorder %s23, %s22
      // Predicated region
      $region41: #{_lambda_.12} parent=31 // pred_check
        %p2404 = pneg %p2403
      $region42: #{_lambda_.12} parent=31 // pred_check_branch
        %2406 = sbr.rel (%p2404) target = $region44
      $region43: #{_lambda_.12} parent=31 // pred_region
        %v2407 = vld [vmem:[%s324] sm:$0xf]
        %v2408 = vld [vmem:[%s324 + $0x4] sm:$0xf]
        %v2409 = vld [vmem:[%s324 + $0x8] sm:$0xf]
        %v2410 = vld [vmem:[%s324 + $0xc] sm:$0xf]
        %v2411 = vld [vmem:[%s324 + $0x10] sm:$0xf]
        %v2412 = vld [vmem:[%s324 + $0x14] sm:$0xf]
        %v2413 = vld [vmem:[%s324 + $0x18] sm:$0xf]
        %v2414 = vld [vmem:[%s324 + $0x1c] sm:$0xf]
        %v2415 = vld [vmem:[%s340] sm:$0xf]
        %v2416 = vld [vmem:[%s340 + $0x4] sm:$0xf]
        %v2417 = vld [vmem:[%s340 + $0x8] sm:$0xf]
        %v2418 = vld [vmem:[%s340 + $0xc] sm:$0xf]
        %v2419 = vld [vmem:[%s340 + $0x10] sm:$0xf]
        %v2420 = vld [vmem:[%s340 + $0x14] sm:$0xf]
        %v2421 = vld [vmem:[%s340 + $0x18] sm:$0xf]
        %v2422 = vld [vmem:[%s340 + $0x1c] sm:$0xf]
        %v2423 = vld [vmem:[%s358] sm:$0xf]
        %v2424 = vld [vmem:[%s358 + $0x4] sm:$0xf]
        %v2425 = vld [vmem:[%s358 + $0x8] sm:$0xf]
        %v2426 = vld [vmem:[%s358 + $0xc] sm:$0xf]
        %v2427 = vld [vmem:[%s358 + $0x10] sm:$0xf]
        %v2428 = vld [vmem:[%s358 + $0x14] sm:$0xf]
        %v2429 = vld [vmem:[%s358 + $0x18] sm:$0xf]
        %v2430 = vld [vmem:[%s358 + $0x1c] sm:$0xf]
        %v2431 = vlaneseq
        %v2432 = vshrl.u32 %v2431, 7
        %v2433 = vadd.s32 %v2432, 8
        %v2434 = vadd.s32 %v2432, 16
        %v2435 = vadd.s32 %v2432, 24
        %v2436 = vadd.s32 %v2432, 32
        %v2437 = vadd.s32 %v2432, 40
        %v2438 = vadd.s32 %v2432, 48
        %v2439 = vadd.s32 %v2432, 56
        %v2440 = vlaneseq
        %v2441 = vand.u32 %v2440, 127
        %vm2442 = vcmp.le.s32.totalorder %v2441, %v2432
        %vm2443 = vcmp.le.s32.totalorder %v2441, %v2433
        %vm2444 = vcmp.le.s32.totalorder %v2441, %v2434
        %vm2445 = vcmp.le.s32.totalorder %v2441, %v2435
        %vm2446 = vcmp.le.s32.totalorder %v2441, %v2436
        %vm2447 = vcmp.le.s32.totalorder %v2441, %v2437
        %vm2448 = vcmp.le.s32.totalorder %v2441, %v2438
        %vm2449 = vcmp.le.s32.totalorder %v2441, %v2439
        %v2458 = vunpack.c.l.b16 %v2407
        %v2459 = vunpack.c.l.b16 %v2408
        %v2460 = vunpack.c.l.b16 %v2409
        %v2461 = vunpack.c.l.b16 %v2410
        %v2462 = vunpack.c.l.b16 %v2411
        %v2463 = vunpack.c.l.b16 %v2412
        %v2464 = vunpack.c.l.b16 %v2413
        %v2465 = vunpack.c.l.b16 %v2414
        %v2466 = vpack.c.b16 %v2459, %v2458
        %v2467 = vpack.c.b16 %v2461, %v2460
        %v2468 = vpack.c.b16 %v2463, %v2462
        %v2469 = vpack.c.b16 %v2465, %v2464
        %v2478 = vunpack.c.l.b16 %v2415
        %v2479 = vunpack.c.l.b16 %v2416
        %v2480 = vunpack.c.l.b16 %v2417
        %v2481 = vunpack.c.l.b16 %v2418
        %v2482 = vunpack.c.l.b16 %v2419
        %v2483 = vunpack.c.l.b16 %v2420
        %v2484 = vunpack.c.l.b16 %v2421
        %v2485 = vunpack.c.l.b16 %v2422
        %v2486 = vpack.c.b16 %v2479, %v2478
        %v2487 = vpack.c.b16 %v2481, %v2480
        %v2488 = vpack.c.b16 %v2483, %v2482
        %v2489 = vpack.c.b16 %v2485, %v2484
        %vm2490 = vcmask 261120
        %v2492 = vsel %vm2490, %v2466, 0
        %v2495 = vsel %vm2490, %v2467, 0
        %v2498 = vsel %vm2490, %v2468, 0
        %v2501 = vsel %vm2490, %v2469, 0
        %v2504 = vsel %vm2490, %v2486, 0
        %v2507 = vsel %vm2490, %v2487, 0
        %v2510 = vsel %vm2490, %v2488, 0
        %v2513 = vsel %vm2490, %v2489, 0
        %2515 = vmatprep.subr.bf16.mxu0 0
        %2516 = vmatpush1.bf16.xpose.msra.mxu0 0
        %2517 = vmatprep.subr.bf16.mxu0 0
        %2518 = vmatpush1.bf16.xpose.msra.mxu0 0
        %2519 = vmatprep.subr.bf16.mxu0 0
        %2520 = vmatpush1.bf16.xpose.msra.mxu0 0
        %2521 = vmatprep.subr.bf16.mxu0 0
        %2522 = vmatpush1.bf16.xpose.msra.mxu0 0
        %2523 = vmatprep.subr.bf16.mxu0 0
        %2524 = vmatpush1.bf16.xpose.msra.mxu0 %v2513
        %2525 = vmatprep.subr.bf16.mxu0 0
        %2526 = vmatpush1.bf16.xpose.msra.mxu0 %v2510
        %2527 = vmatprep.subr.bf16.mxu0 0
        %2528 = vmatpush1.bf16.xpose.msra.mxu0 %v2507
        %2529 = vmatprep.subr.bf16.mxu0 0
        %2530 = vmatpush1.bf16.xpose.msra.mxu0 %v2504
        %2531 = vmatprep.subr.bf16.mxu0 0
        %2532 = vmatpush2.bf16.xpose.msra.mxu0 0
        %2533 = vmatprep.subr.bf16.mxu0 0
        %2534 = vmatpush2.bf16.xpose.msra.mxu0 0
        %2535 = vmatprep.subr.bf16.mxu0 0
        %2536 = vmatpush2.bf16.xpose.msra.mxu0 0
        %2537 = vmatprep.subr.bf16.mxu0 0
        %2538 = vmatpush2.bf16.xpose.msra.mxu0 0
        %2539 = vmatprep.subr.bf16.mxu0 0
        %2540 = vmatpush2.bf16.xpose.msra.mxu0 0
        %2541 = vmatprep.subr.bf16.mxu0 0
        %2542 = vmatpush2.bf16.xpose.msra.mxu0 0
        %2543 = vmatprep.subr.bf16.mxu0 0
        %2544 = vmatpush2.bf16.xpose.msra.mxu0 0
        %2545 = vmatprep.subr.bf16.mxu0 0
        %2546 = vmatpush2.bf16.xpose.msra.mxu0 0
        %2547 = vmatprep.mubr.bf16.mxu0 0
        %2548 = vmatmul.mubr.bf16.gmra.mxu0 %v2492
        %v2549 = vpop.f32.mrf.mxu0
        %v2550 = vadd.f32 0.0, %v2549
        %v2551 = vpop.f32.mrf.mxu0
        %v2552 = vpop.f32.mrf.mxu0
        %v2553 = vadd.f32 0.0, %v2552
        %v2554 = vpop.f32.mrf.mxu0
        %2555 = vmatprep.mubr.bf16.mxu0 0
        %2556 = vmatmul.mubr.bf16.gmra.mxu0 %v2495
        %v2557 = vpop.f32.mrf.mxu0
        %v2558 = vadd.f32 0.0, %v2557
        %v2559 = vpop.f32.mrf.mxu0
        %v2560 = vpop.f32.mrf.mxu0
        %v2561 = vadd.f32 0.0, %v2560
        %v2562 = vpop.f32.mrf.mxu0
        %2563 = vmatprep.mubr.bf16.mxu0 0
        %2564 = vmatmul.mubr.bf16.gmra.mxu0 %v2498
        %v2565 = vpop.f32.mrf.mxu0
        %v2566 = vadd.f32 0.0, %v2565
        %v2567 = vpop.f32.mrf.mxu0
        %v2568 = vpop.f32.mrf.mxu0
        %v2569 = vadd.f32 0.0, %v2568
        %v2570 = vpop.f32.mrf.mxu0
        %2571 = vmatprep.mubr.bf16.mxu0 0
        %2572 = vmatmul.mubr.bf16.gmra.mxu0 %v2501
        %v2573 = vpop.f32.mrf.mxu0
        %v2574 = vadd.f32 0.0, %v2573
        %v2575 = vpop.f32.mrf.mxu0
        %v2576 = vpop.f32.mrf.mxu0
        %v2577 = vadd.f32 0.0, %v2576
        %v2578 = vpop.f32.mrf.mxu0
        %2579 = vdwg.mxu0
        %v2580 = vsel %vm2442, %v2550, -1e+30
        %v2581 = vsel %vm2443, %v2553, -1e+30
        %v2582 = vsel %vm2444, %v2558, -1e+30
        %v2583 = vsel %vm2445, %v2561, -1e+30
        %v2584 = vsel %vm2446, %v2566, -1e+30
        %v2585 = vsel %vm2447, %v2569, -1e+30
        %v2586 = vsel %vm2448, %v2574, -1e+30
        %v2587 = vsel %vm2449, %v2577, -1e+30
        %v2588 = vld [vmem:[#allocation2] sm:$0xff]
        %v2589 = vld [vmem:[#allocation2 + $0x8] sm:$0xff]
        %v2590 = vld [vmem:[#allocation2 + $0x10] sm:$0xff]
        %v2591 = vld [vmem:[#allocation2 + $0x18] sm:$0xff]
        %v2592 = vld [vmem:[#allocation2 + $0x20] sm:$0xff]
        %v2593 = vld [vmem:[#allocation2 + $0x28] sm:$0xff]
        %v2594 = vld [vmem:[#allocation2 + $0x30] sm:$0xff]
        %v2595 = vld [vmem:[#allocation2 + $0x38] sm:$0xff]
        %vm2596 = vcmask 523264
        %v2597 = vsel %vm2596, %v2580, -inf
        %2598 = vmax.xlane.f32.xlu0 %v2597
        %v2599 = vpop.xlane.xlu0 %2598
        %v2600 = vsel %vm2596, %v2581, -inf
        %2601 = vmax.xlane.f32.xlu0 %v2600
        %v2602 = vpop.xlane.xlu0 %2601
        %v2603 = vsel %vm2596, %v2582, -inf
        %2604 = vmax.xlane.f32.xlu0 %v2603
        %v2605 = vpop.xlane.xlu0 %2604
        %v2606 = vsel %vm2596, %v2583, -inf
        %2607 = vmax.xlane.f32.xlu0 %v2606
        %v2608 = vpop.xlane.xlu0 %2607
        %v2609 = vsel %vm2596, %v2584, -inf
        %2610 = vmax.xlane.f32.xlu0 %v2609
        %v2611 = vpop.xlane.xlu0 %2610
        %v2612 = vsel %vm2596, %v2585, -inf
        %2613 = vmax.xlane.f32.xlu0 %v2612
        %v2614 = vpop.xlane.xlu0 %2613
        %v2615 = vsel %vm2596, %v2586, -inf
        %2616 = vmax.xlane.f32.xlu0 %v2615
        %v2617 = vpop.xlane.xlu0 %2616
        %v2618 = vsel %vm2596, %v2587, -inf
        %2619 = vmax.xlane.f32.xlu0 %v2618
        %v2620 = vpop.xlane.xlu0 %2619
        %v2621 = vmax.f32 %v2588, %v2599
        %v2622 = vmax.f32 %v2589, %v2602
        %v2623 = vmax.f32 %v2590, %v2605
        %v2624 = vmax.f32 %v2591, %v2608
        %v2625 = vmax.f32 %v2592, %v2611
        %v2626 = vmax.f32 %v2593, %v2614
        %v2627 = vmax.f32 %v2594, %v2617
        %v2628 = vmax.f32 %v2595, %v2620
        %v2629 = vsub.f32 %v2588, %v2621
        %v2630 = vsub.f32 %v2589, %v2622
        %v2631 = vsub.f32 %v2590, %v2623
        %v2632 = vsub.f32 %v2591, %v2624
        %v2633 = vsub.f32 %v2592, %v2625
        %v2634 = vsub.f32 %v2593, %v2626
        %v2635 = vsub.f32 %v2594, %v2627
        %v2636 = vsub.f32 %v2595, %v2628
        %v2637 = vmul.f32 %v2629, 1.442695
        %v2638 = vpow.pop %v2637
        %v2639 = vmul.f32 %v2630, 1.442695
        %v2640 = vpow.pop %v2639
        %v2641 = vmul.f32 %v2631, 1.442695
        %v2642 = vpow.pop %v2641
        %v2643 = vmul.f32 %v2632, 1.442695
        %v2644 = vpow.pop %v2643
        %v2645 = vmul.f32 %v2633, 1.442695
        %v2646 = vpow.pop %v2645
        %v2647 = vmul.f32 %v2634, 1.442695
        %v2648 = vpow.pop %v2647
        %v2649 = vmul.f32 %v2635, 1.442695
        %v2650 = vpow.pop %v2649
        %v2651 = vmul.f32 %v2636, 1.442695
        %v2652 = vpow.pop %v2651
        %2654 = vset.pattern.permute.xlu0 0
        %2655 = vperm.xlu0 %2654, %v2621
        %v2656 = vpop.permute.xlu0 %2655
        %2659 = vset.pattern.permute.xlu0 0
        %2660 = vperm.xlu0 %2659, %v2622
        %v2661 = vpop.permute.xlu0 %2660
        %2664 = vset.pattern.permute.xlu0 0
        %2665 = vperm.xlu0 %2664, %v2623
        %v2666 = vpop.permute.xlu0 %2665
        %2669 = vset.pattern.permute.xlu0 0
        %2670 = vperm.xlu0 %2669, %v2624
        %v2671 = vpop.permute.xlu0 %2670
        %2674 = vset.pattern.permute.xlu0 0
        %2675 = vperm.xlu0 %2674, %v2625
        %v2676 = vpop.permute.xlu0 %2675
        %2679 = vset.pattern.permute.xlu0 0
        %2680 = vperm.xlu0 %2679, %v2626
        %v2681 = vpop.permute.xlu0 %2680
        %2684 = vset.pattern.permute.xlu0 0
        %2685 = vperm.xlu0 %2684, %v2627
        %v2686 = vpop.permute.xlu0 %2685
        %2689 = vset.pattern.permute.xlu0 0
        %2690 = vperm.xlu0 %2689, %v2628
        %v2691 = vpop.permute.xlu0 %2690
        %v2693 = vsub.f32 %v2580, %v2656
        %v2694 = vsub.f32 %v2581, %v2661
        %v2695 = vsub.f32 %v2582, %v2666
        %v2696 = vsub.f32 %v2583, %v2671
        %v2697 = vsub.f32 %v2584, %v2676
        %v2698 = vsub.f32 %v2585, %v2681
        %v2699 = vsub.f32 %v2586, %v2686
        %v2700 = vsub.f32 %v2587, %v2691
        %v2701 = vmul.f32 %v2693, 1.442695
        %v2702 = vpow.pop %v2701
        %v2703 = vmul.f32 %v2694, 1.442695
        %v2704 = vpow.pop %v2703
        %v2705 = vmul.f32 %v2695, 1.442695
        %v2706 = vpow.pop %v2705
        %v2707 = vmul.f32 %v2696, 1.442695
        %v2708 = vpow.pop %v2707
        %v2709 = vmul.f32 %v2697, 1.442695
        %v2710 = vpow.pop %v2709
        %v2711 = vmul.f32 %v2698, 1.442695
        %v2712 = vpow.pop %v2711
        %v2713 = vmul.f32 %v2699, 1.442695
        %v2714 = vpow.pop %v2713
        %v2715 = vmul.f32 %v2700, 1.442695
        %v2716 = vpow.pop %v2715
        %v2717 = vld [vmem:[#allocation3] sm:$0xff]
        %v2718 = vld [vmem:[#allocation3 + $0x8] sm:$0xff]
        %v2719 = vld [vmem:[#allocation3 + $0x10] sm:$0xff]
        %v2720 = vld [vmem:[#allocation3 + $0x18] sm:$0xff]
        %v2721 = vld [vmem:[#allocation3 + $0x20] sm:$0xff]
        %v2722 = vld [vmem:[#allocation3 + $0x28] sm:$0xff]
        %v2723 = vld [vmem:[#allocation3 + $0x30] sm:$0xff]
        %v2724 = vld [vmem:[#allocation3 + $0x38] sm:$0xff]
        %v2725 = vmul.f32 %v2638, %v2717
        %v2726 = vmul.f32 %v2640, %v2718
        %v2727 = vmul.f32 %v2642, %v2719
        %v2728 = vmul.f32 %v2644, %v2720
        %v2729 = vmul.f32 %v2646, %v2721
        %v2730 = vmul.f32 %v2648, %v2722
        %v2731 = vmul.f32 %v2650, %v2723
        %v2732 = vmul.f32 %v2652, %v2724
        %v2733 = vsel %vm2596, %v2702, 0.0
        %2734 = vadd.xlane.f32.xlu0 %v2733
        %v2735 = vpop.xlane.xlu0 %2734
        %v2736 = vsel %vm2596, %v2704, 0.0
        %2737 = vadd.xlane.f32.xlu0 %v2736
        %v2738 = vpop.xlane.xlu0 %2737
        %v2739 = vsel %vm2596, %v2706, 0.0
        %2740 = vadd.xlane.f32.xlu0 %v2739
        %v2741 = vpop.xlane.xlu0 %2740
        %v2742 = vsel %vm2596, %v2708, 0.0
        %2743 = vadd.xlane.f32.xlu0 %v2742
        %v2744 = vpop.xlane.xlu0 %2743
        %v2745 = vsel %vm2596, %v2710, 0.0
        %2746 = vadd.xlane.f32.xlu0 %v2745
        %v2747 = vpop.xlane.xlu0 %2746
        %v2748 = vsel %vm2596, %v2712, 0.0
        %2749 = vadd.xlane.f32.xlu0 %v2748
        %v2750 = vpop.xlane.xlu0 %2749
        %v2751 = vsel %vm2596, %v2714, 0.0
        %2752 = vadd.xlane.f32.xlu0 %v2751
        %v2753 = vpop.xlane.xlu0 %2752
        %v2754 = vsel %vm2596, %v2716, 0.0
        %2755 = vadd.xlane.f32.xlu0 %v2754
        %v2756 = vpop.xlane.xlu0 %2755
        %v2757 = vadd.f32 %v2725, %v2735
        %v2758 = vadd.f32 %v2726, %v2738
        %v2759 = vadd.f32 %v2727, %v2741
        %v2760 = vadd.f32 %v2728, %v2744
        %v2761 = vadd.f32 %v2729, %v2747
        %v2762 = vadd.f32 %v2730, %v2750
        %v2763 = vadd.f32 %v2731, %v2753
        %v2764 = vadd.f32 %v2732, %v2756
        %vm2765 = vcmask 7168
        %2766 = vst.msk [vmem:[#allocation3] sm:$0xff] %vm2765, %v2757
        %2767 = vst.msk [vmem:[#allocation3 + $0x8] sm:$0xff] %vm2765, %v2758
        %2768 = vst.msk [vmem:[#allocation3 + $0x10] sm:$0xff] %vm2765, %v2759
        %2769 = vst.msk [vmem:[#allocation3 + $0x18] sm:$0xff] %vm2765, %v2760
        %2770 = vst.msk [vmem:[#allocation3 + $0x20] sm:$0xff] %vm2765, %v2761
        %2771 = vst.msk [vmem:[#allocation3 + $0x28] sm:$0xff] %vm2765, %v2762
        %2772 = vst.msk [vmem:[#allocation3 + $0x30] sm:$0xff] %vm2765, %v2763
        %2773 = vst.msk [vmem:[#allocation3 + $0x38] sm:$0xff] %vm2765, %v2764
        %v2774 = vld [vmem:[#allocation4] sm:$0xff]
        %v2775 = vld [vmem:[#allocation4 + $0x8] sm:$0xff]
        %v2776 = vld [vmem:[#allocation4 + $0x10] sm:$0xff]
        %v2777 = vld [vmem:[#allocation4 + $0x18] sm:$0xff]
        %v2778 = vld [vmem:[#allocation4 + $0x20] sm:$0xff]
        %v2779 = vld [vmem:[#allocation4 + $0x28] sm:$0xff]
        %v2780 = vld [vmem:[#allocation4 + $0x30] sm:$0xff]
        %v2781 = vld [vmem:[#allocation4 + $0x38] sm:$0xff]
        %2783 = vset.pattern.permute.xlu0 0
        %2784 = vperm.xlu0 %2783, %v2638
        %v2785 = vpop.permute.xlu0 %2784
        %2788 = vset.pattern.permute.xlu0 0
        %2789 = vperm.xlu0 %2788, %v2640
        %v2790 = vpop.permute.xlu0 %2789
        %2793 = vset.pattern.permute.xlu0 0
        %2794 = vperm.xlu0 %2793, %v2642
        %v2795 = vpop.permute.xlu0 %2794
        %2798 = vset.pattern.permute.xlu0 0
        %2799 = vperm.xlu0 %2798, %v2644
        %v2800 = vpop.permute.xlu0 %2799
        %2803 = vset.pattern.permute.xlu0 0
        %2804 = vperm.xlu0 %2803, %v2646
        %v2805 = vpop.permute.xlu0 %2804
        %2808 = vset.pattern.permute.xlu0 0
        %2809 = vperm.xlu0 %2808, %v2648
        %v2810 = vpop.permute.xlu0 %2809
        %2813 = vset.pattern.permute.xlu0 0
        %2814 = vperm.xlu0 %2813, %v2650
        %v2815 = vpop.permute.xlu0 %2814
        %2818 = vset.pattern.permute.xlu0 0
        %2819 = vperm.xlu0 %2818, %v2652
        %v2820 = vpop.permute.xlu0 %2819
        %v2822 = vmul.f32 %v2785, %v2774
        %v2823 = vmul.f32 %v2790, %v2775
        %v2824 = vmul.f32 %v2795, %v2776
        %v2825 = vmul.f32 %v2800, %v2777
        %v2826 = vmul.f32 %v2805, %v2778
        %v2827 = vmul.f32 %v2810, %v2779
        %v2828 = vmul.f32 %v2815, %v2780
        %v2829 = vmul.f32 %v2820, %v2781
        %v2830 = vpack.c.bf16 %v2704, %v2702
        %v2831 = vpack.c.bf16 %v2708, %v2706
        %v2832 = vpack.c.bf16 %v2712, %v2710
        %v2833 = vpack.c.bf16 %v2716, %v2714
        %v2842 = vunpack.c.l.b16 %v2423
        %v2843 = vunpack.c.l.b16 %v2424
        %v2844 = vunpack.c.l.b16 %v2425
        %v2845 = vunpack.c.l.b16 %v2426
        %v2846 = vunpack.c.l.b16 %v2427
        %v2847 = vunpack.c.l.b16 %v2428
        %v2848 = vunpack.c.l.b16 %v2429
        %v2849 = vunpack.c.l.b16 %v2430
        %v2850 = vpack.c.b16 %v2843, %v2842
        %v2851 = vpack.c.b16 %v2845, %v2844
        %v2852 = vpack.c.b16 %v2847, %v2846
        %v2853 = vpack.c.b16 %v2849, %v2848
        %v2859 = vsel %vm2596, %v2830, 0
        %v2862 = vsel %vm2596, %v2831, 0
        %v2865 = vsel %vm2596, %v2832, 0
        %v2868 = vsel %vm2596, %v2833, 0
        %2870 = vmatprep.subr.bf16.mxu0 0
        %2871 = vmatpush1.bf16.msra.mxu0 0
        %2872 = vmatprep.subr.bf16.mxu0 0
        %2873 = vmatpush1.bf16.msra.mxu0 0
        %2874 = vmatprep.subr.bf16.mxu0 0
        %2875 = vmatpush1.bf16.msra.mxu0 0
        %2876 = vmatprep.subr.bf16.mxu0 0
        %2877 = vmatpush1.bf16.msra.mxu0 0
        %2878 = vmatprep.subr.bf16.mxu0 0
        %2879 = vmatpush1.bf16.msra.mxu0 %v2853
        %2880 = vmatprep.subr.bf16.mxu0 0
        %2881 = vmatpush1.bf16.msra.mxu0 %v2852
        %2882 = vmatprep.subr.bf16.mxu0 0
        %2883 = vmatpush1.bf16.msra.mxu0 %v2851
        %2884 = vmatprep.subr.bf16.mxu0 0
        %2885 = vmatpush1.bf16.msra.mxu0 %v2850
        %2886 = vmatprep.subr.bf16.mxu0 0
        %2887 = vmatpush2.bf16.msra.mxu0 0
        %2888 = vmatprep.subr.bf16.mxu0 0
        %2889 = vmatpush2.bf16.msra.mxu0 0
        %2890 = vmatprep.subr.bf16.mxu0 0
        %2891 = vmatpush2.bf16.msra.mxu0 0
        %2892 = vmatprep.subr.bf16.mxu0 0
        %2893 = vmatpush2.bf16.msra.mxu0 0
        %2894 = vmatprep.subr.bf16.mxu0 0
        %2895 = vmatpush2.bf16.msra.mxu0 0
        %2896 = vmatprep.subr.bf16.mxu0 0
        %2897 = vmatpush2.bf16.msra.mxu0 0
        %2898 = vmatprep.subr.bf16.mxu0 0
        %2899 = vmatpush2.bf16.msra.mxu0 0
        %2900 = vmatprep.subr.bf16.mxu0 0
        %2901 = vmatpush2.bf16.msra.mxu0 0
        %2902 = vmatprep.mubr.bf16.mxu0 0
        %2903 = vmatmul.mubr.bf16.gmra.mxu0 %v2859
        %v2904 = vpop.f32.mrf.mxu0
        %v2905 = vadd.f32 0.0, %v2904
        %v2906 = vpop.f32.mrf.mxu0
        %v2907 = vpop.f32.mrf.mxu0
        %v2908 = vadd.f32 0.0, %v2907
        %v2909 = vpop.f32.mrf.mxu0
        %2910 = vmatprep.mubr.bf16.mxu0 0
        %2911 = vmatmul.mubr.bf16.gmra.mxu0 %v2862
        %v2912 = vpop.f32.mrf.mxu0
        %v2913 = vadd.f32 0.0, %v2912
        %v2914 = vpop.f32.mrf.mxu0
        %v2915 = vpop.f32.mrf.mxu0
        %v2916 = vadd.f32 0.0, %v2915
        %v2917 = vpop.f32.mrf.mxu0
        %2918 = vmatprep.mubr.bf16.mxu0 0
        %2919 = vmatmul.mubr.bf16.gmra.mxu0 %v2865
        %v2920 = vpop.f32.mrf.mxu0
        %v2921 = vadd.f32 0.0, %v2920
        %v2922 = vpop.f32.mrf.mxu0
        %v2923 = vpop.f32.mrf.mxu0
        %v2924 = vadd.f32 0.0, %v2923
        %v2925 = vpop.f32.mrf.mxu0
        %2926 = vmatprep.mubr.bf16.mxu0 0
        %2927 = vmatmul.mubr.bf16.gmra.mxu0 %v2868
        %v2928 = vpop.f32.mrf.mxu0
        %v2929 = vadd.f32 0.0, %v2928
        %v2930 = vpop.f32.mrf.mxu0
        %v2931 = vpop.f32.mrf.mxu0
        %v2932 = vadd.f32 0.0, %v2931
        %v2933 = vpop.f32.mrf.mxu0
        %2934 = vdwg.mxu0
        %v2935 = vadd.f32 %v2822, %v2905
        %v2936 = vadd.f32 %v2823, %v2908
        %v2937 = vadd.f32 %v2824, %v2913
        %v2938 = vadd.f32 %v2825, %v2916
        %v2939 = vadd.f32 %v2826, %v2921
        %v2940 = vadd.f32 %v2827, %v2924
        %v2941 = vadd.f32 %v2828, %v2929
        %v2942 = vadd.f32 %v2829, %v2932
        %2943 = vst.msk [vmem:[#allocation4] sm:$0xff] %vm2490, %v2935
        %2944 = vst.msk [vmem:[#allocation4 + $0x8] sm:$0xff] %vm2490, %v2936
        %2945 = vst.msk [vmem:[#allocation4 + $0x10] sm:$0xff] %vm2490, %v2937
        %2946 = vst.msk [vmem:[#allocation4 + $0x18] sm:$0xff] %vm2490, %v2938
        %2947 = vst.msk [vmem:[#allocation4 + $0x20] sm:$0xff] %vm2490, %v2939
        %2948 = vst.msk [vmem:[#allocation4 + $0x28] sm:$0xff] %vm2490, %v2940
        %2949 = vst.msk [vmem:[#allocation4 + $0x30] sm:$0xff] %vm2490, %v2941
        %2950 = vst.msk [vmem:[#allocation4 + $0x38] sm:$0xff] %vm2490, %v2942
        %2951 = vst.msk [vmem:[#allocation2] sm:$0xff] %vm2765, %v2621
        %2952 = vst.msk [vmem:[#allocation2 + $0x8] sm:$0xff] %vm2765, %v2622
        %2953 = vst.msk [vmem:[#allocation2 + $0x10] sm:$0xff] %vm2765, %v2623
        %2954 = vst.msk [vmem:[#allocation2 + $0x18] sm:$0xff] %vm2765, %v2624
        %2955 = vst.msk [vmem:[#allocation2 + $0x20] sm:$0xff] %vm2765, %v2625
        %2956 = vst.msk [vmem:[#allocation2 + $0x28] sm:$0xff] %vm2765, %v2626
        %2957 = vst.msk [vmem:[#allocation2 + $0x30] sm:$0xff] %vm2765, %v2627
        %2958 = vst.msk [vmem:[#allocation2 + $0x38] sm:$0xff] %vm2765, %v2628
        %2959 = vrot.lane.b32.xlu0 %v2466, 96
        %v2960 = vpop.permute.xlu0 %2959
        %2961 = vrot.lane.b32.xlu0 %v2467, 96
        %v2962 = vpop.permute.xlu0 %2961
        %2963 = vrot.lane.b32.xlu0 %v2468, 96
        %v2964 = vpop.permute.xlu0 %2963
        %2965 = vrot.lane.b32.xlu0 %v2469, 96
        %v2966 = vpop.permute.xlu0 %2965
        %2967 = vrot.lane.b32.xlu0 %v2486, 96
        %v2968 = vpop.permute.xlu0 %2967
        %2969 = vrot.lane.b32.xlu0 %v2487, 96
        %v2970 = vpop.permute.xlu0 %2969
        %2971 = vrot.lane.b32.xlu0 %v2488, 96
        %v2972 = vpop.permute.xlu0 %2971
        %2973 = vrot.lane.b32.xlu0 %v2489, 96
        %v2974 = vpop.permute.xlu0 %2973
        %v2976 = vsel %vm2490, %v2960, 0
        %v2979 = vsel %vm2490, %v2962, 0
        %v2982 = vsel %vm2490, %v2964, 0
        %v2985 = vsel %vm2490, %v2966, 0
        %v2988 = vsel %vm2490, %v2968, 0
        %v2991 = vsel %vm2490, %v2970, 0
        %v2994 = vsel %vm2490, %v2972, 0
        %v2997 = vsel %vm2490, %v2974, 0
        %2999 = vmatprep.subr.bf16.mxu0 0
        %3000 = vmatpush1.bf16.xpose.msra.mxu0 0
        %3001 = vmatprep.subr.bf16.mxu0 0
        %3002 = vmatpush1.bf16.xpose.msra.mxu0 0
        %3003 = vmatprep.subr.bf16.mxu0 0
        %3004 = vmatpush1.bf16.xpose.msra.mxu0 0
        %3005 = vmatprep.subr.bf16.mxu0 0
        %3006 = vmatpush1.bf16.xpose.msra.mxu0 0
        %3007 = vmatprep.subr.bf16.mxu0 0
        %3008 = vmatpush1.bf16.xpose.msra.mxu0 %v2997
        %3009 = vmatprep.subr.bf16.mxu0 0
        %3010 = vmatpush1.bf16.xpose.msra.mxu0 %v2994
        %3011 = vmatprep.subr.bf16.mxu0 0
        %3012 = vmatpush1.bf16.xpose.msra.mxu0 %v2991
        %3013 = vmatprep.subr.bf16.mxu0 0
        %3014 = vmatpush1.bf16.xpose.msra.mxu0 %v2988
        %3015 = vmatprep.subr.bf16.mxu0 0
        %3016 = vmatpush2.bf16.xpose.msra.mxu0 0
        %3017 = vmatprep.subr.bf16.mxu0 0
        %3018 = vmatpush2.bf16.xpose.msra.mxu0 0
        %3019 = vmatprep.subr.bf16.mxu0 0
        %3020 = vmatpush2.bf16.xpose.msra.mxu0 0
        %3021 = vmatprep.subr.bf16.mxu0 0
        %3022 = vmatpush2.bf16.xpose.msra.mxu0 0
        %3023 = vmatprep.subr.bf16.mxu0 0
        %3024 = vmatpush2.bf16.xpose.msra.mxu0 0
        %3025 = vmatprep.subr.bf16.mxu0 0
        %3026 = vmatpush2.bf16.xpose.msra.mxu0 0
        %3027 = vmatprep.subr.bf16.mxu0 0
        %3028 = vmatpush2.bf16.xpose.msra.mxu0 0
        %3029 = vmatprep.subr.bf16.mxu0 0
        %3030 = vmatpush2.bf16.xpose.msra.mxu0 0
        %3031 = vmatprep.mubr.bf16.mxu0 0
        %3032 = vmatmul.mubr.bf16.gmra.mxu0 %v2976
        %v3033 = vpop.f32.mrf.mxu0
        %v3034 = vadd.f32 0.0, %v3033
        %v3035 = vpop.f32.mrf.mxu0
        %v3036 = vpop.f32.mrf.mxu0
        %v3037 = vadd.f32 0.0, %v3036
        %v3038 = vpop.f32.mrf.mxu0
        %3039 = vmatprep.mubr.bf16.mxu0 0
        %3040 = vmatmul.mubr.bf16.gmra.mxu0 %v2979
        %v3041 = vpop.f32.mrf.mxu0
        %v3042 = vadd.f32 0.0, %v3041
        %v3043 = vpop.f32.mrf.mxu0
        %v3044 = vpop.f32.mrf.mxu0
        %v3045 = vadd.f32 0.0, %v3044
        %v3046 = vpop.f32.mrf.mxu0
        %3047 = vmatprep.mubr.bf16.mxu0 0
        %3048 = vmatmul.mubr.bf16.gmra.mxu0 %v2982
        %v3049 = vpop.f32.mrf.mxu0
        %v3050 = vadd.f32 0.0, %v3049
        %v3051 = vpop.f32.mrf.mxu0
        %v3052 = vpop.f32.mrf.mxu0
        %v3053 = vadd.f32 0.0, %v3052
        %v3054 = vpop.f32.mrf.mxu0
        %3055 = vmatprep.mubr.bf16.mxu0 0
        %3056 = vmatmul.mubr.bf16.gmra.mxu0 %v2985
        %v3057 = vpop.f32.mrf.mxu0
        %v3058 = vadd.f32 0.0, %v3057
        %v3059 = vpop.f32.mrf.mxu0
        %v3060 = vpop.f32.mrf.mxu0
        %v3061 = vadd.f32 0.0, %v3060
        %v3062 = vpop.f32.mrf.mxu0
        %3063 = vdwg.mxu0
        %v3064 = vsel %vm2442, %v3034, -1e+30
        %v3065 = vsel %vm2443, %v3037, -1e+30
        %v3066 = vsel %vm2444, %v3042, -1e+30
        %v3067 = vsel %vm2445, %v3045, -1e+30
        %v3068 = vsel %vm2446, %v3050, -1e+30
        %v3069 = vsel %vm2447, %v3053, -1e+30
        %v3070 = vsel %vm2448, %v3058, -1e+30
        %v3071 = vsel %vm2449, %v3061, -1e+30
        %s3072 = scalar_lea.vmem [#allocation2], 64
        %v3073 = vld [vmem:[%s3072] sm:$0xff]
        %v3074 = vld [vmem:[%s3072 + $0x8] sm:$0xff]
        %v3075 = vld [vmem:[%s3072 + $0x10] sm:$0xff]
        %v3076 = vld [vmem:[%s3072 + $0x18] sm:$0xff]
        %v3077 = vld [vmem:[%s3072 + $0x20] sm:$0xff]
        %v3078 = vld [vmem:[%s3072 + $0x28] sm:$0xff]
        %v3079 = vld [vmem:[%s3072 + $0x30] sm:$0xff]
        %v3080 = vld [vmem:[%s3072 + $0x38] sm:$0xff]
        %v3081 = vsel %vm2596, %v3064, -inf
        %3082 = vmax.xlane.f32.xlu0 %v3081
        %v3083 = vpop.xlane.xlu0 %3082
        %v3084 = vsel %vm2596, %v3065, -inf
        %3085 = vmax.xlane.f32.xlu0 %v3084
        %v3086 = vpop.xlane.xlu0 %3085
        %v3087 = vsel %vm2596, %v3066, -inf
        %3088 = vmax.xlane.f32.xlu0 %v3087
        %v3089 = vpop.xlane.xlu0 %3088
        %v3090 = vsel %vm2596, %v3067, -inf
        %3091 = vmax.xlane.f32.xlu0 %v3090
        %v3092 = vpop.xlane.xlu0 %3091
        %v3093 = vsel %vm2596, %v3068, -inf
        %3094 = vmax.xlane.f32.xlu0 %v3093
        %v3095 = vpop.xlane.xlu0 %3094
        %v3096 = vsel %vm2596, %v3069, -inf
        %3097 = vmax.xlane.f32.xlu0 %v3096
        %v3098 = vpop.xlane.xlu0 %3097
        %v3099 = vsel %vm2596, %v3070, -inf
        %3100 = vmax.xlane.f32.xlu0 %v3099
        %v3101 = vpop.xlane.xlu0 %3100
        %v3102 = vsel %vm2596, %v3071, -inf
        %3103 = vmax.xlane.f32.xlu0 %v3102
        %v3104 = vpop.xlane.xlu0 %3103
        %v3105 = vmax.f32 %v3073, %v3083
        %v3106 = vmax.f32 %v3074, %v3086
        %v3107 = vmax.f32 %v3075, %v3089
        %v3108 = vmax.f32 %v3076, %v3092
        %v3109 = vmax.f32 %v3077, %v3095
        %v3110 = vmax.f32 %v3078, %v3098
        %v3111 = vmax.f32 %v3079, %v3101
        %v3112 = vmax.f32 %v3080, %v3104
        %v3113 = vsub.f32 %v3073, %v3105
        %v3114 = vsub.f32 %v3074, %v3106
        %v3115 = vsub.f32 %v3075, %v3107
        %v3116 = vsub.f32 %v3076, %v3108
        %v3117 = vsub.f32 %v3077, %v3109
        %v3118 = vsub.f32 %v3078, %v3110
        %v3119 = vsub.f32 %v3079, %v3111
        %v3120 = vsub.f32 %v3080, %v3112
        %v3121 = vmul.f32 %v3113, 1.442695
        %v3122 = vpow.pop %v3121
        %v3123 = vmul.f32 %v3114, 1.442695
        %v3124 = vpow.pop %v3123
        %v3125 = vmul.f32 %v3115, 1.442695
        %v3126 = vpow.pop %v3125
        %v3127 = vmul.f32 %v3116, 1.442695
        %v3128 = vpow.pop %v3127
        %v3129 = vmul.f32 %v3117, 1.442695
        %v3130 = vpow.pop %v3129
        %v3131 = vmul.f32 %v3118, 1.442695
        %v3132 = vpow.pop %v3131
        %v3133 = vmul.f32 %v3119, 1.442695
        %v3134 = vpow.pop %v3133
        %v3135 = vmul.f32 %v3120, 1.442695
        %v3136 = vpow.pop %v3135
        %3138 = vset.pattern.permute.xlu0 0
        %3139 = vperm.xlu0 %3138, %v3105
        %v3140 = vpop.permute.xlu0 %3139
        %3143 = vset.pattern.permute.xlu0 0
        %3144 = vperm.xlu0 %3143, %v3106
        %v3145 = vpop.permute.xlu0 %3144
        %3148 = vset.pattern.permute.xlu0 0
        %3149 = vperm.xlu0 %3148, %v3107
        %v3150 = vpop.permute.xlu0 %3149
        %3153 = vset.pattern.permute.xlu0 0
        %3154 = vperm.xlu0 %3153, %v3108
        %v3155 = vpop.permute.xlu0 %3154
        %3158 = vset.pattern.permute.xlu0 0
        %3159 = vperm.xlu0 %3158, %v3109
        %v3160 = vpop.permute.xlu0 %3159
        %3163 = vset.pattern.permute.xlu0 0
        %3164 = vperm.xlu0 %3163, %v3110
        %v3165 = vpop.permute.xlu0 %3164
        %3168 = vset.pattern.permute.xlu0 0
        %3169 = vperm.xlu0 %3168, %v3111
        %v3170 = vpop.permute.xlu0 %3169
        %3173 = vset.pattern.permute.xlu0 0
        %3174 = vperm.xlu0 %3173, %v3112
        %v3175 = vpop.permute.xlu0 %3174
        %v3177 = vsub.f32 %v3064, %v3140
        %v3178 = vsub.f32 %v3065, %v3145
        %v3179 = vsub.f32 %v3066, %v3150
        %v3180 = vsub.f32 %v3067, %v3155
        %v3181 = vsub.f32 %v3068, %v3160
        %v3182 = vsub.f32 %v3069, %v3165
        %v3183 = vsub.f32 %v3070, %v3170
        %v3184 = vsub.f32 %v3071, %v3175
        %v3185 = vmul.f32 %v3177, 1.442695
        %v3186 = vpow.pop %v3185
        %v3187 = vmul.f32 %v3178, 1.442695
        %v3188 = vpow.pop %v3187
        %v3189 = vmul.f32 %v3179, 1.442695
        %v3190 = vpow.pop %v3189
        %v3191 = vmul.f32 %v3180, 1.442695
        %v3192 = vpow.pop %v3191
        %v3193 = vmul.f32 %v3181, 1.442695
        %v3194 = vpow.pop %v3193
        %v3195 = vmul.f32 %v3182, 1.442695
        %v3196 = vpow.pop %v3195
        %v3197 = vmul.f32 %v3183, 1.442695
        %v3198 = vpow.pop %v3197
        %v3199 = vmul.f32 %v3184, 1.442695
        %v3200 = vpow.pop %v3199
        %s3201 = scalar_lea.vmem [#allocation3], 64
        %v3202 = vld [vmem:[%s3201] sm:$0xff]
        %v3203 = vld [vmem:[%s3201 + $0x8] sm:$0xff]
        %v3204 = vld [vmem:[%s3201 + $0x10] sm:$0xff]
        %v3205 = vld [vmem:[%s3201 + $0x18] sm:$0xff]
        %v3206 = vld [vmem:[%s3201 + $0x20] sm:$0xff]
        %v3207 = vld [vmem:[%s3201 + $0x28] sm:$0xff]
        %v3208 = vld [vmem:[%s3201 + $0x30] sm:$0xff]
        %v3209 = vld [vmem:[%s3201 + $0x38] sm:$0xff]
        %v3210 = vmul.f32 %v3122, %v3202
        %v3211 = vmul.f32 %v3124, %v3203
        %v3212 = vmul.f32 %v3126, %v3204
        %v3213 = vmul.f32 %v3128, %v3205
        %v3214 = vmul.f32 %v3130, %v3206
        %v3215 = vmul.f32 %v3132, %v3207
        %v3216 = vmul.f32 %v3134, %v3208
        %v3217 = vmul.f32 %v3136, %v3209
        %v3218 = vsel %vm2596, %v3186, 0.0
        %3219 = vadd.xlane.f32.xlu0 %v3218
        %v3220 = vpop.xlane.xlu0 %3219
        %v3221 = vsel %vm2596, %v3188, 0.0
        %3222 = vadd.xlane.f32.xlu0 %v3221
        %v3223 = vpop.xlane.xlu0 %3222
        %v3224 = vsel %vm2596, %v3190, 0.0
        %3225 = vadd.xlane.f32.xlu0 %v3224
        %v3226 = vpop.xlane.xlu0 %3225
        %v3227 = vsel %vm2596, %v3192, 0.0
        %3228 = vadd.xlane.f32.xlu0 %v3227
        %v3229 = vpop.xlane.xlu0 %3228
        %v3230 = vsel %vm2596, %v3194, 0.0
        %3231 = vadd.xlane.f32.xlu0 %v3230
        %v3232 = vpop.xlane.xlu0 %3231
        %v3233 = vsel %vm2596, %v3196, 0.0
        %3234 = vadd.xlane.f32.xlu0 %v3233
        %v3235 = vpop.xlane.xlu0 %3234
        %v3236 = vsel %vm2596, %v3198, 0.0
        %3237 = vadd.xlane.f32.xlu0 %v3236
        %v3238 = vpop.xlane.xlu0 %3237
        %v3239 = vsel %vm2596, %v3200, 0.0
        %3240 = vadd.xlane.f32.xlu0 %v3239
        %v3241 = vpop.xlane.xlu0 %3240
        %v3242 = vadd.f32 %v3210, %v3220
        %v3243 = vadd.f32 %v3211, %v3223
        %v3244 = vadd.f32 %v3212, %v3226
        %v3245 = vadd.f32 %v3213, %v3229
        %v3246 = vadd.f32 %v3214, %v3232
        %v3247 = vadd.f32 %v3215, %v3235
        %v3248 = vadd.f32 %v3216, %v3238
        %v3249 = vadd.f32 %v3217, %v3241
        %3250 = vst.msk [vmem:[%s3201] sm:$0xff] %vm2765, %v3242
        %3251 = vst.msk [vmem:[%s3201 + $0x8] sm:$0xff] %vm2765, %v3243
        %3252 = vst.msk [vmem:[%s3201 + $0x10] sm:$0xff] %vm2765, %v3244
        %3253 = vst.msk [vmem:[%s3201 + $0x18] sm:$0xff] %vm2765, %v3245
        %3254 = vst.msk [vmem:[%s3201 + $0x20] sm:$0xff] %vm2765, %v3246
        %3255 = vst.msk [vmem:[%s3201 + $0x28] sm:$0xff] %vm2765, %v3247
        %3256 = vst.msk [vmem:[%s3201 + $0x30] sm:$0xff] %vm2765, %v3248
        %3257 = vst.msk [vmem:[%s3201 + $0x38] sm:$0xff] %vm2765, %v3249
        %s3258 = scalar_lea.vmem [#allocation4], 64
        %v3259 = vld [vmem:[%s3258] sm:$0xff]
        %v3260 = vld [vmem:[%s3258 + $0x8] sm:$0xff]
        %v3261 = vld [vmem:[%s3258 + $0x10] sm:$0xff]
        %v3262 = vld [vmem:[%s3258 + $0x18] sm:$0xff]
        %v3263 = vld [vmem:[%s3258 + $0x20] sm:$0xff]
        %v3264 = vld [vmem:[%s3258 + $0x28] sm:$0xff]
        %v3265 = vld [vmem:[%s3258 + $0x30] sm:$0xff]
        %v3266 = vld [vmem:[%s3258 + $0x38] sm:$0xff]
        %3268 = vset.pattern.permute.xlu0 0
        %3269 = vperm.xlu0 %3268, %v3122
        %v3270 = vpop.permute.xlu0 %3269
        %3273 = vset.pattern.permute.xlu0 0
        %3274 = vperm.xlu0 %3273, %v3124
        %v3275 = vpop.permute.xlu0 %3274
        %3278 = vset.pattern.permute.xlu0 0
        %3279 = vperm.xlu0 %3278, %v3126
        %v3280 = vpop.permute.xlu0 %3279
        %3283 = vset.pattern.permute.xlu0 0
        %3284 = vperm.xlu0 %3283, %v3128
        %v3285 = vpop.permute.xlu0 %3284
        %3288 = vset.pattern.permute.xlu0 0
        %3289 = vperm.xlu0 %3288, %v3130
        %v3290 = vpop.permute.xlu0 %3289
        %3293 = vset.pattern.permute.xlu0 0
        %3294 = vperm.xlu0 %3293, %v3132
        %v3295 = vpop.permute.xlu0 %3294
        %3298 = vset.pattern.permute.xlu0 0
        %3299 = vperm.xlu0 %3298, %v3134
        %v3300 = vpop.permute.xlu0 %3299
        %3303 = vset.pattern.permute.xlu0 0
        %3304 = vperm.xlu0 %3303, %v3136
        %v3305 = vpop.permute.xlu0 %3304
        %v3307 = vmul.f32 %v3270, %v3259
        %v3308 = vmul.f32 %v3275, %v3260
        %v3309 = vmul.f32 %v3280, %v3261
        %v3310 = vmul.f32 %v3285, %v3262
        %v3311 = vmul.f32 %v3290, %v3263
        %v3312 = vmul.f32 %v3295, %v3264
        %v3313 = vmul.f32 %v3300, %v3265
        %v3314 = vmul.f32 %v3305, %v3266
        %v3315 = vpack.c.bf16 %v3188, %v3186
        %v3316 = vpack.c.bf16 %v3192, %v3190
        %v3317 = vpack.c.bf16 %v3196, %v3194
        %v3318 = vpack.c.bf16 %v3200, %v3198
        %3319 = vrot.lane.b32.xlu0 %v2850, 96
        %v3320 = vpop.permute.xlu0 %3319
        %3321 = vrot.lane.b32.xlu0 %v2851, 96
        %v3322 = vpop.permute.xlu0 %3321
        %3323 = vrot.lane.b32.xlu0 %v2852, 96
        %v3324 = vpop.permute.xlu0 %3323
        %3325 = vrot.lane.b32.xlu0 %v2853, 96
        %v3326 = vpop.permute.xlu0 %3325
        %v3332 = vsel %vm2596, %v3315, 0
        %v3335 = vsel %vm2596, %v3316, 0
        %v3338 = vsel %vm2596, %v3317, 0
        %v3341 = vsel %vm2596, %v3318, 0
        %3343 = vmatprep.subr.bf16.mxu0 0
        %3344 = vmatpush1.bf16.msra.mxu0 0
        %3345 = vmatprep.subr.bf16.mxu0 0
        %3346 = vmatpush1.bf16.msra.mxu0 0
        %3347 = vmatprep.subr.bf16.mxu0 0
        %3348 = vmatpush1.bf16.msra.mxu0 0
        %3349 = vmatprep.subr.bf16.mxu0 0
        %3350 = vmatpush1.bf16.msra.mxu0 0
        %3351 = vmatprep.subr.bf16.mxu0 0
        %3352 = vmatpush1.bf16.msra.mxu0 %v3326
        %3353 = vmatprep.subr.bf16.mxu0 0
        %3354 = vmatpush1.bf16.msra.mxu0 %v3324
        %3355 = vmatprep.subr.bf16.mxu0 0
        %3356 = vmatpush1.bf16.msra.mxu0 %v3322
        %3357 = vmatprep.subr.bf16.mxu0 0
        %3358 = vmatpush1.bf16.msra.mxu0 %v3320
        %3359 = vmatprep.subr.bf16.mxu0 0
        %3360 = vmatpush2.bf16.msra.mxu0 0
        %3361 = vmatprep.subr.bf16.mxu0 0
        %3362 = vmatpush2.bf16.msra.mxu0 0
        %3363 = vmatprep.subr.bf16.mxu0 0
        %3364 = vmatpush2.bf16.msra.mxu0 0
        %3365 = vmatprep.subr.bf16.mxu0 0
        %3366 = vmatpush2.bf16.msra.mxu0 0
        %3367 = vmatprep.subr.bf16.mxu0 0
        %3368 = vmatpush2.bf16.msra.mxu0 0
        %3369 = vmatprep.subr.bf16.mxu0 0
        %3370 = vmatpush2.bf16.msra.mxu0 0
        %3371 = vmatprep.subr.bf16.mxu0 0
        %3372 = vmatpush2.bf16.msra.mxu0 0
        %3373 = vmatprep.subr.bf16.mxu0 0
        %3374 = vmatpush2.bf16.msra.mxu0 0
        %3375 = vmatprep.mubr.bf16.mxu0 0
        %3376 = vmatmul.mubr.bf16.gmra.mxu0 %v3332
        %v3377 = vpop.f32.mrf.mxu0
        %v3378 = vadd.f32 0.0, %v3377
        %v3379 = vpop.f32.mrf.mxu0
        %v3380 = vpop.f32.mrf.mxu0
        %v3381 = vadd.f32 0.0, %v3380
        %v3382 = vpop.f32.mrf.mxu0
        %3383 = vmatprep.mubr.bf16.mxu0 0
        %3384 = vmatmul.mubr.bf16.gmra.mxu0 %v3335
        %v3385 = vpop.f32.mrf.mxu0
        %v3386 = vadd.f32 0.0, %v3385
        %v3387 = vpop.f32.mrf.mxu0
        %v3388 = vpop.f32.mrf.mxu0
        %v3389 = vadd.f32 0.0, %v3388
        %v3390 = vpop.f32.mrf.mxu0
        %3391 = vmatprep.mubr.bf16.mxu0 0
        %3392 = vmatmul.mubr.bf16.gmra.mxu0 %v3338
        %v3393 = vpop.f32.mrf.mxu0
        %v3394 = vadd.f32 0.0, %v3393
        %v3395 = vpop.f32.mrf.mxu0
        %v3396 = vpop.f32.mrf.mxu0
        %v3397 = vadd.f32 0.0, %v3396
        %v3398 = vpop.f32.mrf.mxu0
        %3399 = vmatprep.mubr.bf16.mxu0 0
        %3400 = vmatmul.mubr.bf16.gmra.mxu0 %v3341
        %v3401 = vpop.f32.mrf.mxu0
        %v3402 = vadd.f32 0.0, %v3401
        %v3403 = vpop.f32.mrf.mxu0
        %v3404 = vpop.f32.mrf.mxu0
        %v3405 = vadd.f32 0.0, %v3404
        %v3406 = vpop.f32.mrf.mxu0
        %3407 = vdwg.mxu0
        %v3408 = vadd.f32 %v3307, %v3378
        %v3409 = vadd.f32 %v3308, %v3381
        %v3410 = vadd.f32 %v3309, %v3386
        %v3411 = vadd.f32 %v3310, %v3389
        %v3412 = vadd.f32 %v3311, %v3394
        %v3413 = vadd.f32 %v3312, %v3397
        %v3414 = vadd.f32 %v3313, %v3402
        %v3415 = vadd.f32 %v3314, %v3405
        %3416 = vst.msk [vmem:[%s3258] sm:$0xff] %vm2490, %v3408
        %3417 = vst.msk [vmem:[%s3258 + $0x8] sm:$0xff] %vm2490, %v3409
        %3418 = vst.msk [vmem:[%s3258 + $0x10] sm:$0xff] %vm2490, %v3410
        %3419 = vst.msk [vmem:[%s3258 + $0x18] sm:$0xff] %vm2490, %v3411
        %3420 = vst.msk [vmem:[%s3258 + $0x20] sm:$0xff] %vm2490, %v3412
        %3421 = vst.msk [vmem:[%s3258 + $0x28] sm:$0xff] %vm2490, %v3413
        %3422 = vst.msk [vmem:[%s3258 + $0x30] sm:$0xff] %vm2490, %v3414
        %3423 = vst.msk [vmem:[%s3258 + $0x38] sm:$0xff] %vm2490, %v3415
        %3424 = vst.msk [vmem:[%s3072] sm:$0xff] %vm2765, %v3105
        %3425 = vst.msk [vmem:[%s3072 + $0x8] sm:$0xff] %vm2765, %v3106
        %3426 = vst.msk [vmem:[%s3072 + $0x10] sm:$0xff] %vm2765, %v3107
        %3427 = vst.msk [vmem:[%s3072 + $0x18] sm:$0xff] %vm2765, %v3108
        %3428 = vst.msk [vmem:[%s3072 + $0x20] sm:$0xff] %vm2765, %v3109
        %3429 = vst.msk [vmem:[%s3072 + $0x28] sm:$0xff] %vm2765, %v3110
        %3430 = vst.msk [vmem:[%s3072 + $0x30] sm:$0xff] %vm2765, %v3111
        %3431 = vst.msk [vmem:[%s3072 + $0x38] sm:$0xff] %vm2765, %v3112
        %3432 = vrot.lane.b32.xlu0 %v2466, 64
        %v3433 = vpop.permute.xlu0 %3432
        %3434 = vrot.lane.b32.xlu0 %v2467, 64
        %v3435 = vpop.permute.xlu0 %3434
        %3436 = vrot.lane.b32.xlu0 %v2468, 64
        %v3437 = vpop.permute.xlu0 %3436
        %3438 = vrot.lane.b32.xlu0 %v2469, 64
        %v3439 = vpop.permute.xlu0 %3438
        %3440 = vrot.lane.b32.xlu0 %v2486, 64
        %v3441 = vpop.permute.xlu0 %3440
        %3442 = vrot.lane.b32.xlu0 %v2487, 64
        %v3443 = vpop.permute.xlu0 %3442
        %3444 = vrot.lane.b32.xlu0 %v2488, 64
        %v3445 = vpop.permute.xlu0 %3444
        %3446 = vrot.lane.b32.xlu0 %v2489, 64
        %v3447 = vpop.permute.xlu0 %3446
        %v3449 = vsel %vm2490, %v3433, 0
        %v3452 = vsel %vm2490, %v3435, 0
        %v3455 = vsel %vm2490, %v3437, 0
        %v3458 = vsel %vm2490, %v3439, 0
        %v3461 = vsel %vm2490, %v3441, 0
        %v3464 = vsel %vm2490, %v3443, 0
        %v3467 = vsel %vm2490, %v3445, 0
        %v3470 = vsel %vm2490, %v3447, 0
        %3472 = vmatprep.subr.bf16.mxu0 0
        %3473 = vmatpush1.bf16.xpose.msra.mxu0 0
        %3474 = vmatprep.subr.bf16.mxu0 0
        %3475 = vmatpush1.bf16.xpose.msra.mxu0 0
        %3476 = vmatprep.subr.bf16.mxu0 0
        %3477 = vmatpush1.bf16.xpose.msra.mxu0 0
        %3478 = vmatprep.subr.bf16.mxu0 0
        %3479 = vmatpush1.bf16.xpose.msra.mxu0 0
        %3480 = vmatprep.subr.bf16.mxu0 0
        %3481 = vmatpush1.bf16.xpose.msra.mxu0 %v3470
        %3482 = vmatprep.subr.bf16.mxu0 0
        %3483 = vmatpush1.bf16.xpose.msra.mxu0 %v3467
        %3484 = vmatprep.subr.bf16.mxu0 0
        %3485 = vmatpush1.bf16.xpose.msra.mxu0 %v3464
        %3486 = vmatprep.subr.bf16.mxu0 0
        %3487 = vmatpush1.bf16.xpose.msra.mxu0 %v3461
        %3488 = vmatprep.subr.bf16.mxu0 0
        %3489 = vmatpush2.bf16.xpose.msra.mxu0 0
        %3490 = vmatprep.subr.bf16.mxu0 0
        %3491 = vmatpush2.bf16.xpose.msra.mxu0 0
        %3492 = vmatprep.subr.bf16.mxu0 0
        %3493 = vmatpush2.bf16.xpose.msra.mxu0 0
        %3494 = vmatprep.subr.bf16.mxu0 0
        %3495 = vmatpush2.bf16.xpose.msra.mxu0 0
        %3496 = vmatprep.subr.bf16.mxu0 0
        %3497 = vmatpush2.bf16.xpose.msra.mxu0 0
        %3498 = vmatprep.subr.bf16.mxu0 0
        %3499 = vmatpush2.bf16.xpose.msra.mxu0 0
        %3500 = vmatprep.subr.bf16.mxu0 0
        %3501 = vmatpush2.bf16.xpose.msra.mxu0 0
        %3502 = vmatprep.subr.bf16.mxu0 0
        %3503 = vmatpush2.bf16.xpose.msra.mxu0 0
        %3504 = vmatprep.mubr.bf16.mxu0 0
        %3505 = vmatmul.mubr.bf16.gmra.mxu0 %v3449
        %v3506 = vpop.f32.mrf.mxu0
        %v3507 = vadd.f32 0.0, %v3506
        %v3508 = vpop.f32.mrf.mxu0
        %v3509 = vpop.f32.mrf.mxu0
        %v3510 = vadd.f32 0.0, %v3509
        %v3511 = vpop.f32.mrf.mxu0
        %3512 = vmatprep.mubr.bf16.mxu0 0
        %3513 = vmatmul.mubr.bf16.gmra.mxu0 %v3452
        %v3514 = vpop.f32.mrf.mxu0
        %v3515 = vadd.f32 0.0, %v3514
        %v3516 = vpop.f32.mrf.mxu0
        %v3517 = vpop.f32.mrf.mxu0
        %v3518 = vadd.f32 0.0, %v3517
        %v3519 = vpop.f32.mrf.mxu0
        %3520 = vmatprep.mubr.bf16.mxu0 0
        %3521 = vmatmul.mubr.bf16.gmra.mxu0 %v3455
        %v3522 = vpop.f32.mrf.mxu0
        %v3523 = vadd.f32 0.0, %v3522
        %v3524 = vpop.f32.mrf.mxu0
        %v3525 = vpop.f32.mrf.mxu0
        %v3526 = vadd.f32 0.0, %v3525
        %v3527 = vpop.f32.mrf.mxu0
        %3528 = vmatprep.mubr.bf16.mxu0 0
        %3529 = vmatmul.mubr.bf16.gmra.mxu0 %v3458
        %v3530 = vpop.f32.mrf.mxu0
        %v3531 = vadd.f32 0.0, %v3530
        %v3532 = vpop.f32.mrf.mxu0
        %v3533 = vpop.f32.mrf.mxu0
        %v3534 = vadd.f32 0.0, %v3533
        %v3535 = vpop.f32.mrf.mxu0
        %3536 = vdwg.mxu0
        %v3537 = vsel %vm2442, %v3507, -1e+30
        %v3538 = vsel %vm2443, %v3510, -1e+30
        %v3539 = vsel %vm2444, %v3515, -1e+30
        %v3540 = vsel %vm2445, %v3518, -1e+30
        %v3541 = vsel %vm2446, %v3523, -1e+30
        %v3542 = vsel %vm2447, %v3526, -1e+30
        %v3543 = vsel %vm2448, %v3531, -1e+30
        %v3544 = vsel %vm2449, %v3534, -1e+30
        %s3545 = scalar_lea.vmem [#allocation2], 128
        %v3546 = vld [vmem:[%s3545] sm:$0xff]
        %v3547 = vld [vmem:[%s3545 + $0x8] sm:$0xff]
        %v3548 = vld [vmem:[%s3545 + $0x10] sm:$0xff]
        %v3549 = vld [vmem:[%s3545 + $0x18] sm:$0xff]
        %v3550 = vld [vmem:[%s3545 + $0x20] sm:$0xff]
        %v3551 = vld [vmem:[%s3545 + $0x28] sm:$0xff]
        %v3552 = vld [vmem:[%s3545 + $0x30] sm:$0xff]
        %v3553 = vld [vmem:[%s3545 + $0x38] sm:$0xff]
        %v3554 = vsel %vm2596, %v3537, -inf
        %3555 = vmax.xlane.f32.xlu0 %v3554
        %v3556 = vpop.xlane.xlu0 %3555
        %v3557 = vsel %vm2596, %v3538, -inf
        %3558 = vmax.xlane.f32.xlu0 %v3557
        %v3559 = vpop.xlane.xlu0 %3558
        %v3560 = vsel %vm2596, %v3539, -inf
        %3561 = vmax.xlane.f32.xlu0 %v3560
        %v3562 = vpop.xlane.xlu0 %3561
        %v3563 = vsel %vm2596, %v3540, -inf
        %3564 = vmax.xlane.f32.xlu0 %v3563
        %v3565 = vpop.xlane.xlu0 %3564
        %v3566 = vsel %vm2596, %v3541, -inf
        %3567 = vmax.xlane.f32.xlu0 %v3566
        %v3568 = vpop.xlane.xlu0 %3567
        %v3569 = vsel %vm2596, %v3542, -inf
        %3570 = vmax.xlane.f32.xlu0 %v3569
        %v3571 = vpop.xlane.xlu0 %3570
        %v3572 = vsel %vm2596, %v3543, -inf
        %3573 = vmax.xlane.f32.xlu0 %v3572
        %v3574 = vpop.xlane.xlu0 %3573
        %v3575 = vsel %vm2596, %v3544, -inf
        %3576 = vmax.xlane.f32.xlu0 %v3575
        %v3577 = vpop.xlane.xlu0 %3576
        %v3578 = vmax.f32 %v3546, %v3556
        %v3579 = vmax.f32 %v3547, %v3559
        %v3580 = vmax.f32 %v3548, %v3562
        %v3581 = vmax.f32 %v3549, %v3565
        %v3582 = vmax.f32 %v3550, %v3568
        %v3583 = vmax.f32 %v3551, %v3571
        %v3584 = vmax.f32 %v3552, %v3574
        %v3585 = vmax.f32 %v3553, %v3577
        %v3586 = vsub.f32 %v3546, %v3578
        %v3587 = vsub.f32 %v3547, %v3579
        %v3588 = vsub.f32 %v3548, %v3580
        %v3589 = vsub.f32 %v3549, %v3581
        %v3590 = vsub.f32 %v3550, %v3582
        %v3591 = vsub.f32 %v3551, %v3583
        %v3592 = vsub.f32 %v3552, %v3584
        %v3593 = vsub.f32 %v3553, %v3585
        %v3594 = vmul.f32 %v3586, 1.442695
        %v3595 = vpow.pop %v3594
        %v3596 = vmul.f32 %v3587, 1.442695
        %v3597 = vpow.pop %v3596
        %v3598 = vmul.f32 %v3588, 1.442695
        %v3599 = vpow.pop %v3598
        %v3600 = vmul.f32 %v3589, 1.442695
        %v3601 = vpow.pop %v3600
        %v3602 = vmul.f32 %v3590, 1.442695
        %v3603 = vpow.pop %v3602
        %v3604 = vmul.f32 %v3591, 1.442695
        %v3605 = vpow.pop %v3604
        %v3606 = vmul.f32 %v3592, 1.442695
        %v3607 = vpow.pop %v3606
        %v3608 = vmul.f32 %v3593, 1.442695
        %v3609 = vpow.pop %v3608
        %3611 = vset.pattern.permute.xlu0 0
        %3612 = vperm.xlu0 %3611, %v3578
        %v3613 = vpop.permute.xlu0 %3612
        %3616 = vset.pattern.permute.xlu0 0
        %3617 = vperm.xlu0 %3616, %v3579
        %v3618 = vpop.permute.xlu0 %3617
        %3621 = vset.pattern.permute.xlu0 0
        %3622 = vperm.xlu0 %3621, %v3580
        %v3623 = vpop.permute.xlu0 %3622
        %3626 = vset.pattern.permute.xlu0 0
        %3627 = vperm.xlu0 %3626, %v3581
        %v3628 = vpop.permute.xlu0 %3627
        %3631 = vset.pattern.permute.xlu0 0
        %3632 = vperm.xlu0 %3631, %v3582
        %v3633 = vpop.permute.xlu0 %3632
        %3636 = vset.pattern.permute.xlu0 0
        %3637 = vperm.xlu0 %3636, %v3583
        %v3638 = vpop.permute.xlu0 %3637
        %3641 = vset.pattern.permute.xlu0 0
        %3642 = vperm.xlu0 %3641, %v3584
        %v3643 = vpop.permute.xlu0 %3642
        %3646 = vset.pattern.permute.xlu0 0
        %3647 = vperm.xlu0 %3646, %v3585
        %v3648 = vpop.permute.xlu0 %3647
        %v3650 = vsub.f32 %v3537, %v3613
        %v3651 = vsub.f32 %v3538, %v3618
        %v3652 = vsub.f32 %v3539, %v3623
        %v3653 = vsub.f32 %v3540, %v3628
        %v3654 = vsub.f32 %v3541, %v3633
        %v3655 = vsub.f32 %v3542, %v3638
        %v3656 = vsub.f32 %v3543, %v3643
        %v3657 = vsub.f32 %v3544, %v3648
        %v3658 = vmul.f32 %v3650, 1.442695
        %v3659 = vpow.pop %v3658
        %v3660 = vmul.f32 %v3651, 1.442695
        %v3661 = vpow.pop %v3660
        %v3662 = vmul.f32 %v3652, 1.442695
        %v3663 = vpow.pop %v3662
        %v3664 = vmul.f32 %v3653, 1.442695
        %v3665 = vpow.pop %v3664
        %v3666 = vmul.f32 %v3654, 1.442695
        %v3667 = vpow.pop %v3666
        %v3668 = vmul.f32 %v3655, 1.442695
        %v3669 = vpow.pop %v3668
        %v3670 = vmul.f32 %v3656, 1.442695
        %v3671 = vpow.pop %v3670
        %v3672 = vmul.f32 %v3657, 1.442695
        %v3673 = vpow.pop %v3672
        %s3674 = scalar_lea.vmem [#allocation3], 128
        %v3675 = vld [vmem:[%s3674] sm:$0xff]
        %v3676 = vld [vmem:[%s3674 + $0x8] sm:$0xff]
        %v3677 = vld [vmem:[%s3674 + $0x10] sm:$0xff]
        %v3678 = vld [vmem:[%s3674 + $0x18] sm:$0xff]
        %v3679 = vld [vmem:[%s3674 + $0x20] sm:$0xff]
        %v3680 = vld [vmem:[%s3674 + $0x28] sm:$0xff]
        %v3681 = vld [vmem:[%s3674 + $0x30] sm:$0xff]
        %v3682 = vld [vmem:[%s3674 + $0x38] sm:$0xff]
        %v3683 = vmul.f32 %v3595, %v3675
        %v3684 = vmul.f32 %v3597, %v3676
        %v3685 = vmul.f32 %v3599, %v3677
        %v3686 = vmul.f32 %v3601, %v3678
        %v3687 = vmul.f32 %v3603, %v3679
        %v3688 = vmul.f32 %v3605, %v3680
        %v3689 = vmul.f32 %v3607, %v3681
        %v3690 = vmul.f32 %v3609, %v3682
        %v3691 = vsel %vm2596, %v3659, 0.0
        %3692 = vadd.xlane.f32.xlu0 %v3691
        %v3693 = vpop.xlane.xlu0 %3692
        %v3694 = vsel %vm2596, %v3661, 0.0
        %3695 = vadd.xlane.f32.xlu0 %v3694
        %v3696 = vpop.xlane.xlu0 %3695
        %v3697 = vsel %vm2596, %v3663, 0.0
        %3698 = vadd.xlane.f32.xlu0 %v3697
        %v3699 = vpop.xlane.xlu0 %3698
        %v3700 = vsel %vm2596, %v3665, 0.0
        %3701 = vadd.xlane.f32.xlu0 %v3700
        %v3702 = vpop.xlane.xlu0 %3701
        %v3703 = vsel %vm2596, %v3667, 0.0
        %3704 = vadd.xlane.f32.xlu0 %v3703
        %v3705 = vpop.xlane.xlu0 %3704
        %v3706 = vsel %vm2596, %v3669, 0.0
        %3707 = vadd.xlane.f32.xlu0 %v3706
        %v3708 = vpop.xlane.xlu0 %3707
        %v3709 = vsel %vm2596, %v3671, 0.0
        %3710 = vadd.xlane.f32.xlu0 %v3709
        %v3711 = vpop.xlane.xlu0 %3710
        %v3712 = vsel %vm2596, %v3673, 0.0
        %3713 = vadd.xlane.f32.xlu0 %v3712
        %v3714 = vpop.xlane.xlu0 %3713
        %v3715 = vadd.f32 %v3683, %v3693
        %v3716 = vadd.f32 %v3684, %v3696
        %v3717 = vadd.f32 %v3685, %v3699
        %v3718 = vadd.f32 %v3686, %v3702
        %v3719 = vadd.f32 %v3687, %v3705
        %v3720 = vadd.f32 %v3688, %v3708
        %v3721 = vadd.f32 %v3689, %v3711
        %v3722 = vadd.f32 %v3690, %v3714
        %3723 = vst.msk [vmem:[%s3674] sm:$0xff] %vm2765, %v3715
        %3724 = vst.msk [vmem:[%s3674 + $0x8] sm:$0xff] %vm2765, %v3716
        %3725 = vst.msk [vmem:[%s3674 + $0x10] sm:$0xff] %vm2765, %v3717
        %3726 = vst.msk [vmem:[%s3674 + $0x18] sm:$0xff] %vm2765, %v3718
        %3727 = vst.msk [vmem:[%s3674 + $0x20] sm:$0xff] %vm2765, %v3719
        %3728 = vst.msk [vmem:[%s3674 + $0x28] sm:$0xff] %vm2765, %v3720
        %3729 = vst.msk [vmem:[%s3674 + $0x30] sm:$0xff] %vm2765, %v3721
        %3730 = vst.msk [vmem:[%s3674 + $0x38] sm:$0xff] %vm2765, %v3722
        %s3731 = scalar_lea.vmem [#allocation4], 128
        %v3732 = vld [vmem:[%s3731] sm:$0xff]
        %v3733 = vld [vmem:[%s3731 + $0x8] sm:$0xff]
        %v3734 = vld [vmem:[%s3731 + $0x10] sm:$0xff]
        %v3735 = vld [vmem:[%s3731 + $0x18] sm:$0xff]
        %v3736 = vld [vmem:[%s3731 + $0x20] sm:$0xff]
        %v3737 = vld [vmem:[%s3731 + $0x28] sm:$0xff]
        %v3738 = vld [vmem:[%s3731 + $0x30] sm:$0xff]
        %v3739 = vld [vmem:[%s3731 + $0x38] sm:$0xff]
        %3741 = vset.pattern.permute.xlu0 0
        %3742 = vperm.xlu0 %3741, %v3595
        %v3743 = vpop.permute.xlu0 %3742
        %3746 = vset.pattern.permute.xlu0 0
        %3747 = vperm.xlu0 %3746, %v3597
        %v3748 = vpop.permute.xlu0 %3747
        %3751 = vset.pattern.permute.xlu0 0
        %3752 = vperm.xlu0 %3751, %v3599
        %v3753 = vpop.permute.xlu0 %3752
        %3756 = vset.pattern.permute.xlu0 0
        %3757 = vperm.xlu0 %3756, %v3601
        %v3758 = vpop.permute.xlu0 %3757
        %3761 = vset.pattern.permute.xlu0 0
        %3762 = vperm.xlu0 %3761, %v3603
        %v3763 = vpop.permute.xlu0 %3762
        %3766 = vset.pattern.permute.xlu0 0
        %3767 = vperm.xlu0 %3766, %v3605
        %v3768 = vpop.permute.xlu0 %3767
        %3771 = vset.pattern.permute.xlu0 0
        %3772 = vperm.xlu0 %3771, %v3607
        %v3773 = vpop.permute.xlu0 %3772
        %3776 = vset.pattern.permute.xlu0 0
        %3777 = vperm.xlu0 %3776, %v3609
        %v3778 = vpop.permute.xlu0 %3777
        %v3780 = vmul.f32 %v3743, %v3732
        %v3781 = vmul.f32 %v3748, %v3733
        %v3782 = vmul.f32 %v3753, %v3734
        %v3783 = vmul.f32 %v3758, %v3735
        %v3784 = vmul.f32 %v3763, %v3736
        %v3785 = vmul.f32 %v3768, %v3737
        %v3786 = vmul.f32 %v3773, %v3738
        %v3787 = vmul.f32 %v3778, %v3739
        %v3788 = vpack.c.bf16 %v3661, %v3659
        %v3789 = vpack.c.bf16 %v3665, %v3663
        %v3790 = vpack.c.bf16 %v3669, %v3667
        %v3791 = vpack.c.bf16 %v3673, %v3671
        %3792 = vrot.lane.b32.xlu0 %v2850, 64
        %v3793 = vpop.permute.xlu0 %3792
        %3794 = vrot.lane.b32.xlu0 %v2851, 64
        %v3795 = vpop.permute.xlu0 %3794
        %3796 = vrot.lane.b32.xlu0 %v2852, 64
        %v3797 = vpop.permute.xlu0 %3796
        %3798 = vrot.lane.b32.xlu0 %v2853, 64
        %v3799 = vpop.permute.xlu0 %3798
        %v3805 = vsel %vm2596, %v3788, 0
        %v3808 = vsel %vm2596, %v3789, 0
        %v3811 = vsel %vm2596, %v3790, 0
        %v3814 = vsel %vm2596, %v3791, 0
        %3816 = vmatprep.subr.bf16.mxu0 0
        %3817 = vmatpush1.bf16.msra.mxu0 0
        %3818 = vmatprep.subr.bf16.mxu0 0
        %3819 = vmatpush1.bf16.msra.mxu0 0
        %3820 = vmatprep.subr.bf16.mxu0 0
        %3821 = vmatpush1.bf16.msra.mxu0 0
        %3822 = vmatprep.subr.bf16.mxu0 0
        %3823 = vmatpush1.bf16.msra.mxu0 0
        %3824 = vmatprep.subr.bf16.mxu0 0
        %3825 = vmatpush1.bf16.msra.mxu0 %v3799
        %3826 = vmatprep.subr.bf16.mxu0 0
        %3827 = vmatpush1.bf16.msra.mxu0 %v3797
        %3828 = vmatprep.subr.bf16.mxu0 0
        %3829 = vmatpush1.bf16.msra.mxu0 %v3795
        %3830 = vmatprep.subr.bf16.mxu0 0
        %3831 = vmatpush1.bf16.msra.mxu0 %v3793
        %3832 = vmatprep.subr.bf16.mxu0 0
        %3833 = vmatpush2.bf16.msra.mxu0 0
        %3834 = vmatprep.subr.bf16.mxu0 0
        %3835 = vmatpush2.bf16.msra.mxu0 0
        %3836 = vmatprep.subr.bf16.mxu0 0
        %3837 = vmatpush2.bf16.msra.mxu0 0
        %3838 = vmatprep.subr.bf16.mxu0 0
        %3839 = vmatpush2.bf16.msra.mxu0 0
        %3840 = vmatprep.subr.bf16.mxu0 0
        %3841 = vmatpush2.bf16.msra.mxu0 0
        %3842 = vmatprep.subr.bf16.mxu0 0
        %3843 = vmatpush2.bf16.msra.mxu0 0
        %3844 = vmatprep.subr.bf16.mxu0 0
        %3845 = vmatpush2.bf16.msra.mxu0 0
        %3846 = vmatprep.subr.bf16.mxu0 0
        %3847 = vmatpush2.bf16.msra.mxu0 0
        %3848 = vmatprep.mubr.bf16.mxu0 0
        %3849 = vmatmul.mubr.bf16.gmra.mxu0 %v3805
        %v3850 = vpop.f32.mrf.mxu0
        %v3851 = vadd.f32 0.0, %v3850
        %v3852 = vpop.f32.mrf.mxu0
        %v3853 = vpop.f32.mrf.mxu0
        %v3854 = vadd.f32 0.0, %v3853
        %v3855 = vpop.f32.mrf.mxu0
        %3856 = vmatprep.mubr.bf16.mxu0 0
        %3857 = vmatmul.mubr.bf16.gmra.mxu0 %v3808
        %v3858 = vpop.f32.mrf.mxu0
        %v3859 = vadd.f32 0.0, %v3858
        %v3860 = vpop.f32.mrf.mxu0
        %v3861 = vpop.f32.mrf.mxu0
        %v3862 = vadd.f32 0.0, %v3861
        %v3863 = vpop.f32.mrf.mxu0
        %3864 = vmatprep.mubr.bf16.mxu0 0
        %3865 = vmatmul.mubr.bf16.gmra.mxu0 %v3811
        %v3866 = vpop.f32.mrf.mxu0
        %v3867 = vadd.f32 0.0, %v3866
        %v3868 = vpop.f32.mrf.mxu0
        %v3869 = vpop.f32.mrf.mxu0
        %v3870 = vadd.f32 0.0, %v3869
        %v3871 = vpop.f32.mrf.mxu0
        %3872 = vmatprep.mubr.bf16.mxu0 0
        %3873 = vmatmul.mubr.bf16.gmra.mxu0 %v3814
        %v3874 = vpop.f32.mrf.mxu0
        %v3875 = vadd.f32 0.0, %v3874
        %v3876 = vpop.f32.mrf.mxu0
        %v3877 = vpop.f32.mrf.mxu0
        %v3878 = vadd.f32 0.0, %v3877
        %v3879 = vpop.f32.mrf.mxu0
        %3880 = vdwg.mxu0
        %v3881 = vadd.f32 %v3780, %v3851
        %v3882 = vadd.f32 %v3781, %v3854
        %v3883 = vadd.f32 %v3782, %v3859
        %v3884 = vadd.f32 %v3783, %v3862
        %v3885 = vadd.f32 %v3784, %v3867
        %v3886 = vadd.f32 %v3785, %v3870
        %v3887 = vadd.f32 %v3786, %v3875
        %v3888 = vadd.f32 %v3787, %v3878
        %3889 = vst.msk [vmem:[%s3731] sm:$0xff] %vm2490, %v3881
        %3890 = vst.msk [vmem:[%s3731 + $0x8] sm:$0xff] %vm2490, %v3882
        %3891 = vst.msk [vmem:[%s3731 + $0x10] sm:$0xff] %vm2490, %v3883
        %3892 = vst.msk [vmem:[%s3731 + $0x18] sm:$0xff] %vm2490, %v3884
        %3893 = vst.msk [vmem:[%s3731 + $0x20] sm:$0xff] %vm2490, %v3885
        %3894 = vst.msk [vmem:[%s3731 + $0x28] sm:$0xff] %vm2490, %v3886
        %3895 = vst.msk [vmem:[%s3731 + $0x30] sm:$0xff] %vm2490, %v3887
        %3896 = vst.msk [vmem:[%s3731 + $0x38] sm:$0xff] %vm2490, %v3888
        %3897 = vst.msk [vmem:[%s3545] sm:$0xff] %vm2765, %v3578
        %3898 = vst.msk [vmem:[%s3545 + $0x8] sm:$0xff] %vm2765, %v3579
        %3899 = vst.msk [vmem:[%s3545 + $0x10] sm:$0xff] %vm2765, %v3580
        %3900 = vst.msk [vmem:[%s3545 + $0x18] sm:$0xff] %vm2765, %v3581
        %3901 = vst.msk [vmem:[%s3545 + $0x20] sm:$0xff] %vm2765, %v3582
        %3902 = vst.msk [vmem:[%s3545 + $0x28] sm:$0xff] %vm2765, %v3583
        %3903 = vst.msk [vmem:[%s3545 + $0x30] sm:$0xff] %vm2765, %v3584
        %3904 = vst.msk [vmem:[%s3545 + $0x38] sm:$0xff] %vm2765, %v3585
        %3905 = vrot.lane.b32.xlu0 %v2466, 32
        %v3906 = vpop.permute.xlu0 %3905
        %3907 = vrot.lane.b32.xlu0 %v2467, 32
        %v3908 = vpop.permute.xlu0 %3907
        %3909 = vrot.lane.b32.xlu0 %v2468, 32
        %v3910 = vpop.permute.xlu0 %3909
        %3911 = vrot.lane.b32.xlu0 %v2469, 32
        %v3912 = vpop.permute.xlu0 %3911
        %3913 = vrot.lane.b32.xlu0 %v2486, 32
        %v3914 = vpop.permute.xlu0 %3913
        %3915 = vrot.lane.b32.xlu0 %v2487, 32
        %v3916 = vpop.permute.xlu0 %3915
        %3917 = vrot.lane.b32.xlu0 %v2488, 32
        %v3918 = vpop.permute.xlu0 %3917
        %3919 = vrot.lane.b32.xlu0 %v2489, 32
        %v3920 = vpop.permute.xlu0 %3919
        %v3922 = vsel %vm2490, %v3906, 0
        %v3925 = vsel %vm2490, %v3908, 0
        %v3928 = vsel %vm2490, %v3910, 0
        %v3931 = vsel %vm2490, %v3912, 0
        %v3934 = vsel %vm2490, %v3914, 0
        %v3937 = vsel %vm2490, %v3916, 0
        %v3940 = vsel %vm2490, %v3918, 0
        %v3943 = vsel %vm2490, %v3920, 0
        %3945 = vmatprep.subr.bf16.mxu0 0
        %3946 = vmatpush1.bf16.xpose.msra.mxu0 0
        %3947 = vmatprep.subr.bf16.mxu0 0
        %3948 = vmatpush1.bf16.xpose.msra.mxu0 0
        %3949 = vmatprep.subr.bf16.mxu0 0
        %3950 = vmatpush1.bf16.xpose.msra.mxu0 0
        %3951 = vmatprep.subr.bf16.mxu0 0
        %3952 = vmatpush1.bf16.xpose.msra.mxu0 0
        %3953 = vmatprep.subr.bf16.mxu0 0
        %3954 = vmatpush1.bf16.xpose.msra.mxu0 %v3943
        %3955 = vmatprep.subr.bf16.mxu0 0
        %3956 = vmatpush1.bf16.xpose.msra.mxu0 %v3940
        %3957 = vmatprep.subr.bf16.mxu0 0
        %3958 = vmatpush1.bf16.xpose.msra.mxu0 %v3937
        %3959 = vmatprep.subr.bf16.mxu0 0
        %3960 = vmatpush1.bf16.xpose.msra.mxu0 %v3934
        %3961 = vmatprep.subr.bf16.mxu0 0
        %3962 = vmatpush2.bf16.xpose.msra.mxu0 0
        %3963 = vmatprep.subr.bf16.mxu0 0
        %3964 = vmatpush2.bf16.xpose.msra.mxu0 0
        %3965 = vmatprep.subr.bf16.mxu0 0
        %3966 = vmatpush2.bf16.xpose.msra.mxu0 0
        %3967 = vmatprep.subr.bf16.mxu0 0
        %3968 = vmatpush2.bf16.xpose.msra.mxu0 0
        %3969 = vmatprep.subr.bf16.mxu0 0
        %3970 = vmatpush2.bf16.xpose.msra.mxu0 0
        %3971 = vmatprep.subr.bf16.mxu0 0
        %3972 = vmatpush2.bf16.xpose.msra.mxu0 0
        %3973 = vmatprep.subr.bf16.mxu0 0
        %3974 = vmatpush2.bf16.xpose.msra.mxu0 0
        %3975 = vmatprep.subr.bf16.mxu0 0
        %3976 = vmatpush2.bf16.xpose.msra.mxu0 0
        %3977 = vmatprep.mubr.bf16.mxu0 0
        %3978 = vmatmul.mubr.bf16.gmra.mxu0 %v3922
        %v3979 = vpop.f32.mrf.mxu0
        %v3980 = vadd.f32 0.0, %v3979
        %v3981 = vpop.f32.mrf.mxu0
        %v3982 = vpop.f32.mrf.mxu0
        %v3983 = vadd.f32 0.0, %v3982
        %v3984 = vpop.f32.mrf.mxu0
        %3985 = vmatprep.mubr.bf16.mxu0 0
        %3986 = vmatmul.mubr.bf16.gmra.mxu0 %v3925
        %v3987 = vpop.f32.mrf.mxu0
        %v3988 = vadd.f32 0.0, %v3987
        %v3989 = vpop.f32.mrf.mxu0
        %v3990 = vpop.f32.mrf.mxu0
        %v3991 = vadd.f32 0.0, %v3990
        %v3992 = vpop.f32.mrf.mxu0
        %3993 = vmatprep.mubr.bf16.mxu0 0
        %3994 = vmatmul.mubr.bf16.gmra.mxu0 %v3928
        %v3995 = vpop.f32.mrf.mxu0
        %v3996 = vadd.f32 0.0, %v3995
        %v3997 = vpop.f32.mrf.mxu0
        %v3998 = vpop.f32.mrf.mxu0
        %v3999 = vadd.f32 0.0, %v3998
        %v4000 = vpop.f32.mrf.mxu0
        %4001 = vmatprep.mubr.bf16.mxu0 0
        %4002 = vmatmul.mubr.bf16.gmra.mxu0 %v3931
        %v4003 = vpop.f32.mrf.mxu0
        %v4004 = vadd.f32 0.0, %v4003
        %v4005 = vpop.f32.mrf.mxu0
        %v4006 = vpop.f32.mrf.mxu0
        %v4007 = vadd.f32 0.0, %v4006
        %v4008 = vpop.f32.mrf.mxu0
        %4009 = vdwg.mxu0
        %v4010 = vsel %vm2442, %v3980, -1e+30
        %v4011 = vsel %vm2443, %v3983, -1e+30
        %v4012 = vsel %vm2444, %v3988, -1e+30
        %v4013 = vsel %vm2445, %v3991, -1e+30
        %v4014 = vsel %vm2446, %v3996, -1e+30
        %v4015 = vsel %vm2447, %v3999, -1e+30
        %v4016 = vsel %vm2448, %v4004, -1e+30
        %v4017 = vsel %vm2449, %v4007, -1e+30
        %s4018 = scalar_lea.vmem [#allocation2], 192
        %v4019 = vld [vmem:[%s4018] sm:$0xff]
        %v4020 = vld [vmem:[%s4018 + $0x8] sm:$0xff]
        %v4021 = vld [vmem:[%s4018 + $0x10] sm:$0xff]
        %v4022 = vld [vmem:[%s4018 + $0x18] sm:$0xff]
        %v4023 = vld [vmem:[%s4018 + $0x20] sm:$0xff]
        %v4024 = vld [vmem:[%s4018 + $0x28] sm:$0xff]
        %v4025 = vld [vmem:[%s4018 + $0x30] sm:$0xff]
        %v4026 = vld [vmem:[%s4018 + $0x38] sm:$0xff]
        %v4027 = vsel %vm2596, %v4010, -inf
        %4028 = vmax.xlane.f32.xlu0 %v4027
        %v4029 = vpop.xlane.xlu0 %4028
        %v4030 = vsel %vm2596, %v4011, -inf
        %4031 = vmax.xlane.f32.xlu0 %v4030
        %v4032 = vpop.xlane.xlu0 %4031
        %v4033 = vsel %vm2596, %v4012, -inf
        %4034 = vmax.xlane.f32.xlu0 %v4033
        %v4035 = vpop.xlane.xlu0 %4034
        %v4036 = vsel %vm2596, %v4013, -inf
        %4037 = vmax.xlane.f32.xlu0 %v4036
        %v4038 = vpop.xlane.xlu0 %4037
        %v4039 = vsel %vm2596, %v4014, -inf
        %4040 = vmax.xlane.f32.xlu0 %v4039
        %v4041 = vpop.xlane.xlu0 %4040
        %v4042 = vsel %vm2596, %v4015, -inf
        %4043 = vmax.xlane.f32.xlu0 %v4042
        %v4044 = vpop.xlane.xlu0 %4043
        %v4045 = vsel %vm2596, %v4016, -inf
        %4046 = vmax.xlane.f32.xlu0 %v4045
        %v4047 = vpop.xlane.xlu0 %4046
        %v4048 = vsel %vm2596, %v4017, -inf
        %4049 = vmax.xlane.f32.xlu0 %v4048
        %v4050 = vpop.xlane.xlu0 %4049
        %v4051 = vmax.f32 %v4019, %v4029
        %v4052 = vmax.f32 %v4020, %v4032
        %v4053 = vmax.f32 %v4021, %v4035
        %v4054 = vmax.f32 %v4022, %v4038
        %v4055 = vmax.f32 %v4023, %v4041
        %v4056 = vmax.f32 %v4024, %v4044
        %v4057 = vmax.f32 %v4025, %v4047
        %v4058 = vmax.f32 %v4026, %v4050
        %v4059 = vsub.f32 %v4019, %v4051
        %v4060 = vsub.f32 %v4020, %v4052
        %v4061 = vsub.f32 %v4021, %v4053
        %v4062 = vsub.f32 %v4022, %v4054
        %v4063 = vsub.f32 %v4023, %v4055
        %v4064 = vsub.f32 %v4024, %v4056
        %v4065 = vsub.f32 %v4025, %v4057
        %v4066 = vsub.f32 %v4026, %v4058
        %v4067 = vmul.f32 %v4059, 1.442695
        %v4068 = vpow.pop %v4067
        %v4069 = vmul.f32 %v4060, 1.442695
        %v4070 = vpow.pop %v4069
        %v4071 = vmul.f32 %v4061, 1.442695
        %v4072 = vpow.pop %v4071
        %v4073 = vmul.f32 %v4062, 1.442695
        %v4074 = vpow.pop %v4073
        %v4075 = vmul.f32 %v4063, 1.442695
        %v4076 = vpow.pop %v4075
        %v4077 = vmul.f32 %v4064, 1.442695
        %v4078 = vpow.pop %v4077
        %v4079 = vmul.f32 %v4065, 1.442695
        %v4080 = vpow.pop %v4079
        %v4081 = vmul.f32 %v4066, 1.442695
        %v4082 = vpow.pop %v4081
        %4084 = vset.pattern.permute.xlu0 0
        %4085 = vperm.xlu0 %4084, %v4051
        %v4086 = vpop.permute.xlu0 %4085
        %4089 = vset.pattern.permute.xlu0 0
        %4090 = vperm.xlu0 %4089, %v4052
        %v4091 = vpop.permute.xlu0 %4090
        %4094 = vset.pattern.permute.xlu0 0
        %4095 = vperm.xlu0 %4094, %v4053
        %v4096 = vpop.permute.xlu0 %4095
        %4099 = vset.pattern.permute.xlu0 0
        %4100 = vperm.xlu0 %4099, %v4054
        %v4101 = vpop.permute.xlu0 %4100
        %4104 = vset.pattern.permute.xlu0 0
        %4105 = vperm.xlu0 %4104, %v4055
        %v4106 = vpop.permute.xlu0 %4105
        %4109 = vset.pattern.permute.xlu0 0
        %4110 = vperm.xlu0 %4109, %v4056
        %v4111 = vpop.permute.xlu0 %4110
        %4114 = vset.pattern.permute.xlu0 0
        %4115 = vperm.xlu0 %4114, %v4057
        %v4116 = vpop.permute.xlu0 %4115
        %4119 = vset.pattern.permute.xlu0 0
        %4120 = vperm.xlu0 %4119, %v4058
        %v4121 = vpop.permute.xlu0 %4120
        %v4123 = vsub.f32 %v4010, %v4086
        %v4124 = vsub.f32 %v4011, %v4091
        %v4125 = vsub.f32 %v4012, %v4096
        %v4126 = vsub.f32 %v4013, %v4101
        %v4127 = vsub.f32 %v4014, %v4106
        %v4128 = vsub.f32 %v4015, %v4111
        %v4129 = vsub.f32 %v4016, %v4116
        %v4130 = vsub.f32 %v4017, %v4121
        %v4131 = vmul.f32 %v4123, 1.442695
        %v4132 = vpow.pop %v4131
        %v4133 = vmul.f32 %v4124, 1.442695
        %v4134 = vpow.pop %v4133
        %v4135 = vmul.f32 %v4125, 1.442695
        %v4136 = vpow.pop %v4135
        %v4137 = vmul.f32 %v4126, 1.442695
        %v4138 = vpow.pop %v4137
        %v4139 = vmul.f32 %v4127, 1.442695
        %v4140 = vpow.pop %v4139
        %v4141 = vmul.f32 %v4128, 1.442695
        %v4142 = vpow.pop %v4141
        %v4143 = vmul.f32 %v4129, 1.442695
        %v4144 = vpow.pop %v4143
        %v4145 = vmul.f32 %v4130, 1.442695
        %v4146 = vpow.pop %v4145
        %s4147 = scalar_lea.vmem [#allocation3], 192
        %v4148 = vld [vmem:[%s4147] sm:$0xff]
        %v4149 = vld [vmem:[%s4147 + $0x8] sm:$0xff]
        %v4150 = vld [vmem:[%s4147 + $0x10] sm:$0xff]
        %v4151 = vld [vmem:[%s4147 + $0x18] sm:$0xff]
        %v4152 = vld [vmem:[%s4147 + $0x20] sm:$0xff]
        %v4153 = vld [vmem:[%s4147 + $0x28] sm:$0xff]
        %v4154 = vld [vmem:[%s4147 + $0x30] sm:$0xff]
        %v4155 = vld [vmem:[%s4147 + $0x38] sm:$0xff]
        %v4156 = vmul.f32 %v4068, %v4148
        %v4157 = vmul.f32 %v4070, %v4149
        %v4158 = vmul.f32 %v4072, %v4150
        %v4159 = vmul.f32 %v4074, %v4151
        %v4160 = vmul.f32 %v4076, %v4152
        %v4161 = vmul.f32 %v4078, %v4153
        %v4162 = vmul.f32 %v4080, %v4154
        %v4163 = vmul.f32 %v4082, %v4155
        %v4164 = vsel %vm2596, %v4132, 0.0
        %4165 = vadd.xlane.f32.xlu0 %v4164
        %v4166 = vpop.xlane.xlu0 %4165
        %v4167 = vsel %vm2596, %v4134, 0.0
        %4168 = vadd.xlane.f32.xlu0 %v4167
        %v4169 = vpop.xlane.xlu0 %4168
        %v4170 = vsel %vm2596, %v4136, 0.0
        %4171 = vadd.xlane.f32.xlu0 %v4170
        %v4172 = vpop.xlane.xlu0 %4171
        %v4173 = vsel %vm2596, %v4138, 0.0
        %4174 = vadd.xlane.f32.xlu0 %v4173
        %v4175 = vpop.xlane.xlu0 %4174
        %v4176 = vsel %vm2596, %v4140, 0.0
        %4177 = vadd.xlane.f32.xlu0 %v4176
        %v4178 = vpop.xlane.xlu0 %4177
        %v4179 = vsel %vm2596, %v4142, 0.0
        %4180 = vadd.xlane.f32.xlu0 %v4179
        %v4181 = vpop.xlane.xlu0 %4180
        %v4182 = vsel %vm2596, %v4144, 0.0
        %4183 = vadd.xlane.f32.xlu0 %v4182
        %v4184 = vpop.xlane.xlu0 %4183
        %v4185 = vsel %vm2596, %v4146, 0.0
        %4186 = vadd.xlane.f32.xlu0 %v4185
        %v4187 = vpop.xlane.xlu0 %4186
        %v4188 = vadd.f32 %v4156, %v4166
        %v4189 = vadd.f32 %v4157, %v4169
        %v4190 = vadd.f32 %v4158, %v4172
        %v4191 = vadd.f32 %v4159, %v4175
        %v4192 = vadd.f32 %v4160, %v4178
        %v4193 = vadd.f32 %v4161, %v4181
        %v4194 = vadd.f32 %v4162, %v4184
        %v4195 = vadd.f32 %v4163, %v4187
        %4196 = vst.msk [vmem:[%s4147] sm:$0xff] %vm2765, %v4188
        %4197 = vst.msk [vmem:[%s4147 + $0x8] sm:$0xff] %vm2765, %v4189
        %4198 = vst.msk [vmem:[%s4147 + $0x10] sm:$0xff] %vm2765, %v4190
        %4199 = vst.msk [vmem:[%s4147 + $0x18] sm:$0xff] %vm2765, %v4191
        %4200 = vst.msk [vmem:[%s4147 + $0x20] sm:$0xff] %vm2765, %v4192
        %4201 = vst.msk [vmem:[%s4147 + $0x28] sm:$0xff] %vm2765, %v4193
        %4202 = vst.msk [vmem:[%s4147 + $0x30] sm:$0xff] %vm2765, %v4194
        %4203 = vst.msk [vmem:[%s4147 + $0x38] sm:$0xff] %vm2765, %v4195
        %s4204 = scalar_lea.vmem [#allocation4], 192
        %v4205 = vld [vmem:[%s4204] sm:$0xff]
        %v4206 = vld [vmem:[%s4204 + $0x8] sm:$0xff]
        %v4207 = vld [vmem:[%s4204 + $0x10] sm:$0xff]
        %v4208 = vld [vmem:[%s4204 + $0x18] sm:$0xff]
        %v4209 = vld [vmem:[%s4204 + $0x20] sm:$0xff]
        %v4210 = vld [vmem:[%s4204 + $0x28] sm:$0xff]
        %v4211 = vld [vmem:[%s4204 + $0x30] sm:$0xff]
        %v4212 = vld [vmem:[%s4204 + $0x38] sm:$0xff]
        %4214 = vset.pattern.permute.xlu0 0
        %4215 = vperm.xlu0 %4214, %v4068
        %v4216 = vpop.permute.xlu0 %4215
        %4219 = vset.pattern.permute.xlu0 0
        %4220 = vperm.xlu0 %4219, %v4070
        %v4221 = vpop.permute.xlu0 %4220
        %4224 = vset.pattern.permute.xlu0 0
        %4225 = vperm.xlu0 %4224, %v4072
        %v4226 = vpop.permute.xlu0 %4225
        %4229 = vset.pattern.permute.xlu0 0
        %4230 = vperm.xlu0 %4229, %v4074
        %v4231 = vpop.permute.xlu0 %4230
        %4234 = vset.pattern.permute.xlu0 0
        %4235 = vperm.xlu0 %4234, %v4076
        %v4236 = vpop.permute.xlu0 %4235
        %4239 = vset.pattern.permute.xlu0 0
        %4240 = vperm.xlu0 %4239, %v4078
        %v4241 = vpop.permute.xlu0 %4240
        %4244 = vset.pattern.permute.xlu0 0
        %4245 = vperm.xlu0 %4244, %v4080
        %v4246 = vpop.permute.xlu0 %4245
        %4249 = vset.pattern.permute.xlu0 0
        %4250 = vperm.xlu0 %4249, %v4082
        %v4251 = vpop.permute.xlu0 %4250
        %v4253 = vmul.f32 %v4216, %v4205
        %v4254 = vmul.f32 %v4221, %v4206
        %v4255 = vmul.f32 %v4226, %v4207
        %v4256 = vmul.f32 %v4231, %v4208
        %v4257 = vmul.f32 %v4236, %v4209
        %v4258 = vmul.f32 %v4241, %v4210
        %v4259 = vmul.f32 %v4246, %v4211
        %v4260 = vmul.f32 %v4251, %v4212
        %v4261 = vpack.c.bf16 %v4134, %v4132
        %v4262 = vpack.c.bf16 %v4138, %v4136
        %v4263 = vpack.c.bf16 %v4142, %v4140
        %v4264 = vpack.c.bf16 %v4146, %v4144
        %4265 = vrot.lane.b32.xlu0 %v2850, 32
        %v4266 = vpop.permute.xlu0 %4265
        %4267 = vrot.lane.b32.xlu0 %v2851, 32
        %v4268 = vpop.permute.xlu0 %4267
        %4269 = vrot.lane.b32.xlu0 %v2852, 32
        %v4270 = vpop.permute.xlu0 %4269
        %4271 = vrot.lane.b32.xlu0 %v2853, 32
        %v4272 = vpop.permute.xlu0 %4271
        %v4278 = vsel %vm2596, %v4261, 0
        %v4281 = vsel %vm2596, %v4262, 0
        %v4284 = vsel %vm2596, %v4263, 0
        %v4287 = vsel %vm2596, %v4264, 0
        %4289 = vmatprep.subr.bf16.mxu0 0
        %4290 = vmatpush1.bf16.msra.mxu0 0
        %4291 = vmatprep.subr.bf16.mxu0 0
        %4292 = vmatpush1.bf16.msra.mxu0 0
        %4293 = vmatprep.subr.bf16.mxu0 0
        %4294 = vmatpush1.bf16.msra.mxu0 0
        %4295 = vmatprep.subr.bf16.mxu0 0
        %4296 = vmatpush1.bf16.msra.mxu0 0
        %4297 = vmatprep.subr.bf16.mxu0 0
        %4298 = vmatpush1.bf16.msra.mxu0 %v4272
        %4299 = vmatprep.subr.bf16.mxu0 0
        %4300 = vmatpush1.bf16.msra.mxu0 %v4270
        %4301 = vmatprep.subr.bf16.mxu0 0
        %4302 = vmatpush1.bf16.msra.mxu0 %v4268
        %4303 = vmatprep.subr.bf16.mxu0 0
        %4304 = vmatpush1.bf16.msra.mxu0 %v4266
        %4305 = vmatprep.subr.bf16.mxu0 0
        %4306 = vmatpush2.bf16.msra.mxu0 0
        %4307 = vmatprep.subr.bf16.mxu0 0
        %4308 = vmatpush2.bf16.msra.mxu0 0
        %4309 = vmatprep.subr.bf16.mxu0 0
        %4310 = vmatpush2.bf16.msra.mxu0 0
        %4311 = vmatprep.subr.bf16.mxu0 0
        %4312 = vmatpush2.bf16.msra.mxu0 0
        %4313 = vmatprep.subr.bf16.mxu0 0
        %4314 = vmatpush2.bf16.msra.mxu0 0
        %4315 = vmatprep.subr.bf16.mxu0 0
        %4316 = vmatpush2.bf16.msra.mxu0 0
        %4317 = vmatprep.subr.bf16.mxu0 0
        %4318 = vmatpush2.bf16.msra.mxu0 0
        %4319 = vmatprep.subr.bf16.mxu0 0
        %4320 = vmatpush2.bf16.msra.mxu0 0
        %4321 = vmatprep.mubr.bf16.mxu0 0
        %4322 = vmatmul.mubr.bf16.gmra.mxu0 %v4278
        %v4323 = vpop.f32.mrf.mxu0
        %v4324 = vadd.f32 0.0, %v4323
        %v4325 = vpop.f32.mrf.mxu0
        %v4326 = vpop.f32.mrf.mxu0
        %v4327 = vadd.f32 0.0, %v4326
        %v4328 = vpop.f32.mrf.mxu0
        %4329 = vmatprep.mubr.bf16.mxu0 0
        %4330 = vmatmul.mubr.bf16.gmra.mxu0 %v4281
        %v4331 = vpop.f32.mrf.mxu0
        %v4332 = vadd.f32 0.0, %v4331
        %v4333 = vpop.f32.mrf.mxu0
        %v4334 = vpop.f32.mrf.mxu0
        %v4335 = vadd.f32 0.0, %v4334
        %v4336 = vpop.f32.mrf.mxu0
        %4337 = vmatprep.mubr.bf16.mxu0 0
        %4338 = vmatmul.mubr.bf16.gmra.mxu0 %v4284
        %v4339 = vpop.f32.mrf.mxu0
        %v4340 = vadd.f32 0.0, %v4339
        %v4341 = vpop.f32.mrf.mxu0
        %v4342 = vpop.f32.mrf.mxu0
        %v4343 = vadd.f32 0.0, %v4342
        %v4344 = vpop.f32.mrf.mxu0
        %4345 = vmatprep.mubr.bf16.mxu0 0
        %4346 = vmatmul.mubr.bf16.gmra.mxu0 %v4287
        %v4347 = vpop.f32.mrf.mxu0
        %v4348 = vadd.f32 0.0, %v4347
        %v4349 = vpop.f32.mrf.mxu0
        %v4350 = vpop.f32.mrf.mxu0
        %v4351 = vadd.f32 0.0, %v4350
        %v4352 = vpop.f32.mrf.mxu0
        %4353 = vdwg.mxu0
        %v4354 = vadd.f32 %v4253, %v4324
        %v4355 = vadd.f32 %v4254, %v4327
        %v4356 = vadd.f32 %v4255, %v4332
        %v4357 = vadd.f32 %v4256, %v4335
        %v4358 = vadd.f32 %v4257, %v4340
        %v4359 = vadd.f32 %v4258, %v4343
        %v4360 = vadd.f32 %v4259, %v4348
        %v4361 = vadd.f32 %v4260, %v4351
        %4362 = vst.msk [vmem:[%s4204] sm:$0xff] %vm2490, %v4354
        %4363 = vst.msk [vmem:[%s4204 + $0x8] sm:$0xff] %vm2490, %v4355
        %4364 = vst.msk [vmem:[%s4204 + $0x10] sm:$0xff] %vm2490, %v4356
        %4365 = vst.msk [vmem:[%s4204 + $0x18] sm:$0xff] %vm2490, %v4357
        %4366 = vst.msk [vmem:[%s4204 + $0x20] sm:$0xff] %vm2490, %v4358
        %4367 = vst.msk [vmem:[%s4204 + $0x28] sm:$0xff] %vm2490, %v4359
        %4368 = vst.msk [vmem:[%s4204 + $0x30] sm:$0xff] %vm2490, %v4360
        %4369 = vst.msk [vmem:[%s4204 + $0x38] sm:$0xff] %vm2490, %v4361
        %4370 = vst.msk [vmem:[%s4018] sm:$0xff] %vm2765, %v4051
        %4371 = vst.msk [vmem:[%s4018 + $0x8] sm:$0xff] %vm2765, %v4052
        %4372 = vst.msk [vmem:[%s4018 + $0x10] sm:$0xff] %vm2765, %v4053
        %4373 = vst.msk [vmem:[%s4018 + $0x18] sm:$0xff] %vm2765, %v4054
        %4374 = vst.msk [vmem:[%s4018 + $0x20] sm:$0xff] %vm2765, %v4055
        %4375 = vst.msk [vmem:[%s4018 + $0x28] sm:$0xff] %vm2765, %v4056
        %4376 = vst.msk [vmem:[%s4018 + $0x30] sm:$0xff] %vm2765, %v4057
        %4377 = vst.msk [vmem:[%s4018 + $0x38] sm:$0xff] %vm2765, %v4058
      $region44: #{_lambda_.12} parent=31 // pred_fallthru
        _
      // Predicated region
      $region45: #{_lambda_.12} parent=31 // pred_check
        %p4378 = pneg %p377
      $region46: #{_lambda_.12} parent=31 // pred_check_branch
        %4380 = sbr.rel (%p4378) target = $region48
      $region47: #{_lambda_.12} parent=31 // pred_region
        %v4381 = vld [vmem:[#allocation3] sm:$0xff]
        %v4382 = vld [vmem:[#allocation3 + $0x8] sm:$0xff]
        %v4383 = vld [vmem:[#allocation3 + $0x10] sm:$0xff]
        %v4384 = vld [vmem:[#allocation3 + $0x18] sm:$0xff]
        %v4385 = vld [vmem:[#allocation3 + $0x20] sm:$0xff]
        %v4386 = vld [vmem:[#allocation3 + $0x28] sm:$0xff]
        %v4387 = vld [vmem:[#allocation3 + $0x30] sm:$0xff]
        %v4388 = vld [vmem:[#allocation3 + $0x38] sm:$0xff]
        %v4389 = vrcp.pop %v4381
        %v4390 = vrcp.pop %v4382
        %v4391 = vrcp.pop %v4383
        %v4392 = vrcp.pop %v4384
        %v4393 = vrcp.pop %v4385
        %v4394 = vrcp.pop %v4386
        %v4395 = vrcp.pop %v4387
        %v4396 = vrcp.pop %v4388
        %v4397 = vld [vmem:[#allocation4] sm:$0xff]
        %v4398 = vld [vmem:[#allocation4 + $0x8] sm:$0xff]
        %v4399 = vld [vmem:[#allocation4 + $0x10] sm:$0xff]
        %v4400 = vld [vmem:[#allocation4 + $0x18] sm:$0xff]
        %v4401 = vld [vmem:[#allocation4 + $0x20] sm:$0xff]
        %v4402 = vld [vmem:[#allocation4 + $0x28] sm:$0xff]
        %v4403 = vld [vmem:[#allocation4 + $0x30] sm:$0xff]
        %v4404 = vld [vmem:[#allocation4 + $0x38] sm:$0xff]
        %4406 = vset.pattern.permute.xlu0 0
        %4407 = vperm.xlu0 %4406, %v4389
        %v4408 = vpop.permute.xlu0 %4407
        %4411 = vset.pattern.permute.xlu0 0
        %4412 = vperm.xlu0 %4411, %v4390
        %v4413 = vpop.permute.xlu0 %4412
        %4416 = vset.pattern.permute.xlu0 0
        %4417 = vperm.xlu0 %4416, %v4391
        %v4418 = vpop.permute.xlu0 %4417
        %4421 = vset.pattern.permute.xlu0 0
        %4422 = vperm.xlu0 %4421, %v4392
        %v4423 = vpop.permute.xlu0 %4422
        %4426 = vset.pattern.permute.xlu0 0
        %4427 = vperm.xlu0 %4426, %v4393
        %v4428 = vpop.permute.xlu0 %4427
        %4431 = vset.pattern.permute.xlu0 0
        %4432 = vperm.xlu0 %4431, %v4394
        %v4433 = vpop.permute.xlu0 %4432
        %4436 = vset.pattern.permute.xlu0 0
        %4437 = vperm.xlu0 %4436, %v4395
        %v4438 = vpop.permute.xlu0 %4437
        %4441 = vset.pattern.permute.xlu0 0
        %4442 = vperm.xlu0 %4441, %v4396
        %v4443 = vpop.permute.xlu0 %4442
        %v4445 = vmul.f32 %v4397, %v4408
        %v4446 = vmul.f32 %v4398, %v4413
        %v4447 = vmul.f32 %v4399, %v4418
        %v4448 = vmul.f32 %v4400, %v4423
        %v4449 = vmul.f32 %v4401, %v4428
        %v4450 = vmul.f32 %v4402, %v4433
        %v4451 = vmul.f32 %v4403, %v4438
        %v4452 = vmul.f32 %v4404, %v4443
        %s4453 = scalar_lea.vmem [#allocation3], 64
        %v4454 = vld [vmem:[%s4453] sm:$0xff]
        %v4455 = vld [vmem:[%s4453 + $0x8] sm:$0xff]
        %v4456 = vld [vmem:[%s4453 + $0x10] sm:$0xff]
        %v4457 = vld [vmem:[%s4453 + $0x18] sm:$0xff]
        %v4458 = vld [vmem:[%s4453 + $0x20] sm:$0xff]
        %v4459 = vld [vmem:[%s4453 + $0x28] sm:$0xff]
        %v4460 = vld [vmem:[%s4453 + $0x30] sm:$0xff]
        %v4461 = vld [vmem:[%s4453 + $0x38] sm:$0xff]
        %v4462 = vrcp.pop %v4454
        %v4463 = vrcp.pop %v4455
        %v4464 = vrcp.pop %v4456
        %v4465 = vrcp.pop %v4457
        %v4466 = vrcp.pop %v4458
        %v4467 = vrcp.pop %v4459
        %v4468 = vrcp.pop %v4460
        %v4469 = vrcp.pop %v4461
        %s4470 = scalar_lea.vmem [#allocation4], 64
        %v4471 = vld [vmem:[%s4470] sm:$0xff]
        %v4472 = vld [vmem:[%s4470 + $0x8] sm:$0xff]
        %v4473 = vld [vmem:[%s4470 + $0x10] sm:$0xff]
        %v4474 = vld [vmem:[%s4470 + $0x18] sm:$0xff]
        %v4475 = vld [vmem:[%s4470 + $0x20] sm:$0xff]
        %v4476 = vld [vmem:[%s4470 + $0x28] sm:$0xff]
        %v4477 = vld [vmem:[%s4470 + $0x30] sm:$0xff]
        %v4478 = vld [vmem:[%s4470 + $0x38] sm:$0xff]
        %4480 = vset.pattern.permute.xlu0 0
        %4481 = vperm.xlu0 %4480, %v4462
        %v4482 = vpop.permute.xlu0 %4481
        %4485 = vset.pattern.permute.xlu0 0
        %4486 = vperm.xlu0 %4485, %v4463
        %v4487 = vpop.permute.xlu0 %4486
        %4490 = vset.pattern.permute.xlu0 0
        %4491 = vperm.xlu0 %4490, %v4464
        %v4492 = vpop.permute.xlu0 %4491
        %4495 = vset.pattern.permute.xlu0 0
        %4496 = vperm.xlu0 %4495, %v4465
        %v4497 = vpop.permute.xlu0 %4496
        %4500 = vset.pattern.permute.xlu0 0
        %4501 = vperm.xlu0 %4500, %v4466
        %v4502 = vpop.permute.xlu0 %4501
        %4505 = vset.pattern.permute.xlu0 0
        %4506 = vperm.xlu0 %4505, %v4467
        %v4507 = vpop.permute.xlu0 %4506
        %4510 = vset.pattern.permute.xlu0 0
        %4511 = vperm.xlu0 %4510, %v4468
        %v4512 = vpop.permute.xlu0 %4511
        %4515 = vset.pattern.permute.xlu0 0
        %4516 = vperm.xlu0 %4515, %v4469
        %v4517 = vpop.permute.xlu0 %4516
        %v4519 = vmul.f32 %v4471, %v4482
        %v4520 = vmul.f32 %v4472, %v4487
        %v4521 = vmul.f32 %v4473, %v4492
        %v4522 = vmul.f32 %v4474, %v4497
        %v4523 = vmul.f32 %v4475, %v4502
        %v4524 = vmul.f32 %v4476, %v4507
        %v4525 = vmul.f32 %v4477, %v4512
        %v4526 = vmul.f32 %v4478, %v4517
        %s4527 = scalar_lea.vmem [#allocation3], 128
        %v4528 = vld [vmem:[%s4527] sm:$0xff]
        %v4529 = vld [vmem:[%s4527 + $0x8] sm:$0xff]
        %v4530 = vld [vmem:[%s4527 + $0x10] sm:$0xff]
        %v4531 = vld [vmem:[%s4527 + $0x18] sm:$0xff]
        %v4532 = vld [vmem:[%s4527 + $0x20] sm:$0xff]
        %v4533 = vld [vmem:[%s4527 + $0x28] sm:$0xff]
        %v4534 = vld [vmem:[%s4527 + $0x30] sm:$0xff]
        %v4535 = vld [vmem:[%s4527 + $0x38] sm:$0xff]
        %v4536 = vrcp.pop %v4528
        %v4537 = vrcp.pop %v4529
        %v4538 = vrcp.pop %v4530
        %v4539 = vrcp.pop %v4531
        %v4540 = vrcp.pop %v4532
        %v4541 = vrcp.pop %v4533
        %v4542 = vrcp.pop %v4534
        %v4543 = vrcp.pop %v4535
        %s4544 = scalar_lea.vmem [#allocation4], 128
        %v4545 = vld [vmem:[%s4544] sm:$0xff]
        %v4546 = vld [vmem:[%s4544 + $0x8] sm:$0xff]
        %v4547 = vld [vmem:[%s4544 + $0x10] sm:$0xff]
        %v4548 = vld [vmem:[%s4544 + $0x18] sm:$0xff]
        %v4549 = vld [vmem:[%s4544 + $0x20] sm:$0xff]
        %v4550 = vld [vmem:[%s4544 + $0x28] sm:$0xff]
        %v4551 = vld [vmem:[%s4544 + $0x30] sm:$0xff]
        %v4552 = vld [vmem:[%s4544 + $0x38] sm:$0xff]
        %4554 = vset.pattern.permute.xlu0 0
        %4555 = vperm.xlu0 %4554, %v4536
        %v4556 = vpop.permute.xlu0 %4555
        %4559 = vset.pattern.permute.xlu0 0
        %4560 = vperm.xlu0 %4559, %v4537
        %v4561 = vpop.permute.xlu0 %4560
        %4564 = vset.pattern.permute.xlu0 0
        %4565 = vperm.xlu0 %4564, %v4538
        %v4566 = vpop.permute.xlu0 %4565
        %4569 = vset.pattern.permute.xlu0 0
        %4570 = vperm.xlu0 %4569, %v4539
        %v4571 = vpop.permute.xlu0 %4570
        %4574 = vset.pattern.permute.xlu0 0
        %4575 = vperm.xlu0 %4574, %v4540
        %v4576 = vpop.permute.xlu0 %4575
        %4579 = vset.pattern.permute.xlu0 0
        %4580 = vperm.xlu0 %4579, %v4541
        %v4581 = vpop.permute.xlu0 %4580
        %4584 = vset.pattern.permute.xlu0 0
        %4585 = vperm.xlu0 %4584, %v4542
        %v4586 = vpop.permute.xlu0 %4585
        %4589 = vset.pattern.permute.xlu0 0
        %4590 = vperm.xlu0 %4589, %v4543
        %v4591 = vpop.permute.xlu0 %4590
        %v4593 = vmul.f32 %v4545, %v4556
        %v4594 = vmul.f32 %v4546, %v4561
        %v4595 = vmul.f32 %v4547, %v4566
        %v4596 = vmul.f32 %v4548, %v4571
        %v4597 = vmul.f32 %v4549, %v4576
        %v4598 = vmul.f32 %v4550, %v4581
        %v4599 = vmul.f32 %v4551, %v4586
        %v4600 = vmul.f32 %v4552, %v4591
        %s4601 = scalar_lea.vmem [#allocation3], 192
        %v4602 = vld [vmem:[%s4601] sm:$0xff]
        %v4603 = vld [vmem:[%s4601 + $0x8] sm:$0xff]
        %v4604 = vld [vmem:[%s4601 + $0x10] sm:$0xff]
        %v4605 = vld [vmem:[%s4601 + $0x18] sm:$0xff]
        %v4606 = vld [vmem:[%s4601 + $0x20] sm:$0xff]
        %v4607 = vld [vmem:[%s4601 + $0x28] sm:$0xff]
        %v4608 = vld [vmem:[%s4601 + $0x30] sm:$0xff]
        %v4609 = vld [vmem:[%s4601 + $0x38] sm:$0xff]
        %v4610 = vrcp.pop %v4602
        %v4611 = vrcp.pop %v4603
        %v4612 = vrcp.pop %v4604
        %v4613 = vrcp.pop %v4605
        %v4614 = vrcp.pop %v4606
        %v4615 = vrcp.pop %v4607
        %v4616 = vrcp.pop %v4608
        %v4617 = vrcp.pop %v4609
        %s4618 = scalar_lea.vmem [#allocation4], 192
        %v4619 = vld [vmem:[%s4618] sm:$0xff]
        %v4620 = vld [vmem:[%s4618 + $0x8] sm:$0xff]
        %v4621 = vld [vmem:[%s4618 + $0x10] sm:$0xff]
        %v4622 = vld [vmem:[%s4618 + $0x18] sm:$0xff]
        %v4623 = vld [vmem:[%s4618 + $0x20] sm:$0xff]
        %v4624 = vld [vmem:[%s4618 + $0x28] sm:$0xff]
        %v4625 = vld [vmem:[%s4618 + $0x30] sm:$0xff]
        %v4626 = vld [vmem:[%s4618 + $0x38] sm:$0xff]
        %4628 = vset.pattern.permute.xlu0 0
        %4629 = vperm.xlu0 %4628, %v4610
        %v4630 = vpop.permute.xlu0 %4629
        %4633 = vset.pattern.permute.xlu0 0
        %4634 = vperm.xlu0 %4633, %v4611
        %v4635 = vpop.permute.xlu0 %4634
        %4638 = vset.pattern.permute.xlu0 0
        %4639 = vperm.xlu0 %4638, %v4612
        %v4640 = vpop.permute.xlu0 %4639
        %4643 = vset.pattern.permute.xlu0 0
        %4644 = vperm.xlu0 %4643, %v4613
        %v4645 = vpop.permute.xlu0 %4644
        %4648 = vset.pattern.permute.xlu0 0
        %4649 = vperm.xlu0 %4648, %v4614
        %v4650 = vpop.permute.xlu0 %4649
        %4653 = vset.pattern.permute.xlu0 0
        %4654 = vperm.xlu0 %4653, %v4615
        %v4655 = vpop.permute.xlu0 %4654
        %4658 = vset.pattern.permute.xlu0 0
        %4659 = vperm.xlu0 %4658, %v4616
        %v4660 = vpop.permute.xlu0 %4659
        %4663 = vset.pattern.permute.xlu0 0
        %4664 = vperm.xlu0 %4663, %v4617
        %v4665 = vpop.permute.xlu0 %4664
        %v4667 = vmul.f32 %v4619, %v4630
        %v4668 = vmul.f32 %v4620, %v4635
        %v4669 = vmul.f32 %v4621, %v4640
        %v4670 = vmul.f32 %v4622, %v4645
        %v4671 = vmul.f32 %v4623, %v4650
        %v4672 = vmul.f32 %v4624, %v4655
        %v4673 = vmul.f32 %v4625, %v4660
        %v4674 = vmul.f32 %v4626, %v4665
        %4683 = vrot.lane.b32.xlu0 %v4519, 32
        %v4684 = vpop.permute.xlu0 %4683
        %4685 = vrot.lane.b32.xlu0 %v4520, 32
        %v4686 = vpop.permute.xlu0 %4685
        %4687 = vrot.lane.b32.xlu0 %v4521, 32
        %v4688 = vpop.permute.xlu0 %4687
        %4689 = vrot.lane.b32.xlu0 %v4522, 32
        %v4690 = vpop.permute.xlu0 %4689
        %4691 = vrot.lane.b32.xlu0 %v4523, 32
        %v4692 = vpop.permute.xlu0 %4691
        %4693 = vrot.lane.b32.xlu0 %v4524, 32
        %v4694 = vpop.permute.xlu0 %4693
        %4695 = vrot.lane.b32.xlu0 %v4525, 32
        %v4696 = vpop.permute.xlu0 %4695
        %4697 = vrot.lane.b32.xlu0 %v4526, 32
        %v4698 = vpop.permute.xlu0 %4697
        %4715 = vrot.lane.b32.xlu0 %v4593, 64
        %v4716 = vpop.permute.xlu0 %4715
        %4717 = vrot.lane.b32.xlu0 %v4594, 64
        %v4718 = vpop.permute.xlu0 %4717
        %4719 = vrot.lane.b32.xlu0 %v4595, 64
        %v4720 = vpop.permute.xlu0 %4719
        %4721 = vrot.lane.b32.xlu0 %v4596, 64
        %v4722 = vpop.permute.xlu0 %4721
        %4723 = vrot.lane.b32.xlu0 %v4597, 64
        %v4724 = vpop.permute.xlu0 %4723
        %4725 = vrot.lane.b32.xlu0 %v4598, 64
        %v4726 = vpop.permute.xlu0 %4725
        %4727 = vrot.lane.b32.xlu0 %v4599, 64
        %v4728 = vpop.permute.xlu0 %4727
        %4729 = vrot.lane.b32.xlu0 %v4600, 64
        %v4730 = vpop.permute.xlu0 %4729
        %4747 = vrot.lane.b32.xlu0 %v4667, 96
        %v4748 = vpop.permute.xlu0 %4747
        %4749 = vrot.lane.b32.xlu0 %v4668, 96
        %v4750 = vpop.permute.xlu0 %4749
        %4751 = vrot.lane.b32.xlu0 %v4669, 96
        %v4752 = vpop.permute.xlu0 %4751
        %4753 = vrot.lane.b32.xlu0 %v4670, 96
        %v4754 = vpop.permute.xlu0 %4753
        %4755 = vrot.lane.b32.xlu0 %v4671, 96
        %v4756 = vpop.permute.xlu0 %4755
        %4757 = vrot.lane.b32.xlu0 %v4672, 96
        %v4758 = vpop.permute.xlu0 %4757
        %4759 = vrot.lane.b32.xlu0 %v4673, 96
        %v4760 = vpop.permute.xlu0 %4759
        %4761 = vrot.lane.b32.xlu0 %v4674, 96
        %v4762 = vpop.permute.xlu0 %4761
        %vm4771 = vcmask 261120
        %v4772 = vsel %vm4771, %v4445, %v4684
        %v4773 = vsel %vm4771, %v4446, %v4686
        %v4774 = vsel %vm4771, %v4447, %v4688
        %v4775 = vsel %vm4771, %v4448, %v4690
        %v4776 = vsel %vm4771, %v4449, %v4692
        %v4777 = vsel %vm4771, %v4450, %v4694
        %v4778 = vsel %vm4771, %v4451, %v4696
        %v4779 = vsel %vm4771, %v4452, %v4698
        %vm4780 = vcmask 523264
        %v4781 = vsel %vm4780, %v4772, %v4716
        %v4782 = vsel %vm4780, %v4773, %v4718
        %v4783 = vsel %vm4780, %v4774, %v4720
        %v4784 = vsel %vm4780, %v4775, %v4722
        %v4785 = vsel %vm4780, %v4776, %v4724
        %v4786 = vsel %vm4780, %v4777, %v4726
        %v4787 = vsel %vm4780, %v4778, %v4728
        %v4788 = vsel %vm4780, %v4779, %v4730
        %vm4789 = vcmask 785408
        %v4790 = vsel %vm4789, %v4781, %v4748
        %v4791 = vsel %vm4789, %v4782, %v4750
        %v4792 = vsel %vm4789, %v4783, %v4752
        %v4793 = vsel %vm4789, %v4784, %v4754
        %v4794 = vsel %vm4789, %v4785, %v4756
        %v4795 = vsel %vm4789, %v4786, %v4758
        %v4796 = vsel %vm4789, %v4787, %v4760
        %v4797 = vsel %vm4789, %v4788, %v4762
        %v4798 = vpack.c.bf16 %v4791, %v4790
        %v4799 = vpack.c.bf16 %v4793, %v4792
        %v4800 = vpack.c.bf16 %v4795, %v4794
        %v4801 = vpack.c.bf16 %v4797, %v4796
        %v4806 = vunpack.c.l.b16 %v4798
        %v4807 = vunpack.c.h.b16 %v4798
        %v4808 = vunpack.c.l.b16 %v4799
        %v4809 = vunpack.c.h.b16 %v4799
        %v4810 = vunpack.c.l.b16 %v4800
        %v4811 = vunpack.c.h.b16 %v4800
        %v4812 = vunpack.c.l.b16 %v4801
        %v4813 = vunpack.c.h.b16 %v4801
        %v4814 = vpack.c.b16 %v4806, %v4806
        %v4815 = vpack.c.b16 %v4807, %v4807
        %v4816 = vpack.c.b16 %v4808, %v4808
        %v4817 = vpack.c.b16 %v4809, %v4809
        %v4818 = vpack.c.b16 %v4810, %v4810
        %v4819 = vpack.c.b16 %v4811, %v4811
        %v4820 = vpack.c.b16 %v4812, %v4812
        %v4821 = vpack.c.b16 %v4813, %v4813
        %4830 = vst [vmem:[%s374] sm:$0xf] %v4814
        %4831 = vst [vmem:[%s374 + $0x4] sm:$0xf] %v4815
        %4832 = vst [vmem:[%s374 + $0x8] sm:$0xf] %v4816
        %4833 = vst [vmem:[%s374 + $0xc] sm:$0xf] %v4817
        %4834 = vst [vmem:[%s374 + $0x10] sm:$0xf] %v4818
        %4835 = vst [vmem:[%s374 + $0x14] sm:$0xf] %v4819
        %4836 = vst [vmem:[%s374 + $0x18] sm:$0xf] %v4820
        %4837 = vst [vmem:[%s374 + $0x1c] sm:$0xf] %v4821
      $region48: #{_lambda_.12} parent=31 // pred_fallthru
        _
      %s4838 = smul.u32 8, %s22
      %p4839 = scmp.lt.s32.totalorder %s21, 0
      %s4840 = scalar_select %p4839, %s21, 0
      %p4841 = scmp.lt.s32.totalorder %s20, 1
      %s4842 = scalar_select %p4841, %s20, 1
      %p4843 = scmp.lt.s32.totalorder %s4838, 7
      %s4844 = scalar_select %p4843, %s4838, 7
      %s4845 = smul.addr %s4842, 8
      %s4846 = sadd.s32 %s4844, %s4845
      %s4847 = smul.addr %s4840, 16
      %s4848 = sadd.s32 %s4846, %s4847
      %s4849 = smul.addr %s4848, 4
      %s4850 = scalar_lea.vmem %s3, %s4849
      // Predicated region
      $region49: #{_lambda_.12} parent=31 // pred_check
        %p4851 = pneg %p160
      $region50: #{_lambda_.12} parent=31 // pred_check_branch
        %4853 = sbr.rel (%p4851) target = $region52
      $region51: #{_lambda_.12} parent=31 // pred_region
        %s4854 = smul.u32 8, %s22
      $region52: #{_lambda_.12} parent=31 // pred_fallthru
        _
    $region32: #{_lambda_.12} parent=5 // pred_fallthru
      _
    %p4855 = scmp.le.s32.totalorder 2, %s9
    // Predicated region
    $region53: #{_lambda_.12} parent=5 // pred_check
      %p4856 = pneg %p4855
    $region54: #{_lambda_.12} parent=5 // pred_check_branch
      %4858 = sbr.rel (%p4856) target = $region56
    $region55: #{_lambda_.12} parent=5 // pred_region
      %s4859 = ssub.s32 %s9, 2
      // Predicated region
      $region57: #{_lambda_.12} parent=55 // pred_check
        %p4860 = pneg %p166
      $region58: #{_lambda_.12} parent=55 // pred_check_branch
        %4862 = sbr.rel (%p4860) target = $region60
      $region59: #{_lambda_.12} parent=55 // pred_region
        %s4863 = smul.u32 8, %s26
        %p4864 = scmp.lt.s32.totalorder %s25, 0
        %s4865 = scalar_select %p4864, %s25, 0
        %p4866 = scmp.lt.s32.totalorder %s24, 1
        %s4867 = scalar_select %p4866, %s24, 1
        %p4868 = scmp.lt.s32.totalorder %s4863, 7
        %s4869 = scalar_select %p4868, %s4863, 7
        %s4870 = smul.addr %s4867, 8
        %s4871 = sadd.s32 %s4869, %s4870
        %s4872 = smul.addr %s4865, 16
        %s4873 = sadd.s32 %s4871, %s4872
        %s4874 = smul.addr %s4873, 4
        %s4875 = scalar_lea.vmem %s3, %s4874
      $region60: #{_lambda_.12} parent=55 // pred_fallthru
        _
    $region56: #{_lambda_.12} parent=5 // pred_fallthru
      _
  $region6: #{_lambda_.12} parent=0 // loop_footer
    %s13 = sadd.s32 1, %s9
  $region7: #{_lambda_.12} parent=0 // loop_footer_branch
    %8 = sbr.rel target = $region3
  $region8: #{_lambda_.12} parent=0 // loop_exit
    _

</llo_original>
